<compile_context>
chip_gen: v7x
topology: tpu7x:2x2x1
jax: 0.10.0
libtpu: 0.0.40
codegen_flags: <defaults>
</compile_context>

<pallas_src>
import functools

import jax
import jax.numpy as jnp
from jax.experimental import pallas as pl
from jax.experimental.pallas import tpu as pltpu


def _round_up(x, m):
    return ((x + m - 1) // m) * m


def _silu(y):
    # y is f32; keep the divide on the EUP slot (exp already goes to EUP).
    return y * pl.reciprocal(1.0 + jnp.exp(-y), approx=True)


# ---------------------------------------------------------------------------
# Kernels
# ---------------------------------------------------------------------------
def _pw_kernel(x_ref, w_ref, b_ref, o_ref):
    """Fused 1x1 conv: o = SiLU(x @ w + b).

    x_ref: (tm, K) bf16, w_ref: (K, C) bf16 (BN scale folded),
    b_ref: (1, C) f32, o_ref: (tm, C) bf16.  Accumulation / epilogue f32.
    """
    y = jnp.dot(x_ref[...], w_ref[...], preferred_element_type=jnp.float32)
    y = _silu(y + b_ref[...])
    o_ref[...] = y.astype(o_ref.dtype)


def _bottleneck_kernel(x_ref, w1_ref, b1_ref, w3_ref, b2_ref, o_ref, pad_ref,
                       *, H, W, band_h, c_sel):
    """Fused Bottleneck with channel-concat pass-through.

    Grid = (N,): one invocation handles one image, processed in row bands.
      x_ref : (1, H*W, c_in)         bf16  (conv/residual use last c_sel chans)
      w1_ref: (c_sel, c_mid)         bf16  (BN scale folded)
      w3_ref: (9*c_mid, c_out)       bf16  (im2col-reshaped 3x3 weights)
      b*_ref: (1, c)                 f32
      o_ref : (1, H*W, c_in + c_out) bf16  = [x | SiLU(3x3(SiLU(1x1(x_last)))) + x_last]
      pad_ref: VMEM scratch (band_h+2, W+2, c_mid) bf16 (zero halo, per-band).
    """
    c_in = x_ref.shape[2]
    c_mid = w1_ref.shape[1]
    c_off = c_in - c_sel

    for r0 in range(0, H, band_h):                 # static band loop
        bh = min(band_h, H - r0)
        lo = max(r0 - 1, 0)                        # halo rows for the 3x3
        hi = min(r0 + bh + 1, H)
        rows = hi - lo
        dst0 = lo - (r0 - 1)                       # 1 iff top image border

        # Fresh zero halo every band: correct under any grid partitioning
        # (no cross-step scratch dependence) and handles image borders.
        pad_ref[...] = jnp.zeros(pad_ref.shape, pad_ref.dtype)

        # 1x1 conv (BN folded) + SiLU on band rows (+1-row halo, recomputed).
        x_halo = x_ref[0, lo * W:hi * W, c_off:c_off + c_sel]   # (rows*W, c_sel)
        h = jnp.dot(x_halo, w1_ref[...], preferred_element_type=jnp.float32)
        h = _silu(h + b1_ref[...])
        pad_ref[dst0:dst0 + rows, 1:W + 1, :] = (
            h.astype(pad_ref.dtype).reshape(rows, W, c_mid))

        # im2col: one (bh*W, 9*c_mid) patch -> single MXU dot with K = 9*Cmid.
        cols = []
        for dy in range(3):
            for dx in range(3):
                cols.append(
                    pad_ref[dy:dy + bh, dx:dx + W, :].reshape(bh * W, c_mid))
        patch = jnp.concatenate(cols, axis=-1)
        y = jnp.dot(patch, w3_ref[...], preferred_element_type=jnp.float32)
        y = _silu(y + b2_ref[...])

        # Residual + fused channel concat: [x_in | y + x_last], lane-dense store.
        x_ctr = x_ref[0, r0 * W:(r0 + bh) * W, :]               # (bh*W, c_in)
        y = y + x_ctr[:, c_off:c_off + c_sel].astype(jnp.float32)
        o_ref[0, r0 * W:(r0 + bh) * W, :] = jnp.concatenate(
            [x_ctr, y.astype(o_ref.dtype)], axis=-1)


# ---------------------------------------------------------------------------
# Wrappers
# ---------------------------------------------------------------------------
def pointwise_conv(x, w, b, *, tm=512):
    """Channels-last 1x1 conv + BN bias + SiLU.  x:(M,K) bf16 -> (M,C) bf16."""
    M, K = x.shape
    C = w.shape[1]
    tm = min(tm, _round_up(M, 8))
    M_pad = _round_up(M, tm)
    if M_pad != M:
        x = jnp.pad(x, ((0, M_pad - M), (0, 0)))

    out = pl.pallas_call(
        _pw_kernel,
        out_shape=jax.ShapeDtypeStruct((M_pad, C), jnp.bfloat16),
        grid_spec=pltpu.PrefetchScalarGridSpec(
            num_scalar_prefetch=0,
            grid=(M_pad // tm,),
            in_specs=[
                pl.BlockSpec((tm, K), lambda i: (i, 0)),
                pl.BlockSpec((K, C), lambda i: (0, 0)),
                pl.BlockSpec((1, C), lambda i: (0, 0)),
            ],
            out_specs=pl.BlockSpec((tm, C), lambda i: (i, 0)),
        ),
        compiler_params=pltpu.CompilerParams(
            dimension_semantics=("parallel",)),
        cost_estimate=pl.CostEstimate(
            flops=2 * M_pad * K * C,
            transcendentals=M_pad * C,
            bytes_accessed=2 * M_pad * (K + C) + 2 * K * C + 4 * C),
    )(x, w, b)
    return out[:M] if M_pad != M else out


def bottleneck_fused(x, w1, b1, w3r, b2, *, H, W):
    """Fused YOLO Bottleneck with concat pass-through.

    x: (N, HW, c_in) bf16 -> (N, HW, c_in + c_out) bf16 where the bottleneck is
    applied to the last c_sel input channels and its output appended.
    """
    N, HW, c_in = x.shape
    c_sel, c_mid = w1.shape
    c_out = w3r.shape[1]
    assert w3r.shape[0] == 9 * c_mid
    assert c_out == c_sel, "shortcut add requires c_in_slice == c_out"
    assert HW == H * W

    band_h = max(1, min(H, 512 // max(W, 1)))      # ~512 matmul rows per band
    c_tot = c_in + c_out

    flops = 2 * N * HW * (c_sel * c_mid + 9 * c_mid * c_out)
    transcendentals = N * HW * (c_mid + c_out)
    bytes_accessed = (2 * N * HW * (c_in + c_tot)
                      + 2 * (c_sel * c_mid + 9 * c_mid * c_out)
                      + 4 * (c_mid + c_out))

    return pl.pallas_call(
        functools.partial(_bottleneck_kernel, H=H, W=W, band_h=band_h,
                          c_sel=c_sel),
        out_shape=jax.ShapeDtypeStruct((N, HW, c_tot), jnp.bfloat16),
        grid_spec=pltpu.PrefetchScalarGridSpec(
            num_scalar_prefetch=0,
            grid=(N,),
            in_specs=[
                pl.BlockSpec((1, HW, c_in), lambda n: (n, 0, 0)),
                pl.BlockSpec((c_sel, c_mid), lambda n: (0, 0)),
                pl.BlockSpec((1, c_mid), lambda n: (0, 0)),
                pl.BlockSpec((9 * c_mid, c_out), lambda n: (0, 0)),
                pl.BlockSpec((1, c_out), lambda n: (0, 0)),
            ],
            out_specs=pl.BlockSpec((1, HW, c_tot), lambda n: (n, 0, 0)),
            scratch_shapes=[pltpu.VMEM((band_h + 2, W + 2, c_mid),
                                       jnp.bfloat16)],
        ),
        compiler_params=pltpu.CompilerParams(
            dimension_semantics=("parallel",),
            vmem_limit_bytes=64 * 1024 * 1024),
        cost_estimate=pl.CostEstimate(
            flops=flops, transcendentals=transcendentals,
            bytes_accessed=bytes_accessed),
    )(x, w1, b1, w3r, b2)


# ---------------------------------------------------------------------------
# Parameter construction (deterministic, synthetic).  BN scale is folded into
# the conv weight (bf16); only the bias (f32) remains for the kernel epilogue.
# ---------------------------------------------------------------------------
def _fold_bn(gamma, beta, mean, var, eps=1e-5):
    scale = gamma / jnp.sqrt(var + eps)
    bias = beta - mean * scale
    return scale, bias


def make_conv_params(key, cin, cout, k):
    kw, kg, kb, km, kv = jax.random.split(key, 5)
    fan_in = cin * k * k
    std = (2.0 / fan_in) ** 0.5
    if k == 1:
        w = jax.random.normal(kw, (cin, cout), jnp.float32) * std
    else:
        w = jax.random.normal(kw, (k, k, cin, cout), jnp.float32) * std
    gamma = 1.0 + 0.1 * jax.random.normal(kg, (cout,), jnp.float32)
    beta = 0.1 * jax.random.normal(kb, (cout,), jnp.float32)
    mean = 0.1 * jax.random.normal(km, (cout,), jnp.float32)
    var = jnp.abs(1.0 + 0.1 * jax.random.normal(kv, (cout,), jnp.float32))
    scale, bias = _fold_bn(gamma, beta, mean, var)
    w = (w * scale).astype(jnp.bfloat16)            # fold BN scale into weights
    return w, bias.reshape(1, cout).astype(jnp.float32)


# ---------------------------------------------------------------------------
# C2f forward (NCHW in / NCHW out) — matches the PyTorch module semantics
# ---------------------------------------------------------------------------
def c2f_forward(x_nchw, params, *, n=1):
    N, C1, H, W = x_nchw.shape
    HW = H * W
    # bf16 BEFORE the relayout: halves the wrapper-level HBM traffic.
    x = jnp.transpose(x_nchw.astype(jnp.bfloat16), (0, 2, 3, 1))  # NHWC bf16
    x_flat = x.reshape(N * HW, C1)

    w1, b1 = params["cv1"]                       # (C1, 2c_), (1, 2c_)
    c_ = w1.shape[1] // 2
    # cv1: single lane-dense (M, 2c_) output; chunk(2) is consumed as an
    # in-kernel channel slice downstream (no split HBM buffers).
    y01 = pointwise_conv(x_flat, w1, b1)
    cur = y01.reshape(N, HW, 2 * c_)

    # Each fused bottleneck appends its output channels to the running concat
    # buffer ([x | y]); after n bottlenecks `cur` IS torch.cat(y, 1).
    for i in range(n):
        pw, pb = params["m"][i]["cv1"]           # (c_, c_), (1, c_)
        cw, cb = params["m"][i]["cv2"]           # (3,3,c_,c_), (1, c_)
        cw_r = cw.reshape(9 * cw.shape[2], cw.shape[3])   # contiguous reshape
        cur = bottleneck_fused(cur, pw, pb, cw_r, cb, H=H, W=W)

    w2, b2 = params["cv2"]                       # ((2+n)c_, C2), (1, C2)
    C2 = w2.shape[1]
    # cv2: single dot with K = (2+n)*c_ over the fused concat buffer.
    out = pointwise_conv(cur.reshape(N * HW, (2 + n) * c_), w2, b2)
    out = out.reshape(N, H, W, C2)
    return jnp.transpose(out, (0, 3, 1, 2)).astype(jnp.float32)   # NHWC -> NCHW


# ---------------------------------------------------------------------------
# Pure-JAX reference with the same bf16-input / f32-accumulate policy
# ---------------------------------------------------------------------------
def _ref_pw(x, w, b):
    y = jnp.einsum("nmc,cd->nmd", x, w,
                   preferred_element_type=jnp.float32) + b[0]
    y = y * jax.nn.sigmoid(y)
    return y.astype(jnp.bfloat16)


def _ref_bottleneck(cur, w1, b1, w3, b2, H, W):
    N, HW, c_ = cur.shape
    h = _ref_pw(cur, w1, b1).reshape(N, H, W, -1)
    y = jax.lax.conv_general_dilated(
        h, w3, (1, 1), "SAME",
        dimension_numbers=("NHWC", "HWIO", "NHWC"),
        preferred_element_type=jnp.float32)
    y = y + b2[0]
    y = y * jax.nn.sigmoid(y)
    y = y + cur.reshape(N, H, W, c_).astype(jnp.float32)
    return y.astype(jnp.bfloat16).reshape(N, HW, -1)


def c2f_reference(x_nchw, params, *, n=1):
    N, C1, H, W = x_nchw.shape
    HW = H * W
    x = jnp.transpose(x_nchw.astype(jnp.bfloat16), (0, 2, 3, 1))
    x = x.reshape(N, HW, C1)
    t = _ref_pw(x, *params["cv1"])
    c_ = t.shape[-1] // 2
    ys = [t[..., :c_], t[..., c_:]]
    cur = ys[-1]
    for i in range(n):
        cur = _ref_bottleneck(cur, *params["m"][i]["cv1"],
                              *params["m"][i]["cv2"], H, W)
        ys.append(cur)
    out = _ref_pw(jnp.concatenate(ys, axis=-1), *params["cv2"])
    out = out.reshape(N, H, W, -1)
    return jnp.transpose(out, (0, 3, 1, 2)).astype(jnp.float32)


# ---------------------------------------------------------------------------
if __name__ == "__main__":
    key = jax.random.PRNGKey(0)
    N, C1, H, W = 2, 4, 16, 16
    C2, n_bottlenecks = 8, 1
    c_ = int(C2 * 0.5)

    keys = jax.random.split(key, 8)
    x = jax.random.normal(keys[0], (N, C1, H, W), jnp.float32)

    params = {
        "cv1": make_conv_params(keys[1], C1, 2 * c_, 1),
        "cv2": make_conv_params(keys[2], (2 + n_bottlenecks) * c_, C2, 1),
        "m": [
            {
                "cv1": make_conv_params(keys[3], c_, c_, 1),
                "cv2": make_conv_params(keys[4], c_, c_, 3),
            }
        ],
    }

    fwd = jax.jit(functools.partial(c2f_forward, n=n_bottlenecks))
    out = fwd(x, params)
    out = jax.block_until_ready(out)

    ref = c2f_reference(x, params, n=n_bottlenecks)
    assert out.shape == (N, C2, H, W), out.shape
    assert jnp.allclose(out, ref, rtol=3e-2, atol=3e-2), float(
        jnp.max(jnp.abs(out - ref)))

    print("KERNEL_OK")
</pallas_src>

<mosaic_0001>
module attributes {stable_mosaic.version = 11 : i64} {
  func.func @_bottleneck_kernel(%arg0: i32, %arg1: memref<1x256x8xbf16, #tpu.memory_space<vmem>>, %arg2: memref<4x4xbf16, #tpu.memory_space<vmem>>, %arg3: memref<1x4xf32, #tpu.memory_space<vmem>>, %arg4: memref<36x4xbf16, #tpu.memory_space<vmem>>, %arg5: memref<1x4xf32, #tpu.memory_space<vmem>>, %arg6: memref<1x256x12xbf16, #tpu.memory_space<vmem>>, %arg7: memref<18x18x4xbf16, #tpu.memory_space<vmem>>) attributes {dimension_semantics = [#tpu.dimension_semantics<parallel>], iteration_bounds = array<i64: 2>, scalar_prefetch = 0 : i64, scratch_operands = 1 : i64, tpu.core_type = #tpu.core_type<tc>, window_params = [{transform_indices = @transform_0, window_bounds = array<i64: 1, 256, 8>}, {pipeline_mode = #tpu.pipeline_mode<synchronous>, transform_indices = @transform_1, window_bounds = array<i64: 4, 4>}, {pipeline_mode = #tpu.pipeline_mode<synchronous>, transform_indices = @transform_2, window_bounds = array<i64: 1, 4>}, {pipeline_mode = #tpu.pipeline_mode<synchronous>, transform_indices = @transform_3, window_bounds = array<i64: 36, 4>}, {pipeline_mode = #tpu.pipeline_mode<synchronous>, transform_indices = @transform_4, window_bounds = array<i64: 1, 4>}, {transform_indices = @transform_5, window_bounds = array<i64: 1, 256, 12>}]} {
    %cst = arith.constant 0.000000e+00 : bf16
    %0 = vector.broadcast %cst : bf16 to vector<18x18x4xbf16>
    %c0 = arith.constant 0 : index
    %c0_0 = arith.constant 0 : index
    %c0_1 = arith.constant 0 : index
    %1 = vector.load %arg7[%c0, %c0_0, %c0_1] : memref<18x18x4xbf16, #tpu.memory_space<vmem>>, vector<18x18x4xbf16>
    tpu.vector_store %arg7[%c0, %c0_0, %c0_1], %0 {strides = array<i32>} : memref<18x18x4xbf16, #tpu.memory_space<vmem>>, vector<18x18x4xbf16>,
    %c0_2 = arith.constant 0 : index
    %c0_3 = arith.constant 0 : index
    %c4 = arith.constant 4 : index
    %2 = vector.load %arg1[%c0_2, %c0_3, %c4] : memref<1x256x8xbf16, #tpu.memory_space<vmem>>, vector<1x256x4xbf16>
    %3 = vector.shape_cast %2 : vector<1x256x4xbf16> to vector<256x4xbf16>
    %c0_4 = arith.constant 0 : index
    %c0_5 = arith.constant 0 : index
    %4 = vector.load %arg2[%c0_4, %c0_5] : memref<4x4xbf16, #tpu.memory_space<vmem>>, vector<4x4xbf16>
    %cst_6 = arith.constant dense<0.000000e+00> : vector<256x4xf32>
    %5 = tpu.matmul %3, %4, %cst_6 {dimension_numbers = #tpu.dot_dimension_numbers<[1], [0], [0], [1], [0, 0, 1, 1], [], []>} : vector<256x4xbf16>, vector<4x4xbf16>, vector<256x4xf32> -> vector<256x4xf32>
    %c0_7 = arith.constant 0 : index
    %c0_8 = arith.constant 0 : index
    %6 = vector.load %arg3[%c0_7, %c0_8] : memref<1x4xf32, #tpu.memory_space<vmem>>, vector<1x4xf32>
    %7 = vector.broadcast %6 : vector<1x4xf32> to vector<256x4xf32>
    %8 = arith.addf %5, %7 : vector<256x4xf32>
    %cst_9 = arith.constant 0.000000e+00 : f32
    %9 = vector.broadcast %cst_9 : f32 to vector<256x4xf32>
    %10 = arith.subf %9, %8 : vector<256x4xf32>
    %11 = math.exp %10 : vector<256x4xf32>
    %cst_10 = arith.constant 1.000000e+00 : f32
    %12 = vector.broadcast %cst_10 : f32 to vector<256x4xf32>
    %13 = arith.addf %12, %11 : vector<256x4xf32>
    %14 = tpu.reciprocal %13 {approx = true} : vector<256x4xf32> -> vector<256x4xf32>
    %15 = arith.mulf %8, %14 : vector<256x4xf32>
    %16 = arith.truncf %15 : vector<256x4xf32> to vector<256x4xbf16>
    %17 = vector.shape_cast %16 : vector<256x4xbf16> to vector<16x16x4xbf16>
    %c1 = arith.constant 1 : index
    %c1_11 = arith.constant 1 : index
    %c0_12 = arith.constant 0 : index
    %18 = vector.load %arg7[%c1, %c1_11, %c0_12] : memref<18x18x4xbf16, #tpu.memory_space<vmem>>, vector<16x16x4xbf16>
    tpu.vector_store %arg7[%c1, %c1_11, %c0_12], %17 {strides = array<i32>} : memref<18x18x4xbf16, #tpu.memory_space<vmem>>, vector<16x16x4xbf16>,
    %c0_13 = arith.constant 0 : index
    %c0_14 = arith.constant 0 : index
    %c0_15 = arith.constant 0 : index
    %19 = vector.load %arg7[%c0_13, %c0_14, %c0_15] : memref<18x18x4xbf16, #tpu.memory_space<vmem>>, vector<16x16x4xbf16>
    %20 = vector.shape_cast %19 : vector<16x16x4xbf16> to vector<256x4xbf16>
    %c0_16 = arith.constant 0 : index
    %c1_17 = arith.constant 1 : index
    %c0_18 = arith.constant 0 : index
    %21 = vector.load %arg7[%c0_16, %c1_17, %c0_18] : memref<18x18x4xbf16, #tpu.memory_space<vmem>>, vector<16x16x4xbf16>
    %22 = vector.shape_cast %21 : vector<16x16x4xbf16> to vector<256x4xbf16>
    %c0_19 = arith.constant 0 : index
    %c2 = arith.constant 2 : index
    %c0_20 = arith.constant 0 : index
    %23 = vector.load %arg7[%c0_19, %c2, %c0_20] : memref<18x18x4xbf16, #tpu.memory_space<vmem>>, vector<16x16x4xbf16>
    %24 = vector.shape_cast %23 : vector<16x16x4xbf16> to vector<256x4xbf16>
    %c1_21 = arith.constant 1 : index
    %c0_22 = arith.constant 0 : index
    %c0_23 = arith.constant 0 : index
    %25 = vector.load %arg7[%c1_21, %c0_22, %c0_23] : memref<18x18x4xbf16, #tpu.memory_space<vmem>>, vector<16x16x4xbf16>
    %26 = vector.shape_cast %25 : vector<16x16x4xbf16> to vector<256x4xbf16>
    %c1_24 = arith.constant 1 : index
    %c1_25 = arith.constant 1 : index
    %c0_26 = arith.constant 0 : index
    %27 = vector.load %arg7[%c1_24, %c1_25, %c0_26] : memref<18x18x4xbf16, #tpu.memory_space<vmem>>, vector<16x16x4xbf16>
    %28 = vector.shape_cast %27 : vector<16x16x4xbf16> to vector<256x4xbf16>
    %c1_27 = arith.constant 1 : index
    %c2_28 = arith.constant 2 : index
    %c0_29 = arith.constant 0 : index
    %29 = vector.load %arg7[%c1_27, %c2_28, %c0_29] : memref<18x18x4xbf16, #tpu.memory_space<vmem>>, vector<16x16x4xbf16>
    %30 = vector.shape_cast %29 : vector<16x16x4xbf16> to vector<256x4xbf16>
    %c2_30 = arith.constant 2 : index
    %c0_31 = arith.constant 0 : index
    %c0_32 = arith.constant 0 : index
    %31 = vector.load %arg7[%c2_30, %c0_31, %c0_32] : memref<18x18x4xbf16, #tpu.memory_space<vmem>>, vector<16x16x4xbf16>
    %32 = vector.shape_cast %31 : vector<16x16x4xbf16> to vector<256x4xbf16>
    %c2_33 = arith.constant 2 : index
    %c1_34 = arith.constant 1 : index
    %c0_35 = arith.constant 0 : index
    %33 = vector.load %arg7[%c2_33, %c1_34, %c0_35] : memref<18x18x4xbf16, #tpu.memory_space<vmem>>, vector<16x16x4xbf16>
    %34 = vector.shape_cast %33 : vector<16x16x4xbf16> to vector<256x4xbf16>
    %c2_36 = arith.constant 2 : index
    %c2_37 = arith.constant 2 : index
    %c0_38 = arith.constant 0 : index
    %35 = vector.load %arg7[%c2_36, %c2_37, %c0_38] : memref<18x18x4xbf16, #tpu.memory_space<vmem>>, vector<16x16x4xbf16>
    %36 = vector.shape_cast %35 : vector<16x16x4xbf16> to vector<256x4xbf16>
    %37 = tpu.concatenate %20, %22, %24, %26, %28, %30, %32, %34, %36 in 1 : vector<256x4xbf16>, vector<256x4xbf16>, vector<256x4xbf16>, vector<256x4xbf16>, vector<256x4xbf16>, vector<256x4xbf16>, vector<256x4xbf16>, vector<256x4xbf16>, vector<256x4xbf16> -> vector<256x36xbf16>
    %c0_39 = arith.constant 0 : index
    %c0_40 = arith.constant 0 : index
    %38 = vector.load %arg4[%c0_39, %c0_40] : memref<36x4xbf16, #tpu.memory_space<vmem>>, vector<36x4xbf16>
    %cst_41 = arith.constant dense<0.000000e+00> : vector<256x4xf32>
    %39 = tpu.matmul %37, %38, %cst_41 {dimension_numbers = #tpu.dot_dimension_numbers<[1], [0], [0], [1], [0, 0, 1, 1], [], []>} : vector<256x36xbf16>, vector<36x4xbf16>, vector<256x4xf32> -> vector<256x4xf32>
    %c0_42 = arith.constant 0 : index
    %c0_43 = arith.constant 0 : index
    %40 = vector.load %arg5[%c0_42, %c0_43] : memref<1x4xf32, #tpu.memory_space<vmem>>, vector<1x4xf32>
    %41 = vector.broadcast %40 : vector<1x4xf32> to vector<256x4xf32>
    %42 = arith.addf %39, %41 : vector<256x4xf32>
    %cst_44 = arith.constant 0.000000e+00 : f32
    %43 = vector.broadcast %cst_44 : f32 to vector<256x4xf32>
    %44 = arith.subf %43, %42 : vector<256x4xf32>
    %45 = math.exp %44 : vector<256x4xf32>
    %cst_45 = arith.constant 1.000000e+00 : f32
    %46 = vector.broadcast %cst_45 : f32 to vector<256x4xf32>
    %47 = arith.addf %46, %45 : vector<256x4xf32>
    %48 = tpu.reciprocal %47 {approx = true} : vector<256x4xf32> -> vector<256x4xf32>
    %49 = arith.mulf %42, %48 : vector<256x4xf32>
    %c0_46 = arith.constant 0 : index
    %c0_47 = arith.constant 0 : index
    %c0_48 = arith.constant 0 : index
    %50 = vector.load %arg1[%c0_46, %c0_47, %c0_48] : memref<1x256x8xbf16, #tpu.memory_space<vmem>>, vector<1x256x8xbf16>
    %51 = vector.shape_cast %50 : vector<1x256x8xbf16> to vector<256x8xbf16>
    %52 = vector.extract_strided_slice %51 {offsets = [0, 4], sizes = [256, 4], strides = [1, 1]} : vector<256x8xbf16> to vector<256x4xbf16>
    %53 = arith.extf %52 : vector<256x4xbf16> to vector<256x4xf32>
    %54 = arith.addf %49, %53 : vector<256x4xf32>
    %55 = arith.truncf %54 : vector<256x4xf32> to vector<256x4xbf16>
    %56 = tpu.concatenate %51, %55 in 1 : vector<256x8xbf16>, vector<256x4xbf16> -> vector<256x12xbf16>
    %c0_49 = arith.constant 0 : index
    %c0_50 = arith.constant 0 : index
    %c0_51 = arith.constant 0 : index
    %57 = vector.load %arg6[%c0_49, %c0_50, %c0_51] : memref<1x256x12xbf16, #tpu.memory_space<vmem>>, vector<1x256x12xbf16>
    %58 = vector.shape_cast %57 : vector<1x256x12xbf16> to vector<256x12xbf16>
    %59 = vector.shape_cast %56 : vector<256x12xbf16> to vector<1x256x12xbf16>
    tpu.vector_store %arg6[%c0_49, %c0_50, %c0_51], %59 {strides = array<i32>} : memref<1x256x12xbf16, #tpu.memory_space<vmem>>, vector<1x256x12xbf16>,
    return
  }
  func.func @transform_0(%arg0: i32) -> (i32, i32, i32) {
    %c0_i32 = arith.constant 0 : i32
    %c0_i32_0 = arith.constant 0 : i32
    %c0_i32_1 = arith.constant 0 : i32
    return %arg0, %c0_i32, %c0_i32_0 : i32, i32, i32
  }
  func.func @transform_1(%arg0: i32) -> (i32, i32) {
    %c0_i32 = arith.constant 0 : i32
    %c0_i32_0 = arith.constant 0 : i32
    %c0_i32_1 = arith.constant 0 : i32
    return %c0_i32, %c0_i32_0 : i32, i32
  }
  func.func @transform_2(%arg0: i32) -> (i32, i32) {
    %c0_i32 = arith.constant 0 : i32
    %c0_i32_0 = arith.constant 0 : i32
    %c0_i32_1 = arith.constant 0 : i32
    return %c0_i32, %c0_i32_0 : i32, i32
  }
  func.func @transform_3(%arg0: i32) -> (i32, i32) {
    %c0_i32 = arith.constant 0 : i32
    %c0_i32_0 = arith.constant 0 : i32
    %c0_i32_1 = arith.constant 0 : i32
    return %c0_i32, %c0_i32_0 : i32, i32
  }
  func.func @transform_4(%arg0: i32) -> (i32, i32) {
    %c0_i32 = arith.constant 0 : i32
    %c0_i32_0 = arith.constant 0 : i32
    %c0_i32_1 = arith.constant 0 : i32
    return %c0_i32, %c0_i32_0 : i32, i32
  }
  func.func @transform_5(%arg0: i32) -> (i32, i32, i32) {
    %c0_i32 = arith.constant 0 : i32
    %c0_i32_0 = arith.constant 0 : i32
    %c0_i32_1 = arith.constant 0 : i32
    return %arg0, %c0_i32, %c0_i32_0 : i32, i32, i32
  }
}

module attributes {stable_mosaic.version = 11 : i64} {
  func.func @_pw_kernel(%arg0: i32, %arg1: memref<512x4xbf16, #tpu.memory_space<vmem>>, %arg2: memref<4x8xbf16, #tpu.memory_space<vmem>>, %arg3: memref<1x8xf32, #tpu.memory_space<vmem>>, %arg4: memref<512x8xbf16, #tpu.memory_space<vmem>>) attributes {dimension_semantics = [#tpu.dimension_semantics<parallel>], iteration_bounds = array<i64: 1>, scalar_prefetch = 0 : i64, scratch_operands = 0 : i64, tpu.core_type = #tpu.core_type<tc>, window_params = [{transform_indices = @transform_0, window_bounds = array<i64: 512, 4>}, {pipeline_mode = #tpu.pipeline_mode<synchronous>, transform_indices = @transform_1, window_bounds = array<i64: 4, 8>}, {pipeline_mode = #tpu.pipeline_mode<synchronous>, transform_indices = @transform_2, window_bounds = array<i64: 1, 8>}, {transform_indices = @transform_3, window_bounds = array<i64: 512, 8>}]} {
    %c0 = arith.constant 0 : index
    %c0_0 = arith.constant 0 : index
    %0 = vector.load %arg1[%c0, %c0_0] : memref<512x4xbf16, #tpu.memory_space<vmem>>, vector<512x4xbf16>
    %c0_1 = arith.constant 0 : index
    %c0_2 = arith.constant 0 : index
    %1 = vector.load %arg2[%c0_1, %c0_2] : memref<4x8xbf16, #tpu.memory_space<vmem>>, vector<4x8xbf16>
    %cst = arith.constant dense<0.000000e+00> : vector<512x8xf32>
    %2 = tpu.matmul %0, %1, %cst {dimension_numbers = #tpu.dot_dimension_numbers<[1], [0], [0], [1], [0, 0, 1, 1], [], []>} : vector<512x4xbf16>, vector<4x8xbf16>, vector<512x8xf32> -> vector<512x8xf32>
    %c0_3 = arith.constant 0 : index
    %c0_4 = arith.constant 0 : index
    %3 = vector.load %arg3[%c0_3, %c0_4] : memref<1x8xf32, #tpu.memory_space<vmem>>, vector<1x8xf32>
    %4 = vector.broadcast %3 : vector<1x8xf32> to vector<512x8xf32>
    %5 = arith.addf %2, %4 : vector<512x8xf32>
    %cst_5 = arith.constant 0.000000e+00 : f32
    %6 = vector.broadcast %cst_5 : f32 to vector<512x8xf32>
    %7 = arith.subf %6, %5 : vector<512x8xf32>
    %8 = math.exp %7 : vector<512x8xf32>
    %cst_6 = arith.constant 1.000000e+00 : f32
    %9 = vector.broadcast %cst_6 : f32 to vector<512x8xf32>
    %10 = arith.addf %9, %8 : vector<512x8xf32>
    %11 = tpu.reciprocal %10 {approx = true} : vector<512x8xf32> -> vector<512x8xf32>
    %12 = arith.mulf %5, %11 : vector<512x8xf32>
    %13 = arith.truncf %12 : vector<512x8xf32> to vector<512x8xbf16>
    %c0_7 = arith.constant 0 : index
    %c0_8 = arith.constant 0 : index
    %14 = vector.load %arg4[%c0_7, %c0_8] : memref<512x8xbf16, #tpu.memory_space<vmem>>, vector<512x8xbf16>
    tpu.vector_store %arg4[%c0_7, %c0_8], %13 {strides = array<i32>} : memref<512x8xbf16, #tpu.memory_space<vmem>>, vector<512x8xbf16>,
    return
  }
  func.func @transform_0(%arg0: i32) -> (i32, i32) {
    %c0_i32 = arith.constant 0 : i32
    %c0_i32_0 = arith.constant 0 : i32
    return %arg0, %c0_i32 : i32, i32
  }
  func.func @transform_1(%arg0: i32) -> (i32, i32) {
    %c0_i32 = arith.constant 0 : i32
    %c0_i32_0 = arith.constant 0 : i32
    %c0_i32_1 = arith.constant 0 : i32
    return %c0_i32, %c0_i32_0 : i32, i32
  }
  func.func @transform_2(%arg0: i32) -> (i32, i32) {
    %c0_i32 = arith.constant 0 : i32
    %c0_i32_0 = arith.constant 0 : i32
    %c0_i32_1 = arith.constant 0 : i32
    return %c0_i32, %c0_i32_0 : i32, i32
  }
  func.func @transform_3(%arg0: i32) -> (i32, i32) {
    %c0_i32 = arith.constant 0 : i32
    %c0_i32_0 = arith.constant 0 : i32
    return %arg0, %c0_i32 : i32, i32
  }
}

module attributes {stable_mosaic.version = 11 : i64} {
  func.func @_pw_kernel(%arg0: i32, %arg1: memref<512x12xbf16, #tpu.memory_space<vmem>>, %arg2: memref<12x8xbf16, #tpu.memory_space<vmem>>, %arg3: memref<1x8xf32, #tpu.memory_space<vmem>>, %arg4: memref<512x8xbf16, #tpu.memory_space<vmem>>) attributes {dimension_semantics = [#tpu.dimension_semantics<parallel>], iteration_bounds = array<i64: 1>, scalar_prefetch = 0 : i64, scratch_operands = 0 : i64, tpu.core_type = #tpu.core_type<tc>, window_params = [{transform_indices = @transform_0, window_bounds = array<i64: 512, 12>}, {pipeline_mode = #tpu.pipeline_mode<synchronous>, transform_indices = @transform_1, window_bounds = array<i64: 12, 8>}, {pipeline_mode = #tpu.pipeline_mode<synchronous>, transform_indices = @transform_2, window_bounds = array<i64: 1, 8>}, {transform_indices = @transform_3, window_bounds = array<i64: 512, 8>}]} {
    %c0 = arith.constant 0 : index
    %c0_0 = arith.constant 0 : index
    %0 = vector.load %arg1[%c0, %c0_0] : memref<512x12xbf16, #tpu.memory_space<vmem>>, vector<512x12xbf16>
    %c0_1 = arith.constant 0 : index
    %c0_2 = arith.constant 0 : index
    %1 = vector.load %arg2[%c0_1, %c0_2] : memref<12x8xbf16, #tpu.memory_space<vmem>>, vector<12x8xbf16>
    %cst = arith.constant dense<0.000000e+00> : vector<512x8xf32>
    %2 = tpu.matmul %0, %1, %cst {dimension_numbers = #tpu.dot_dimension_numbers<[1], [0], [0], [1], [0, 0, 1, 1], [], []>} : vector<512x12xbf16>, vector<12x8xbf16>, vector<512x8xf32> -> vector<512x8xf32>
    %c0_3 = arith.constant 0 : index
    %c0_4 = arith.constant 0 : index
    %3 = vector.load %arg3[%c0_3, %c0_4] : memref<1x8xf32, #tpu.memory_space<vmem>>, vector<1x8xf32>
    %4 = vector.broadcast %3 : vector<1x8xf32> to vector<512x8xf32>
    %5 = arith.addf %2, %4 : vector<512x8xf32>
    %cst_5 = arith.constant 0.000000e+00 : f32
    %6 = vector.broadcast %cst_5 : f32 to vector<512x8xf32>
    %7 = arith.subf %6, %5 : vector<512x8xf32>
    %8 = math.exp %7 : vector<512x8xf32>
    %cst_6 = arith.constant 1.000000e+00 : f32
    %9 = vector.broadcast %cst_6 : f32 to vector<512x8xf32>
    %10 = arith.addf %9, %8 : vector<512x8xf32>
    %11 = tpu.reciprocal %10 {approx = true} : vector<512x8xf32> -> vector<512x8xf32>
    %12 = arith.mulf %5, %11 : vector<512x8xf32>
    %13 = arith.truncf %12 : vector<512x8xf32> to vector<512x8xbf16>
    %c0_7 = arith.constant 0 : index
    %c0_8 = arith.constant 0 : index
    %14 = vector.load %arg4[%c0_7, %c0_8] : memref<512x8xbf16, #tpu.memory_space<vmem>>, vector<512x8xbf16>
    tpu.vector_store %arg4[%c0_7, %c0_8], %13 {strides = array<i32>} : memref<512x8xbf16, #tpu.memory_space<vmem>>, vector<512x8xbf16>,
    return
  }
  func.func @transform_0(%arg0: i32) -> (i32, i32) {
    %c0_i32 = arith.constant 0 : i32
    %c0_i32_0 = arith.constant 0 : i32
    return %arg0, %c0_i32 : i32, i32
  }
  func.func @transform_1(%arg0: i32) -> (i32, i32) {
    %c0_i32 = arith.constant 0 : i32
    %c0_i32_0 = arith.constant 0 : i32
    %c0_i32_1 = arith.constant 0 : i32
    return %c0_i32, %c0_i32_0 : i32, i32
  }
  func.func @transform_2(%arg0: i32) -> (i32, i32) {
    %c0_i32 = arith.constant 0 : i32
    %c0_i32_0 = arith.constant 0 : i32
    %c0_i32_1 = arith.constant 0 : i32
    return %c0_i32, %c0_i32_0 : i32, i32
  }
  func.func @transform_3(%arg0: i32) -> (i32, i32) {
    %c0_i32 = arith.constant 0 : i32
    %c0_i32_0 = arith.constant 0 : i32
    return %arg0, %c0_i32 : i32, i32
  }
}

</mosaic_0001>

<llo_original>
// kernel: c2f_forward.5
$region0: #{c2f_forward.5}
  #allocation0 [shape = 'u32[]', space=smem, size = 0x4, offset = 0x4, fixed_abs, tag = 'smem constant byte address 0x4 - core index']
  #allocation1 [shape = 'u32[144,128]{1,0:T(1,128)}', space=vmem, size = 0x12000, scoped, tag = 'internal scratch']
  %s0 = inlined_call_operand.hbm [shape: bf16[512,12], index: 0, kind: input, shape index: {}]
  %s1 = inlined_call_operand.hbm [shape: bf16[12,8], index: 1, kind: input, shape index: {}]
  %s2 = inlined_call_operand.vmem [shape: f32[1,8], index: 2, kind: input, shape index: {}]
  %s3 = inlined_call_operand.vmem [shape: bf16[512,8], index: 3, kind: output, shape index: {}]
  %s4 = sld [smem:[#allocation0]]
  $region30: #{c2f_forward.5} parent=0
    _
  %s6 = ssub.s32 1, %s4
  %s7 = scalar_select 0, %s6, %s4
  $region1: #{c2f_forward.5} parent=0
    #allocation2 [shape = 'u8[131072]{0}', space=vmem, size = 0x20000, scoped, tag = 'input window, operand 0, single buffered']
    #allocation3 [shape = 's32[1]{0}', space=sflag, size = 0x4, scoped, tag = 'scoped memory for c2f_forward.5']
    #allocation4 [shape = 'u8[4096]{0}', space=vmem, size = 0x1000, scoped, tag = 'input window, operand 1, single buffered']
    #allocation5 [shape = 's32[1]{0}', space=sflag, size = 0x4, scoped, tag = 'scoped memory for c2f_forward.5']
    %8 = vsyncpa [#allocation3], 0
    %9 = vsyncpa [#allocation5], 0
    // Predicated region
    $region2: #{c2f_forward.5} parent=1 // pred_check
      _
    $region3: #{c2f_forward.5} parent=1 // pred_check_branch
      %11 = sbr.rel (0) target = $region5
    $region4: #{c2f_forward.5} parent=1 // pred_region
      %s13 = ssub.s32 4096, 4096
      %14 = vsyncadd [#allocation3], %s13
      %s15 = sshll.u32 [#allocation2], 4
      %s16 = int_to_ptr.vmem [resolvable:$true] %s15
      %21 = dma.hbm_to_vmem [thread:$0]  %s0, 4096, %s16, [#allocation3], 64, 64, 4
    $region5: #{c2f_forward.5} parent=1 // pred_fallthru
      _
    // Predicated region
    $region6: #{c2f_forward.5} parent=1 // pred_check
      _
    $region7: #{c2f_forward.5} parent=1 // pred_check_branch
      %23 = sbr.rel (0) target = $region9
    $region8: #{c2f_forward.5} parent=1 // pred_region
      %s25 = ssub.s32 128, 128
      %26 = vsyncadd [#allocation5], %s25
      %s27 = sshll.u32 [#allocation4], 4
      %s28 = int_to_ptr.vmem [resolvable:$true] %s27
      %33 = dma.hbm_to_vmem [thread:$0]  %s1, 128, %s28, [#allocation5], 64, 64, 4
    $region9: #{c2f_forward.5} parent=1 // pred_fallthru
      _
    // Predicated region
    $region10: #{c2f_forward.5} parent=1 // pred_check
      _
    $region11: #{c2f_forward.5} parent=1 // pred_check_branch
      %35 = sbr.rel (0) target = $region13
    $region12: #{c2f_forward.5} parent=1 // pred_region
      _
    $region13: #{c2f_forward.5} parent=1 // pred_fallthru
      _
    // Predicated region
    $region14: #{c2f_forward.5} parent=1 // pred_check
      _
    $region15: #{c2f_forward.5} parent=1 // pred_check_branch
      %37 = sbr.rel (0) target = $region17
    $region16: #{c2f_forward.5} parent=1 // pred_region
      %38 = dma.done [#allocation3], 4096
    $region17: #{c2f_forward.5} parent=1 // pred_fallthru
      _
    // Predicated region
    $region18: #{c2f_forward.5} parent=1 // pred_check
      _
    $region19: #{c2f_forward.5} parent=1 // pred_check_branch
      %40 = sbr.rel (0) target = $region21
    $region20: #{c2f_forward.5} parent=1 // pred_region
      %41 = dma.done [#allocation5], 128
    $region21: #{c2f_forward.5} parent=1 // pred_fallthru
      _
    %v43 = vld [vmem:[#allocation2] sm:$0xf]
    %v44 = vld [vmem:[#allocation2 + $0x4] sm:$0xf]
    %v45 = vld [vmem:[#allocation2 + $0x8] sm:$0xf]
    %v46 = vld [vmem:[#allocation2 + $0xc] sm:$0xf]
    %v47 = vld [vmem:[#allocation2 + $0x10] sm:$0xf]
    %v48 = vld [vmem:[#allocation2 + $0x14] sm:$0xf]
    %v49 = vld [vmem:[#allocation2 + $0x18] sm:$0xf]
    %v50 = vld [vmem:[#allocation2 + $0x1c] sm:$0xf]
    %v51 = vld [vmem:[#allocation2 + $0x20] sm:$0xf]
    %v52 = vld [vmem:[#allocation2 + $0x24] sm:$0xf]
    %v53 = vld [vmem:[#allocation2 + $0x28] sm:$0xf]
    %v54 = vld [vmem:[#allocation2 + $0x2c] sm:$0xf]
    %v55 = vld [vmem:[#allocation2 + $0x30] sm:$0xf]
    %v56 = vld [vmem:[#allocation2 + $0x34] sm:$0xf]
    %v57 = vld [vmem:[#allocation2 + $0x38] sm:$0xf]
    %v58 = vld [vmem:[#allocation2 + $0x3c] sm:$0xf]
    %v59 = vld [vmem:[#allocation2 + $0x40] sm:$0xf]
    %v60 = vld [vmem:[#allocation2 + $0x44] sm:$0xf]
    %v61 = vld [vmem:[#allocation2 + $0x48] sm:$0xf]
    %v62 = vld [vmem:[#allocation2 + $0x4c] sm:$0xf]
    %v63 = vld [vmem:[#allocation2 + $0x50] sm:$0xf]
    %v64 = vld [vmem:[#allocation2 + $0x54] sm:$0xf]
    %v65 = vld [vmem:[#allocation2 + $0x58] sm:$0xf]
    %v66 = vld [vmem:[#allocation2 + $0x5c] sm:$0xf]
    %v67 = vld [vmem:[#allocation2 + $0x60] sm:$0xf]
    %v68 = vld [vmem:[#allocation2 + $0x64] sm:$0xf]
    %v69 = vld [vmem:[#allocation2 + $0x68] sm:$0xf]
    %v70 = vld [vmem:[#allocation2 + $0x6c] sm:$0xf]
    %v71 = vld [vmem:[#allocation2 + $0x70] sm:$0xf]
    %v72 = vld [vmem:[#allocation2 + $0x74] sm:$0xf]
    %v73 = vld [vmem:[#allocation2 + $0x78] sm:$0xf]
    %v74 = vld [vmem:[#allocation2 + $0x7c] sm:$0xf]
    %v75 = vld [vmem:[#allocation2 + $0x80] sm:$0xf]
    %v76 = vld [vmem:[#allocation2 + $0x84] sm:$0xf]
    %v77 = vld [vmem:[#allocation2 + $0x88] sm:$0xf]
    %v78 = vld [vmem:[#allocation2 + $0x8c] sm:$0xf]
    %v79 = vld [vmem:[#allocation2 + $0x90] sm:$0xf]
    %v80 = vld [vmem:[#allocation2 + $0x94] sm:$0xf]
    %v81 = vld [vmem:[#allocation2 + $0x98] sm:$0xf]
    %v82 = vld [vmem:[#allocation2 + $0x9c] sm:$0xf]
    %v83 = vld [vmem:[#allocation2 + $0xa0] sm:$0xf]
    %v84 = vld [vmem:[#allocation2 + $0xa4] sm:$0xf]
    %v85 = vld [vmem:[#allocation2 + $0xa8] sm:$0xf]
    %v86 = vld [vmem:[#allocation2 + $0xac] sm:$0xf]
    %v87 = vld [vmem:[#allocation2 + $0xb0] sm:$0xf]
    %v88 = vld [vmem:[#allocation2 + $0xb4] sm:$0xf]
    %v89 = vld [vmem:[#allocation2 + $0xb8] sm:$0xf]
    %v90 = vld [vmem:[#allocation2 + $0xbc] sm:$0xf]
    %v91 = vld [vmem:[#allocation2 + $0xc0] sm:$0xf]
    %v92 = vld [vmem:[#allocation2 + $0xc4] sm:$0xf]
    %v93 = vld [vmem:[#allocation2 + $0xc8] sm:$0xf]
    %v94 = vld [vmem:[#allocation2 + $0xcc] sm:$0xf]
    %v95 = vld [vmem:[#allocation2 + $0xd0] sm:$0xf]
    %v96 = vld [vmem:[#allocation2 + $0xd4] sm:$0xf]
    %v97 = vld [vmem:[#allocation2 + $0xd8] sm:$0xf]
    %v98 = vld [vmem:[#allocation2 + $0xdc] sm:$0xf]
    %v99 = vld [vmem:[#allocation2 + $0xe0] sm:$0xf]
    %v100 = vld [vmem:[#allocation2 + $0xe4] sm:$0xf]
    %v101 = vld [vmem:[#allocation2 + $0xe8] sm:$0xf]
    %v102 = vld [vmem:[#allocation2 + $0xec] sm:$0xf]
    %v103 = vld [vmem:[#allocation2 + $0xf0] sm:$0xf]
    %v104 = vld [vmem:[#allocation2 + $0xf4] sm:$0xf]
    %v105 = vld [vmem:[#allocation2 + $0xf8] sm:$0xf]
    %v106 = vld [vmem:[#allocation2 + $0xfc] sm:$0xf]
    %v107 = vld [vmem:[#allocation4] sm:$0xf]
    %v108 = vld [vmem:[#allocation4 + $0x4] sm:$0x3]
    %v109 = vld [vmem:[%s2] sm:$0x1]
    %v111 = vlaneseq
    %v112 = vshrl.u32 %v111, 7
    %v113 = vsub.s32 0, %v112
    %v114 = vrot.slane %v109, %v113
    %v180 = vunpack.c.l.b16 %v43
    %v181 = vunpack.c.l.b16 %v44
    %v182 = vunpack.c.l.b16 %v45
    %v183 = vunpack.c.l.b16 %v46
    %v184 = vunpack.c.l.b16 %v47
    %v185 = vunpack.c.l.b16 %v48
    %v186 = vunpack.c.l.b16 %v49
    %v187 = vunpack.c.l.b16 %v50
    %v188 = vunpack.c.l.b16 %v51
    %v189 = vunpack.c.l.b16 %v52
    %v190 = vunpack.c.l.b16 %v53
    %v191 = vunpack.c.l.b16 %v54
    %v192 = vunpack.c.l.b16 %v55
    %v193 = vunpack.c.l.b16 %v56
    %v194 = vunpack.c.l.b16 %v57
    %v195 = vunpack.c.l.b16 %v58
    %v196 = vunpack.c.l.b16 %v59
    %v197 = vunpack.c.l.b16 %v60
    %v198 = vunpack.c.l.b16 %v61
    %v199 = vunpack.c.l.b16 %v62
    %v200 = vunpack.c.l.b16 %v63
    %v201 = vunpack.c.l.b16 %v64
    %v202 = vunpack.c.l.b16 %v65
    %v203 = vunpack.c.l.b16 %v66
    %v204 = vunpack.c.l.b16 %v67
    %v205 = vunpack.c.l.b16 %v68
    %v206 = vunpack.c.l.b16 %v69
    %v207 = vunpack.c.l.b16 %v70
    %v208 = vunpack.c.l.b16 %v71
    %v209 = vunpack.c.l.b16 %v72
    %v210 = vunpack.c.l.b16 %v73
    %v211 = vunpack.c.l.b16 %v74
    %v212 = vunpack.c.l.b16 %v75
    %v213 = vunpack.c.l.b16 %v76
    %v214 = vunpack.c.l.b16 %v77
    %v215 = vunpack.c.l.b16 %v78
    %v216 = vunpack.c.l.b16 %v79
    %v217 = vunpack.c.l.b16 %v80
    %v218 = vunpack.c.l.b16 %v81
    %v219 = vunpack.c.l.b16 %v82
    %v220 = vunpack.c.l.b16 %v83
    %v221 = vunpack.c.l.b16 %v84
    %v222 = vunpack.c.l.b16 %v85
    %v223 = vunpack.c.l.b16 %v86
    %v224 = vunpack.c.l.b16 %v87
    %v225 = vunpack.c.l.b16 %v88
    %v226 = vunpack.c.l.b16 %v89
    %v227 = vunpack.c.l.b16 %v90
    %v228 = vunpack.c.l.b16 %v91
    %v229 = vunpack.c.l.b16 %v92
    %v230 = vunpack.c.l.b16 %v93
    %v231 = vunpack.c.l.b16 %v94
    %v232 = vunpack.c.l.b16 %v95
    %v233 = vunpack.c.l.b16 %v96
    %v234 = vunpack.c.l.b16 %v97
    %v235 = vunpack.c.l.b16 %v98
    %v236 = vunpack.c.l.b16 %v99
    %v237 = vunpack.c.l.b16 %v100
    %v238 = vunpack.c.l.b16 %v101
    %v239 = vunpack.c.l.b16 %v102
    %v240 = vunpack.c.l.b16 %v103
    %v241 = vunpack.c.l.b16 %v104
    %v242 = vunpack.c.l.b16 %v105
    %v243 = vunpack.c.l.b16 %v106
    %v244 = vpack.c.b16 %v181, %v180
    %v245 = vpack.c.b16 %v183, %v182
    %v246 = vpack.c.b16 %v185, %v184
    %v247 = vpack.c.b16 %v187, %v186
    %v248 = vpack.c.b16 %v189, %v188
    %v249 = vpack.c.b16 %v191, %v190
    %v250 = vpack.c.b16 %v193, %v192
    %v251 = vpack.c.b16 %v195, %v194
    %v252 = vpack.c.b16 %v197, %v196
    %v253 = vpack.c.b16 %v199, %v198
    %v254 = vpack.c.b16 %v201, %v200
    %v255 = vpack.c.b16 %v203, %v202
    %v256 = vpack.c.b16 %v205, %v204
    %v257 = vpack.c.b16 %v207, %v206
    %v258 = vpack.c.b16 %v209, %v208
    %v259 = vpack.c.b16 %v211, %v210
    %v260 = vpack.c.b16 %v213, %v212
    %v261 = vpack.c.b16 %v215, %v214
    %v262 = vpack.c.b16 %v217, %v216
    %v263 = vpack.c.b16 %v219, %v218
    %v264 = vpack.c.b16 %v221, %v220
    %v265 = vpack.c.b16 %v223, %v222
    %v266 = vpack.c.b16 %v225, %v224
    %v267 = vpack.c.b16 %v227, %v226
    %v268 = vpack.c.b16 %v229, %v228
    %v269 = vpack.c.b16 %v231, %v230
    %v270 = vpack.c.b16 %v233, %v232
    %v271 = vpack.c.b16 %v235, %v234
    %v272 = vpack.c.b16 %v237, %v236
    %v273 = vpack.c.b16 %v239, %v238
    %v274 = vpack.c.b16 %v241, %v240
    %v275 = vpack.c.b16 %v243, %v242
    %v278 = vunpack.c.l.b16 %v107
    %v279 = vunpack.c.l.b16 %v108
    %v280 = vpack.c.b16 %v279, %v278
    %vm281 = vcmask 97280
    %v283 = vsel %vm281, %v244, 0
    %v286 = vsel %vm281, %v245, 0
    %v289 = vsel %vm281, %v246, 0
    %v292 = vsel %vm281, %v247, 0
    %v295 = vsel %vm281, %v248, 0
    %v298 = vsel %vm281, %v249, 0
    %v301 = vsel %vm281, %v250, 0
    %v304 = vsel %vm281, %v251, 0
    %v307 = vsel %vm281, %v252, 0
    %v310 = vsel %vm281, %v253, 0
    %v313 = vsel %vm281, %v254, 0
    %v316 = vsel %vm281, %v255, 0
    %v319 = vsel %vm281, %v256, 0
    %v322 = vsel %vm281, %v257, 0
    %v325 = vsel %vm281, %v258, 0
    %v328 = vsel %vm281, %v259, 0
    %v331 = vsel %vm281, %v260, 0
    %v334 = vsel %vm281, %v261, 0
    %v337 = vsel %vm281, %v262, 0
    %v340 = vsel %vm281, %v263, 0
    %v343 = vsel %vm281, %v264, 0
    %v346 = vsel %vm281, %v265, 0
    %v349 = vsel %vm281, %v266, 0
    %v352 = vsel %vm281, %v267, 0
    %v355 = vsel %vm281, %v268, 0
    %v358 = vsel %vm281, %v269, 0
    %v361 = vsel %vm281, %v270, 0
    %v364 = vsel %vm281, %v271, 0
    %v367 = vsel %vm281, %v272, 0
    %v370 = vsel %vm281, %v273, 0
    %v373 = vsel %vm281, %v274, 0
    %v376 = vsel %vm281, %v275, 0
    %vm378 = vcmask 1045504
    %v380 = vsel %vm378, %v280, 0
    %382 = vmatprep.subr.bf16.mxu0 0
    %383 = vmatpush1.bf16.msra.mxu0 %v380
    %384 = vmatprep.subr.bf16.mxu0 0
    %385 = vmatpush1.bf16.msra.mxu0 0
    %386 = vmatprep.subr.bf16.mxu0 0
    %387 = vmatpush1.bf16.msra.mxu0 0
    %388 = vmatprep.subr.bf16.mxu0 0
    %389 = vmatpush1.bf16.msra.mxu0 0
    %390 = vmatprep.subr.bf16.mxu0 0
    %391 = vmatpush1.bf16.msra.mxu0 0
    %392 = vmatprep.subr.bf16.mxu0 0
    %393 = vmatpush1.bf16.msra.mxu0 0
    %394 = vmatprep.subr.bf16.mxu0 0
    %395 = vmatpush1.bf16.msra.mxu0 0
    %396 = vmatprep.subr.bf16.mxu0 0
    %397 = vmatpush1.bf16.msra.mxu0 0
    %398 = vmatprep.subr.bf16.mxu0 0
    %399 = vmatpush1.bf16.msra.mxu0 0
    %400 = vmatprep.subr.bf16.mxu0 0
    %401 = vmatpush1.bf16.msra.mxu0 0
    %402 = vmatprep.subr.bf16.mxu0 0
    %403 = vmatpush1.bf16.msra.mxu0 0
    %404 = vmatprep.subr.bf16.mxu0 0
    %405 = vmatpush1.bf16.msra.mxu0 0
    %406 = vmatprep.subr.bf16.mxu0 0
    %407 = vmatpush1.bf16.msra.mxu0 0
    %408 = vmatprep.subr.bf16.mxu0 0
    %409 = vmatpush1.bf16.msra.mxu0 0
    %410 = vmatprep.subr.bf16.mxu0 0
    %411 = vmatpush1.bf16.msra.mxu0 0
    %412 = vmatprep.subr.bf16.mxu0 0
    %413 = vmatpush1.bf16.msra.mxu0 0
    %414 = vmatprep.mubr.bf16.mxu0 0
    %415 = vmatmul.mubr.bf16.gmra.mrb[0].mxu0 %v283
    %v416 = vpop.f32.mrb[0].mxu0
    %v417 = vadd.f32 %v114, %v416
    %v418 = vpop.f32.mrb[0].mxu0
    %v419 = vpop.f32.mrb[0].mxu0
    %v420 = vadd.f32 %v114, %v419
    %v421 = vpop.f32.mrb[0].mxu0
    %422 = vmatprep.mubr.bf16.mxu0 0
    %423 = vmatmul.mubr.bf16.gmra.mrb[0].mxu0 %v286
    %v424 = vpop.f32.mrb[0].mxu0
    %v425 = vadd.f32 %v114, %v424
    %v426 = vpop.f32.mrb[0].mxu0
    %v427 = vpop.f32.mrb[0].mxu0
    %v428 = vadd.f32 %v114, %v427
    %v429 = vpop.f32.mrb[0].mxu0
    %430 = vmatprep.mubr.bf16.mxu0 0
    %431 = vmatmul.mubr.bf16.gmra.mrb[0].mxu0 %v289
    %v432 = vpop.f32.mrb[0].mxu0
    %v433 = vadd.f32 %v114, %v432
    %v434 = vpop.f32.mrb[0].mxu0
    %v435 = vpop.f32.mrb[0].mxu0
    %v436 = vadd.f32 %v114, %v435
    %v437 = vpop.f32.mrb[0].mxu0
    %438 = vmatprep.mubr.bf16.mxu0 0
    %439 = vmatmul.mubr.bf16.gmra.mrb[0].mxu0 %v292
    %v440 = vpop.f32.mrb[0].mxu0
    %v441 = vadd.f32 %v114, %v440
    %v442 = vpop.f32.mrb[0].mxu0
    %v443 = vpop.f32.mrb[0].mxu0
    %v444 = vadd.f32 %v114, %v443
    %v445 = vpop.f32.mrb[0].mxu0
    %446 = vmatprep.mubr.bf16.mxu0 0
    %447 = vmatmul.mubr.bf16.gmra.mrb[0].mxu0 %v295
    %v448 = vpop.f32.mrb[0].mxu0
    %v449 = vadd.f32 %v114, %v448
    %v450 = vpop.f32.mrb[0].mxu0
    %v451 = vpop.f32.mrb[0].mxu0
    %v452 = vadd.f32 %v114, %v451
    %v453 = vpop.f32.mrb[0].mxu0
    %454 = vmatprep.mubr.bf16.mxu0 0
    %455 = vmatmul.mubr.bf16.gmra.mrb[0].mxu0 %v298
    %v456 = vpop.f32.mrb[0].mxu0
    %v457 = vadd.f32 %v114, %v456
    %v458 = vpop.f32.mrb[0].mxu0
    %v459 = vpop.f32.mrb[0].mxu0
    %v460 = vadd.f32 %v114, %v459
    %v461 = vpop.f32.mrb[0].mxu0
    %462 = vmatprep.mubr.bf16.mxu0 0
    %463 = vmatmul.mubr.bf16.gmra.mrb[0].mxu0 %v301
    %v464 = vpop.f32.mrb[0].mxu0
    %v465 = vadd.f32 %v114, %v464
    %v466 = vpop.f32.mrb[0].mxu0
    %v467 = vpop.f32.mrb[0].mxu0
    %v468 = vadd.f32 %v114, %v467
    %v469 = vpop.f32.mrb[0].mxu0
    %470 = vmatprep.mubr.bf16.mxu0 0
    %471 = vmatmul.mubr.bf16.gmra.mrb[0].mxu0 %v304
    %v472 = vpop.f32.mrb[0].mxu0
    %v473 = vadd.f32 %v114, %v472
    %v474 = vpop.f32.mrb[0].mxu0
    %v475 = vpop.f32.mrb[0].mxu0
    %v476 = vadd.f32 %v114, %v475
    %v477 = vpop.f32.mrb[0].mxu0
    %478 = vmatprep.mubr.bf16.mxu0 0
    %479 = vmatmul.mubr.bf16.gmra.mrb[0].mxu0 %v307
    %v480 = vpop.f32.mrb[0].mxu0
    %v481 = vadd.f32 %v114, %v480
    %v482 = vpop.f32.mrb[0].mxu0
    %v483 = vpop.f32.mrb[0].mxu0
    %v484 = vadd.f32 %v114, %v483
    %v485 = vpop.f32.mrb[0].mxu0
    %486 = vmatprep.mubr.bf16.mxu0 0
    %487 = vmatmul.mubr.bf16.gmra.mrb[0].mxu0 %v310
    %v488 = vpop.f32.mrb[0].mxu0
    %v489 = vadd.f32 %v114, %v488
    %v490 = vpop.f32.mrb[0].mxu0
    %v491 = vpop.f32.mrb[0].mxu0
    %v492 = vadd.f32 %v114, %v491
    %v493 = vpop.f32.mrb[0].mxu0
    %494 = vmatprep.mubr.bf16.mxu0 0
    %495 = vmatmul.mubr.bf16.gmra.mrb[0].mxu0 %v313
    %v496 = vpop.f32.mrb[0].mxu0
    %v497 = vadd.f32 %v114, %v496
    %v498 = vpop.f32.mrb[0].mxu0
    %v499 = vpop.f32.mrb[0].mxu0
    %v500 = vadd.f32 %v114, %v499
    %v501 = vpop.f32.mrb[0].mxu0
    %502 = vmatprep.mubr.bf16.mxu0 0
    %503 = vmatmul.mubr.bf16.gmra.mrb[0].mxu0 %v316
    %v504 = vpop.f32.mrb[0].mxu0
    %v505 = vadd.f32 %v114, %v504
    %v506 = vpop.f32.mrb[0].mxu0
    %v507 = vpop.f32.mrb[0].mxu0
    %v508 = vadd.f32 %v114, %v507
    %v509 = vpop.f32.mrb[0].mxu0
    %510 = vmatprep.mubr.bf16.mxu0 0
    %511 = vmatmul.mubr.bf16.gmra.mrb[0].mxu0 %v319
    %v512 = vpop.f32.mrb[0].mxu0
    %v513 = vadd.f32 %v114, %v512
    %v514 = vpop.f32.mrb[0].mxu0
    %v515 = vpop.f32.mrb[0].mxu0
    %v516 = vadd.f32 %v114, %v515
    %v517 = vpop.f32.mrb[0].mxu0
    %518 = vmatprep.mubr.bf16.mxu0 0
    %519 = vmatmul.mubr.bf16.gmra.mrb[0].mxu0 %v322
    %v520 = vpop.f32.mrb[0].mxu0
    %v521 = vadd.f32 %v114, %v520
    %v522 = vpop.f32.mrb[0].mxu0
    %v523 = vpop.f32.mrb[0].mxu0
    %v524 = vadd.f32 %v114, %v523
    %v525 = vpop.f32.mrb[0].mxu0
    %526 = vmatprep.mubr.bf16.mxu0 0
    %527 = vmatmul.mubr.bf16.gmra.mrb[0].mxu0 %v325
    %v528 = vpop.f32.mrb[0].mxu0
    %v529 = vadd.f32 %v114, %v528
    %v530 = vpop.f32.mrb[0].mxu0
    %v531 = vpop.f32.mrb[0].mxu0
    %v532 = vadd.f32 %v114, %v531
    %v533 = vpop.f32.mrb[0].mxu0
    %534 = vmatprep.mubr.bf16.mxu0 0
    %535 = vmatmul.mubr.bf16.gmra.mrb[0].mxu0 %v328
    %v536 = vpop.f32.mrb[0].mxu0
    %v537 = vadd.f32 %v114, %v536
    %v538 = vpop.f32.mrb[0].mxu0
    %v539 = vpop.f32.mrb[0].mxu0
    %v540 = vadd.f32 %v114, %v539
    %v541 = vpop.f32.mrb[0].mxu0
    %542 = vmatprep.mubr.bf16.mxu0 0
    %543 = vmatmul.mubr.bf16.gmra.mrb[0].mxu0 %v331
    %v544 = vpop.f32.mrb[0].mxu0
    %v545 = vadd.f32 %v114, %v544
    %v546 = vpop.f32.mrb[0].mxu0
    %v547 = vpop.f32.mrb[0].mxu0
    %v548 = vadd.f32 %v114, %v547
    %v549 = vpop.f32.mrb[0].mxu0
    %550 = vmatprep.mubr.bf16.mxu0 0
    %551 = vmatmul.mubr.bf16.gmra.mrb[0].mxu0 %v334
    %v552 = vpop.f32.mrb[0].mxu0
    %v553 = vadd.f32 %v114, %v552
    %v554 = vpop.f32.mrb[0].mxu0
    %v555 = vpop.f32.mrb[0].mxu0
    %v556 = vadd.f32 %v114, %v555
    %v557 = vpop.f32.mrb[0].mxu0
    %558 = vmatprep.mubr.bf16.mxu0 0
    %559 = vmatmul.mubr.bf16.gmra.mrb[0].mxu0 %v337
    %v560 = vpop.f32.mrb[0].mxu0
    %v561 = vadd.f32 %v114, %v560
    %v562 = vpop.f32.mrb[0].mxu0
    %v563 = vpop.f32.mrb[0].mxu0
    %v564 = vadd.f32 %v114, %v563
    %v565 = vpop.f32.mrb[0].mxu0
    %566 = vmatprep.mubr.bf16.mxu0 0
    %567 = vmatmul.mubr.bf16.gmra.mrb[0].mxu0 %v340
    %v568 = vpop.f32.mrb[0].mxu0
    %v569 = vadd.f32 %v114, %v568
    %v570 = vpop.f32.mrb[0].mxu0
    %v571 = vpop.f32.mrb[0].mxu0
    %v572 = vadd.f32 %v114, %v571
    %v573 = vpop.f32.mrb[0].mxu0
    %574 = vmatprep.mubr.bf16.mxu0 0
    %575 = vmatmul.mubr.bf16.gmra.mrb[0].mxu0 %v343
    %v576 = vpop.f32.mrb[0].mxu0
    %v577 = vadd.f32 %v114, %v576
    %v578 = vpop.f32.mrb[0].mxu0
    %v579 = vpop.f32.mrb[0].mxu0
    %v580 = vadd.f32 %v114, %v579
    %v581 = vpop.f32.mrb[0].mxu0
    %582 = vmatprep.mubr.bf16.mxu0 0
    %583 = vmatmul.mubr.bf16.gmra.mrb[0].mxu0 %v346
    %v584 = vpop.f32.mrb[0].mxu0
    %v585 = vadd.f32 %v114, %v584
    %v586 = vpop.f32.mrb[0].mxu0
    %v587 = vpop.f32.mrb[0].mxu0
    %v588 = vadd.f32 %v114, %v587
    %v589 = vpop.f32.mrb[0].mxu0
    %590 = vmatprep.mubr.bf16.mxu0 0
    %591 = vmatmul.mubr.bf16.gmra.mrb[0].mxu0 %v349
    %v592 = vpop.f32.mrb[0].mxu0
    %v593 = vadd.f32 %v114, %v592
    %v594 = vpop.f32.mrb[0].mxu0
    %v595 = vpop.f32.mrb[0].mxu0
    %v596 = vadd.f32 %v114, %v595
    %v597 = vpop.f32.mrb[0].mxu0
    %598 = vmatprep.mubr.bf16.mxu0 0
    %599 = vmatmul.mubr.bf16.gmra.mrb[0].mxu0 %v352
    %v600 = vpop.f32.mrb[0].mxu0
    %v601 = vadd.f32 %v114, %v600
    %v602 = vpop.f32.mrb[0].mxu0
    %v603 = vpop.f32.mrb[0].mxu0
    %v604 = vadd.f32 %v114, %v603
    %v605 = vpop.f32.mrb[0].mxu0
    %606 = vmatprep.mubr.bf16.mxu0 0
    %607 = vmatmul.mubr.bf16.gmra.mrb[0].mxu0 %v355
    %v608 = vpop.f32.mrb[0].mxu0
    %v609 = vadd.f32 %v114, %v608
    %v610 = vpop.f32.mrb[0].mxu0
    %v611 = vpop.f32.mrb[0].mxu0
    %v612 = vadd.f32 %v114, %v611
    %v613 = vpop.f32.mrb[0].mxu0
    %614 = vmatprep.mubr.bf16.mxu0 0
    %615 = vmatmul.mubr.bf16.gmra.mrb[0].mxu0 %v358
    %v616 = vpop.f32.mrb[0].mxu0
    %v617 = vadd.f32 %v114, %v616
    %v618 = vpop.f32.mrb[0].mxu0
    %v619 = vpop.f32.mrb[0].mxu0
    %v620 = vadd.f32 %v114, %v619
    %v621 = vpop.f32.mrb[0].mxu0
    %622 = vmatprep.mubr.bf16.mxu0 0
    %623 = vmatmul.mubr.bf16.gmra.mrb[0].mxu0 %v361
    %v624 = vpop.f32.mrb[0].mxu0
    %v625 = vadd.f32 %v114, %v624
    %v626 = vpop.f32.mrb[0].mxu0
    %v627 = vpop.f32.mrb[0].mxu0
    %v628 = vadd.f32 %v114, %v627
    %v629 = vpop.f32.mrb[0].mxu0
    %630 = vmatprep.mubr.bf16.mxu0 0
    %631 = vmatmul.mubr.bf16.gmra.mrb[0].mxu0 %v364
    %v632 = vpop.f32.mrb[0].mxu0
    %v633 = vadd.f32 %v114, %v632
    %v634 = vpop.f32.mrb[0].mxu0
    %v635 = vpop.f32.mrb[0].mxu0
    %v636 = vadd.f32 %v114, %v635
    %v637 = vpop.f32.mrb[0].mxu0
    %638 = vmatprep.mubr.bf16.mxu0 0
    %639 = vmatmul.mubr.bf16.gmra.mrb[0].mxu0 %v367
    %v640 = vpop.f32.mrb[0].mxu0
    %v641 = vadd.f32 %v114, %v640
    %v642 = vpop.f32.mrb[0].mxu0
    %v643 = vpop.f32.mrb[0].mxu0
    %v644 = vadd.f32 %v114, %v643
    %v645 = vpop.f32.mrb[0].mxu0
    %646 = vmatprep.mubr.bf16.mxu0 0
    %647 = vmatmul.mubr.bf16.gmra.mrb[0].mxu0 %v370
    %v648 = vpop.f32.mrb[0].mxu0
    %v649 = vadd.f32 %v114, %v648
    %v650 = vpop.f32.mrb[0].mxu0
    %v651 = vpop.f32.mrb[0].mxu0
    %v652 = vadd.f32 %v114, %v651
    %v653 = vpop.f32.mrb[0].mxu0
    %654 = vmatprep.mubr.bf16.mxu0 0
    %655 = vmatmul.mubr.bf16.gmra.mrb[0].mxu0 %v373
    %v656 = vpop.f32.mrb[0].mxu0
    %v657 = vadd.f32 %v114, %v656
    %v658 = vpop.f32.mrb[0].mxu0
    %v659 = vpop.f32.mrb[0].mxu0
    %v660 = vadd.f32 %v114, %v659
    %v661 = vpop.f32.mrb[0].mxu0
    %662 = vmatprep.mubr.bf16.mxu0 0
    %663 = vmatmul.mubr.bf16.gmra.mrb[0].mxu0 %v376
    %v664 = vpop.f32.mrb[0].mxu0
    %v665 = vadd.f32 %v114, %v664
    %v666 = vpop.f32.mrb[0].mxu0
    %v667 = vpop.f32.mrb[0].mxu0
    %v668 = vadd.f32 %v114, %v667
    %v669 = vpop.f32.mrb[0].mxu0
    %670 = vdwg.mxu0
    %v671 = vsub.f32 0.0, %v417
    %v672 = vsub.f32 0.0, %v420
    %v673 = vsub.f32 0.0, %v425
    %v674 = vsub.f32 0.0, %v428
    %v675 = vsub.f32 0.0, %v433
    %v676 = vsub.f32 0.0, %v436
    %v677 = vsub.f32 0.0, %v441
    %v678 = vsub.f32 0.0, %v444
    %v679 = vsub.f32 0.0, %v449
    %v680 = vsub.f32 0.0, %v452
    %v681 = vsub.f32 0.0, %v457
    %v682 = vsub.f32 0.0, %v460
    %v683 = vsub.f32 0.0, %v465
    %v684 = vsub.f32 0.0, %v468
    %v685 = vsub.f32 0.0, %v473
    %v686 = vsub.f32 0.0, %v476
    %v687 = vsub.f32 0.0, %v481
    %v688 = vsub.f32 0.0, %v484
    %v689 = vsub.f32 0.0, %v489
    %v690 = vsub.f32 0.0, %v492
    %v691 = vsub.f32 0.0, %v497
    %v692 = vsub.f32 0.0, %v500
    %v693 = vsub.f32 0.0, %v505
    %v694 = vsub.f32 0.0, %v508
    %v695 = vsub.f32 0.0, %v513
    %v696 = vsub.f32 0.0, %v516
    %v697 = vsub.f32 0.0, %v521
    %v698 = vsub.f32 0.0, %v524
    %v699 = vsub.f32 0.0, %v529
    %v700 = vsub.f32 0.0, %v532
    %v701 = vsub.f32 0.0, %v537
    %v702 = vsub.f32 0.0, %v540
    %v703 = vsub.f32 0.0, %v545
    %v704 = vsub.f32 0.0, %v548
    %v705 = vsub.f32 0.0, %v553
    %v706 = vsub.f32 0.0, %v556
    %v707 = vsub.f32 0.0, %v561
    %v708 = vsub.f32 0.0, %v564
    %v709 = vsub.f32 0.0, %v569
    %v710 = vsub.f32 0.0, %v572
    %v711 = vsub.f32 0.0, %v577
    %v712 = vsub.f32 0.0, %v580
    %v713 = vsub.f32 0.0, %v585
    %v714 = vsub.f32 0.0, %v588
    %v715 = vsub.f32 0.0, %v593
    %v716 = vsub.f32 0.0, %v596
    %v717 = vsub.f32 0.0, %v601
    %v718 = vsub.f32 0.0, %v604
    %v719 = vsub.f32 0.0, %v609
    %v720 = vsub.f32 0.0, %v612
    %v721 = vsub.f32 0.0, %v617
    %v722 = vsub.f32 0.0, %v620
    %v723 = vsub.f32 0.0, %v625
    %v724 = vsub.f32 0.0, %v628
    %v725 = vsub.f32 0.0, %v633
    %v726 = vsub.f32 0.0, %v636
    %v727 = vsub.f32 0.0, %v641
    %v728 = vsub.f32 0.0, %v644
    %v729 = vsub.f32 0.0, %v649
    %v730 = vsub.f32 0.0, %v652
    %v731 = vsub.f32 0.0, %v657
    %v732 = vsub.f32 0.0, %v660
    %v733 = vsub.f32 0.0, %v665
    %v734 = vsub.f32 0.0, %v668
    %v735 = vmul.f32 %v671, 1.442695
    %v736 = vpow.pop %v735
    %v737 = vmul.f32 %v672, 1.442695
    %v738 = vpow.pop %v737
    %v739 = vmul.f32 %v673, 1.442695
    %v740 = vpow.pop %v739
    %v741 = vmul.f32 %v674, 1.442695
    %v742 = vpow.pop %v741
    %v743 = vmul.f32 %v675, 1.442695
    %v744 = vpow.pop %v743
    %v745 = vmul.f32 %v676, 1.442695
    %v746 = vpow.pop %v745
    %v747 = vmul.f32 %v677, 1.442695
    %v748 = vpow.pop %v747
    %v749 = vmul.f32 %v678, 1.442695
    %v750 = vpow.pop %v749
    %v751 = vmul.f32 %v679, 1.442695
    %v752 = vpow.pop %v751
    %v753 = vmul.f32 %v680, 1.442695
    %v754 = vpow.pop %v753
    %v755 = vmul.f32 %v681, 1.442695
    %v756 = vpow.pop %v755
    %v757 = vmul.f32 %v682, 1.442695
    %v758 = vpow.pop %v757
    %v759 = vmul.f32 %v683, 1.442695
    %v760 = vpow.pop %v759
    %v761 = vmul.f32 %v684, 1.442695
    %v762 = vpow.pop %v761
    %v763 = vmul.f32 %v685, 1.442695
    %v764 = vpow.pop %v763
    %v765 = vmul.f32 %v686, 1.442695
    %v766 = vpow.pop %v765
    %v767 = vmul.f32 %v687, 1.442695
    %v768 = vpow.pop %v767
    %v769 = vmul.f32 %v688, 1.442695
    %v770 = vpow.pop %v769
    %v771 = vmul.f32 %v689, 1.442695
    %v772 = vpow.pop %v771
    %v773 = vmul.f32 %v690, 1.442695
    %v774 = vpow.pop %v773
    %v775 = vmul.f32 %v691, 1.442695
    %v776 = vpow.pop %v775
    %v777 = vmul.f32 %v692, 1.442695
    %v778 = vpow.pop %v777
    %v779 = vmul.f32 %v693, 1.442695
    %v780 = vpow.pop %v779
    %v781 = vmul.f32 %v694, 1.442695
    %v782 = vpow.pop %v781
    %v783 = vmul.f32 %v695, 1.442695
    %v784 = vpow.pop %v783
    %v785 = vmul.f32 %v696, 1.442695
    %v786 = vpow.pop %v785
    %v787 = vmul.f32 %v697, 1.442695
    %v788 = vpow.pop %v787
    %v789 = vmul.f32 %v698, 1.442695
    %v790 = vpow.pop %v789
    %v791 = vmul.f32 %v699, 1.442695
    %v792 = vpow.pop %v791
    %v793 = vmul.f32 %v700, 1.442695
    %v794 = vpow.pop %v793
    %v795 = vmul.f32 %v701, 1.442695
    %v796 = vpow.pop %v795
    %v797 = vmul.f32 %v702, 1.442695
    %v798 = vpow.pop %v797
    %v799 = vmul.f32 %v703, 1.442695
    %v800 = vpow.pop %v799
    %v801 = vmul.f32 %v704, 1.442695
    %v802 = vpow.pop %v801
    %v803 = vmul.f32 %v705, 1.442695
    %v804 = vpow.pop %v803
    %v805 = vmul.f32 %v706, 1.442695
    %v806 = vpow.pop %v805
    %v807 = vmul.f32 %v707, 1.442695
    %v808 = vpow.pop %v807
    %v809 = vmul.f32 %v708, 1.442695
    %v810 = vpow.pop %v809
    %v811 = vmul.f32 %v709, 1.442695
    %v812 = vpow.pop %v811
    %v813 = vmul.f32 %v710, 1.442695
    %v814 = vpow.pop %v813
    %v815 = vmul.f32 %v711, 1.442695
    %v816 = vpow.pop %v815
    %v817 = vmul.f32 %v712, 1.442695
    %v818 = vpow.pop %v817
    %v819 = vmul.f32 %v713, 1.442695
    %v820 = vpow.pop %v819
    %v821 = vmul.f32 %v714, 1.442695
    %v822 = vpow.pop %v821
    %v823 = vmul.f32 %v715, 1.442695
    %v824 = vpow.pop %v823
    %v825 = vmul.f32 %v716, 1.442695
    %v826 = vpow.pop %v825
    %v827 = vmul.f32 %v717, 1.442695
    %v828 = vpow.pop %v827
    %v829 = vmul.f32 %v718, 1.442695
    %v830 = vpow.pop %v829
    %v831 = vmul.f32 %v719, 1.442695
    %v832 = vpow.pop %v831
    %v833 = vmul.f32 %v720, 1.442695
    %v834 = vpow.pop %v833
    %v835 = vmul.f32 %v721, 1.442695
    %v836 = vpow.pop %v835
    %v837 = vmul.f32 %v722, 1.442695
    %v838 = vpow.pop %v837
    %v839 = vmul.f32 %v723, 1.442695
    %v840 = vpow.pop %v839
    %v841 = vmul.f32 %v724, 1.442695
    %v842 = vpow.pop %v841
    %v843 = vmul.f32 %v725, 1.442695
    %v844 = vpow.pop %v843
    %v845 = vmul.f32 %v726, 1.442695
    %v846 = vpow.pop %v845
    %v847 = vmul.f32 %v727, 1.442695
    %v848 = vpow.pop %v847
    %v849 = vmul.f32 %v728, 1.442695
    %v850 = vpow.pop %v849
    %v851 = vmul.f32 %v729, 1.442695
    %v852 = vpow.pop %v851
    %v853 = vmul.f32 %v730, 1.442695
    %v854 = vpow.pop %v853
    %v855 = vmul.f32 %v731, 1.442695
    %v856 = vpow.pop %v855
    %v857 = vmul.f32 %v732, 1.442695
    %v858 = vpow.pop %v857
    %v859 = vmul.f32 %v733, 1.442695
    %v860 = vpow.pop %v859
    %v861 = vmul.f32 %v734, 1.442695
    %v862 = vpow.pop %v861
    %v863 = vadd.f32 %v736, 1.0
    %v864 = vadd.f32 %v738, 1.0
    %v865 = vadd.f32 %v740, 1.0
    %v866 = vadd.f32 %v742, 1.0
    %v867 = vadd.f32 %v744, 1.0
    %v868 = vadd.f32 %v746, 1.0
    %v869 = vadd.f32 %v748, 1.0
    %v870 = vadd.f32 %v750, 1.0
    %v871 = vadd.f32 %v752, 1.0
    %v872 = vadd.f32 %v754, 1.0
    %v873 = vadd.f32 %v756, 1.0
    %v874 = vadd.f32 %v758, 1.0
    %v875 = vadd.f32 %v760, 1.0
    %v876 = vadd.f32 %v762, 1.0
    %v877 = vadd.f32 %v764, 1.0
    %v878 = vadd.f32 %v766, 1.0
    %v879 = vadd.f32 %v768, 1.0
    %v880 = vadd.f32 %v770, 1.0
    %v881 = vadd.f32 %v772, 1.0
    %v882 = vadd.f32 %v774, 1.0
    %v883 = vadd.f32 %v776, 1.0
    %v884 = vadd.f32 %v778, 1.0
    %v885 = vadd.f32 %v780, 1.0
    %v886 = vadd.f32 %v782, 1.0
    %v887 = vadd.f32 %v784, 1.0
    %v888 = vadd.f32 %v786, 1.0
    %v889 = vadd.f32 %v788, 1.0
    %v890 = vadd.f32 %v790, 1.0
    %v891 = vadd.f32 %v792, 1.0
    %v892 = vadd.f32 %v794, 1.0
    %v893 = vadd.f32 %v796, 1.0
    %v894 = vadd.f32 %v798, 1.0
    %v895 = vadd.f32 %v800, 1.0
    %v896 = vadd.f32 %v802, 1.0
    %v897 = vadd.f32 %v804, 1.0
    %v898 = vadd.f32 %v806, 1.0
    %v899 = vadd.f32 %v808, 1.0
    %v900 = vadd.f32 %v810, 1.0
    %v901 = vadd.f32 %v812, 1.0
    %v902 = vadd.f32 %v814, 1.0
    %v903 = vadd.f32 %v816, 1.0
    %v904 = vadd.f32 %v818, 1.0
    %v905 = vadd.f32 %v820, 1.0
    %v906 = vadd.f32 %v822, 1.0
    %v907 = vadd.f32 %v824, 1.0
    %v908 = vadd.f32 %v826, 1.0
    %v909 = vadd.f32 %v828, 1.0
    %v910 = vadd.f32 %v830, 1.0
    %v911 = vadd.f32 %v832, 1.0
    %v912 = vadd.f32 %v834, 1.0
    %v913 = vadd.f32 %v836, 1.0
    %v914 = vadd.f32 %v838, 1.0
    %v915 = vadd.f32 %v840, 1.0
    %v916 = vadd.f32 %v842, 1.0
    %v917 = vadd.f32 %v844, 1.0
    %v918 = vadd.f32 %v846, 1.0
    %v919 = vadd.f32 %v848, 1.0
    %v920 = vadd.f32 %v850, 1.0
    %v921 = vadd.f32 %v852, 1.0
    %v922 = vadd.f32 %v854, 1.0
    %v923 = vadd.f32 %v856, 1.0
    %v924 = vadd.f32 %v858, 1.0
    %v925 = vadd.f32 %v860, 1.0
    %v926 = vadd.f32 %v862, 1.0
    %v927 = vrcp.pop %v863
    %v928 = vrcp.pop %v864
    %v929 = vrcp.pop %v865
    %v930 = vrcp.pop %v866
    %v931 = vrcp.pop %v867
    %v932 = vrcp.pop %v868
    %v933 = vrcp.pop %v869
    %v934 = vrcp.pop %v870
    %v935 = vrcp.pop %v871
    %v936 = vrcp.pop %v872
    %v937 = vrcp.pop %v873
    %v938 = vrcp.pop %v874
    %v939 = vrcp.pop %v875
    %v940 = vrcp.pop %v876
    %v941 = vrcp.pop %v877
    %v942 = vrcp.pop %v878
    %v943 = vrcp.pop %v879
    %v944 = vrcp.pop %v880
    %v945 = vrcp.pop %v881
    %v946 = vrcp.pop %v882
    %v947 = vrcp.pop %v883
    %v948 = vrcp.pop %v884
    %v949 = vrcp.pop %v885
    %v950 = vrcp.pop %v886
    %v951 = vrcp.pop %v887
    %v952 = vrcp.pop %v888
    %v953 = vrcp.pop %v889
    %v954 = vrcp.pop %v890
    %v955 = vrcp.pop %v891
    %v956 = vrcp.pop %v892
    %v957 = vrcp.pop %v893
    %v958 = vrcp.pop %v894
    %v959 = vrcp.pop %v895
    %v960 = vrcp.pop %v896
    %v961 = vrcp.pop %v897
    %v962 = vrcp.pop %v898
    %v963 = vrcp.pop %v899
    %v964 = vrcp.pop %v900
    %v965 = vrcp.pop %v901
    %v966 = vrcp.pop %v902
    %v967 = vrcp.pop %v903
    %v968 = vrcp.pop %v904
    %v969 = vrcp.pop %v905
    %v970 = vrcp.pop %v906
    %v971 = vrcp.pop %v907
    %v972 = vrcp.pop %v908
    %v973 = vrcp.pop %v909
    %v974 = vrcp.pop %v910
    %v975 = vrcp.pop %v911
    %v976 = vrcp.pop %v912
    %v977 = vrcp.pop %v913
    %v978 = vrcp.pop %v914
    %v979 = vrcp.pop %v915
    %v980 = vrcp.pop %v916
    %v981 = vrcp.pop %v917
    %v982 = vrcp.pop %v918
    %v983 = vrcp.pop %v919
    %v984 = vrcp.pop %v920
    %v985 = vrcp.pop %v921
    %v986 = vrcp.pop %v922
    %v987 = vrcp.pop %v923
    %v988 = vrcp.pop %v924
    %v989 = vrcp.pop %v925
    %v990 = vrcp.pop %v926
    %v991 = vmul.f32 %v417, %v927
    %v992 = vmul.f32 %v420, %v928
    %v993 = vmul.f32 %v425, %v929
    %v994 = vmul.f32 %v428, %v930
    %v995 = vmul.f32 %v433, %v931
    %v996 = vmul.f32 %v436, %v932
    %v997 = vmul.f32 %v441, %v933
    %v998 = vmul.f32 %v444, %v934
    %v999 = vmul.f32 %v449, %v935
    %v1000 = vmul.f32 %v452, %v936
    %v1001 = vmul.f32 %v457, %v937
    %v1002 = vmul.f32 %v460, %v938
    %v1003 = vmul.f32 %v465, %v939
    %v1004 = vmul.f32 %v468, %v940
    %v1005 = vmul.f32 %v473, %v941
    %v1006 = vmul.f32 %v476, %v942
    %v1007 = vmul.f32 %v481, %v943
    %v1008 = vmul.f32 %v484, %v944
    %v1009 = vmul.f32 %v489, %v945
    %v1010 = vmul.f32 %v492, %v946
    %v1011 = vmul.f32 %v497, %v947
    %v1012 = vmul.f32 %v500, %v948
    %v1013 = vmul.f32 %v505, %v949
    %v1014 = vmul.f32 %v508, %v950
    %v1015 = vmul.f32 %v513, %v951
    %v1016 = vmul.f32 %v516, %v952
    %v1017 = vmul.f32 %v521, %v953
    %v1018 = vmul.f32 %v524, %v954
    %v1019 = vmul.f32 %v529, %v955
    %v1020 = vmul.f32 %v532, %v956
    %v1021 = vmul.f32 %v537, %v957
    %v1022 = vmul.f32 %v540, %v958
    %v1023 = vmul.f32 %v545, %v959
    %v1024 = vmul.f32 %v548, %v960
    %v1025 = vmul.f32 %v553, %v961
    %v1026 = vmul.f32 %v556, %v962
    %v1027 = vmul.f32 %v561, %v963
    %v1028 = vmul.f32 %v564, %v964
    %v1029 = vmul.f32 %v569, %v965
    %v1030 = vmul.f32 %v572, %v966
    %v1031 = vmul.f32 %v577, %v967
    %v1032 = vmul.f32 %v580, %v968
    %v1033 = vmul.f32 %v585, %v969
    %v1034 = vmul.f32 %v588, %v970
    %v1035 = vmul.f32 %v593, %v971
    %v1036 = vmul.f32 %v596, %v972
    %v1037 = vmul.f32 %v601, %v973
    %v1038 = vmul.f32 %v604, %v974
    %v1039 = vmul.f32 %v609, %v975
    %v1040 = vmul.f32 %v612, %v976
    %v1041 = vmul.f32 %v617, %v977
    %v1042 = vmul.f32 %v620, %v978
    %v1043 = vmul.f32 %v625, %v979
    %v1044 = vmul.f32 %v628, %v980
    %v1045 = vmul.f32 %v633, %v981
    %v1046 = vmul.f32 %v636, %v982
    %v1047 = vmul.f32 %v641, %v983
    %v1048 = vmul.f32 %v644, %v984
    %v1049 = vmul.f32 %v649, %v985
    %v1050 = vmul.f32 %v652, %v986
    %v1051 = vmul.f32 %v657, %v987
    %v1052 = vmul.f32 %v660, %v988
    %v1053 = vmul.f32 %v665, %v989
    %v1054 = vmul.f32 %v668, %v990
    %v1055 = vpack.c.bf16 %v992, %v991
    %v1056 = vpack.c.bf16 %v994, %v993
    %v1057 = vpack.c.bf16 %v996, %v995
    %v1058 = vpack.c.bf16 %v998, %v997
    %v1059 = vpack.c.bf16 %v1000, %v999
    %v1060 = vpack.c.bf16 %v1002, %v1001
    %v1061 = vpack.c.bf16 %v1004, %v1003
    %v1062 = vpack.c.bf16 %v1006, %v1005
    %v1063 = vpack.c.bf16 %v1008, %v1007
    %v1064 = vpack.c.bf16 %v1010, %v1009
    %v1065 = vpack.c.bf16 %v1012, %v1011
    %v1066 = vpack.c.bf16 %v1014, %v1013
    %v1067 = vpack.c.bf16 %v1016, %v1015
    %v1068 = vpack.c.bf16 %v1018, %v1017
    %v1069 = vpack.c.bf16 %v1020, %v1019
    %v1070 = vpack.c.bf16 %v1022, %v1021
    %v1071 = vpack.c.bf16 %v1024, %v1023
    %v1072 = vpack.c.bf16 %v1026, %v1025
    %v1073 = vpack.c.bf16 %v1028, %v1027
    %v1074 = vpack.c.bf16 %v1030, %v1029
    %v1075 = vpack.c.bf16 %v1032, %v1031
    %v1076 = vpack.c.bf16 %v1034, %v1033
    %v1077 = vpack.c.bf16 %v1036, %v1035
    %v1078 = vpack.c.bf16 %v1038, %v1037
    %v1079 = vpack.c.bf16 %v1040, %v1039
    %v1080 = vpack.c.bf16 %v1042, %v1041
    %v1081 = vpack.c.bf16 %v1044, %v1043
    %v1082 = vpack.c.bf16 %v1046, %v1045
    %v1083 = vpack.c.bf16 %v1048, %v1047
    %v1084 = vpack.c.bf16 %v1050, %v1049
    %v1085 = vpack.c.bf16 %v1052, %v1051
    %v1086 = vpack.c.bf16 %v1054, %v1053
    %v1119 = vunpack.c.l.b16 %v1055
    %v1120 = vunpack.c.h.b16 %v1055
    %v1121 = vunpack.c.l.b16 %v1056
    %v1122 = vunpack.c.h.b16 %v1056
    %v1123 = vunpack.c.l.b16 %v1057
    %v1124 = vunpack.c.h.b16 %v1057
    %v1125 = vunpack.c.l.b16 %v1058
    %v1126 = vunpack.c.h.b16 %v1058
    %v1127 = vunpack.c.l.b16 %v1059
    %v1128 = vunpack.c.h.b16 %v1059
    %v1129 = vunpack.c.l.b16 %v1060
    %v1130 = vunpack.c.h.b16 %v1060
    %v1131 = vunpack.c.l.b16 %v1061
    %v1132 = vunpack.c.h.b16 %v1061
    %v1133 = vunpack.c.l.b16 %v1062
    %v1134 = vunpack.c.h.b16 %v1062
    %v1135 = vunpack.c.l.b16 %v1063
    %v1136 = vunpack.c.h.b16 %v1063
    %v1137 = vunpack.c.l.b16 %v1064
    %v1138 = vunpack.c.h.b16 %v1064
    %v1139 = vunpack.c.l.b16 %v1065
    %v1140 = vunpack.c.h.b16 %v1065
    %v1141 = vunpack.c.l.b16 %v1066
    %v1142 = vunpack.c.h.b16 %v1066
    %v1143 = vunpack.c.l.b16 %v1067
    %v1144 = vunpack.c.h.b16 %v1067
    %v1145 = vunpack.c.l.b16 %v1068
    %v1146 = vunpack.c.h.b16 %v1068
    %v1147 = vunpack.c.l.b16 %v1069
    %v1148 = vunpack.c.h.b16 %v1069
    %v1149 = vunpack.c.l.b16 %v1070
    %v1150 = vunpack.c.h.b16 %v1070
    %v1151 = vunpack.c.l.b16 %v1071
    %v1152 = vunpack.c.h.b16 %v1071
    %v1153 = vunpack.c.l.b16 %v1072
    %v1154 = vunpack.c.h.b16 %v1072
    %v1155 = vunpack.c.l.b16 %v1073
    %v1156 = vunpack.c.h.b16 %v1073
    %v1157 = vunpack.c.l.b16 %v1074
    %v1158 = vunpack.c.h.b16 %v1074
    %v1159 = vunpack.c.l.b16 %v1075
    %v1160 = vunpack.c.h.b16 %v1075
    %v1161 = vunpack.c.l.b16 %v1076
    %v1162 = vunpack.c.h.b16 %v1076
    %v1163 = vunpack.c.l.b16 %v1077
    %v1164 = vunpack.c.h.b16 %v1077
    %v1165 = vunpack.c.l.b16 %v1078
    %v1166 = vunpack.c.h.b16 %v1078
    %v1167 = vunpack.c.l.b16 %v1079
    %v1168 = vunpack.c.h.b16 %v1079
    %v1169 = vunpack.c.l.b16 %v1080
    %v1170 = vunpack.c.h.b16 %v1080
    %v1171 = vunpack.c.l.b16 %v1081
    %v1172 = vunpack.c.h.b16 %v1081
    %v1173 = vunpack.c.l.b16 %v1082
    %v1174 = vunpack.c.h.b16 %v1082
    %v1175 = vunpack.c.l.b16 %v1083
    %v1176 = vunpack.c.h.b16 %v1083
    %v1177 = vunpack.c.l.b16 %v1084
    %v1178 = vunpack.c.h.b16 %v1084
    %v1179 = vunpack.c.l.b16 %v1085
    %v1180 = vunpack.c.h.b16 %v1085
    %v1181 = vunpack.c.l.b16 %v1086
    %v1182 = vunpack.c.h.b16 %v1086
    %v1183 = vpack.c.b16 %v1119, %v1119
    %v1184 = vpack.c.b16 %v1120, %v1120
    %v1185 = vpack.c.b16 %v1121, %v1121
    %v1186 = vpack.c.b16 %v1122, %v1122
    %v1187 = vpack.c.b16 %v1123, %v1123
    %v1188 = vpack.c.b16 %v1124, %v1124
    %v1189 = vpack.c.b16 %v1125, %v1125
    %v1190 = vpack.c.b16 %v1126, %v1126
    %v1191 = vpack.c.b16 %v1127, %v1127
    %v1192 = vpack.c.b16 %v1128, %v1128
    %v1193 = vpack.c.b16 %v1129, %v1129
    %v1194 = vpack.c.b16 %v1130, %v1130
    %v1195 = vpack.c.b16 %v1131, %v1131
    %v1196 = vpack.c.b16 %v1132, %v1132
    %v1197 = vpack.c.b16 %v1133, %v1133
    %v1198 = vpack.c.b16 %v1134, %v1134
    %v1199 = vpack.c.b16 %v1135, %v1135
    %v1200 = vpack.c.b16 %v1136, %v1136
    %v1201 = vpack.c.b16 %v1137, %v1137
    %v1202 = vpack.c.b16 %v1138, %v1138
    %v1203 = vpack.c.b16 %v1139, %v1139
    %v1204 = vpack.c.b16 %v1140, %v1140
    %v1205 = vpack.c.b16 %v1141, %v1141
    %v1206 = vpack.c.b16 %v1142, %v1142
    %v1207 = vpack.c.b16 %v1143, %v1143
    %v1208 = vpack.c.b16 %v1144, %v1144
    %v1209 = vpack.c.b16 %v1145, %v1145
    %v1210 = vpack.c.b16 %v1146, %v1146
    %v1211 = vpack.c.b16 %v1147, %v1147
    %v1212 = vpack.c.b16 %v1148, %v1148
    %v1213 = vpack.c.b16 %v1149, %v1149
    %v1214 = vpack.c.b16 %v1150, %v1150
    %v1215 = vpack.c.b16 %v1151, %v1151
    %v1216 = vpack.c.b16 %v1152, %v1152
    %v1217 = vpack.c.b16 %v1153, %v1153
    %v1218 = vpack.c.b16 %v1154, %v1154
    %v1219 = vpack.c.b16 %v1155, %v1155
    %v1220 = vpack.c.b16 %v1156, %v1156
    %v1221 = vpack.c.b16 %v1157, %v1157
    %v1222 = vpack.c.b16 %v1158, %v1158
    %v1223 = vpack.c.b16 %v1159, %v1159
    %v1224 = vpack.c.b16 %v1160, %v1160
    %v1225 = vpack.c.b16 %v1161, %v1161
    %v1226 = vpack.c.b16 %v1162, %v1162
    %v1227 = vpack.c.b16 %v1163, %v1163
    %v1228 = vpack.c.b16 %v1164, %v1164
    %v1229 = vpack.c.b16 %v1165, %v1165
    %v1230 = vpack.c.b16 %v1166, %v1166
    %v1231 = vpack.c.b16 %v1167, %v1167
    %v1232 = vpack.c.b16 %v1168, %v1168
    %v1233 = vpack.c.b16 %v1169, %v1169
    %v1234 = vpack.c.b16 %v1170, %v1170
    %v1235 = vpack.c.b16 %v1171, %v1171
    %v1236 = vpack.c.b16 %v1172, %v1172
    %v1237 = vpack.c.b16 %v1173, %v1173
    %v1238 = vpack.c.b16 %v1174, %v1174
    %v1239 = vpack.c.b16 %v1175, %v1175
    %v1240 = vpack.c.b16 %v1176, %v1176
    %v1241 = vpack.c.b16 %v1177, %v1177
    %v1242 = vpack.c.b16 %v1178, %v1178
    %v1243 = vpack.c.b16 %v1179, %v1179
    %v1244 = vpack.c.b16 %v1180, %v1180
    %v1245 = vpack.c.b16 %v1181, %v1181
    %v1246 = vpack.c.b16 %v1182, %v1182
    %vm1311 = vcmask 60416
    %1312 = vst.msk [vmem:[%s3] sm:$0xf] %vm1311, %v1183
    %1313 = vst.msk [vmem:[%s3 + $0x4] sm:$0xf] %vm1311, %v1184
    %1314 = vst.msk [vmem:[%s3 + $0x8] sm:$0xf] %vm1311, %v1185
    %1315 = vst.msk [vmem:[%s3 + $0xc] sm:$0xf] %vm1311, %v1186
    %1316 = vst.msk [vmem:[%s3 + $0x10] sm:$0xf] %vm1311, %v1187
    %1317 = vst.msk [vmem:[%s3 + $0x14] sm:$0xf] %vm1311, %v1188
    %1318 = vst.msk [vmem:[%s3 + $0x18] sm:$0xf] %vm1311, %v1189
    %1319 = vst.msk [vmem:[%s3 + $0x1c] sm:$0xf] %vm1311, %v1190
    %1320 = vst.msk [vmem:[%s3 + $0x20] sm:$0xf] %vm1311, %v1191
    %1321 = vst.msk [vmem:[%s3 + $0x24] sm:$0xf] %vm1311, %v1192
    %1322 = vst.msk [vmem:[%s3 + $0x28] sm:$0xf] %vm1311, %v1193
    %1323 = vst.msk [vmem:[%s3 + $0x2c] sm:$0xf] %vm1311, %v1194
    %1324 = vst.msk [vmem:[%s3 + $0x30] sm:$0xf] %vm1311, %v1195
    %1325 = vst.msk [vmem:[%s3 + $0x34] sm:$0xf] %vm1311, %v1196
    %1326 = vst.msk [vmem:[%s3 + $0x38] sm:$0xf] %vm1311, %v1197
    %1327 = vst.msk [vmem:[%s3 + $0x3c] sm:$0xf] %vm1311, %v1198
    %1328 = vst.msk [vmem:[%s3 + $0x40] sm:$0xf] %vm1311, %v1199
    %1329 = vst.msk [vmem:[%s3 + $0x44] sm:$0xf] %vm1311, %v1200
    %1330 = vst.msk [vmem:[%s3 + $0x48] sm:$0xf] %vm1311, %v1201
    %1331 = vst.msk [vmem:[%s3 + $0x4c] sm:$0xf] %vm1311, %v1202
    %1332 = vst.msk [vmem:[%s3 + $0x50] sm:$0xf] %vm1311, %v1203
    %1333 = vst.msk [vmem:[%s3 + $0x54] sm:$0xf] %vm1311, %v1204
    %1334 = vst.msk [vmem:[%s3 + $0x58] sm:$0xf] %vm1311, %v1205
    %1335 = vst.msk [vmem:[%s3 + $0x5c] sm:$0xf] %vm1311, %v1206
    %1336 = vst.msk [vmem:[%s3 + $0x60] sm:$0xf] %vm1311, %v1207
    %1337 = vst.msk [vmem:[%s3 + $0x64] sm:$0xf] %vm1311, %v1208
    %1338 = vst.msk [vmem:[%s3 + $0x68] sm:$0xf] %vm1311, %v1209
    %1339 = vst.msk [vmem:[%s3 + $0x6c] sm:$0xf] %vm1311, %v1210
    %1340 = vst.msk [vmem:[%s3 + $0x70] sm:$0xf] %vm1311, %v1211
    %1341 = vst.msk [vmem:[%s3 + $0x74] sm:$0xf] %vm1311, %v1212
    %1342 = vst.msk [vmem:[%s3 + $0x78] sm:$0xf] %vm1311, %v1213
    %1343 = vst.msk [vmem:[%s3 + $0x7c] sm:$0xf] %vm1311, %v1214
    %1344 = vst.msk [vmem:[%s3 + $0x80] sm:$0xf] %vm1311, %v1215
    %1345 = vst.msk [vmem:[%s3 + $0x84] sm:$0xf] %vm1311, %v1216
    %1346 = vst.msk [vmem:[%s3 + $0x88] sm:$0xf] %vm1311, %v1217
    %1347 = vst.msk [vmem:[%s3 + $0x8c] sm:$0xf] %vm1311, %v1218
    %1348 = vst.msk [vmem:[%s3 + $0x90] sm:$0xf] %vm1311, %v1219
    %1349 = vst.msk [vmem:[%s3 + $0x94] sm:$0xf] %vm1311, %v1220
    %1350 = vst.msk [vmem:[%s3 + $0x98] sm:$0xf] %vm1311, %v1221
    %1351 = vst.msk [vmem:[%s3 + $0x9c] sm:$0xf] %vm1311, %v1222
    %1352 = vst.msk [vmem:[%s3 + $0xa0] sm:$0xf] %vm1311, %v1223
    %1353 = vst.msk [vmem:[%s3 + $0xa4] sm:$0xf] %vm1311, %v1224
    %1354 = vst.msk [vmem:[%s3 + $0xa8] sm:$0xf] %vm1311, %v1225
    %1355 = vst.msk [vmem:[%s3 + $0xac] sm:$0xf] %vm1311, %v1226
    %1356 = vst.msk [vmem:[%s3 + $0xb0] sm:$0xf] %vm1311, %v1227
    %1357 = vst.msk [vmem:[%s3 + $0xb4] sm:$0xf] %vm1311, %v1228
    %1358 = vst.msk [vmem:[%s3 + $0xb8] sm:$0xf] %vm1311, %v1229
    %1359 = vst.msk [vmem:[%s3 + $0xbc] sm:$0xf] %vm1311, %v1230
    %1360 = vst.msk [vmem:[%s3 + $0xc0] sm:$0xf] %vm1311, %v1231
    %1361 = vst.msk [vmem:[%s3 + $0xc4] sm:$0xf] %vm1311, %v1232
    %1362 = vst.msk [vmem:[%s3 + $0xc8] sm:$0xf] %vm1311, %v1233
    %1363 = vst.msk [vmem:[%s3 + $0xcc] sm:$0xf] %vm1311, %v1234
    %1364 = vst.msk [vmem:[%s3 + $0xd0] sm:$0xf] %vm1311, %v1235
    %1365 = vst.msk [vmem:[%s3 + $0xd4] sm:$0xf] %vm1311, %v1236
    %1366 = vst.msk [vmem:[%s3 + $0xd8] sm:$0xf] %vm1311, %v1237
    %1367 = vst.msk [vmem:[%s3 + $0xdc] sm:$0xf] %vm1311, %v1238
    %1368 = vst.msk [vmem:[%s3 + $0xe0] sm:$0xf] %vm1311, %v1239
    %1369 = vst.msk [vmem:[%s3 + $0xe4] sm:$0xf] %vm1311, %v1240
    %1370 = vst.msk [vmem:[%s3 + $0xe8] sm:$0xf] %vm1311, %v1241
    %1371 = vst.msk [vmem:[%s3 + $0xec] sm:$0xf] %vm1311, %v1242
    %1372 = vst.msk [vmem:[%s3 + $0xf0] sm:$0xf] %vm1311, %v1243
    %1373 = vst.msk [vmem:[%s3 + $0xf4] sm:$0xf] %vm1311, %v1244
    %1374 = vst.msk [vmem:[%s3 + $0xf8] sm:$0xf] %vm1311, %v1245
    %1375 = vst.msk [vmem:[%s3 + $0xfc] sm:$0xf] %vm1311, %v1246
    // Predicated region
    $region22: #{c2f_forward.5} parent=1 // pred_check
      _
    $region23: #{c2f_forward.5} parent=1 // pred_check_branch
      %1377 = sbr.rel (0) target = $region25
    $region24: #{c2f_forward.5} parent=1 // pred_region
      _
    $region25: #{c2f_forward.5} parent=1 // pred_fallthru
      _
    // Predicated region
    $region26: #{c2f_forward.5} parent=1 // pred_check
      _
    $region27: #{c2f_forward.5} parent=1 // pred_check_branch
      %1379 = sbr.rel (0) target = $region29
    $region28: #{c2f_forward.5} parent=1 // pred_region
      _
    $region29: #{c2f_forward.5} parent=1 // pred_fallthru
      _
    %1380 = vsyncpa [#allocation3], 1
    %1381 = vsyncpa [#allocation5], 1

// kernel: c2f_forward.3
$region0: #{c2f_forward.3}
  #allocation0 [shape = 'u32[]', space=smem, size = 0x4, offset = 0x4, fixed_abs, tag = 'smem constant byte address 0x4 - core index']
  #allocation1 [shape = 'u32[144,128]{1,0:T(1,128)}', space=vmem, size = 0x12000, scoped, tag = 'internal scratch']
  %s0 = inlined_call_operand.vmem [shape: bf16[512,4], index: 0, kind: input, shape index: {}]
  %s1 = inlined_call_operand.vmem [shape: bf16[4,8], index: 1, kind: input, shape index: {}]
  %s2 = inlined_call_operand.vmem [shape: f32[1,8], index: 2, kind: input, shape index: {}]
  %s3 = inlined_call_operand.hbm [shape: bf16[512,8], index: 3, kind: output, shape index: {}]
  %s4 = sld [smem:[#allocation0]]
  $region22: #{c2f_forward.3} parent=0
    _
  %s6 = ssub.s32 1, %s4
  %s7 = scalar_select 0, %s6, %s4
  $region1: #{c2f_forward.3} parent=0
    #allocation2 [shape = 'u8[131072]{0}', space=vmem, size = 0x20000, scoped, tag = 'output window, operand 0, single buffered']
    #allocation3 [shape = 's32[1]{0}', space=sflag, size = 0x4, scoped, tag = 'scoped memory for c2f_forward.3']
    %8 = vsyncpa [#allocation3], 0
    // Predicated region
    $region2: #{c2f_forward.3} parent=1 // pred_check
      _
    $region3: #{c2f_forward.3} parent=1 // pred_check_branch
      %10 = sbr.rel (0) target = $region5
    $region4: #{c2f_forward.3} parent=1 // pred_region
      _
    $region5: #{c2f_forward.3} parent=1 // pred_fallthru
      _
    // Predicated region
    $region6: #{c2f_forward.3} parent=1 // pred_check
      _
    $region7: #{c2f_forward.3} parent=1 // pred_check_branch
      %12 = sbr.rel (0) target = $region9
    $region8: #{c2f_forward.3} parent=1 // pred_region
      _
    $region9: #{c2f_forward.3} parent=1 // pred_fallthru
      _
    // Predicated region
    $region10: #{c2f_forward.3} parent=1 // pred_check
      _
    $region11: #{c2f_forward.3} parent=1 // pred_check_branch
      %14 = sbr.rel (0) target = $region13
    $region12: #{c2f_forward.3} parent=1 // pred_region
      _
    $region13: #{c2f_forward.3} parent=1 // pred_fallthru
      _
    %v16 = vld [vmem:[%s0] sm:$0xf]
    %v17 = vld [vmem:[%s0 + $0x4] sm:$0xf]
    %v18 = vld [vmem:[%s0 + $0x8] sm:$0xf]
    %v19 = vld [vmem:[%s0 + $0xc] sm:$0xf]
    %v20 = vld [vmem:[%s0 + $0x10] sm:$0xf]
    %v21 = vld [vmem:[%s0 + $0x14] sm:$0xf]
    %v22 = vld [vmem:[%s0 + $0x18] sm:$0xf]
    %v23 = vld [vmem:[%s0 + $0x1c] sm:$0xf]
    %v24 = vld [vmem:[%s0 + $0x20] sm:$0xf]
    %v25 = vld [vmem:[%s0 + $0x24] sm:$0xf]
    %v26 = vld [vmem:[%s0 + $0x28] sm:$0xf]
    %v27 = vld [vmem:[%s0 + $0x2c] sm:$0xf]
    %v28 = vld [vmem:[%s0 + $0x30] sm:$0xf]
    %v29 = vld [vmem:[%s0 + $0x34] sm:$0xf]
    %v30 = vld [vmem:[%s0 + $0x38] sm:$0xf]
    %v31 = vld [vmem:[%s0 + $0x3c] sm:$0xf]
    %v32 = vld [vmem:[%s0 + $0x40] sm:$0xf]
    %v33 = vld [vmem:[%s0 + $0x44] sm:$0xf]
    %v34 = vld [vmem:[%s0 + $0x48] sm:$0xf]
    %v35 = vld [vmem:[%s0 + $0x4c] sm:$0xf]
    %v36 = vld [vmem:[%s0 + $0x50] sm:$0xf]
    %v37 = vld [vmem:[%s0 + $0x54] sm:$0xf]
    %v38 = vld [vmem:[%s0 + $0x58] sm:$0xf]
    %v39 = vld [vmem:[%s0 + $0x5c] sm:$0xf]
    %v40 = vld [vmem:[%s0 + $0x60] sm:$0xf]
    %v41 = vld [vmem:[%s0 + $0x64] sm:$0xf]
    %v42 = vld [vmem:[%s0 + $0x68] sm:$0xf]
    %v43 = vld [vmem:[%s0 + $0x6c] sm:$0xf]
    %v44 = vld [vmem:[%s0 + $0x70] sm:$0xf]
    %v45 = vld [vmem:[%s0 + $0x74] sm:$0xf]
    %v46 = vld [vmem:[%s0 + $0x78] sm:$0xf]
    %v47 = vld [vmem:[%s0 + $0x7c] sm:$0xf]
    %v48 = vld [vmem:[%s0 + $0x80] sm:$0xf]
    %v49 = vld [vmem:[%s0 + $0x84] sm:$0xf]
    %v50 = vld [vmem:[%s0 + $0x88] sm:$0xf]
    %v51 = vld [vmem:[%s0 + $0x8c] sm:$0xf]
    %v52 = vld [vmem:[%s0 + $0x90] sm:$0xf]
    %v53 = vld [vmem:[%s0 + $0x94] sm:$0xf]
    %v54 = vld [vmem:[%s0 + $0x98] sm:$0xf]
    %v55 = vld [vmem:[%s0 + $0x9c] sm:$0xf]
    %v56 = vld [vmem:[%s0 + $0xa0] sm:$0xf]
    %v57 = vld [vmem:[%s0 + $0xa4] sm:$0xf]
    %v58 = vld [vmem:[%s0 + $0xa8] sm:$0xf]
    %v59 = vld [vmem:[%s0 + $0xac] sm:$0xf]
    %v60 = vld [vmem:[%s0 + $0xb0] sm:$0xf]
    %v61 = vld [vmem:[%s0 + $0xb4] sm:$0xf]
    %v62 = vld [vmem:[%s0 + $0xb8] sm:$0xf]
    %v63 = vld [vmem:[%s0 + $0xbc] sm:$0xf]
    %v64 = vld [vmem:[%s0 + $0xc0] sm:$0xf]
    %v65 = vld [vmem:[%s0 + $0xc4] sm:$0xf]
    %v66 = vld [vmem:[%s0 + $0xc8] sm:$0xf]
    %v67 = vld [vmem:[%s0 + $0xcc] sm:$0xf]
    %v68 = vld [vmem:[%s0 + $0xd0] sm:$0xf]
    %v69 = vld [vmem:[%s0 + $0xd4] sm:$0xf]
    %v70 = vld [vmem:[%s0 + $0xd8] sm:$0xf]
    %v71 = vld [vmem:[%s0 + $0xdc] sm:$0xf]
    %v72 = vld [vmem:[%s0 + $0xe0] sm:$0xf]
    %v73 = vld [vmem:[%s0 + $0xe4] sm:$0xf]
    %v74 = vld [vmem:[%s0 + $0xe8] sm:$0xf]
    %v75 = vld [vmem:[%s0 + $0xec] sm:$0xf]
    %v76 = vld [vmem:[%s0 + $0xf0] sm:$0xf]
    %v77 = vld [vmem:[%s0 + $0xf4] sm:$0xf]
    %v78 = vld [vmem:[%s0 + $0xf8] sm:$0xf]
    %v79 = vld [vmem:[%s0 + $0xfc] sm:$0xf]
    %v80 = vld [vmem:[%s1] sm:$0x3]
    %v81 = vld [vmem:[%s2] sm:$0x1]
    %v83 = vlaneseq
    %v84 = vshrl.u32 %v83, 7
    %v85 = vsub.s32 0, %v84
    %v86 = vrot.slane %v81, %v85
    %v152 = vunpack.c.l.b16 %v16
    %v153 = vunpack.c.l.b16 %v17
    %v154 = vunpack.c.l.b16 %v18
    %v155 = vunpack.c.l.b16 %v19
    %v156 = vunpack.c.l.b16 %v20
    %v157 = vunpack.c.l.b16 %v21
    %v158 = vunpack.c.l.b16 %v22
    %v159 = vunpack.c.l.b16 %v23
    %v160 = vunpack.c.l.b16 %v24
    %v161 = vunpack.c.l.b16 %v25
    %v162 = vunpack.c.l.b16 %v26
    %v163 = vunpack.c.l.b16 %v27
    %v164 = vunpack.c.l.b16 %v28
    %v165 = vunpack.c.l.b16 %v29
    %v166 = vunpack.c.l.b16 %v30
    %v167 = vunpack.c.l.b16 %v31
    %v168 = vunpack.c.l.b16 %v32
    %v169 = vunpack.c.l.b16 %v33
    %v170 = vunpack.c.l.b16 %v34
    %v171 = vunpack.c.l.b16 %v35
    %v172 = vunpack.c.l.b16 %v36
    %v173 = vunpack.c.l.b16 %v37
    %v174 = vunpack.c.l.b16 %v38
    %v175 = vunpack.c.l.b16 %v39
    %v176 = vunpack.c.l.b16 %v40
    %v177 = vunpack.c.l.b16 %v41
    %v178 = vunpack.c.l.b16 %v42
    %v179 = vunpack.c.l.b16 %v43
    %v180 = vunpack.c.l.b16 %v44
    %v181 = vunpack.c.l.b16 %v45
    %v182 = vunpack.c.l.b16 %v46
    %v183 = vunpack.c.l.b16 %v47
    %v184 = vunpack.c.l.b16 %v48
    %v185 = vunpack.c.l.b16 %v49
    %v186 = vunpack.c.l.b16 %v50
    %v187 = vunpack.c.l.b16 %v51
    %v188 = vunpack.c.l.b16 %v52
    %v189 = vunpack.c.l.b16 %v53
    %v190 = vunpack.c.l.b16 %v54
    %v191 = vunpack.c.l.b16 %v55
    %v192 = vunpack.c.l.b16 %v56
    %v193 = vunpack.c.l.b16 %v57
    %v194 = vunpack.c.l.b16 %v58
    %v195 = vunpack.c.l.b16 %v59
    %v196 = vunpack.c.l.b16 %v60
    %v197 = vunpack.c.l.b16 %v61
    %v198 = vunpack.c.l.b16 %v62
    %v199 = vunpack.c.l.b16 %v63
    %v200 = vunpack.c.l.b16 %v64
    %v201 = vunpack.c.l.b16 %v65
    %v202 = vunpack.c.l.b16 %v66
    %v203 = vunpack.c.l.b16 %v67
    %v204 = vunpack.c.l.b16 %v68
    %v205 = vunpack.c.l.b16 %v69
    %v206 = vunpack.c.l.b16 %v70
    %v207 = vunpack.c.l.b16 %v71
    %v208 = vunpack.c.l.b16 %v72
    %v209 = vunpack.c.l.b16 %v73
    %v210 = vunpack.c.l.b16 %v74
    %v211 = vunpack.c.l.b16 %v75
    %v212 = vunpack.c.l.b16 %v76
    %v213 = vunpack.c.l.b16 %v77
    %v214 = vunpack.c.l.b16 %v78
    %v215 = vunpack.c.l.b16 %v79
    %v216 = vpack.c.b16 %v153, %v152
    %v217 = vpack.c.b16 %v155, %v154
    %v218 = vpack.c.b16 %v157, %v156
    %v219 = vpack.c.b16 %v159, %v158
    %v220 = vpack.c.b16 %v161, %v160
    %v221 = vpack.c.b16 %v163, %v162
    %v222 = vpack.c.b16 %v165, %v164
    %v223 = vpack.c.b16 %v167, %v166
    %v224 = vpack.c.b16 %v169, %v168
    %v225 = vpack.c.b16 %v171, %v170
    %v226 = vpack.c.b16 %v173, %v172
    %v227 = vpack.c.b16 %v175, %v174
    %v228 = vpack.c.b16 %v177, %v176
    %v229 = vpack.c.b16 %v179, %v178
    %v230 = vpack.c.b16 %v181, %v180
    %v231 = vpack.c.b16 %v183, %v182
    %v232 = vpack.c.b16 %v185, %v184
    %v233 = vpack.c.b16 %v187, %v186
    %v234 = vpack.c.b16 %v189, %v188
    %v235 = vpack.c.b16 %v191, %v190
    %v236 = vpack.c.b16 %v193, %v192
    %v237 = vpack.c.b16 %v195, %v194
    %v238 = vpack.c.b16 %v197, %v196
    %v239 = vpack.c.b16 %v199, %v198
    %v240 = vpack.c.b16 %v201, %v200
    %v241 = vpack.c.b16 %v203, %v202
    %v242 = vpack.c.b16 %v205, %v204
    %v243 = vpack.c.b16 %v207, %v206
    %v244 = vpack.c.b16 %v209, %v208
    %v245 = vpack.c.b16 %v211, %v210
    %v246 = vpack.c.b16 %v213, %v212
    %v247 = vpack.c.b16 %v215, %v214
    %vm248 = vcmask 31744
    %v250 = vsel %vm248, %v216, 0
    %v253 = vsel %vm248, %v217, 0
    %v256 = vsel %vm248, %v218, 0
    %v259 = vsel %vm248, %v219, 0
    %v262 = vsel %vm248, %v220, 0
    %v265 = vsel %vm248, %v221, 0
    %v268 = vsel %vm248, %v222, 0
    %v271 = vsel %vm248, %v223, 0
    %v274 = vsel %vm248, %v224, 0
    %v277 = vsel %vm248, %v225, 0
    %v280 = vsel %vm248, %v226, 0
    %v283 = vsel %vm248, %v227, 0
    %v286 = vsel %vm248, %v228, 0
    %v289 = vsel %vm248, %v229, 0
    %v292 = vsel %vm248, %v230, 0
    %v295 = vsel %vm248, %v231, 0
    %v298 = vsel %vm248, %v232, 0
    %v301 = vsel %vm248, %v233, 0
    %v304 = vsel %vm248, %v234, 0
    %v307 = vsel %vm248, %v235, 0
    %v310 = vsel %vm248, %v236, 0
    %v313 = vsel %vm248, %v237, 0
    %v316 = vsel %vm248, %v238, 0
    %v319 = vsel %vm248, %v239, 0
    %v322 = vsel %vm248, %v240, 0
    %v325 = vsel %vm248, %v241, 0
    %v328 = vsel %vm248, %v242, 0
    %v331 = vsel %vm248, %v243, 0
    %v334 = vsel %vm248, %v244, 0
    %v337 = vsel %vm248, %v245, 0
    %v340 = vsel %vm248, %v246, 0
    %v343 = vsel %vm248, %v247, 0
    %vm345 = vcmask 1041408
    %v347 = vsel %vm345, %v80, 0
    %349 = vmatprep.subr.bf16.mxu0 0
    %350 = vmatpush1.bf16.msra.mxu0 %v347
    %351 = vmatprep.subr.bf16.mxu0 0
    %352 = vmatpush1.bf16.msra.mxu0 0
    %353 = vmatprep.subr.bf16.mxu0 0
    %354 = vmatpush1.bf16.msra.mxu0 0
    %355 = vmatprep.subr.bf16.mxu0 0
    %356 = vmatpush1.bf16.msra.mxu0 0
    %357 = vmatprep.subr.bf16.mxu0 0
    %358 = vmatpush1.bf16.msra.mxu0 0
    %359 = vmatprep.subr.bf16.mxu0 0
    %360 = vmatpush1.bf16.msra.mxu0 0
    %361 = vmatprep.subr.bf16.mxu0 0
    %362 = vmatpush1.bf16.msra.mxu0 0
    %363 = vmatprep.subr.bf16.mxu0 0
    %364 = vmatpush1.bf16.msra.mxu0 0
    %365 = vmatprep.subr.bf16.mxu0 0
    %366 = vmatpush1.bf16.msra.mxu0 0
    %367 = vmatprep.subr.bf16.mxu0 0
    %368 = vmatpush1.bf16.msra.mxu0 0
    %369 = vmatprep.subr.bf16.mxu0 0
    %370 = vmatpush1.bf16.msra.mxu0 0
    %371 = vmatprep.subr.bf16.mxu0 0
    %372 = vmatpush1.bf16.msra.mxu0 0
    %373 = vmatprep.subr.bf16.mxu0 0
    %374 = vmatpush1.bf16.msra.mxu0 0
    %375 = vmatprep.subr.bf16.mxu0 0
    %376 = vmatpush1.bf16.msra.mxu0 0
    %377 = vmatprep.subr.bf16.mxu0 0
    %378 = vmatpush1.bf16.msra.mxu0 0
    %379 = vmatprep.subr.bf16.mxu0 0
    %380 = vmatpush1.bf16.msra.mxu0 0
    %381 = vmatprep.mubr.bf16.mxu0 0
    %382 = vmatmul.mubr.bf16.gmra.mrb[0].mxu0 %v250
    %v383 = vpop.f32.mrb[0].mxu0
    %v384 = vadd.f32 %v86, %v383
    %v385 = vpop.f32.mrb[0].mxu0
    %v386 = vpop.f32.mrb[0].mxu0
    %v387 = vadd.f32 %v86, %v386
    %v388 = vpop.f32.mrb[0].mxu0
    %389 = vmatprep.mubr.bf16.mxu0 0
    %390 = vmatmul.mubr.bf16.gmra.mrb[0].mxu0 %v253
    %v391 = vpop.f32.mrb[0].mxu0
    %v392 = vadd.f32 %v86, %v391
    %v393 = vpop.f32.mrb[0].mxu0
    %v394 = vpop.f32.mrb[0].mxu0
    %v395 = vadd.f32 %v86, %v394
    %v396 = vpop.f32.mrb[0].mxu0
    %397 = vmatprep.mubr.bf16.mxu0 0
    %398 = vmatmul.mubr.bf16.gmra.mrb[0].mxu0 %v256
    %v399 = vpop.f32.mrb[0].mxu0
    %v400 = vadd.f32 %v86, %v399
    %v401 = vpop.f32.mrb[0].mxu0
    %v402 = vpop.f32.mrb[0].mxu0
    %v403 = vadd.f32 %v86, %v402
    %v404 = vpop.f32.mrb[0].mxu0
    %405 = vmatprep.mubr.bf16.mxu0 0
    %406 = vmatmul.mubr.bf16.gmra.mrb[0].mxu0 %v259
    %v407 = vpop.f32.mrb[0].mxu0
    %v408 = vadd.f32 %v86, %v407
    %v409 = vpop.f32.mrb[0].mxu0
    %v410 = vpop.f32.mrb[0].mxu0
    %v411 = vadd.f32 %v86, %v410
    %v412 = vpop.f32.mrb[0].mxu0
    %413 = vmatprep.mubr.bf16.mxu0 0
    %414 = vmatmul.mubr.bf16.gmra.mrb[0].mxu0 %v262
    %v415 = vpop.f32.mrb[0].mxu0
    %v416 = vadd.f32 %v86, %v415
    %v417 = vpop.f32.mrb[0].mxu0
    %v418 = vpop.f32.mrb[0].mxu0
    %v419 = vadd.f32 %v86, %v418
    %v420 = vpop.f32.mrb[0].mxu0
    %421 = vmatprep.mubr.bf16.mxu0 0
    %422 = vmatmul.mubr.bf16.gmra.mrb[0].mxu0 %v265
    %v423 = vpop.f32.mrb[0].mxu0
    %v424 = vadd.f32 %v86, %v423
    %v425 = vpop.f32.mrb[0].mxu0
    %v426 = vpop.f32.mrb[0].mxu0
    %v427 = vadd.f32 %v86, %v426
    %v428 = vpop.f32.mrb[0].mxu0
    %429 = vmatprep.mubr.bf16.mxu0 0
    %430 = vmatmul.mubr.bf16.gmra.mrb[0].mxu0 %v268
    %v431 = vpop.f32.mrb[0].mxu0
    %v432 = vadd.f32 %v86, %v431
    %v433 = vpop.f32.mrb[0].mxu0
    %v434 = vpop.f32.mrb[0].mxu0
    %v435 = vadd.f32 %v86, %v434
    %v436 = vpop.f32.mrb[0].mxu0
    %437 = vmatprep.mubr.bf16.mxu0 0
    %438 = vmatmul.mubr.bf16.gmra.mrb[0].mxu0 %v271
    %v439 = vpop.f32.mrb[0].mxu0
    %v440 = vadd.f32 %v86, %v439
    %v441 = vpop.f32.mrb[0].mxu0
    %v442 = vpop.f32.mrb[0].mxu0
    %v443 = vadd.f32 %v86, %v442
    %v444 = vpop.f32.mrb[0].mxu0
    %445 = vmatprep.mubr.bf16.mxu0 0
    %446 = vmatmul.mubr.bf16.gmra.mrb[0].mxu0 %v274
    %v447 = vpop.f32.mrb[0].mxu0
    %v448 = vadd.f32 %v86, %v447
    %v449 = vpop.f32.mrb[0].mxu0
    %v450 = vpop.f32.mrb[0].mxu0
    %v451 = vadd.f32 %v86, %v450
    %v452 = vpop.f32.mrb[0].mxu0
    %453 = vmatprep.mubr.bf16.mxu0 0
    %454 = vmatmul.mubr.bf16.gmra.mrb[0].mxu0 %v277
    %v455 = vpop.f32.mrb[0].mxu0
    %v456 = vadd.f32 %v86, %v455
    %v457 = vpop.f32.mrb[0].mxu0
    %v458 = vpop.f32.mrb[0].mxu0
    %v459 = vadd.f32 %v86, %v458
    %v460 = vpop.f32.mrb[0].mxu0
    %461 = vmatprep.mubr.bf16.mxu0 0
    %462 = vmatmul.mubr.bf16.gmra.mrb[0].mxu0 %v280
    %v463 = vpop.f32.mrb[0].mxu0
    %v464 = vadd.f32 %v86, %v463
    %v465 = vpop.f32.mrb[0].mxu0
    %v466 = vpop.f32.mrb[0].mxu0
    %v467 = vadd.f32 %v86, %v466
    %v468 = vpop.f32.mrb[0].mxu0
    %469 = vmatprep.mubr.bf16.mxu0 0
    %470 = vmatmul.mubr.bf16.gmra.mrb[0].mxu0 %v283
    %v471 = vpop.f32.mrb[0].mxu0
    %v472 = vadd.f32 %v86, %v471
    %v473 = vpop.f32.mrb[0].mxu0
    %v474 = vpop.f32.mrb[0].mxu0
    %v475 = vadd.f32 %v86, %v474
    %v476 = vpop.f32.mrb[0].mxu0
    %477 = vmatprep.mubr.bf16.mxu0 0
    %478 = vmatmul.mubr.bf16.gmra.mrb[0].mxu0 %v286
    %v479 = vpop.f32.mrb[0].mxu0
    %v480 = vadd.f32 %v86, %v479
    %v481 = vpop.f32.mrb[0].mxu0
    %v482 = vpop.f32.mrb[0].mxu0
    %v483 = vadd.f32 %v86, %v482
    %v484 = vpop.f32.mrb[0].mxu0
    %485 = vmatprep.mubr.bf16.mxu0 0
    %486 = vmatmul.mubr.bf16.gmra.mrb[0].mxu0 %v289
    %v487 = vpop.f32.mrb[0].mxu0
    %v488 = vadd.f32 %v86, %v487
    %v489 = vpop.f32.mrb[0].mxu0
    %v490 = vpop.f32.mrb[0].mxu0
    %v491 = vadd.f32 %v86, %v490
    %v492 = vpop.f32.mrb[0].mxu0
    %493 = vmatprep.mubr.bf16.mxu0 0
    %494 = vmatmul.mubr.bf16.gmra.mrb[0].mxu0 %v292
    %v495 = vpop.f32.mrb[0].mxu0
    %v496 = vadd.f32 %v86, %v495
    %v497 = vpop.f32.mrb[0].mxu0
    %v498 = vpop.f32.mrb[0].mxu0
    %v499 = vadd.f32 %v86, %v498
    %v500 = vpop.f32.mrb[0].mxu0
    %501 = vmatprep.mubr.bf16.mxu0 0
    %502 = vmatmul.mubr.bf16.gmra.mrb[0].mxu0 %v295
    %v503 = vpop.f32.mrb[0].mxu0
    %v504 = vadd.f32 %v86, %v503
    %v505 = vpop.f32.mrb[0].mxu0
    %v506 = vpop.f32.mrb[0].mxu0
    %v507 = vadd.f32 %v86, %v506
    %v508 = vpop.f32.mrb[0].mxu0
    %509 = vmatprep.mubr.bf16.mxu0 0
    %510 = vmatmul.mubr.bf16.gmra.mrb[0].mxu0 %v298
    %v511 = vpop.f32.mrb[0].mxu0
    %v512 = vadd.f32 %v86, %v511
    %v513 = vpop.f32.mrb[0].mxu0
    %v514 = vpop.f32.mrb[0].mxu0
    %v515 = vadd.f32 %v86, %v514
    %v516 = vpop.f32.mrb[0].mxu0
    %517 = vmatprep.mubr.bf16.mxu0 0
    %518 = vmatmul.mubr.bf16.gmra.mrb[0].mxu0 %v301
    %v519 = vpop.f32.mrb[0].mxu0
    %v520 = vadd.f32 %v86, %v519
    %v521 = vpop.f32.mrb[0].mxu0
    %v522 = vpop.f32.mrb[0].mxu0
    %v523 = vadd.f32 %v86, %v522
    %v524 = vpop.f32.mrb[0].mxu0
    %525 = vmatprep.mubr.bf16.mxu0 0
    %526 = vmatmul.mubr.bf16.gmra.mrb[0].mxu0 %v304
    %v527 = vpop.f32.mrb[0].mxu0
    %v528 = vadd.f32 %v86, %v527
    %v529 = vpop.f32.mrb[0].mxu0
    %v530 = vpop.f32.mrb[0].mxu0
    %v531 = vadd.f32 %v86, %v530
    %v532 = vpop.f32.mrb[0].mxu0
    %533 = vmatprep.mubr.bf16.mxu0 0
    %534 = vmatmul.mubr.bf16.gmra.mrb[0].mxu0 %v307
    %v535 = vpop.f32.mrb[0].mxu0
    %v536 = vadd.f32 %v86, %v535
    %v537 = vpop.f32.mrb[0].mxu0
    %v538 = vpop.f32.mrb[0].mxu0
    %v539 = vadd.f32 %v86, %v538
    %v540 = vpop.f32.mrb[0].mxu0
    %541 = vmatprep.mubr.bf16.mxu0 0
    %542 = vmatmul.mubr.bf16.gmra.mrb[0].mxu0 %v310
    %v543 = vpop.f32.mrb[0].mxu0
    %v544 = vadd.f32 %v86, %v543
    %v545 = vpop.f32.mrb[0].mxu0
    %v546 = vpop.f32.mrb[0].mxu0
    %v547 = vadd.f32 %v86, %v546
    %v548 = vpop.f32.mrb[0].mxu0
    %549 = vmatprep.mubr.bf16.mxu0 0
    %550 = vmatmul.mubr.bf16.gmra.mrb[0].mxu0 %v313
    %v551 = vpop.f32.mrb[0].mxu0
    %v552 = vadd.f32 %v86, %v551
    %v553 = vpop.f32.mrb[0].mxu0
    %v554 = vpop.f32.mrb[0].mxu0
    %v555 = vadd.f32 %v86, %v554
    %v556 = vpop.f32.mrb[0].mxu0
    %557 = vmatprep.mubr.bf16.mxu0 0
    %558 = vmatmul.mubr.bf16.gmra.mrb[0].mxu0 %v316
    %v559 = vpop.f32.mrb[0].mxu0
    %v560 = vadd.f32 %v86, %v559
    %v561 = vpop.f32.mrb[0].mxu0
    %v562 = vpop.f32.mrb[0].mxu0
    %v563 = vadd.f32 %v86, %v562
    %v564 = vpop.f32.mrb[0].mxu0
    %565 = vmatprep.mubr.bf16.mxu0 0
    %566 = vmatmul.mubr.bf16.gmra.mrb[0].mxu0 %v319
    %v567 = vpop.f32.mrb[0].mxu0
    %v568 = vadd.f32 %v86, %v567
    %v569 = vpop.f32.mrb[0].mxu0
    %v570 = vpop.f32.mrb[0].mxu0
    %v571 = vadd.f32 %v86, %v570
    %v572 = vpop.f32.mrb[0].mxu0
    %573 = vmatprep.mubr.bf16.mxu0 0
    %574 = vmatmul.mubr.bf16.gmra.mrb[0].mxu0 %v322
    %v575 = vpop.f32.mrb[0].mxu0
    %v576 = vadd.f32 %v86, %v575
    %v577 = vpop.f32.mrb[0].mxu0
    %v578 = vpop.f32.mrb[0].mxu0
    %v579 = vadd.f32 %v86, %v578
    %v580 = vpop.f32.mrb[0].mxu0
    %581 = vmatprep.mubr.bf16.mxu0 0
    %582 = vmatmul.mubr.bf16.gmra.mrb[0].mxu0 %v325
    %v583 = vpop.f32.mrb[0].mxu0
    %v584 = vadd.f32 %v86, %v583
    %v585 = vpop.f32.mrb[0].mxu0
    %v586 = vpop.f32.mrb[0].mxu0
    %v587 = vadd.f32 %v86, %v586
    %v588 = vpop.f32.mrb[0].mxu0
    %589 = vmatprep.mubr.bf16.mxu0 0
    %590 = vmatmul.mubr.bf16.gmra.mrb[0].mxu0 %v328
    %v591 = vpop.f32.mrb[0].mxu0
    %v592 = vadd.f32 %v86, %v591
    %v593 = vpop.f32.mrb[0].mxu0
    %v594 = vpop.f32.mrb[0].mxu0
    %v595 = vadd.f32 %v86, %v594
    %v596 = vpop.f32.mrb[0].mxu0
    %597 = vmatprep.mubr.bf16.mxu0 0
    %598 = vmatmul.mubr.bf16.gmra.mrb[0].mxu0 %v331
    %v599 = vpop.f32.mrb[0].mxu0
    %v600 = vadd.f32 %v86, %v599
    %v601 = vpop.f32.mrb[0].mxu0
    %v602 = vpop.f32.mrb[0].mxu0
    %v603 = vadd.f32 %v86, %v602
    %v604 = vpop.f32.mrb[0].mxu0
    %605 = vmatprep.mubr.bf16.mxu0 0
    %606 = vmatmul.mubr.bf16.gmra.mrb[0].mxu0 %v334
    %v607 = vpop.f32.mrb[0].mxu0
    %v608 = vadd.f32 %v86, %v607
    %v609 = vpop.f32.mrb[0].mxu0
    %v610 = vpop.f32.mrb[0].mxu0
    %v611 = vadd.f32 %v86, %v610
    %v612 = vpop.f32.mrb[0].mxu0
    %613 = vmatprep.mubr.bf16.mxu0 0
    %614 = vmatmul.mubr.bf16.gmra.mrb[0].mxu0 %v337
    %v615 = vpop.f32.mrb[0].mxu0
    %v616 = vadd.f32 %v86, %v615
    %v617 = vpop.f32.mrb[0].mxu0
    %v618 = vpop.f32.mrb[0].mxu0
    %v619 = vadd.f32 %v86, %v618
    %v620 = vpop.f32.mrb[0].mxu0
    %621 = vmatprep.mubr.bf16.mxu0 0
    %622 = vmatmul.mubr.bf16.gmra.mrb[0].mxu0 %v340
    %v623 = vpop.f32.mrb[0].mxu0
    %v624 = vadd.f32 %v86, %v623
    %v625 = vpop.f32.mrb[0].mxu0
    %v626 = vpop.f32.mrb[0].mxu0
    %v627 = vadd.f32 %v86, %v626
    %v628 = vpop.f32.mrb[0].mxu0
    %629 = vmatprep.mubr.bf16.mxu0 0
    %630 = vmatmul.mubr.bf16.gmra.mrb[0].mxu0 %v343
    %v631 = vpop.f32.mrb[0].mxu0
    %v632 = vadd.f32 %v86, %v631
    %v633 = vpop.f32.mrb[0].mxu0
    %v634 = vpop.f32.mrb[0].mxu0
    %v635 = vadd.f32 %v86, %v634
    %v636 = vpop.f32.mrb[0].mxu0
    %637 = vdwg.mxu0
    %v638 = vsub.f32 0.0, %v384
    %v639 = vsub.f32 0.0, %v387
    %v640 = vsub.f32 0.0, %v392
    %v641 = vsub.f32 0.0, %v395
    %v642 = vsub.f32 0.0, %v400
    %v643 = vsub.f32 0.0, %v403
    %v644 = vsub.f32 0.0, %v408
    %v645 = vsub.f32 0.0, %v411
    %v646 = vsub.f32 0.0, %v416
    %v647 = vsub.f32 0.0, %v419
    %v648 = vsub.f32 0.0, %v424
    %v649 = vsub.f32 0.0, %v427
    %v650 = vsub.f32 0.0, %v432
    %v651 = vsub.f32 0.0, %v435
    %v652 = vsub.f32 0.0, %v440
    %v653 = vsub.f32 0.0, %v443
    %v654 = vsub.f32 0.0, %v448
    %v655 = vsub.f32 0.0, %v451
    %v656 = vsub.f32 0.0, %v456
    %v657 = vsub.f32 0.0, %v459
    %v658 = vsub.f32 0.0, %v464
    %v659 = vsub.f32 0.0, %v467
    %v660 = vsub.f32 0.0, %v472
    %v661 = vsub.f32 0.0, %v475
    %v662 = vsub.f32 0.0, %v480
    %v663 = vsub.f32 0.0, %v483
    %v664 = vsub.f32 0.0, %v488
    %v665 = vsub.f32 0.0, %v491
    %v666 = vsub.f32 0.0, %v496
    %v667 = vsub.f32 0.0, %v499
    %v668 = vsub.f32 0.0, %v504
    %v669 = vsub.f32 0.0, %v507
    %v670 = vsub.f32 0.0, %v512
    %v671 = vsub.f32 0.0, %v515
    %v672 = vsub.f32 0.0, %v520
    %v673 = vsub.f32 0.0, %v523
    %v674 = vsub.f32 0.0, %v528
    %v675 = vsub.f32 0.0, %v531
    %v676 = vsub.f32 0.0, %v536
    %v677 = vsub.f32 0.0, %v539
    %v678 = vsub.f32 0.0, %v544
    %v679 = vsub.f32 0.0, %v547
    %v680 = vsub.f32 0.0, %v552
    %v681 = vsub.f32 0.0, %v555
    %v682 = vsub.f32 0.0, %v560
    %v683 = vsub.f32 0.0, %v563
    %v684 = vsub.f32 0.0, %v568
    %v685 = vsub.f32 0.0, %v571
    %v686 = vsub.f32 0.0, %v576
    %v687 = vsub.f32 0.0, %v579
    %v688 = vsub.f32 0.0, %v584
    %v689 = vsub.f32 0.0, %v587
    %v690 = vsub.f32 0.0, %v592
    %v691 = vsub.f32 0.0, %v595
    %v692 = vsub.f32 0.0, %v600
    %v693 = vsub.f32 0.0, %v603
    %v694 = vsub.f32 0.0, %v608
    %v695 = vsub.f32 0.0, %v611
    %v696 = vsub.f32 0.0, %v616
    %v697 = vsub.f32 0.0, %v619
    %v698 = vsub.f32 0.0, %v624
    %v699 = vsub.f32 0.0, %v627
    %v700 = vsub.f32 0.0, %v632
    %v701 = vsub.f32 0.0, %v635
    %v702 = vmul.f32 %v638, 1.442695
    %v703 = vpow.pop %v702
    %v704 = vmul.f32 %v639, 1.442695
    %v705 = vpow.pop %v704
    %v706 = vmul.f32 %v640, 1.442695
    %v707 = vpow.pop %v706
    %v708 = vmul.f32 %v641, 1.442695
    %v709 = vpow.pop %v708
    %v710 = vmul.f32 %v642, 1.442695
    %v711 = vpow.pop %v710
    %v712 = vmul.f32 %v643, 1.442695
    %v713 = vpow.pop %v712
    %v714 = vmul.f32 %v644, 1.442695
    %v715 = vpow.pop %v714
    %v716 = vmul.f32 %v645, 1.442695
    %v717 = vpow.pop %v716
    %v718 = vmul.f32 %v646, 1.442695
    %v719 = vpow.pop %v718
    %v720 = vmul.f32 %v647, 1.442695
    %v721 = vpow.pop %v720
    %v722 = vmul.f32 %v648, 1.442695
    %v723 = vpow.pop %v722
    %v724 = vmul.f32 %v649, 1.442695
    %v725 = vpow.pop %v724
    %v726 = vmul.f32 %v650, 1.442695
    %v727 = vpow.pop %v726
    %v728 = vmul.f32 %v651, 1.442695
    %v729 = vpow.pop %v728
    %v730 = vmul.f32 %v652, 1.442695
    %v731 = vpow.pop %v730
    %v732 = vmul.f32 %v653, 1.442695
    %v733 = vpow.pop %v732
    %v734 = vmul.f32 %v654, 1.442695
    %v735 = vpow.pop %v734
    %v736 = vmul.f32 %v655, 1.442695
    %v737 = vpow.pop %v736
    %v738 = vmul.f32 %v656, 1.442695
    %v739 = vpow.pop %v738
    %v740 = vmul.f32 %v657, 1.442695
    %v741 = vpow.pop %v740
    %v742 = vmul.f32 %v658, 1.442695
    %v743 = vpow.pop %v742
    %v744 = vmul.f32 %v659, 1.442695
    %v745 = vpow.pop %v744
    %v746 = vmul.f32 %v660, 1.442695
    %v747 = vpow.pop %v746
    %v748 = vmul.f32 %v661, 1.442695
    %v749 = vpow.pop %v748
    %v750 = vmul.f32 %v662, 1.442695
    %v751 = vpow.pop %v750
    %v752 = vmul.f32 %v663, 1.442695
    %v753 = vpow.pop %v752
    %v754 = vmul.f32 %v664, 1.442695
    %v755 = vpow.pop %v754
    %v756 = vmul.f32 %v665, 1.442695
    %v757 = vpow.pop %v756
    %v758 = vmul.f32 %v666, 1.442695
    %v759 = vpow.pop %v758
    %v760 = vmul.f32 %v667, 1.442695
    %v761 = vpow.pop %v760
    %v762 = vmul.f32 %v668, 1.442695
    %v763 = vpow.pop %v762
    %v764 = vmul.f32 %v669, 1.442695
    %v765 = vpow.pop %v764
    %v766 = vmul.f32 %v670, 1.442695
    %v767 = vpow.pop %v766
    %v768 = vmul.f32 %v671, 1.442695
    %v769 = vpow.pop %v768
    %v770 = vmul.f32 %v672, 1.442695
    %v771 = vpow.pop %v770
    %v772 = vmul.f32 %v673, 1.442695
    %v773 = vpow.pop %v772
    %v774 = vmul.f32 %v674, 1.442695
    %v775 = vpow.pop %v774
    %v776 = vmul.f32 %v675, 1.442695
    %v777 = vpow.pop %v776
    %v778 = vmul.f32 %v676, 1.442695
    %v779 = vpow.pop %v778
    %v780 = vmul.f32 %v677, 1.442695
    %v781 = vpow.pop %v780
    %v782 = vmul.f32 %v678, 1.442695
    %v783 = vpow.pop %v782
    %v784 = vmul.f32 %v679, 1.442695
    %v785 = vpow.pop %v784
    %v786 = vmul.f32 %v680, 1.442695
    %v787 = vpow.pop %v786
    %v788 = vmul.f32 %v681, 1.442695
    %v789 = vpow.pop %v788
    %v790 = vmul.f32 %v682, 1.442695
    %v791 = vpow.pop %v790
    %v792 = vmul.f32 %v683, 1.442695
    %v793 = vpow.pop %v792
    %v794 = vmul.f32 %v684, 1.442695
    %v795 = vpow.pop %v794
    %v796 = vmul.f32 %v685, 1.442695
    %v797 = vpow.pop %v796
    %v798 = vmul.f32 %v686, 1.442695
    %v799 = vpow.pop %v798
    %v800 = vmul.f32 %v687, 1.442695
    %v801 = vpow.pop %v800
    %v802 = vmul.f32 %v688, 1.442695
    %v803 = vpow.pop %v802
    %v804 = vmul.f32 %v689, 1.442695
    %v805 = vpow.pop %v804
    %v806 = vmul.f32 %v690, 1.442695
    %v807 = vpow.pop %v806
    %v808 = vmul.f32 %v691, 1.442695
    %v809 = vpow.pop %v808
    %v810 = vmul.f32 %v692, 1.442695
    %v811 = vpow.pop %v810
    %v812 = vmul.f32 %v693, 1.442695
    %v813 = vpow.pop %v812
    %v814 = vmul.f32 %v694, 1.442695
    %v815 = vpow.pop %v814
    %v816 = vmul.f32 %v695, 1.442695
    %v817 = vpow.pop %v816
    %v818 = vmul.f32 %v696, 1.442695
    %v819 = vpow.pop %v818
    %v820 = vmul.f32 %v697, 1.442695
    %v821 = vpow.pop %v820
    %v822 = vmul.f32 %v698, 1.442695
    %v823 = vpow.pop %v822
    %v824 = vmul.f32 %v699, 1.442695
    %v825 = vpow.pop %v824
    %v826 = vmul.f32 %v700, 1.442695
    %v827 = vpow.pop %v826
    %v828 = vmul.f32 %v701, 1.442695
    %v829 = vpow.pop %v828
    %v830 = vadd.f32 %v703, 1.0
    %v831 = vadd.f32 %v705, 1.0
    %v832 = vadd.f32 %v707, 1.0
    %v833 = vadd.f32 %v709, 1.0
    %v834 = vadd.f32 %v711, 1.0
    %v835 = vadd.f32 %v713, 1.0
    %v836 = vadd.f32 %v715, 1.0
    %v837 = vadd.f32 %v717, 1.0
    %v838 = vadd.f32 %v719, 1.0
    %v839 = vadd.f32 %v721, 1.0
    %v840 = vadd.f32 %v723, 1.0
    %v841 = vadd.f32 %v725, 1.0
    %v842 = vadd.f32 %v727, 1.0
    %v843 = vadd.f32 %v729, 1.0
    %v844 = vadd.f32 %v731, 1.0
    %v845 = vadd.f32 %v733, 1.0
    %v846 = vadd.f32 %v735, 1.0
    %v847 = vadd.f32 %v737, 1.0
    %v848 = vadd.f32 %v739, 1.0
    %v849 = vadd.f32 %v741, 1.0
    %v850 = vadd.f32 %v743, 1.0
    %v851 = vadd.f32 %v745, 1.0
    %v852 = vadd.f32 %v747, 1.0
    %v853 = vadd.f32 %v749, 1.0
    %v854 = vadd.f32 %v751, 1.0
    %v855 = vadd.f32 %v753, 1.0
    %v856 = vadd.f32 %v755, 1.0
    %v857 = vadd.f32 %v757, 1.0
    %v858 = vadd.f32 %v759, 1.0
    %v859 = vadd.f32 %v761, 1.0
    %v860 = vadd.f32 %v763, 1.0
    %v861 = vadd.f32 %v765, 1.0
    %v862 = vadd.f32 %v767, 1.0
    %v863 = vadd.f32 %v769, 1.0
    %v864 = vadd.f32 %v771, 1.0
    %v865 = vadd.f32 %v773, 1.0
    %v866 = vadd.f32 %v775, 1.0
    %v867 = vadd.f32 %v777, 1.0
    %v868 = vadd.f32 %v779, 1.0
    %v869 = vadd.f32 %v781, 1.0
    %v870 = vadd.f32 %v783, 1.0
    %v871 = vadd.f32 %v785, 1.0
    %v872 = vadd.f32 %v787, 1.0
    %v873 = vadd.f32 %v789, 1.0
    %v874 = vadd.f32 %v791, 1.0
    %v875 = vadd.f32 %v793, 1.0
    %v876 = vadd.f32 %v795, 1.0
    %v877 = vadd.f32 %v797, 1.0
    %v878 = vadd.f32 %v799, 1.0
    %v879 = vadd.f32 %v801, 1.0
    %v880 = vadd.f32 %v803, 1.0
    %v881 = vadd.f32 %v805, 1.0
    %v882 = vadd.f32 %v807, 1.0
    %v883 = vadd.f32 %v809, 1.0
    %v884 = vadd.f32 %v811, 1.0
    %v885 = vadd.f32 %v813, 1.0
    %v886 = vadd.f32 %v815, 1.0
    %v887 = vadd.f32 %v817, 1.0
    %v888 = vadd.f32 %v819, 1.0
    %v889 = vadd.f32 %v821, 1.0
    %v890 = vadd.f32 %v823, 1.0
    %v891 = vadd.f32 %v825, 1.0
    %v892 = vadd.f32 %v827, 1.0
    %v893 = vadd.f32 %v829, 1.0
    %v894 = vrcp.pop %v830
    %v895 = vrcp.pop %v831
    %v896 = vrcp.pop %v832
    %v897 = vrcp.pop %v833
    %v898 = vrcp.pop %v834
    %v899 = vrcp.pop %v835
    %v900 = vrcp.pop %v836
    %v901 = vrcp.pop %v837
    %v902 = vrcp.pop %v838
    %v903 = vrcp.pop %v839
    %v904 = vrcp.pop %v840
    %v905 = vrcp.pop %v841
    %v906 = vrcp.pop %v842
    %v907 = vrcp.pop %v843
    %v908 = vrcp.pop %v844
    %v909 = vrcp.pop %v845
    %v910 = vrcp.pop %v846
    %v911 = vrcp.pop %v847
    %v912 = vrcp.pop %v848
    %v913 = vrcp.pop %v849
    %v914 = vrcp.pop %v850
    %v915 = vrcp.pop %v851
    %v916 = vrcp.pop %v852
    %v917 = vrcp.pop %v853
    %v918 = vrcp.pop %v854
    %v919 = vrcp.pop %v855
    %v920 = vrcp.pop %v856
    %v921 = vrcp.pop %v857
    %v922 = vrcp.pop %v858
    %v923 = vrcp.pop %v859
    %v924 = vrcp.pop %v860
    %v925 = vrcp.pop %v861
    %v926 = vrcp.pop %v862
    %v927 = vrcp.pop %v863
    %v928 = vrcp.pop %v864
    %v929 = vrcp.pop %v865
    %v930 = vrcp.pop %v866
    %v931 = vrcp.pop %v867
    %v932 = vrcp.pop %v868
    %v933 = vrcp.pop %v869
    %v934 = vrcp.pop %v870
    %v935 = vrcp.pop %v871
    %v936 = vrcp.pop %v872
    %v937 = vrcp.pop %v873
    %v938 = vrcp.pop %v874
    %v939 = vrcp.pop %v875
    %v940 = vrcp.pop %v876
    %v941 = vrcp.pop %v877
    %v942 = vrcp.pop %v878
    %v943 = vrcp.pop %v879
    %v944 = vrcp.pop %v880
    %v945 = vrcp.pop %v881
    %v946 = vrcp.pop %v882
    %v947 = vrcp.pop %v883
    %v948 = vrcp.pop %v884
    %v949 = vrcp.pop %v885
    %v950 = vrcp.pop %v886
    %v951 = vrcp.pop %v887
    %v952 = vrcp.pop %v888
    %v953 = vrcp.pop %v889
    %v954 = vrcp.pop %v890
    %v955 = vrcp.pop %v891
    %v956 = vrcp.pop %v892
    %v957 = vrcp.pop %v893
    %v958 = vmul.f32 %v384, %v894
    %v959 = vmul.f32 %v387, %v895
    %v960 = vmul.f32 %v392, %v896
    %v961 = vmul.f32 %v395, %v897
    %v962 = vmul.f32 %v400, %v898
    %v963 = vmul.f32 %v403, %v899
    %v964 = vmul.f32 %v408, %v900
    %v965 = vmul.f32 %v411, %v901
    %v966 = vmul.f32 %v416, %v902
    %v967 = vmul.f32 %v419, %v903
    %v968 = vmul.f32 %v424, %v904
    %v969 = vmul.f32 %v427, %v905
    %v970 = vmul.f32 %v432, %v906
    %v971 = vmul.f32 %v435, %v907
    %v972 = vmul.f32 %v440, %v908
    %v973 = vmul.f32 %v443, %v909
    %v974 = vmul.f32 %v448, %v910
    %v975 = vmul.f32 %v451, %v911
    %v976 = vmul.f32 %v456, %v912
    %v977 = vmul.f32 %v459, %v913
    %v978 = vmul.f32 %v464, %v914
    %v979 = vmul.f32 %v467, %v915
    %v980 = vmul.f32 %v472, %v916
    %v981 = vmul.f32 %v475, %v917
    %v982 = vmul.f32 %v480, %v918
    %v983 = vmul.f32 %v483, %v919
    %v984 = vmul.f32 %v488, %v920
    %v985 = vmul.f32 %v491, %v921
    %v986 = vmul.f32 %v496, %v922
    %v987 = vmul.f32 %v499, %v923
    %v988 = vmul.f32 %v504, %v924
    %v989 = vmul.f32 %v507, %v925
    %v990 = vmul.f32 %v512, %v926
    %v991 = vmul.f32 %v515, %v927
    %v992 = vmul.f32 %v520, %v928
    %v993 = vmul.f32 %v523, %v929
    %v994 = vmul.f32 %v528, %v930
    %v995 = vmul.f32 %v531, %v931
    %v996 = vmul.f32 %v536, %v932
    %v997 = vmul.f32 %v539, %v933
    %v998 = vmul.f32 %v544, %v934
    %v999 = vmul.f32 %v547, %v935
    %v1000 = vmul.f32 %v552, %v936
    %v1001 = vmul.f32 %v555, %v937
    %v1002 = vmul.f32 %v560, %v938
    %v1003 = vmul.f32 %v563, %v939
    %v1004 = vmul.f32 %v568, %v940
    %v1005 = vmul.f32 %v571, %v941
    %v1006 = vmul.f32 %v576, %v942
    %v1007 = vmul.f32 %v579, %v943
    %v1008 = vmul.f32 %v584, %v944
    %v1009 = vmul.f32 %v587, %v945
    %v1010 = vmul.f32 %v592, %v946
    %v1011 = vmul.f32 %v595, %v947
    %v1012 = vmul.f32 %v600, %v948
    %v1013 = vmul.f32 %v603, %v949
    %v1014 = vmul.f32 %v608, %v950
    %v1015 = vmul.f32 %v611, %v951
    %v1016 = vmul.f32 %v616, %v952
    %v1017 = vmul.f32 %v619, %v953
    %v1018 = vmul.f32 %v624, %v954
    %v1019 = vmul.f32 %v627, %v955
    %v1020 = vmul.f32 %v632, %v956
    %v1021 = vmul.f32 %v635, %v957
    %v1022 = vpack.c.bf16 %v959, %v958
    %v1023 = vpack.c.bf16 %v961, %v960
    %v1024 = vpack.c.bf16 %v963, %v962
    %v1025 = vpack.c.bf16 %v965, %v964
    %v1026 = vpack.c.bf16 %v967, %v966
    %v1027 = vpack.c.bf16 %v969, %v968
    %v1028 = vpack.c.bf16 %v971, %v970
    %v1029 = vpack.c.bf16 %v973, %v972
    %v1030 = vpack.c.bf16 %v975, %v974
    %v1031 = vpack.c.bf16 %v977, %v976
    %v1032 = vpack.c.bf16 %v979, %v978
    %v1033 = vpack.c.bf16 %v981, %v980
    %v1034 = vpack.c.bf16 %v983, %v982
    %v1035 = vpack.c.bf16 %v985, %v984
    %v1036 = vpack.c.bf16 %v987, %v986
    %v1037 = vpack.c.bf16 %v989, %v988
    %v1038 = vpack.c.bf16 %v991, %v990
    %v1039 = vpack.c.bf16 %v993, %v992
    %v1040 = vpack.c.bf16 %v995, %v994
    %v1041 = vpack.c.bf16 %v997, %v996
    %v1042 = vpack.c.bf16 %v999, %v998
    %v1043 = vpack.c.bf16 %v1001, %v1000
    %v1044 = vpack.c.bf16 %v1003, %v1002
    %v1045 = vpack.c.bf16 %v1005, %v1004
    %v1046 = vpack.c.bf16 %v1007, %v1006
    %v1047 = vpack.c.bf16 %v1009, %v1008
    %v1048 = vpack.c.bf16 %v1011, %v1010
    %v1049 = vpack.c.bf16 %v1013, %v1012
    %v1050 = vpack.c.bf16 %v1015, %v1014
    %v1051 = vpack.c.bf16 %v1017, %v1016
    %v1052 = vpack.c.bf16 %v1019, %v1018
    %v1053 = vpack.c.bf16 %v1021, %v1020
    %v1086 = vunpack.c.l.b16 %v1022
    %v1087 = vunpack.c.h.b16 %v1022
    %v1088 = vunpack.c.l.b16 %v1023
    %v1089 = vunpack.c.h.b16 %v1023
    %v1090 = vunpack.c.l.b16 %v1024
    %v1091 = vunpack.c.h.b16 %v1024
    %v1092 = vunpack.c.l.b16 %v1025
    %v1093 = vunpack.c.h.b16 %v1025
    %v1094 = vunpack.c.l.b16 %v1026
    %v1095 = vunpack.c.h.b16 %v1026
    %v1096 = vunpack.c.l.b16 %v1027
    %v1097 = vunpack.c.h.b16 %v1027
    %v1098 = vunpack.c.l.b16 %v1028
    %v1099 = vunpack.c.h.b16 %v1028
    %v1100 = vunpack.c.l.b16 %v1029
    %v1101 = vunpack.c.h.b16 %v1029
    %v1102 = vunpack.c.l.b16 %v1030
    %v1103 = vunpack.c.h.b16 %v1030
    %v1104 = vunpack.c.l.b16 %v1031
    %v1105 = vunpack.c.h.b16 %v1031
    %v1106 = vunpack.c.l.b16 %v1032
    %v1107 = vunpack.c.h.b16 %v1032
    %v1108 = vunpack.c.l.b16 %v1033
    %v1109 = vunpack.c.h.b16 %v1033
    %v1110 = vunpack.c.l.b16 %v1034
    %v1111 = vunpack.c.h.b16 %v1034
    %v1112 = vunpack.c.l.b16 %v1035
    %v1113 = vunpack.c.h.b16 %v1035
    %v1114 = vunpack.c.l.b16 %v1036
    %v1115 = vunpack.c.h.b16 %v1036
    %v1116 = vunpack.c.l.b16 %v1037
    %v1117 = vunpack.c.h.b16 %v1037
    %v1118 = vunpack.c.l.b16 %v1038
    %v1119 = vunpack.c.h.b16 %v1038
    %v1120 = vunpack.c.l.b16 %v1039
    %v1121 = vunpack.c.h.b16 %v1039
    %v1122 = vunpack.c.l.b16 %v1040
    %v1123 = vunpack.c.h.b16 %v1040
    %v1124 = vunpack.c.l.b16 %v1041
    %v1125 = vunpack.c.h.b16 %v1041
    %v1126 = vunpack.c.l.b16 %v1042
    %v1127 = vunpack.c.h.b16 %v1042
    %v1128 = vunpack.c.l.b16 %v1043
    %v1129 = vunpack.c.h.b16 %v1043
    %v1130 = vunpack.c.l.b16 %v1044
    %v1131 = vunpack.c.h.b16 %v1044
    %v1132 = vunpack.c.l.b16 %v1045
    %v1133 = vunpack.c.h.b16 %v1045
    %v1134 = vunpack.c.l.b16 %v1046
    %v1135 = vunpack.c.h.b16 %v1046
    %v1136 = vunpack.c.l.b16 %v1047
    %v1137 = vunpack.c.h.b16 %v1047
    %v1138 = vunpack.c.l.b16 %v1048
    %v1139 = vunpack.c.h.b16 %v1048
    %v1140 = vunpack.c.l.b16 %v1049
    %v1141 = vunpack.c.h.b16 %v1049
    %v1142 = vunpack.c.l.b16 %v1050
    %v1143 = vunpack.c.h.b16 %v1050
    %v1144 = vunpack.c.l.b16 %v1051
    %v1145 = vunpack.c.h.b16 %v1051
    %v1146 = vunpack.c.l.b16 %v1052
    %v1147 = vunpack.c.h.b16 %v1052
    %v1148 = vunpack.c.l.b16 %v1053
    %v1149 = vunpack.c.h.b16 %v1053
    %v1150 = vpack.c.b16 %v1086, %v1086
    %v1151 = vpack.c.b16 %v1087, %v1087
    %v1152 = vpack.c.b16 %v1088, %v1088
    %v1153 = vpack.c.b16 %v1089, %v1089
    %v1154 = vpack.c.b16 %v1090, %v1090
    %v1155 = vpack.c.b16 %v1091, %v1091
    %v1156 = vpack.c.b16 %v1092, %v1092
    %v1157 = vpack.c.b16 %v1093, %v1093
    %v1158 = vpack.c.b16 %v1094, %v1094
    %v1159 = vpack.c.b16 %v1095, %v1095
    %v1160 = vpack.c.b16 %v1096, %v1096
    %v1161 = vpack.c.b16 %v1097, %v1097
    %v1162 = vpack.c.b16 %v1098, %v1098
    %v1163 = vpack.c.b16 %v1099, %v1099
    %v1164 = vpack.c.b16 %v1100, %v1100
    %v1165 = vpack.c.b16 %v1101, %v1101
    %v1166 = vpack.c.b16 %v1102, %v1102
    %v1167 = vpack.c.b16 %v1103, %v1103
    %v1168 = vpack.c.b16 %v1104, %v1104
    %v1169 = vpack.c.b16 %v1105, %v1105
    %v1170 = vpack.c.b16 %v1106, %v1106
    %v1171 = vpack.c.b16 %v1107, %v1107
    %v1172 = vpack.c.b16 %v1108, %v1108
    %v1173 = vpack.c.b16 %v1109, %v1109
    %v1174 = vpack.c.b16 %v1110, %v1110
    %v1175 = vpack.c.b16 %v1111, %v1111
    %v1176 = vpack.c.b16 %v1112, %v1112
    %v1177 = vpack.c.b16 %v1113, %v1113
    %v1178 = vpack.c.b16 %v1114, %v1114
    %v1179 = vpack.c.b16 %v1115, %v1115
    %v1180 = vpack.c.b16 %v1116, %v1116
    %v1181 = vpack.c.b16 %v1117, %v1117
    %v1182 = vpack.c.b16 %v1118, %v1118
    %v1183 = vpack.c.b16 %v1119, %v1119
    %v1184 = vpack.c.b16 %v1120, %v1120
    %v1185 = vpack.c.b16 %v1121, %v1121
    %v1186 = vpack.c.b16 %v1122, %v1122
    %v1187 = vpack.c.b16 %v1123, %v1123
    %v1188 = vpack.c.b16 %v1124, %v1124
    %v1189 = vpack.c.b16 %v1125, %v1125
    %v1190 = vpack.c.b16 %v1126, %v1126
    %v1191 = vpack.c.b16 %v1127, %v1127
    %v1192 = vpack.c.b16 %v1128, %v1128
    %v1193 = vpack.c.b16 %v1129, %v1129
    %v1194 = vpack.c.b16 %v1130, %v1130
    %v1195 = vpack.c.b16 %v1131, %v1131
    %v1196 = vpack.c.b16 %v1132, %v1132
    %v1197 = vpack.c.b16 %v1133, %v1133
    %v1198 = vpack.c.b16 %v1134, %v1134
    %v1199 = vpack.c.b16 %v1135, %v1135
    %v1200 = vpack.c.b16 %v1136, %v1136
    %v1201 = vpack.c.b16 %v1137, %v1137
    %v1202 = vpack.c.b16 %v1138, %v1138
    %v1203 = vpack.c.b16 %v1139, %v1139
    %v1204 = vpack.c.b16 %v1140, %v1140
    %v1205 = vpack.c.b16 %v1141, %v1141
    %v1206 = vpack.c.b16 %v1142, %v1142
    %v1207 = vpack.c.b16 %v1143, %v1143
    %v1208 = vpack.c.b16 %v1144, %v1144
    %v1209 = vpack.c.b16 %v1145, %v1145
    %v1210 = vpack.c.b16 %v1146, %v1146
    %v1211 = vpack.c.b16 %v1147, %v1147
    %v1212 = vpack.c.b16 %v1148, %v1148
    %v1213 = vpack.c.b16 %v1149, %v1149
    %vm1278 = vcmask 60416
    %1279 = vst.msk [vmem:[#allocation2] sm:$0xf] %vm1278, %v1150
    %1280 = vst.msk [vmem:[#allocation2 + $0x4] sm:$0xf] %vm1278, %v1151
    %1281 = vst.msk [vmem:[#allocation2 + $0x8] sm:$0xf] %vm1278, %v1152
    %1282 = vst.msk [vmem:[#allocation2 + $0xc] sm:$0xf] %vm1278, %v1153
    %1283 = vst.msk [vmem:[#allocation2 + $0x10] sm:$0xf] %vm1278, %v1154
    %1284 = vst.msk [vmem:[#allocation2 + $0x14] sm:$0xf] %vm1278, %v1155
    %1285 = vst.msk [vmem:[#allocation2 + $0x18] sm:$0xf] %vm1278, %v1156
    %1286 = vst.msk [vmem:[#allocation2 + $0x1c] sm:$0xf] %vm1278, %v1157
    %1287 = vst.msk [vmem:[#allocation2 + $0x20] sm:$0xf] %vm1278, %v1158
    %1288 = vst.msk [vmem:[#allocation2 + $0x24] sm:$0xf] %vm1278, %v1159
    %1289 = vst.msk [vmem:[#allocation2 + $0x28] sm:$0xf] %vm1278, %v1160
    %1290 = vst.msk [vmem:[#allocation2 + $0x2c] sm:$0xf] %vm1278, %v1161
    %1291 = vst.msk [vmem:[#allocation2 + $0x30] sm:$0xf] %vm1278, %v1162
    %1292 = vst.msk [vmem:[#allocation2 + $0x34] sm:$0xf] %vm1278, %v1163
    %1293 = vst.msk [vmem:[#allocation2 + $0x38] sm:$0xf] %vm1278, %v1164
    %1294 = vst.msk [vmem:[#allocation2 + $0x3c] sm:$0xf] %vm1278, %v1165
    %1295 = vst.msk [vmem:[#allocation2 + $0x40] sm:$0xf] %vm1278, %v1166
    %1296 = vst.msk [vmem:[#allocation2 + $0x44] sm:$0xf] %vm1278, %v1167
    %1297 = vst.msk [vmem:[#allocation2 + $0x48] sm:$0xf] %vm1278, %v1168
    %1298 = vst.msk [vmem:[#allocation2 + $0x4c] sm:$0xf] %vm1278, %v1169
    %1299 = vst.msk [vmem:[#allocation2 + $0x50] sm:$0xf] %vm1278, %v1170
    %1300 = vst.msk [vmem:[#allocation2 + $0x54] sm:$0xf] %vm1278, %v1171
    %1301 = vst.msk [vmem:[#allocation2 + $0x58] sm:$0xf] %vm1278, %v1172
    %1302 = vst.msk [vmem:[#allocation2 + $0x5c] sm:$0xf] %vm1278, %v1173
    %1303 = vst.msk [vmem:[#allocation2 + $0x60] sm:$0xf] %vm1278, %v1174
    %1304 = vst.msk [vmem:[#allocation2 + $0x64] sm:$0xf] %vm1278, %v1175
    %1305 = vst.msk [vmem:[#allocation2 + $0x68] sm:$0xf] %vm1278, %v1176
    %1306 = vst.msk [vmem:[#allocation2 + $0x6c] sm:$0xf] %vm1278, %v1177
    %1307 = vst.msk [vmem:[#allocation2 + $0x70] sm:$0xf] %vm1278, %v1178
    %1308 = vst.msk [vmem:[#allocation2 + $0x74] sm:$0xf] %vm1278, %v1179
    %1309 = vst.msk [vmem:[#allocation2 + $0x78] sm:$0xf] %vm1278, %v1180
    %1310 = vst.msk [vmem:[#allocation2 + $0x7c] sm:$0xf] %vm1278, %v1181
    %1311 = vst.msk [vmem:[#allocation2 + $0x80] sm:$0xf] %vm1278, %v1182
    %1312 = vst.msk [vmem:[#allocation2 + $0x84] sm:$0xf] %vm1278, %v1183
    %1313 = vst.msk [vmem:[#allocation2 + $0x88] sm:$0xf] %vm1278, %v1184
    %1314 = vst.msk [vmem:[#allocation2 + $0x8c] sm:$0xf] %vm1278, %v1185
    %1315 = vst.msk [vmem:[#allocation2 + $0x90] sm:$0xf] %vm1278, %v1186
    %1316 = vst.msk [vmem:[#allocation2 + $0x94] sm:$0xf] %vm1278, %v1187
    %1317 = vst.msk [vmem:[#allocation2 + $0x98] sm:$0xf] %vm1278, %v1188
    %1318 = vst.msk [vmem:[#allocation2 + $0x9c] sm:$0xf] %vm1278, %v1189
    %1319 = vst.msk [vmem:[#allocation2 + $0xa0] sm:$0xf] %vm1278, %v1190
    %1320 = vst.msk [vmem:[#allocation2 + $0xa4] sm:$0xf] %vm1278, %v1191
    %1321 = vst.msk [vmem:[#allocation2 + $0xa8] sm:$0xf] %vm1278, %v1192
    %1322 = vst.msk [vmem:[#allocation2 + $0xac] sm:$0xf] %vm1278, %v1193
    %1323 = vst.msk [vmem:[#allocation2 + $0xb0] sm:$0xf] %vm1278, %v1194
    %1324 = vst.msk [vmem:[#allocation2 + $0xb4] sm:$0xf] %vm1278, %v1195
    %1325 = vst.msk [vmem:[#allocation2 + $0xb8] sm:$0xf] %vm1278, %v1196
    %1326 = vst.msk [vmem:[#allocation2 + $0xbc] sm:$0xf] %vm1278, %v1197
    %1327 = vst.msk [vmem:[#allocation2 + $0xc0] sm:$0xf] %vm1278, %v1198
    %1328 = vst.msk [vmem:[#allocation2 + $0xc4] sm:$0xf] %vm1278, %v1199
    %1329 = vst.msk [vmem:[#allocation2 + $0xc8] sm:$0xf] %vm1278, %v1200
    %1330 = vst.msk [vmem:[#allocation2 + $0xcc] sm:$0xf] %vm1278, %v1201
    %1331 = vst.msk [vmem:[#allocation2 + $0xd0] sm:$0xf] %vm1278, %v1202
    %1332 = vst.msk [vmem:[#allocation2 + $0xd4] sm:$0xf] %vm1278, %v1203
    %1333 = vst.msk [vmem:[#allocation2 + $0xd8] sm:$0xf] %vm1278, %v1204
    %1334 = vst.msk [vmem:[#allocation2 + $0xdc] sm:$0xf] %vm1278, %v1205
    %1335 = vst.msk [vmem:[#allocation2 + $0xe0] sm:$0xf] %vm1278, %v1206
    %1336 = vst.msk [vmem:[#allocation2 + $0xe4] sm:$0xf] %vm1278, %v1207
    %1337 = vst.msk [vmem:[#allocation2 + $0xe8] sm:$0xf] %vm1278, %v1208
    %1338 = vst.msk [vmem:[#allocation2 + $0xec] sm:$0xf] %vm1278, %v1209
    %1339 = vst.msk [vmem:[#allocation2 + $0xf0] sm:$0xf] %vm1278, %v1210
    %1340 = vst.msk [vmem:[#allocation2 + $0xf4] sm:$0xf] %vm1278, %v1211
    %1341 = vst.msk [vmem:[#allocation2 + $0xf8] sm:$0xf] %vm1278, %v1212
    %1342 = vst.msk [vmem:[#allocation2 + $0xfc] sm:$0xf] %vm1278, %v1213
    // Predicated region
    $region14: #{c2f_forward.3} parent=1 // pred_check
      _
    $region15: #{c2f_forward.3} parent=1 // pred_check_branch
      %1344 = sbr.rel (0) target = $region17
    $region16: #{c2f_forward.3} parent=1 // pred_region
      %s1346 = ssub.s32 4096, 4096
      %1347 = vsyncadd [#allocation3], %s1346
      %s1348 = sshll.u32 [#allocation2], 4
      %s1349 = int_to_ptr.vmem [resolvable:$true] %s1348
      %1354 = dma.vmem_to_hbm [thread:$0]  %s1349, 4096, %s3, [#allocation3], 64, 64, 4
    $region17: #{c2f_forward.3} parent=1 // pred_fallthru
      _
    // Predicated region
    $region18: #{c2f_forward.3} parent=1 // pred_check
      _
    $region19: #{c2f_forward.3} parent=1 // pred_check_branch
      %1356 = sbr.rel (0) target = $region21
    $region20: #{c2f_forward.3} parent=1 // pred_region
      %1357 = dma.done [#allocation3], 4096
    $region21: #{c2f_forward.3} parent=1 // pred_fallthru
      _
    %1358 = vsyncpa [#allocation3], 1

// kernel: c2f_forward.4
$region0: #{c2f_forward.4}
  #allocation0 [shape = 'u32[]', space=smem, size = 0x4, offset = 0x4, fixed_abs, tag = 'smem constant byte address 0x4 - core index']
  #allocation1 [shape = 'u32[144,128]{1,0:T(1,128)}', space=vmem, size = 0x12000, scoped, tag = 'internal scratch']
  #allocation2 [shape = 'bf16[18,18,4]{2,1,0:T(8,128)(2,1)}', space=vmem, size = 0x1b000, scoped, tag = 'scratch operand']
  %s0 = inlined_call_operand.hbm [shape: bf16[2,256,8], index: 0, kind: input, shape index: {}]
  %s1 = inlined_call_operand.hbm [shape: bf16[4,4], index: 1, kind: input, shape index: {}]
  %s2 = inlined_call_operand.hbm [shape: f32[1,4], index: 2, kind: input, shape index: {}]
  %s3 = inlined_call_operand.hbm [shape: bf16[36,4], index: 3, kind: input, shape index: {}]
  %s4 = inlined_call_operand.hbm [shape: f32[1,4], index: 4, kind: input, shape index: {}]
  %s5 = inlined_call_operand.hbm [shape: bf16[2,256,12], index: 5, kind: output, shape index: {}]
  %s6 = sld [smem:[#allocation0]]
  $region73: #{c2f_forward.4} parent=0
    _
  %s8 = ssub.s32 1, %s6
  %s9 = scalar_select 0, %s8, %s6
  $region1: #{c2f_forward.4} parent=0
    #allocation3 [shape = 'u8[131072]{0}', space=vmem, size = 0x20000, scoped, tag = 'input window, operand 0']
    #allocation4 [shape = 's32[2]{0}', space=sflag, size = 0x8, scoped, tag = 'scoped memory for c2f_forward.4']
    #allocation5 [shape = 's32[2]{0}', space=sflag, size = 0x8, scoped, tag = 'scoped memory for c2f_forward.4']
    #allocation6 [shape = 'u8[1024]{0}', space=vmem, size = 0x400, scoped, tag = 'input window, operand 1, single buffered']
    #allocation7 [shape = 's32[1]{0}', space=sflag, size = 0x4, scoped, tag = 'scoped memory for c2f_forward.4']
    #allocation8 [shape = 'u8[512]{0}', space=vmem, size = 0x400, scoped, tag = 'input window, operand 2, single buffered']
    #allocation9 [shape = 'u8[10240]{0}', space=vmem, size = 0x2800, scoped, tag = 'input window, operand 3, single buffered']
    #allocation10 [shape = 's32[1]{0}', space=sflag, size = 0x4, scoped, tag = 'scoped memory for c2f_forward.4']
    #allocation11 [shape = 'u8[512]{0}', space=vmem, size = 0x400, scoped, tag = 'input window, operand 4, single buffered']
    #allocation12 [shape = 'u8[131072]{0}', space=vmem, size = 0x20000, scoped, tag = 'output window, operand 0']
    %10 = vsyncpa [#allocation4], 0
    %s11 = scalar_lea.sflag [#allocation4], 1
    %12 = vsyncpa %s11, 0
    %13 = vsyncpa [#allocation7], 0
    %14 = vsyncpa [#allocation10], 0
    %15 = vsyncpa [#allocation5], 0
    %s16 = scalar_lea.sflag [#allocation5], 1
    %17 = vsyncpa %s16, 0
    loop: start=0, step=1, limit=4
    $region2: #{c2f_forward.4} parent=1 // loop_pre_header
      _
    $region3: #{c2f_forward.4} parent=1 // loop_header
      %s19 = sphi 0, %s23
      %p20 = scmp.ge.s32.totalorder %s19, 4
      %s29 = sphi 0, %s31
      %s32 = sphi 0, %s29
      %s33 = sphi 0, %s32
      %s49 = sphi 0, %s33
      %s53 = sphi 0, %s53
      %s55 = sphi 0, %s53
      %s56 = sphi 0, %s55
      %s70 = sphi 0, %s56
      %s74 = sphi 0, %s74
      %s76 = sphi 0, %s74
      %s77 = sphi 0, %s76
      %s91 = sphi 0, %s77
      %s95 = sphi 0, %s95
      %s97 = sphi 0, %s95
      %s98 = sphi 0, %s97
      %s112 = sphi 0, %s98
      %s116 = sphi 0, %s116
      %s118 = sphi 0, %s116
      %s119 = sphi 0, %s118
      %s133 = sphi 0, %s119
      %s139 = sphi 0, %s141
      %s142 = sphi 0, %s139
      %s143 = sphi 0, %s142
      %s159 = sphi 0, %s143
    $region4: #{c2f_forward.4} parent=1 // loop_header_branch
      %22 = sbr.rel (%p20) target = $region8
    $region5: #{c2f_forward.4} parent=1 // loop_body
      %s24 = ssub.s32 %s19, 1
      %s25 = ssub.s32 %s19, 2
      %s26 = sadd.s32 %s19, 1
      %s27 = ssub.s32 %s19, %s26
      %p28 = scmp.eq.s32.totalorder %s27, 0
      %s30 = sadd.s32 %s29, 1
      %s31 = scalar_select %p28, %s29, %s30
      %p34 = pneg %p28
      %p35 = scmp.eq.s32.totalorder %s19, 1
      %p36 = por %p34, %p35
      %p37 = scmp.ne.s32.totalorder %s29, %s32
      %p38 = scmp.eq.s32.totalorder %s19, 0
      %p39 = por %p37, %p38
      %p40 = scmp.ne.s32.totalorder %s29, %s32
      %p41 = scmp.eq.s32.totalorder %s24, 1
      %p42 = por %p40, %p41
      %p43 = scmp.ne.s32.totalorder %s32, %s33
      %p44 = scmp.eq.s32.totalorder %s24, 0
      %p45 = por %p43, %p44
      %p46 = scmp.ne.s32.totalorder %s32, %s33
      %p47 = scmp.eq.s32.totalorder %s25, 1
      %p48 = por %p46, %p47
      %p50 = scmp.ne.s32.totalorder %s33, %s49
      %p51 = scmp.eq.s32.totalorder %s25, 0
      %p52 = por %p50, %p51
      %s54 = sadd.s32 %s53, 1
      %p57 = scmp.eq.s32.totalorder %s19, 1
      %p58 = scmp.ne.s32.totalorder %s53, %s55
      %p59 = scmp.eq.s32.totalorder %s19, 0
      %p60 = por %p58, %p59
      %p61 = scmp.ne.s32.totalorder %s53, %s55
      %p62 = scmp.eq.s32.totalorder %s24, 1
      %p63 = por %p61, %p62
      %p64 = scmp.ne.s32.totalorder %s55, %s56
      %p65 = scmp.eq.s32.totalorder %s24, 0
      %p66 = por %p64, %p65
      %p67 = scmp.ne.s32.totalorder %s55, %s56
      %p68 = scmp.eq.s32.totalorder %s25, 1
      %p69 = por %p67, %p68
      %p71 = scmp.ne.s32.totalorder %s56, %s70
      %p72 = scmp.eq.s32.totalorder %s25, 0
      %p73 = por %p71, %p72
      %s75 = sadd.s32 %s74, 1
      %p78 = scmp.eq.s32.totalorder %s19, 1
      %p79 = scmp.ne.s32.totalorder %s74, %s76
      %p80 = scmp.eq.s32.totalorder %s19, 0
      %p81 = por %p79, %p80
      %p82 = scmp.ne.s32.totalorder %s74, %s76
      %p83 = scmp.eq.s32.totalorder %s24, 1
      %p84 = por %p82, %p83
      %p85 = scmp.ne.s32.totalorder %s76, %s77
      %p86 = scmp.eq.s32.totalorder %s24, 0
      %p87 = por %p85, %p86
      %p88 = scmp.ne.s32.totalorder %s76, %s77
      %p89 = scmp.eq.s32.totalorder %s25, 1
      %p90 = por %p88, %p89
      %p92 = scmp.ne.s32.totalorder %s77, %s91
      %p93 = scmp.eq.s32.totalorder %s25, 0
      %p94 = por %p92, %p93
      %s96 = sadd.s32 %s95, 1
      %p99 = scmp.eq.s32.totalorder %s19, 1
      %p100 = scmp.ne.s32.totalorder %s95, %s97
      %p101 = scmp.eq.s32.totalorder %s19, 0
      %p102 = por %p100, %p101
      %p103 = scmp.ne.s32.totalorder %s95, %s97
      %p104 = scmp.eq.s32.totalorder %s24, 1
      %p105 = por %p103, %p104
      %p106 = scmp.ne.s32.totalorder %s97, %s98
      %p107 = scmp.eq.s32.totalorder %s24, 0
      %p108 = por %p106, %p107
      %p109 = scmp.ne.s32.totalorder %s97, %s98
      %p110 = scmp.eq.s32.totalorder %s25, 1
      %p111 = por %p109, %p110
      %p113 = scmp.ne.s32.totalorder %s98, %s112
      %p114 = scmp.eq.s32.totalorder %s25, 0
      %p115 = por %p113, %p114
      %s117 = sadd.s32 %s116, 1
      %p120 = scmp.eq.s32.totalorder %s19, 1
      %p121 = scmp.ne.s32.totalorder %s116, %s118
      %p122 = scmp.eq.s32.totalorder %s19, 0
      %p123 = por %p121, %p122
      %p124 = scmp.ne.s32.totalorder %s116, %s118
      %p125 = scmp.eq.s32.totalorder %s24, 1
      %p126 = por %p124, %p125
      %p127 = scmp.ne.s32.totalorder %s118, %s119
      %p128 = scmp.eq.s32.totalorder %s24, 0
      %p129 = por %p127, %p128
      %p130 = scmp.ne.s32.totalorder %s118, %s119
      %p131 = scmp.eq.s32.totalorder %s25, 1
      %p132 = por %p130, %p131
      %p134 = scmp.ne.s32.totalorder %s119, %s133
      %p135 = scmp.eq.s32.totalorder %s25, 0
      %p136 = por %p134, %p135
      %s137 = ssub.s32 %s19, %s26
      %p138 = scmp.eq.s32.totalorder %s137, 0
      %s140 = sadd.s32 %s139, 1
      %s141 = scalar_select %p138, %s139, %s140
      %p144 = pneg %p138
      %p145 = scmp.eq.s32.totalorder %s19, 1
      %p146 = por %p144, %p145
      %p147 = scmp.ne.s32.totalorder %s139, %s142
      %p148 = scmp.eq.s32.totalorder %s19, 0
      %p149 = por %p147, %p148
      %p150 = scmp.ne.s32.totalorder %s139, %s142
      %p151 = scmp.eq.s32.totalorder %s24, 1
      %p152 = por %p150, %p151
      %p153 = scmp.ne.s32.totalorder %s142, %s143
      %p154 = scmp.eq.s32.totalorder %s24, 0
      %p155 = por %p153, %p154
      %p156 = scmp.ne.s32.totalorder %s142, %s143
      %p157 = scmp.eq.s32.totalorder %s25, 1
      %p158 = por %p156, %p157
      %p160 = scmp.ne.s32.totalorder %s143, %s159
      %p161 = scmp.eq.s32.totalorder %s25, 0
      %p162 = por %p160, %p161
      %p163 = scmp.le.s32.totalorder 1, %s19
      %p164 = scmp.lt.s32.totalorder %s19, 3
      %p165 = pnand %p163, %p164
      %p166 = pneg %p165
      // Predicated region
      $region9: #{c2f_forward.4} parent=5 // pred_check
        _
      $region10: #{c2f_forward.4} parent=5 // pred_check_branch
        %168 = sbr.rel (%p165) target = $region12
      $region11: #{c2f_forward.4} parent=5 // pred_region
        %s169 = ssub.s32 %s19, 1
        // Predicated region
        $region13: #{c2f_forward.4} parent=11 // pred_check
          %p170 = pneg %p66
        $region14: #{c2f_forward.4} parent=11 // pred_check_branch
          %172 = sbr.rel (%p170) target = $region16
        $region15: #{c2f_forward.4} parent=11 // pred_region
          %s174 = ssub.s32 32, 32
          %175 = vsyncadd [#allocation7], %s174
          %s177 = sshll.u32 [#allocation6], 4
          %s178 = int_to_ptr.vmem [resolvable:$true] %s177
          %180 = dma.hbm_to_vmem [thread:$0]  %s1, 32, %s178, [#allocation7]
        $region16: #{c2f_forward.4} parent=11 // pred_fallthru
          _
        // Predicated region
        $region17: #{c2f_forward.4} parent=11 // pred_check
          %p181 = pneg %p87
        $region18: #{c2f_forward.4} parent=11 // pred_check_branch
          %183 = sbr.rel (%p181) target = $region20
        $region19: #{c2f_forward.4} parent=11 // pred_region
          %s185 = ssub.s32 16, 16
          %186 = vsyncadd [#allocation7], %s185
          %s188 = sshll.u32 [#allocation8], 4
          %s189 = int_to_ptr.vmem [resolvable:$true] %s188
          %191 = dma.hbm_to_vmem [thread:$0]  %s2, 16, %s189, [#allocation7]
        $region20: #{c2f_forward.4} parent=11 // pred_fallthru
          _
        // Predicated region
        $region21: #{c2f_forward.4} parent=11 // pred_check
          %p192 = pneg %p108
        $region22: #{c2f_forward.4} parent=11 // pred_check_branch
          %194 = sbr.rel (%p192) target = $region24
        $region23: #{c2f_forward.4} parent=11 // pred_region
          %s196 = ssub.s32 320, 320
          %197 = vsyncadd [#allocation10], %s196
          %s198 = sshll.u32 [#allocation9], 4
          %s199 = int_to_ptr.vmem [resolvable:$true] %s198
          %204 = dma.hbm_to_vmem [thread:$0]  %s3, 320, %s199, [#allocation10], 64, 64, 4
        $region24: #{c2f_forward.4} parent=11 // pred_fallthru
          _
        // Predicated region
        $region25: #{c2f_forward.4} parent=11 // pred_check
          %p205 = pneg %p129
        $region26: #{c2f_forward.4} parent=11 // pred_check_branch
          %207 = sbr.rel (%p205) target = $region28
        $region27: #{c2f_forward.4} parent=11 // pred_region
          %s209 = ssub.s32 16, 16
          %210 = vsyncadd [#allocation10], %s209
          %s212 = sshll.u32 [#allocation11], 4
          %s213 = int_to_ptr.vmem [resolvable:$true] %s212
          %215 = dma.hbm_to_vmem [thread:$0]  %s4, 16, %s213, [#allocation10]
        $region28: #{c2f_forward.4} parent=11 // pred_fallthru
          _
      $region12: #{c2f_forward.4} parent=5 // pred_fallthru
        _
      %p216 = scmp.lt.s32.totalorder %s19, 2
      // Predicated region
      $region29: #{c2f_forward.4} parent=5 // pred_check
        %p217 = pneg %p216
      $region30: #{c2f_forward.4} parent=5 // pred_check_branch
        %219 = sbr.rel (%p217) target = $region32
      $region31: #{c2f_forward.4} parent=5 // pred_region
        // Predicated region
        $region33: #{c2f_forward.4} parent=31 // pred_check
          %p220 = pneg %p39
        $region34: #{c2f_forward.4} parent=31 // pred_check_branch
          %222 = sbr.rel (%p220) target = $region36
        $region35: #{c2f_forward.4} parent=31 // pred_region
          %s223 = sand.u32 %s29, 1
          %s224 = scalar_lea.sflag [#allocation4], %s223
          %s225 = sand.u32 %s29, 1
          %s226 = smul.addr %s225, 128
          %s227 = scalar_lea.vmem [#allocation3], %s226
          %s229 = ssub.s32 2048, 2048
          %230 = vsyncadd %s224, %s229
          %s231 = smul.addr %s19, 32
          %s232 = smul.addr %s231, 64
          %s233 = scalar_lea.hbm %s0, %s232
          %s234 = sshll.u32 %s227, 4
          %s235 = int_to_ptr.vmem [resolvable:$true] %s234
          %240 = dma.hbm_to_vmem [thread:$0]  %s233, 2048, %s235, %s224, 64, 64, 4
        $region36: #{c2f_forward.4} parent=31 // pred_fallthru
          _
      $region32: #{c2f_forward.4} parent=5 // pred_fallthru
        _
      %p241 = scmp.le.s32.totalorder 1, %s19
      %p242 = scmp.lt.s32.totalorder %s19, 3
      %p243 = pnand %p241, %p242
      %p244 = pneg %p243
      // Predicated region
      $region37: #{c2f_forward.4} parent=5 // pred_check
        _
      $region38: #{c2f_forward.4} parent=5 // pred_check_branch
        %246 = sbr.rel (%p243) target = $region40
      $region39: #{c2f_forward.4} parent=5 // pred_region
        %s247 = ssub.s32 %s19, 1
        %s248 = sand.u32 %s32, 1
        %s249 = scalar_lea.sflag [#allocation4], %s248
        %s250 = sand.u32 %s32, 1
        %s251 = smul.addr %s250, 128
        %s252 = scalar_lea.vmem [#allocation3], %s251
        // Predicated region
        $region41: #{c2f_forward.4} parent=39 // pred_check
          %p253 = pneg %p45
        $region42: #{c2f_forward.4} parent=39 // pred_check_branch
          %255 = sbr.rel (%p253) target = $region44
        $region43: #{c2f_forward.4} parent=39 // pred_region
          %256 = dma.done %s249, 2048
        $region44: #{c2f_forward.4} parent=39 // pred_fallthru
          _
        // Predicated region
        $region45: #{c2f_forward.4} parent=39 // pred_check
          %p257 = pneg %p66
        $region46: #{c2f_forward.4} parent=39 // pred_check_branch
          %259 = sbr.rel (%p257) target = $region48
        $region47: #{c2f_forward.4} parent=39 // pred_region
          %260 = dma.done [#allocation7], 32
        $region48: #{c2f_forward.4} parent=39 // pred_fallthru
          _
        // Predicated region
        $region49: #{c2f_forward.4} parent=39 // pred_check
          %p261 = pneg %p87
        $region50: #{c2f_forward.4} parent=39 // pred_check_branch
          %263 = sbr.rel (%p261) target = $region52
        $region51: #{c2f_forward.4} parent=39 // pred_region
          %264 = dma.done [#allocation7], 16
        $region52: #{c2f_forward.4} parent=39 // pred_fallthru
          _
        // Predicated region
        $region53: #{c2f_forward.4} parent=39 // pred_check
          %p265 = pneg %p108
        $region54: #{c2f_forward.4} parent=39 // pred_check_branch
          %267 = sbr.rel (%p265) target = $region56
        $region55: #{c2f_forward.4} parent=39 // pred_region
          %268 = dma.done [#allocation10], 320
        $region56: #{c2f_forward.4} parent=39 // pred_fallthru
          _
        // Predicated region
        $region57: #{c2f_forward.4} parent=39 // pred_check
          %p269 = pneg %p129
        $region58: #{c2f_forward.4} parent=39 // pred_check_branch
          %271 = sbr.rel (%p269) target = $region60
        $region59: #{c2f_forward.4} parent=39 // pred_region
          %272 = dma.done [#allocation10], 16
        $region60: #{c2f_forward.4} parent=39 // pred_fallthru
          _
        %s273 = sand.u32 %s32, 1
        %s274 = scalar_lea.sflag [#allocation4], %s273
        %s275 = sand.u32 %s32, 1
        %s276 = smul.addr %s275, 128
        %s277 = scalar_lea.vmem [#allocation3], %s276
        %p278 = pneg %p45
        %p279 = pneg %p42
        %p280 = pneg %p66
        %p281 = pneg %p63
        %p282 = pneg %p87
        %p283 = pneg %p84
        %p284 = pneg %p108
        %p285 = pneg %p105
        %p286 = pneg %p129
        %p287 = pneg %p126
        %p288 = pneg %p155
        %p289 = pneg %p152
        %s290 = sand.u32 %s142, 1
        %s291 = scalar_lea.sflag [#allocation5], %s290
        %s292 = sand.u32 %s142, 1
        %s293 = smul.addr %s292, 128
        %s294 = scalar_lea.vmem [#allocation12], %s293
        %vm296 = vcmask 27648
        %297 = vst.msk [vmem:[#allocation2] sm:$0xf] %vm296, 0
        %298 = vst.msk [vmem:[#allocation2 + $0x4] sm:$0xf] %vm296, 0
        %vm299 = vcmask 24576
        %300 = vst.msk [vmem:[#allocation2 + $0x8] sm:$0x1] %vm299, 0
        %301 = vst.msk [vmem:[#allocation2 + $0xc] sm:$0xf] %vm296, 0
        %302 = vst.msk [vmem:[#allocation2 + $0x10] sm:$0xf] %vm296, 0
        %303 = vst.msk [vmem:[#allocation2 + $0x14] sm:$0x1] %vm299, 0
        %304 = vst.msk [vmem:[#allocation2 + $0x18] sm:$0xf] %vm296, 0
        %305 = vst.msk [vmem:[#allocation2 + $0x1c] sm:$0xf] %vm296, 0
        %306 = vst.msk [vmem:[#allocation2 + $0x20] sm:$0x1] %vm299, 0
        %307 = vst.msk [vmem:[#allocation2 + $0x24] sm:$0xf] %vm296, 0
        %308 = vst.msk [vmem:[#allocation2 + $0x28] sm:$0xf] %vm296, 0
        %309 = vst.msk [vmem:[#allocation2 + $0x2c] sm:$0x1] %vm299, 0
        %310 = vst.msk [vmem:[#allocation2 + $0x30] sm:$0xf] %vm296, 0
        %311 = vst.msk [vmem:[#allocation2 + $0x34] sm:$0xf] %vm296, 0
        %312 = vst.msk [vmem:[#allocation2 + $0x38] sm:$0x1] %vm299, 0
        %313 = vst.msk [vmem:[#allocation2 + $0x3c] sm:$0xf] %vm296, 0
        %314 = vst.msk [vmem:[#allocation2 + $0x40] sm:$0xf] %vm296, 0
        %315 = vst.msk [vmem:[#allocation2 + $0x44] sm:$0x1] %vm299, 0
        %316 = vst.msk [vmem:[#allocation2 + $0x48] sm:$0xf] %vm296, 0
        %317 = vst.msk [vmem:[#allocation2 + $0x4c] sm:$0xf] %vm296, 0
        %318 = vst.msk [vmem:[#allocation2 + $0x50] sm:$0x1] %vm299, 0
        %319 = vst.msk [vmem:[#allocation2 + $0x54] sm:$0xf] %vm296, 0
        %320 = vst.msk [vmem:[#allocation2 + $0x58] sm:$0xf] %vm296, 0
        %321 = vst.msk [vmem:[#allocation2 + $0x5c] sm:$0x1] %vm299, 0
        %322 = vst.msk [vmem:[#allocation2 + $0x60] sm:$0xf] %vm296, 0
        %323 = vst.msk [vmem:[#allocation2 + $0x64] sm:$0xf] %vm296, 0
        %324 = vst.msk [vmem:[#allocation2 + $0x68] sm:$0x1] %vm299, 0
        %325 = vst.msk [vmem:[#allocation2 + $0x6c] sm:$0xf] %vm296, 0
        %326 = vst.msk [vmem:[#allocation2 + $0x70] sm:$0xf] %vm296, 0
        %327 = vst.msk [vmem:[#allocation2 + $0x74] sm:$0x1] %vm299, 0
        %328 = vst.msk [vmem:[#allocation2 + $0x78] sm:$0xf] %vm296, 0
        %329 = vst.msk [vmem:[#allocation2 + $0x7c] sm:$0xf] %vm296, 0
        %330 = vst.msk [vmem:[#allocation2 + $0x80] sm:$0x1] %vm299, 0
        %331 = vst.msk [vmem:[#allocation2 + $0x84] sm:$0xf] %vm296, 0
        %332 = vst.msk [vmem:[#allocation2 + $0x88] sm:$0xf] %vm296, 0
        %333 = vst.msk [vmem:[#allocation2 + $0x8c] sm:$0x1] %vm299, 0
        %334 = vst.msk [vmem:[#allocation2 + $0x90] sm:$0xf] %vm296, 0
        %335 = vst.msk [vmem:[#allocation2 + $0x94] sm:$0xf] %vm296, 0
        %336 = vst.msk [vmem:[#allocation2 + $0x98] sm:$0x1] %vm299, 0
        %337 = vst.msk [vmem:[#allocation2 + $0x9c] sm:$0xf] %vm296, 0
        %338 = vst.msk [vmem:[#allocation2 + $0xa0] sm:$0xf] %vm296, 0
        %339 = vst.msk [vmem:[#allocation2 + $0xa4] sm:$0x1] %vm299, 0
        %340 = vst.msk [vmem:[#allocation2 + $0xa8] sm:$0xf] %vm296, 0
        %341 = vst.msk [vmem:[#allocation2 + $0xac] sm:$0xf] %vm296, 0
        %342 = vst.msk [vmem:[#allocation2 + $0xb0] sm:$0x1] %vm299, 0
        %343 = vst.msk [vmem:[#allocation2 + $0xb4] sm:$0xf] %vm296, 0
        %344 = vst.msk [vmem:[#allocation2 + $0xb8] sm:$0xf] %vm296, 0
        %345 = vst.msk [vmem:[#allocation2 + $0xbc] sm:$0x1] %vm299, 0
        %346 = vst.msk [vmem:[#allocation2 + $0xc0] sm:$0xf] %vm296, 0
        %347 = vst.msk [vmem:[#allocation2 + $0xc4] sm:$0xf] %vm296, 0
        %348 = vst.msk [vmem:[#allocation2 + $0xc8] sm:$0x1] %vm299, 0
        %349 = vst.msk [vmem:[#allocation2 + $0xcc] sm:$0xf] %vm296, 0
        %350 = vst.msk [vmem:[#allocation2 + $0xd0] sm:$0xf] %vm296, 0
        %351 = vst.msk [vmem:[#allocation2 + $0xd4] sm:$0x1] %vm299, 0
        %v352 = vld [vmem:[%s252] sm:$0xf]
        %v353 = vld [vmem:[%s252 + $0x4] sm:$0xf]
        %v354 = vld [vmem:[%s252 + $0x8] sm:$0xf]
        %v355 = vld [vmem:[%s252 + $0xc] sm:$0xf]
        %v356 = vld [vmem:[%s252 + $0x10] sm:$0xf]
        %v357 = vld [vmem:[%s252 + $0x14] sm:$0xf]
        %v358 = vld [vmem:[%s252 + $0x18] sm:$0xf]
        %v359 = vld [vmem:[%s252 + $0x1c] sm:$0xf]
        %v360 = vld [vmem:[%s252 + $0x20] sm:$0xf]
        %v361 = vld [vmem:[%s252 + $0x24] sm:$0xf]
        %v362 = vld [vmem:[%s252 + $0x28] sm:$0xf]
        %v363 = vld [vmem:[%s252 + $0x2c] sm:$0xf]
        %v364 = vld [vmem:[%s252 + $0x30] sm:$0xf]
        %v365 = vld [vmem:[%s252 + $0x34] sm:$0xf]
        %v366 = vld [vmem:[%s252 + $0x38] sm:$0xf]
        %v367 = vld [vmem:[%s252 + $0x3c] sm:$0xf]
        %v368 = vld [vmem:[%s252 + $0x40] sm:$0xf]
        %v369 = vld [vmem:[%s252 + $0x44] sm:$0xf]
        %v370 = vld [vmem:[%s252 + $0x48] sm:$0xf]
        %v371 = vld [vmem:[%s252 + $0x4c] sm:$0xf]
        %v372 = vld [vmem:[%s252 + $0x50] sm:$0xf]
        %v373 = vld [vmem:[%s252 + $0x54] sm:$0xf]
        %v374 = vld [vmem:[%s252 + $0x58] sm:$0xf]
        %v375 = vld [vmem:[%s252 + $0x5c] sm:$0xf]
        %v376 = vld [vmem:[%s252 + $0x60] sm:$0xf]
        %v377 = vld [vmem:[%s252 + $0x64] sm:$0xf]
        %v378 = vld [vmem:[%s252 + $0x68] sm:$0xf]
        %v379 = vld [vmem:[%s252 + $0x6c] sm:$0xf]
        %v380 = vld [vmem:[%s252 + $0x70] sm:$0xf]
        %v381 = vld [vmem:[%s252 + $0x74] sm:$0xf]
        %v382 = vld [vmem:[%s252 + $0x78] sm:$0xf]
        %v383 = vld [vmem:[%s252 + $0x7c] sm:$0xf]
        %v384 = vld [vmem:[#allocation6] sm:$0x3]
        %v385 = vld [vmem:[#allocation8] sm:$0x1]
        %v387 = vlaneseq
        %v388 = vshrl.u32 %v387, 7
        %v389 = vsub.s32 0, %v388
        %v390 = vrot.slane %v385, %v389
        %v424 = vunpack.c.l.b16 %v352
        %v425 = vunpack.c.l.b16 %v353
        %v426 = vunpack.c.l.b16 %v354
        %v427 = vunpack.c.l.b16 %v355
        %v428 = vunpack.c.l.b16 %v356
        %v429 = vunpack.c.l.b16 %v357
        %v430 = vunpack.c.l.b16 %v358
        %v431 = vunpack.c.l.b16 %v359
        %v432 = vunpack.c.l.b16 %v360
        %v433 = vunpack.c.l.b16 %v361
        %v434 = vunpack.c.l.b16 %v362
        %v435 = vunpack.c.l.b16 %v363
        %v436 = vunpack.c.l.b16 %v364
        %v437 = vunpack.c.l.b16 %v365
        %v438 = vunpack.c.l.b16 %v366
        %v439 = vunpack.c.l.b16 %v367
        %v440 = vunpack.c.l.b16 %v368
        %v441 = vunpack.c.l.b16 %v369
        %v442 = vunpack.c.l.b16 %v370
        %v443 = vunpack.c.l.b16 %v371
        %v444 = vunpack.c.l.b16 %v372
        %v445 = vunpack.c.l.b16 %v373
        %v446 = vunpack.c.l.b16 %v374
        %v447 = vunpack.c.l.b16 %v375
        %v448 = vunpack.c.l.b16 %v376
        %v449 = vunpack.c.l.b16 %v377
        %v450 = vunpack.c.l.b16 %v378
        %v451 = vunpack.c.l.b16 %v379
        %v452 = vunpack.c.l.b16 %v380
        %v453 = vunpack.c.l.b16 %v381
        %v454 = vunpack.c.l.b16 %v382
        %v455 = vunpack.c.l.b16 %v383
        %v456 = vpack.c.b16 %v425, %v424
        %v457 = vpack.c.b16 %v427, %v426
        %v458 = vpack.c.b16 %v429, %v428
        %v459 = vpack.c.b16 %v431, %v430
        %v460 = vpack.c.b16 %v433, %v432
        %v461 = vpack.c.b16 %v435, %v434
        %v462 = vpack.c.b16 %v437, %v436
        %v463 = vpack.c.b16 %v439, %v438
        %v464 = vpack.c.b16 %v441, %v440
        %v465 = vpack.c.b16 %v443, %v442
        %v466 = vpack.c.b16 %v445, %v444
        %v467 = vpack.c.b16 %v447, %v446
        %v468 = vpack.c.b16 %v449, %v448
        %v469 = vpack.c.b16 %v451, %v450
        %v470 = vpack.c.b16 %v453, %v452
        %v471 = vpack.c.b16 %v455, %v454
        %472 = vrot.lane.b32.xlu0 %v456, 124
        %v473 = vpop.permute.xlu0 %472
        %474 = vrot.lane.b32.xlu0 %v457, 124
        %v475 = vpop.permute.xlu0 %474
        %476 = vrot.lane.b32.xlu0 %v458, 124
        %v477 = vpop.permute.xlu0 %476
        %478 = vrot.lane.b32.xlu0 %v459, 124
        %v479 = vpop.permute.xlu0 %478
        %480 = vrot.lane.b32.xlu0 %v460, 124
        %v481 = vpop.permute.xlu0 %480
        %482 = vrot.lane.b32.xlu0 %v461, 124
        %v483 = vpop.permute.xlu0 %482
        %484 = vrot.lane.b32.xlu0 %v462, 124
        %v485 = vpop.permute.xlu0 %484
        %486 = vrot.lane.b32.xlu0 %v463, 124
        %v487 = vpop.permute.xlu0 %486
        %488 = vrot.lane.b32.xlu0 %v464, 124
        %v489 = vpop.permute.xlu0 %488
        %490 = vrot.lane.b32.xlu0 %v465, 124
        %v491 = vpop.permute.xlu0 %490
        %492 = vrot.lane.b32.xlu0 %v466, 124
        %v493 = vpop.permute.xlu0 %492
        %494 = vrot.lane.b32.xlu0 %v467, 124
        %v495 = vpop.permute.xlu0 %494
        %496 = vrot.lane.b32.xlu0 %v468, 124
        %v497 = vpop.permute.xlu0 %496
        %498 = vrot.lane.b32.xlu0 %v469, 124
        %v499 = vpop.permute.xlu0 %498
        %500 = vrot.lane.b32.xlu0 %v470, 124
        %v501 = vpop.permute.xlu0 %500
        %502 = vrot.lane.b32.xlu0 %v471, 124
        %v503 = vpop.permute.xlu0 %502
        %vm504 = vcmask 31744
        %v506 = vsel %vm504, %v473, 0
        %v509 = vsel %vm504, %v475, 0
        %v512 = vsel %vm504, %v477, 0
        %v515 = vsel %vm504, %v479, 0
        %v518 = vsel %vm504, %v481, 0
        %v521 = vsel %vm504, %v483, 0
        %v524 = vsel %vm504, %v485, 0
        %v527 = vsel %vm504, %v487, 0
        %v530 = vsel %vm504, %v489, 0
        %v533 = vsel %vm504, %v491, 0
        %v536 = vsel %vm504, %v493, 0
        %v539 = vsel %vm504, %v495, 0
        %v542 = vsel %vm504, %v497, 0
        %v545 = vsel %vm504, %v499, 0
        %v548 = vsel %vm504, %v501, 0
        %v551 = vsel %vm504, %v503, 0
        %vm553 = vcmask 1041408
        %v555 = vsel %vm553, %v384, 0
        %557 = vmatprep.subr.bf16.mxu0 0
        %558 = vmatpush1.bf16.msra.mxu0 %v555
        %559 = vmatprep.subr.bf16.mxu0 0
        %560 = vmatpush1.bf16.msra.mxu0 0
        %561 = vmatprep.subr.bf16.mxu0 0
        %562 = vmatpush1.bf16.msra.mxu0 0
        %563 = vmatprep.subr.bf16.mxu0 0
        %564 = vmatpush1.bf16.msra.mxu0 0
        %565 = vmatprep.subr.bf16.mxu0 0
        %566 = vmatpush1.bf16.msra.mxu0 0
        %567 = vmatprep.subr.bf16.mxu0 0
        %568 = vmatpush1.bf16.msra.mxu0 0
        %569 = vmatprep.subr.bf16.mxu0 0
        %570 = vmatpush1.bf16.msra.mxu0 0
        %571 = vmatprep.subr.bf16.mxu0 0
        %572 = vmatpush1.bf16.msra.mxu0 0
        %573 = vmatprep.subr.bf16.mxu0 0
        %574 = vmatpush1.bf16.msra.mxu0 0
        %575 = vmatprep.subr.bf16.mxu0 0
        %576 = vmatpush1.bf16.msra.mxu0 0
        %577 = vmatprep.subr.bf16.mxu0 0
        %578 = vmatpush1.bf16.msra.mxu0 0
        %579 = vmatprep.subr.bf16.mxu0 0
        %580 = vmatpush1.bf16.msra.mxu0 0
        %581 = vmatprep.subr.bf16.mxu0 0
        %582 = vmatpush1.bf16.msra.mxu0 0
        %583 = vmatprep.subr.bf16.mxu0 0
        %584 = vmatpush1.bf16.msra.mxu0 0
        %585 = vmatprep.subr.bf16.mxu0 0
        %586 = vmatpush1.bf16.msra.mxu0 0
        %587 = vmatprep.subr.bf16.mxu0 0
        %588 = vmatpush1.bf16.msra.mxu0 0
        %589 = vmatprep.mubr.bf16.mxu0 0
        %590 = vmatmul.mubr.bf16.gmra.mrb[0].mxu0 %v506
        %v591 = vpop.f32.mrb[0].mxu0
        %v592 = vadd.f32 %v390, %v591
        %v593 = vpop.f32.mrb[0].mxu0
        %v594 = vpop.f32.mrb[0].mxu0
        %v595 = vadd.f32 %v390, %v594
        %v596 = vpop.f32.mrb[0].mxu0
        %597 = vmatprep.mubr.bf16.mxu0 0
        %598 = vmatmul.mubr.bf16.gmra.mrb[0].mxu0 %v509
        %v599 = vpop.f32.mrb[0].mxu0
        %v600 = vadd.f32 %v390, %v599
        %v601 = vpop.f32.mrb[0].mxu0
        %v602 = vpop.f32.mrb[0].mxu0
        %v603 = vadd.f32 %v390, %v602
        %v604 = vpop.f32.mrb[0].mxu0
        %605 = vmatprep.mubr.bf16.mxu0 0
        %606 = vmatmul.mubr.bf16.gmra.mrb[0].mxu0 %v512
        %v607 = vpop.f32.mrb[0].mxu0
        %v608 = vadd.f32 %v390, %v607
        %v609 = vpop.f32.mrb[0].mxu0
        %v610 = vpop.f32.mrb[0].mxu0
        %v611 = vadd.f32 %v390, %v610
        %v612 = vpop.f32.mrb[0].mxu0
        %613 = vmatprep.mubr.bf16.mxu0 0
        %614 = vmatmul.mubr.bf16.gmra.mrb[0].mxu0 %v515
        %v615 = vpop.f32.mrb[0].mxu0
        %v616 = vadd.f32 %v390, %v615
        %v617 = vpop.f32.mrb[0].mxu0
        %v618 = vpop.f32.mrb[0].mxu0
        %v619 = vadd.f32 %v390, %v618
        %v620 = vpop.f32.mrb[0].mxu0
        %621 = vmatprep.mubr.bf16.mxu0 0
        %622 = vmatmul.mubr.bf16.gmra.mrb[0].mxu0 %v518
        %v623 = vpop.f32.mrb[0].mxu0
        %v624 = vadd.f32 %v390, %v623
        %v625 = vpop.f32.mrb[0].mxu0
        %v626 = vpop.f32.mrb[0].mxu0
        %v627 = vadd.f32 %v390, %v626
        %v628 = vpop.f32.mrb[0].mxu0
        %629 = vmatprep.mubr.bf16.mxu0 0
        %630 = vmatmul.mubr.bf16.gmra.mrb[0].mxu0 %v521
        %v631 = vpop.f32.mrb[0].mxu0
        %v632 = vadd.f32 %v390, %v631
        %v633 = vpop.f32.mrb[0].mxu0
        %v634 = vpop.f32.mrb[0].mxu0
        %v635 = vadd.f32 %v390, %v634
        %v636 = vpop.f32.mrb[0].mxu0
        %637 = vmatprep.mubr.bf16.mxu0 0
        %638 = vmatmul.mubr.bf16.gmra.mrb[0].mxu0 %v524
        %v639 = vpop.f32.mrb[0].mxu0
        %v640 = vadd.f32 %v390, %v639
        %v641 = vpop.f32.mrb[0].mxu0
        %v642 = vpop.f32.mrb[0].mxu0
        %v643 = vadd.f32 %v390, %v642
        %v644 = vpop.f32.mrb[0].mxu0
        %645 = vmatprep.mubr.bf16.mxu0 0
        %646 = vmatmul.mubr.bf16.gmra.mrb[0].mxu0 %v527
        %v647 = vpop.f32.mrb[0].mxu0
        %v648 = vadd.f32 %v390, %v647
        %v649 = vpop.f32.mrb[0].mxu0
        %v650 = vpop.f32.mrb[0].mxu0
        %v651 = vadd.f32 %v390, %v650
        %v652 = vpop.f32.mrb[0].mxu0
        %653 = vmatprep.mubr.bf16.mxu0 0
        %654 = vmatmul.mubr.bf16.gmra.mrb[0].mxu0 %v530
        %v655 = vpop.f32.mrb[0].mxu0
        %v656 = vadd.f32 %v390, %v655
        %v657 = vpop.f32.mrb[0].mxu0
        %v658 = vpop.f32.mrb[0].mxu0
        %v659 = vadd.f32 %v390, %v658
        %v660 = vpop.f32.mrb[0].mxu0
        %661 = vmatprep.mubr.bf16.mxu0 0
        %662 = vmatmul.mubr.bf16.gmra.mrb[0].mxu0 %v533
        %v663 = vpop.f32.mrb[0].mxu0
        %v664 = vadd.f32 %v390, %v663
        %v665 = vpop.f32.mrb[0].mxu0
        %v666 = vpop.f32.mrb[0].mxu0
        %v667 = vadd.f32 %v390, %v666
        %v668 = vpop.f32.mrb[0].mxu0
        %669 = vmatprep.mubr.bf16.mxu0 0
        %670 = vmatmul.mubr.bf16.gmra.mrb[0].mxu0 %v536
        %v671 = vpop.f32.mrb[0].mxu0
        %v672 = vadd.f32 %v390, %v671
        %v673 = vpop.f32.mrb[0].mxu0
        %v674 = vpop.f32.mrb[0].mxu0
        %v675 = vadd.f32 %v390, %v674
        %v676 = vpop.f32.mrb[0].mxu0
        %677 = vmatprep.mubr.bf16.mxu0 0
        %678 = vmatmul.mubr.bf16.gmra.mrb[0].mxu0 %v539
        %v679 = vpop.f32.mrb[0].mxu0
        %v680 = vadd.f32 %v390, %v679
        %v681 = vpop.f32.mrb[0].mxu0
        %v682 = vpop.f32.mrb[0].mxu0
        %v683 = vadd.f32 %v390, %v682
        %v684 = vpop.f32.mrb[0].mxu0
        %685 = vmatprep.mubr.bf16.mxu0 0
        %686 = vmatmul.mubr.bf16.gmra.mrb[0].mxu0 %v542
        %v687 = vpop.f32.mrb[0].mxu0
        %v688 = vadd.f32 %v390, %v687
        %v689 = vpop.f32.mrb[0].mxu0
        %v690 = vpop.f32.mrb[0].mxu0
        %v691 = vadd.f32 %v390, %v690
        %v692 = vpop.f32.mrb[0].mxu0
        %693 = vmatprep.mubr.bf16.mxu0 0
        %694 = vmatmul.mubr.bf16.gmra.mrb[0].mxu0 %v545
        %v695 = vpop.f32.mrb[0].mxu0
        %v696 = vadd.f32 %v390, %v695
        %v697 = vpop.f32.mrb[0].mxu0
        %v698 = vpop.f32.mrb[0].mxu0
        %v699 = vadd.f32 %v390, %v698
        %v700 = vpop.f32.mrb[0].mxu0
        %701 = vmatprep.mubr.bf16.mxu0 0
        %702 = vmatmul.mubr.bf16.gmra.mrb[0].mxu0 %v548
        %v703 = vpop.f32.mrb[0].mxu0
        %v704 = vadd.f32 %v390, %v703
        %v705 = vpop.f32.mrb[0].mxu0
        %v706 = vpop.f32.mrb[0].mxu0
        %v707 = vadd.f32 %v390, %v706
        %v708 = vpop.f32.mrb[0].mxu0
        %709 = vmatprep.mubr.bf16.mxu0 0
        %710 = vmatmul.mubr.bf16.gmra.mrb[0].mxu0 %v551
        %v711 = vpop.f32.mrb[0].mxu0
        %v712 = vadd.f32 %v390, %v711
        %v713 = vpop.f32.mrb[0].mxu0
        %v714 = vpop.f32.mrb[0].mxu0
        %v715 = vadd.f32 %v390, %v714
        %v716 = vpop.f32.mrb[0].mxu0
        %717 = vdwg.mxu0
        %v718 = vsub.f32 0.0, %v592
        %v719 = vsub.f32 0.0, %v595
        %v720 = vsub.f32 0.0, %v600
        %v721 = vsub.f32 0.0, %v603
        %v722 = vsub.f32 0.0, %v608
        %v723 = vsub.f32 0.0, %v611
        %v724 = vsub.f32 0.0, %v616
        %v725 = vsub.f32 0.0, %v619
        %v726 = vsub.f32 0.0, %v624
        %v727 = vsub.f32 0.0, %v627
        %v728 = vsub.f32 0.0, %v632
        %v729 = vsub.f32 0.0, %v635
        %v730 = vsub.f32 0.0, %v640
        %v731 = vsub.f32 0.0, %v643
        %v732 = vsub.f32 0.0, %v648
        %v733 = vsub.f32 0.0, %v651
        %v734 = vsub.f32 0.0, %v656
        %v735 = vsub.f32 0.0, %v659
        %v736 = vsub.f32 0.0, %v664
        %v737 = vsub.f32 0.0, %v667
        %v738 = vsub.f32 0.0, %v672
        %v739 = vsub.f32 0.0, %v675
        %v740 = vsub.f32 0.0, %v680
        %v741 = vsub.f32 0.0, %v683
        %v742 = vsub.f32 0.0, %v688
        %v743 = vsub.f32 0.0, %v691
        %v744 = vsub.f32 0.0, %v696
        %v745 = vsub.f32 0.0, %v699
        %v746 = vsub.f32 0.0, %v704
        %v747 = vsub.f32 0.0, %v707
        %v748 = vsub.f32 0.0, %v712
        %v749 = vsub.f32 0.0, %v715
        %v750 = vmul.f32 %v718, 1.442695
        %v751 = vpow.pop %v750
        %v752 = vmul.f32 %v719, 1.442695
        %v753 = vpow.pop %v752
        %v754 = vmul.f32 %v720, 1.442695
        %v755 = vpow.pop %v754
        %v756 = vmul.f32 %v721, 1.442695
        %v757 = vpow.pop %v756
        %v758 = vmul.f32 %v722, 1.442695
        %v759 = vpow.pop %v758
        %v760 = vmul.f32 %v723, 1.442695
        %v761 = vpow.pop %v760
        %v762 = vmul.f32 %v724, 1.442695
        %v763 = vpow.pop %v762
        %v764 = vmul.f32 %v725, 1.442695
        %v765 = vpow.pop %v764
        %v766 = vmul.f32 %v726, 1.442695
        %v767 = vpow.pop %v766
        %v768 = vmul.f32 %v727, 1.442695
        %v769 = vpow.pop %v768
        %v770 = vmul.f32 %v728, 1.442695
        %v771 = vpow.pop %v770
        %v772 = vmul.f32 %v729, 1.442695
        %v773 = vpow.pop %v772
        %v774 = vmul.f32 %v730, 1.442695
        %v775 = vpow.pop %v774
        %v776 = vmul.f32 %v731, 1.442695
        %v777 = vpow.pop %v776
        %v778 = vmul.f32 %v732, 1.442695
        %v779 = vpow.pop %v778
        %v780 = vmul.f32 %v733, 1.442695
        %v781 = vpow.pop %v780
        %v782 = vmul.f32 %v734, 1.442695
        %v783 = vpow.pop %v782
        %v784 = vmul.f32 %v735, 1.442695
        %v785 = vpow.pop %v784
        %v786 = vmul.f32 %v736, 1.442695
        %v787 = vpow.pop %v786
        %v788 = vmul.f32 %v737, 1.442695
        %v789 = vpow.pop %v788
        %v790 = vmul.f32 %v738, 1.442695
        %v791 = vpow.pop %v790
        %v792 = vmul.f32 %v739, 1.442695
        %v793 = vpow.pop %v792
        %v794 = vmul.f32 %v740, 1.442695
        %v795 = vpow.pop %v794
        %v796 = vmul.f32 %v741, 1.442695
        %v797 = vpow.pop %v796
        %v798 = vmul.f32 %v742, 1.442695
        %v799 = vpow.pop %v798
        %v800 = vmul.f32 %v743, 1.442695
        %v801 = vpow.pop %v800
        %v802 = vmul.f32 %v744, 1.442695
        %v803 = vpow.pop %v802
        %v804 = vmul.f32 %v745, 1.442695
        %v805 = vpow.pop %v804
        %v806 = vmul.f32 %v746, 1.442695
        %v807 = vpow.pop %v806
        %v808 = vmul.f32 %v747, 1.442695
        %v809 = vpow.pop %v808
        %v810 = vmul.f32 %v748, 1.442695
        %v811 = vpow.pop %v810
        %v812 = vmul.f32 %v749, 1.442695
        %v813 = vpow.pop %v812
        %v814 = vadd.f32 %v751, 1.0
        %v815 = vadd.f32 %v753, 1.0
        %v816 = vadd.f32 %v755, 1.0
        %v817 = vadd.f32 %v757, 1.0
        %v818 = vadd.f32 %v759, 1.0
        %v819 = vadd.f32 %v761, 1.0
        %v820 = vadd.f32 %v763, 1.0
        %v821 = vadd.f32 %v765, 1.0
        %v822 = vadd.f32 %v767, 1.0
        %v823 = vadd.f32 %v769, 1.0
        %v824 = vadd.f32 %v771, 1.0
        %v825 = vadd.f32 %v773, 1.0
        %v826 = vadd.f32 %v775, 1.0
        %v827 = vadd.f32 %v777, 1.0
        %v828 = vadd.f32 %v779, 1.0
        %v829 = vadd.f32 %v781, 1.0
        %v830 = vadd.f32 %v783, 1.0
        %v831 = vadd.f32 %v785, 1.0
        %v832 = vadd.f32 %v787, 1.0
        %v833 = vadd.f32 %v789, 1.0
        %v834 = vadd.f32 %v791, 1.0
        %v835 = vadd.f32 %v793, 1.0
        %v836 = vadd.f32 %v795, 1.0
        %v837 = vadd.f32 %v797, 1.0
        %v838 = vadd.f32 %v799, 1.0
        %v839 = vadd.f32 %v801, 1.0
        %v840 = vadd.f32 %v803, 1.0
        %v841 = vadd.f32 %v805, 1.0
        %v842 = vadd.f32 %v807, 1.0
        %v843 = vadd.f32 %v809, 1.0
        %v844 = vadd.f32 %v811, 1.0
        %v845 = vadd.f32 %v813, 1.0
        %v846 = vrcp.pop %v814
        %v847 = vrcp.pop %v815
        %v848 = vrcp.pop %v816
        %v849 = vrcp.pop %v817
        %v850 = vrcp.pop %v818
        %v851 = vrcp.pop %v819
        %v852 = vrcp.pop %v820
        %v853 = vrcp.pop %v821
        %v854 = vrcp.pop %v822
        %v855 = vrcp.pop %v823
        %v856 = vrcp.pop %v824
        %v857 = vrcp.pop %v825
        %v858 = vrcp.pop %v826
        %v859 = vrcp.pop %v827
        %v860 = vrcp.pop %v828
        %v861 = vrcp.pop %v829
        %v862 = vrcp.pop %v830
        %v863 = vrcp.pop %v831
        %v864 = vrcp.pop %v832
        %v865 = vrcp.pop %v833
        %v866 = vrcp.pop %v834
        %v867 = vrcp.pop %v835
        %v868 = vrcp.pop %v836
        %v869 = vrcp.pop %v837
        %v870 = vrcp.pop %v838
        %v871 = vrcp.pop %v839
        %v872 = vrcp.pop %v840
        %v873 = vrcp.pop %v841
        %v874 = vrcp.pop %v842
        %v875 = vrcp.pop %v843
        %v876 = vrcp.pop %v844
        %v877 = vrcp.pop %v845
        %v878 = vmul.f32 %v592, %v846
        %v879 = vmul.f32 %v595, %v847
        %v880 = vmul.f32 %v600, %v848
        %v881 = vmul.f32 %v603, %v849
        %v882 = vmul.f32 %v608, %v850
        %v883 = vmul.f32 %v611, %v851
        %v884 = vmul.f32 %v616, %v852
        %v885 = vmul.f32 %v619, %v853
        %v886 = vmul.f32 %v624, %v854
        %v887 = vmul.f32 %v627, %v855
        %v888 = vmul.f32 %v632, %v856
        %v889 = vmul.f32 %v635, %v857
        %v890 = vmul.f32 %v640, %v858
        %v891 = vmul.f32 %v643, %v859
        %v892 = vmul.f32 %v648, %v860
        %v893 = vmul.f32 %v651, %v861
        %v894 = vmul.f32 %v656, %v862
        %v895 = vmul.f32 %v659, %v863
        %v896 = vmul.f32 %v664, %v864
        %v897 = vmul.f32 %v667, %v865
        %v898 = vmul.f32 %v672, %v866
        %v899 = vmul.f32 %v675, %v867
        %v900 = vmul.f32 %v680, %v868
        %v901 = vmul.f32 %v683, %v869
        %v902 = vmul.f32 %v688, %v870
        %v903 = vmul.f32 %v691, %v871
        %v904 = vmul.f32 %v696, %v872
        %v905 = vmul.f32 %v699, %v873
        %v906 = vmul.f32 %v704, %v874
        %v907 = vmul.f32 %v707, %v875
        %v908 = vmul.f32 %v712, %v876
        %v909 = vmul.f32 %v715, %v877
        %v910 = vpack.c.bf16 %v879, %v878
        %v911 = vpack.c.bf16 %v881, %v880
        %v912 = vpack.c.bf16 %v883, %v882
        %v913 = vpack.c.bf16 %v885, %v884
        %v914 = vpack.c.bf16 %v887, %v886
        %v915 = vpack.c.bf16 %v889, %v888
        %v916 = vpack.c.bf16 %v891, %v890
        %v917 = vpack.c.bf16 %v893, %v892
        %v918 = vpack.c.bf16 %v895, %v894
        %v919 = vpack.c.bf16 %v897, %v896
        %v920 = vpack.c.bf16 %v899, %v898
        %v921 = vpack.c.bf16 %v901, %v900
        %v922 = vpack.c.bf16 %v903, %v902
        %v923 = vpack.c.bf16 %v905, %v904
        %v924 = vpack.c.bf16 %v907, %v906
        %v925 = vpack.c.bf16 %v909, %v908
        %v942 = vunpack.c.l.b16 %v910
        %v943 = vunpack.c.h.b16 %v910
        %v944 = vunpack.c.l.b16 %v911
        %v945 = vunpack.c.h.b16 %v911
        %v946 = vunpack.c.l.b16 %v912
        %v947 = vunpack.c.h.b16 %v912
        %v948 = vunpack.c.l.b16 %v913
        %v949 = vunpack.c.h.b16 %v913
        %v950 = vunpack.c.l.b16 %v914
        %v951 = vunpack.c.h.b16 %v914
        %v952 = vunpack.c.l.b16 %v915
        %v953 = vunpack.c.h.b16 %v915
        %v954 = vunpack.c.l.b16 %v916
        %v955 = vunpack.c.h.b16 %v916
        %v956 = vunpack.c.l.b16 %v917
        %v957 = vunpack.c.h.b16 %v917
        %v958 = vunpack.c.l.b16 %v918
        %v959 = vunpack.c.h.b16 %v918
        %v960 = vunpack.c.l.b16 %v919
        %v961 = vunpack.c.h.b16 %v919
        %v962 = vunpack.c.l.b16 %v920
        %v963 = vunpack.c.h.b16 %v920
        %v964 = vunpack.c.l.b16 %v921
        %v965 = vunpack.c.h.b16 %v921
        %v966 = vunpack.c.l.b16 %v922
        %v967 = vunpack.c.h.b16 %v922
        %v968 = vunpack.c.l.b16 %v923
        %v969 = vunpack.c.h.b16 %v923
        %v970 = vunpack.c.l.b16 %v924
        %v971 = vunpack.c.h.b16 %v924
        %v972 = vunpack.c.l.b16 %v925
        %v973 = vunpack.c.h.b16 %v925
        %v974 = vpack.c.b16 %v942, %v942
        %v975 = vpack.c.b16 %v943, %v943
        %v976 = vpack.c.b16 %v944, %v944
        %v977 = vpack.c.b16 %v945, %v945
        %v978 = vpack.c.b16 %v946, %v946
        %v979 = vpack.c.b16 %v947, %v947
        %v980 = vpack.c.b16 %v948, %v948
        %v981 = vpack.c.b16 %v949, %v949
        %v982 = vpack.c.b16 %v950, %v950
        %v983 = vpack.c.b16 %v951, %v951
        %v984 = vpack.c.b16 %v952, %v952
        %v985 = vpack.c.b16 %v953, %v953
        %v986 = vpack.c.b16 %v954, %v954
        %v987 = vpack.c.b16 %v955, %v955
        %v988 = vpack.c.b16 %v956, %v956
        %v989 = vpack.c.b16 %v957, %v957
        %v990 = vpack.c.b16 %v958, %v958
        %v991 = vpack.c.b16 %v959, %v959
        %v992 = vpack.c.b16 %v960, %v960
        %v993 = vpack.c.b16 %v961, %v961
        %v994 = vpack.c.b16 %v962, %v962
        %v995 = vpack.c.b16 %v963, %v963
        %v996 = vpack.c.b16 %v964, %v964
        %v997 = vpack.c.b16 %v965, %v965
        %v998 = vpack.c.b16 %v966, %v966
        %v999 = vpack.c.b16 %v967, %v967
        %v1000 = vpack.c.b16 %v968, %v968
        %v1001 = vpack.c.b16 %v969, %v969
        %v1002 = vpack.c.b16 %v970, %v970
        %v1003 = vpack.c.b16 %v971, %v971
        %v1004 = vpack.c.b16 %v972, %v972
        %v1005 = vpack.c.b16 %v973, %v973
        %vm1006 = vsmask.f32 256
        %vm1007 = vsmask.f32 4368
        %vm1008 = vmor %vm1006, %vm1007
        %v1010 = vshrl.u32 %v974, 16
        %v1012 = vrot.slane %v1010, 7
        %v1013 = vshll.u32 %v974, 16
        %v1015 = vor.u32 %v1012, %v1013
        %v1016 = vrot.slane %v1012, 4
        %v1018 = vshrl.u32 %v975, 16
        %v1020 = vrot.slane %v1018, 7
        %v1021 = vshll.u32 %v975, 16
        %v1023 = vor.u32 %v1020, %v1021
        %v1024 = vsel %vm1008, %v1016, %v1023
        %v1025 = vrot.slane %v1020, 4
        %v1027 = vshrl.u32 %v976, 16
        %v1029 = vrot.slane %v1027, 7
        %v1030 = vshll.u32 %v976, 16
        %v1032 = vor.u32 %v1029, %v1030
        %v1033 = vrot.slane %v1029, 4
        %v1035 = vshrl.u32 %v977, 16
        %v1037 = vrot.slane %v1035, 7
        %v1038 = vshll.u32 %v977, 16
        %v1040 = vor.u32 %v1037, %v1038
        %v1041 = vsel %vm1008, %v1033, %v1040
        %v1042 = vrot.slane %v1037, 4
        %v1044 = vshrl.u32 %v978, 16
        %v1046 = vrot.slane %v1044, 7
        %v1047 = vshll.u32 %v978, 16
        %v1049 = vor.u32 %v1046, %v1047
        %v1050 = vrot.slane %v1046, 4
        %v1052 = vshrl.u32 %v979, 16
        %v1054 = vrot.slane %v1052, 7
        %v1055 = vshll.u32 %v979, 16
        %v1057 = vor.u32 %v1054, %v1055
        %v1058 = vsel %vm1008, %v1050, %v1057
        %v1059 = vrot.slane %v1054, 4
        %v1061 = vshrl.u32 %v980, 16
        %v1063 = vrot.slane %v1061, 7
        %v1064 = vshll.u32 %v980, 16
        %v1066 = vor.u32 %v1063, %v1064
        %v1067 = vrot.slane %v1063, 4
        %v1069 = vshrl.u32 %v981, 16
        %v1071 = vrot.slane %v1069, 7
        %v1072 = vshll.u32 %v981, 16
        %v1074 = vor.u32 %v1071, %v1072
        %v1075 = vsel %vm1008, %v1067, %v1074
        %v1076 = vrot.slane %v1071, 4
        %v1078 = vshrl.u32 %v982, 16
        %v1080 = vrot.slane %v1078, 7
        %v1081 = vshll.u32 %v982, 16
        %v1083 = vor.u32 %v1080, %v1081
        %v1084 = vrot.slane %v1080, 4
        %v1086 = vshrl.u32 %v983, 16
        %v1088 = vrot.slane %v1086, 7
        %v1089 = vshll.u32 %v983, 16
        %v1091 = vor.u32 %v1088, %v1089
        %v1092 = vsel %vm1008, %v1084, %v1091
        %v1093 = vrot.slane %v1088, 4
        %v1095 = vshrl.u32 %v984, 16
        %v1097 = vrot.slane %v1095, 7
        %v1098 = vshll.u32 %v984, 16
        %v1100 = vor.u32 %v1097, %v1098
        %v1101 = vrot.slane %v1097, 4
        %v1103 = vshrl.u32 %v985, 16
        %v1105 = vrot.slane %v1103, 7
        %v1106 = vshll.u32 %v985, 16
        %v1108 = vor.u32 %v1105, %v1106
        %v1109 = vsel %vm1008, %v1101, %v1108
        %v1110 = vrot.slane %v1105, 4
        %v1112 = vshrl.u32 %v986, 16
        %v1114 = vrot.slane %v1112, 7
        %v1115 = vshll.u32 %v986, 16
        %v1117 = vor.u32 %v1114, %v1115
        %v1118 = vrot.slane %v1114, 4
        %v1120 = vshrl.u32 %v987, 16
        %v1122 = vrot.slane %v1120, 7
        %v1123 = vshll.u32 %v987, 16
        %v1125 = vor.u32 %v1122, %v1123
        %v1126 = vsel %vm1008, %v1118, %v1125
        %v1127 = vrot.slane %v1122, 4
        %v1129 = vshrl.u32 %v988, 16
        %v1131 = vrot.slane %v1129, 7
        %v1132 = vshll.u32 %v988, 16
        %v1134 = vor.u32 %v1131, %v1132
        %v1135 = vrot.slane %v1131, 4
        %v1137 = vshrl.u32 %v989, 16
        %v1139 = vrot.slane %v1137, 7
        %v1140 = vshll.u32 %v989, 16
        %v1142 = vor.u32 %v1139, %v1140
        %v1143 = vsel %vm1008, %v1135, %v1142
        %v1144 = vrot.slane %v1139, 4
        %v1146 = vshrl.u32 %v990, 16
        %v1148 = vrot.slane %v1146, 7
        %v1149 = vshll.u32 %v990, 16
        %v1151 = vor.u32 %v1148, %v1149
        %v1152 = vrot.slane %v1148, 4
        %v1154 = vshrl.u32 %v991, 16
        %v1156 = vrot.slane %v1154, 7
        %v1157 = vshll.u32 %v991, 16
        %v1159 = vor.u32 %v1156, %v1157
        %v1160 = vsel %vm1008, %v1152, %v1159
        %v1161 = vrot.slane %v1156, 4
        %v1163 = vshrl.u32 %v992, 16
        %v1165 = vrot.slane %v1163, 7
        %v1166 = vshll.u32 %v992, 16
        %v1168 = vor.u32 %v1165, %v1166
        %v1169 = vrot.slane %v1165, 4
        %v1171 = vshrl.u32 %v993, 16
        %v1173 = vrot.slane %v1171, 7
        %v1174 = vshll.u32 %v993, 16
        %v1176 = vor.u32 %v1173, %v1174
        %v1177 = vsel %vm1008, %v1169, %v1176
        %v1178 = vrot.slane %v1173, 4
        %v1180 = vshrl.u32 %v994, 16
        %v1182 = vrot.slane %v1180, 7
        %v1183 = vshll.u32 %v994, 16
        %v1185 = vor.u32 %v1182, %v1183
        %v1186 = vrot.slane %v1182, 4
        %v1188 = vshrl.u32 %v995, 16
        %v1190 = vrot.slane %v1188, 7
        %v1191 = vshll.u32 %v995, 16
        %v1193 = vor.u32 %v1190, %v1191
        %v1194 = vsel %vm1008, %v1186, %v1193
        %v1195 = vrot.slane %v1190, 4
        %v1197 = vshrl.u32 %v996, 16
        %v1199 = vrot.slane %v1197, 7
        %v1200 = vshll.u32 %v996, 16
        %v1202 = vor.u32 %v1199, %v1200
        %v1203 = vrot.slane %v1199, 4
        %v1205 = vshrl.u32 %v997, 16
        %v1207 = vrot.slane %v1205, 7
        %v1208 = vshll.u32 %v997, 16
        %v1210 = vor.u32 %v1207, %v1208
        %v1211 = vsel %vm1008, %v1203, %v1210
        %v1212 = vrot.slane %v1207, 4
        %v1214 = vshrl.u32 %v998, 16
        %v1216 = vrot.slane %v1214, 7
        %v1217 = vshll.u32 %v998, 16
        %v1219 = vor.u32 %v1216, %v1217
        %v1220 = vrot.slane %v1216, 4
        %v1222 = vshrl.u32 %v999, 16
        %v1224 = vrot.slane %v1222, 7
        %v1225 = vshll.u32 %v999, 16
        %v1227 = vor.u32 %v1224, %v1225
        %v1228 = vsel %vm1008, %v1220, %v1227
        %v1229 = vrot.slane %v1224, 4
        %v1231 = vshrl.u32 %v1000, 16
        %v1233 = vrot.slane %v1231, 7
        %v1234 = vshll.u32 %v1000, 16
        %v1236 = vor.u32 %v1233, %v1234
        %v1237 = vrot.slane %v1233, 4
        %v1239 = vshrl.u32 %v1001, 16
        %v1241 = vrot.slane %v1239, 7
        %v1242 = vshll.u32 %v1001, 16
        %v1244 = vor.u32 %v1241, %v1242
        %v1245 = vsel %vm1008, %v1237, %v1244
        %v1246 = vrot.slane %v1241, 4
        %v1248 = vshrl.u32 %v1002, 16
        %v1250 = vrot.slane %v1248, 7
        %v1251 = vshll.u32 %v1002, 16
        %v1253 = vor.u32 %v1250, %v1251
        %v1254 = vrot.slane %v1250, 4
        %v1256 = vshrl.u32 %v1003, 16
        %v1258 = vrot.slane %v1256, 7
        %v1259 = vshll.u32 %v1003, 16
        %v1261 = vor.u32 %v1258, %v1259
        %v1262 = vsel %vm1008, %v1254, %v1261
        %v1263 = vrot.slane %v1258, 4
        %v1265 = vshrl.u32 %v1004, 16
        %v1267 = vrot.slane %v1265, 7
        %v1268 = vshll.u32 %v1004, 16
        %v1270 = vor.u32 %v1267, %v1268
        %v1271 = vrot.slane %v1267, 4
        %v1273 = vshrl.u32 %v1005, 16
        %v1275 = vrot.slane %v1273, 7
        %v1276 = vshll.u32 %v1005, 16
        %v1278 = vor.u32 %v1275, %v1276
        %v1279 = vsel %vm1008, %v1271, %v1278
        %v1280 = vrot.slane %v1275, 4
        %s1329 = scalar_lea.vmem [#allocation2], 12
        %vm1330 = vcmask 27648
        %vm1331 = vsmask.f32 7938
        %vm1332 = vmand %vm1330, %vm1331
        %v1333 = vld [vmem:[%s1329] sm:$0xf]
        %v1334 = vsel %vm1332, %v1015, %v1333
        %1335 = vst [vmem:[%s1329] sm:$0xf] %v1334
        %1336 = vst.msk [vmem:[%s1329 + $0x4] sm:$0xf] %vm296, %v1024
        %vm1337 = vcmask 24576
        %vm1338 = vmand %vm1337, %vm1006
        %v1339 = vld [vmem:[%s1329 + $0x8] sm:$0x1]
        %v1340 = vsel %vm1338, %v1025, %v1339
        %1341 = vst [vmem:[%s1329 + $0x8] sm:$0x1] %v1340
        %v1342 = vld [vmem:[%s1329 + $0xc] sm:$0xf]
        %v1343 = vsel %vm1332, %v1032, %v1342
        %1344 = vst [vmem:[%s1329 + $0xc] sm:$0xf] %v1343
        %1345 = vst.msk [vmem:[%s1329 + $0x10] sm:$0xf] %vm296, %v1041
        %v1346 = vld [vmem:[%s1329 + $0x14] sm:$0x1]
        %v1347 = vsel %vm1338, %v1042, %v1346
        %1348 = vst [vmem:[%s1329 + $0x14] sm:$0x1] %v1347
        %v1349 = vld [vmem:[%s1329 + $0x18] sm:$0xf]
        %v1350 = vsel %vm1332, %v1049, %v1349
        %1351 = vst [vmem:[%s1329 + $0x18] sm:$0xf] %v1350
        %1352 = vst.msk [vmem:[%s1329 + $0x1c] sm:$0xf] %vm296, %v1058
        %v1353 = vld [vmem:[%s1329 + $0x20] sm:$0x1]
        %v1354 = vsel %vm1338, %v1059, %v1353
        %1355 = vst [vmem:[%s1329 + $0x20] sm:$0x1] %v1354
        %v1356 = vld [vmem:[%s1329 + $0x24] sm:$0xf]
        %v1357 = vsel %vm1332, %v1066, %v1356
        %1358 = vst [vmem:[%s1329 + $0x24] sm:$0xf] %v1357
        %1359 = vst.msk [vmem:[%s1329 + $0x28] sm:$0xf] %vm296, %v1075
        %v1360 = vld [vmem:[%s1329 + $0x2c] sm:$0x1]
        %v1361 = vsel %vm1338, %v1076, %v1360
        %1362 = vst [vmem:[%s1329 + $0x2c] sm:$0x1] %v1361
        %v1363 = vld [vmem:[%s1329 + $0x30] sm:$0xf]
        %v1364 = vsel %vm1332, %v1083, %v1363
        %1365 = vst [vmem:[%s1329 + $0x30] sm:$0xf] %v1364
        %1366 = vst.msk [vmem:[%s1329 + $0x34] sm:$0xf] %vm296, %v1092
        %v1367 = vld [vmem:[%s1329 + $0x38] sm:$0x1]
        %v1368 = vsel %vm1338, %v1093, %v1367
        %1369 = vst [vmem:[%s1329 + $0x38] sm:$0x1] %v1368
        %v1370 = vld [vmem:[%s1329 + $0x3c] sm:$0xf]
        %v1371 = vsel %vm1332, %v1100, %v1370
        %1372 = vst [vmem:[%s1329 + $0x3c] sm:$0xf] %v1371
        %1373 = vst.msk [vmem:[%s1329 + $0x40] sm:$0xf] %vm296, %v1109
        %v1374 = vld [vmem:[%s1329 + $0x44] sm:$0x1]
        %v1375 = vsel %vm1338, %v1110, %v1374
        %1376 = vst [vmem:[%s1329 + $0x44] sm:$0x1] %v1375
        %v1377 = vld [vmem:[%s1329 + $0x48] sm:$0xf]
        %v1378 = vsel %vm1332, %v1117, %v1377
        %1379 = vst [vmem:[%s1329 + $0x48] sm:$0xf] %v1378
        %1380 = vst.msk [vmem:[%s1329 + $0x4c] sm:$0xf] %vm296, %v1126
        %v1381 = vld [vmem:[%s1329 + $0x50] sm:$0x1]
        %v1382 = vsel %vm1338, %v1127, %v1381
        %1383 = vst [vmem:[%s1329 + $0x50] sm:$0x1] %v1382
        %v1384 = vld [vmem:[%s1329 + $0x54] sm:$0xf]
        %v1385 = vsel %vm1332, %v1134, %v1384
        %1386 = vst [vmem:[%s1329 + $0x54] sm:$0xf] %v1385
        %1387 = vst.msk [vmem:[%s1329 + $0x58] sm:$0xf] %vm296, %v1143
        %v1388 = vld [vmem:[%s1329 + $0x5c] sm:$0x1]
        %v1389 = vsel %vm1338, %v1144, %v1388
        %1390 = vst [vmem:[%s1329 + $0x5c] sm:$0x1] %v1389
        %v1391 = vld [vmem:[%s1329 + $0x60] sm:$0xf]
        %v1392 = vsel %vm1332, %v1151, %v1391
        %1393 = vst [vmem:[%s1329 + $0x60] sm:$0xf] %v1392
        %1394 = vst.msk [vmem:[%s1329 + $0x64] sm:$0xf] %vm296, %v1160
        %v1395 = vld [vmem:[%s1329 + $0x68] sm:$0x1]
        %v1396 = vsel %vm1338, %v1161, %v1395
        %1397 = vst [vmem:[%s1329 + $0x68] sm:$0x1] %v1396
        %v1398 = vld [vmem:[%s1329 + $0x6c] sm:$0xf]
        %v1399 = vsel %vm1332, %v1168, %v1398
        %1400 = vst [vmem:[%s1329 + $0x6c] sm:$0xf] %v1399
        %1401 = vst.msk [vmem:[%s1329 + $0x70] sm:$0xf] %vm296, %v1177
        %v1402 = vld [vmem:[%s1329 + $0x74] sm:$0x1]
        %v1403 = vsel %vm1338, %v1178, %v1402
        %1404 = vst [vmem:[%s1329 + $0x74] sm:$0x1] %v1403
        %v1405 = vld [vmem:[%s1329 + $0x78] sm:$0xf]
        %v1406 = vsel %vm1332, %v1185, %v1405
        %1407 = vst [vmem:[%s1329 + $0x78] sm:$0xf] %v1406
        %1408 = vst.msk [vmem:[%s1329 + $0x7c] sm:$0xf] %vm296, %v1194
        %v1409 = vld [vmem:[%s1329 + $0x80] sm:$0x1]
        %v1410 = vsel %vm1338, %v1195, %v1409
        %1411 = vst [vmem:[%s1329 + $0x80] sm:$0x1] %v1410
        %v1412 = vld [vmem:[%s1329 + $0x84] sm:$0xf]
        %v1413 = vsel %vm1332, %v1202, %v1412
        %1414 = vst [vmem:[%s1329 + $0x84] sm:$0xf] %v1413
        %1415 = vst.msk [vmem:[%s1329 + $0x88] sm:$0xf] %vm296, %v1211
        %v1416 = vld [vmem:[%s1329 + $0x8c] sm:$0x1]
        %v1417 = vsel %vm1338, %v1212, %v1416
        %1418 = vst [vmem:[%s1329 + $0x8c] sm:$0x1] %v1417
        %v1419 = vld [vmem:[%s1329 + $0x90] sm:$0xf]
        %v1420 = vsel %vm1332, %v1219, %v1419
        %1421 = vst [vmem:[%s1329 + $0x90] sm:$0xf] %v1420
        %1422 = vst.msk [vmem:[%s1329 + $0x94] sm:$0xf] %vm296, %v1228
        %v1423 = vld [vmem:[%s1329 + $0x98] sm:$0x1]
        %v1424 = vsel %vm1338, %v1229, %v1423
        %1425 = vst [vmem:[%s1329 + $0x98] sm:$0x1] %v1424
        %v1426 = vld [vmem:[%s1329 + $0x9c] sm:$0xf]
        %v1427 = vsel %vm1332, %v1236, %v1426
        %1428 = vst [vmem:[%s1329 + $0x9c] sm:$0xf] %v1427
        %1429 = vst.msk [vmem:[%s1329 + $0xa0] sm:$0xf] %vm296, %v1245
        %v1430 = vld [vmem:[%s1329 + $0xa4] sm:$0x1]
        %v1431 = vsel %vm1338, %v1246, %v1430
        %1432 = vst [vmem:[%s1329 + $0xa4] sm:$0x1] %v1431
        %v1433 = vld [vmem:[%s1329 + $0xa8] sm:$0xf]
        %v1434 = vsel %vm1332, %v1253, %v1433
        %1435 = vst [vmem:[%s1329 + $0xa8] sm:$0xf] %v1434
        %1436 = vst.msk [vmem:[%s1329 + $0xac] sm:$0xf] %vm296, %v1262
        %v1437 = vld [vmem:[%s1329 + $0xb0] sm:$0x1]
        %v1438 = vsel %vm1338, %v1263, %v1437
        %1439 = vst [vmem:[%s1329 + $0xb0] sm:$0x1] %v1438
        %v1440 = vld [vmem:[%s1329 + $0xb4] sm:$0xf]
        %v1441 = vsel %vm1332, %v1270, %v1440
        %1442 = vst [vmem:[%s1329 + $0xb4] sm:$0xf] %v1441
        %1443 = vst.msk [vmem:[%s1329 + $0xb8] sm:$0xf] %vm296, %v1279
        %v1444 = vld [vmem:[%s1329 + $0xbc] sm:$0x1]
        %v1445 = vsel %vm1338, %v1280, %v1444
        %1446 = vst [vmem:[%s1329 + $0xbc] sm:$0x1] %v1445
        %v1447 = vld [vmem:[#allocation2] sm:$0xf]
        %v1448 = vld [vmem:[#allocation2 + $0x4] sm:$0xf]
        %v1449 = vld [vmem:[#allocation2 + $0xc] sm:$0xf]
        %v1450 = vld [vmem:[#allocation2 + $0x10] sm:$0xf]
        %v1451 = vld [vmem:[#allocation2 + $0x18] sm:$0xf]
        %v1452 = vld [vmem:[#allocation2 + $0x1c] sm:$0xf]
        %v1453 = vld [vmem:[#allocation2 + $0x24] sm:$0xf]
        %v1454 = vld [vmem:[#allocation2 + $0x28] sm:$0xf]
        %v1455 = vld [vmem:[#allocation2 + $0x30] sm:$0xf]
        %v1456 = vld [vmem:[#allocation2 + $0x34] sm:$0xf]
        %v1457 = vld [vmem:[#allocation2 + $0x3c] sm:$0xf]
        %v1458 = vld [vmem:[#allocation2 + $0x40] sm:$0xf]
        %v1459 = vld [vmem:[#allocation2 + $0x48] sm:$0xf]
        %v1460 = vld [vmem:[#allocation2 + $0x4c] sm:$0xf]
        %v1461 = vld [vmem:[#allocation2 + $0x54] sm:$0xf]
        %v1462 = vld [vmem:[#allocation2 + $0x58] sm:$0xf]
        %v1463 = vld [vmem:[#allocation2 + $0x60] sm:$0xf]
        %v1464 = vld [vmem:[#allocation2 + $0x64] sm:$0xf]
        %v1465 = vld [vmem:[#allocation2 + $0x6c] sm:$0xf]
        %v1466 = vld [vmem:[#allocation2 + $0x70] sm:$0xf]
        %v1467 = vld [vmem:[#allocation2 + $0x78] sm:$0xf]
        %v1468 = vld [vmem:[#allocation2 + $0x7c] sm:$0xf]
        %v1469 = vld [vmem:[#allocation2 + $0x84] sm:$0xf]
        %v1470 = vld [vmem:[#allocation2 + $0x88] sm:$0xf]
        %v1471 = vld [vmem:[#allocation2 + $0x90] sm:$0xf]
        %v1472 = vld [vmem:[#allocation2 + $0x94] sm:$0xf]
        %v1473 = vld [vmem:[#allocation2 + $0x9c] sm:$0xf]
        %v1474 = vld [vmem:[#allocation2 + $0xa0] sm:$0xf]
        %v1475 = vld [vmem:[#allocation2 + $0xa8] sm:$0xf]
        %v1476 = vld [vmem:[#allocation2 + $0xac] sm:$0xf]
        %v1477 = vld [vmem:[#allocation2 + $0xb4] sm:$0xf]
        %v1478 = vld [vmem:[#allocation2 + $0xb8] sm:$0xf]
        %v1479 = vld [vmem:[#allocation2 + $0x8] sm:$0x1]
        %v1480 = vld [vmem:[#allocation2 + $0x14] sm:$0x1]
        %v1481 = vld [vmem:[#allocation2 + $0x20] sm:$0x1]
        %v1482 = vld [vmem:[#allocation2 + $0x2c] sm:$0x1]
        %v1483 = vld [vmem:[#allocation2 + $0x38] sm:$0x1]
        %v1484 = vld [vmem:[#allocation2 + $0x44] sm:$0x1]
        %v1485 = vld [vmem:[#allocation2 + $0x50] sm:$0x1]
        %v1486 = vld [vmem:[#allocation2 + $0x5c] sm:$0x1]
        %v1487 = vld [vmem:[#allocation2 + $0x68] sm:$0x1]
        %v1488 = vld [vmem:[#allocation2 + $0x74] sm:$0x1]
        %v1489 = vld [vmem:[#allocation2 + $0x80] sm:$0x1]
        %v1490 = vld [vmem:[#allocation2 + $0x8c] sm:$0x1]
        %v1491 = vld [vmem:[#allocation2 + $0x98] sm:$0x1]
        %v1492 = vld [vmem:[#allocation2 + $0xa4] sm:$0x1]
        %v1493 = vld [vmem:[#allocation2 + $0xb0] sm:$0x1]
        %v1494 = vld [vmem:[#allocation2 + $0xbc] sm:$0x1]
        %vm1495 = vsmask.f32 3328
        %vm1496 = vsmask.f32 7440
        %vm1497 = vmor %vm1495, %vm1496
        %v1499 = vshrl.u32 %v1447, 16
        %v1501 = vrot.slane %v1499, 4
        %v1502 = vshll.u32 %v1447, 16
        %v1504 = vrot.slane %v1502, 5
        %v1505 = vor.u32 %v1501, %v1504
        %v1506 = vrot.slane %v1505, 4
        %v1508 = vshll.u32 %v1448, 16
        %v1510 = vrot.slane %v1508, 5
        %v1511 = vsel %vm1497, %v1506, %v1510
        %v1512 = vshrl.u32 %v1448, 16
        %v1514 = vrot.slane %v1512, 4
        %v1515 = vor.u32 %v1514, %v1510
        %v1516 = vrot.slane %v1515, 4
        %v1518 = vshll.u32 %v1479, 16
        %v1520 = vrot.slane %v1518, 5
        %v1521 = vsel %vm1497, %v1516, %v1520
        %v1523 = vshrl.u32 %v1449, 16
        %v1525 = vrot.slane %v1523, 4
        %v1526 = vshll.u32 %v1449, 16
        %v1528 = vrot.slane %v1526, 5
        %v1529 = vor.u32 %v1525, %v1528
        %v1530 = vrot.slane %v1529, 4
        %v1532 = vshll.u32 %v1450, 16
        %v1534 = vrot.slane %v1532, 5
        %v1535 = vsel %vm1497, %v1530, %v1534
        %v1536 = vshrl.u32 %v1450, 16
        %v1538 = vrot.slane %v1536, 4
        %v1539 = vor.u32 %v1538, %v1534
        %v1540 = vrot.slane %v1539, 4
        %v1542 = vshll.u32 %v1480, 16
        %v1544 = vrot.slane %v1542, 5
        %v1545 = vsel %vm1497, %v1540, %v1544
        %v1547 = vshrl.u32 %v1451, 16
        %v1549 = vrot.slane %v1547, 4
        %v1550 = vshll.u32 %v1451, 16
        %v1552 = vrot.slane %v1550, 5
        %v1553 = vor.u32 %v1549, %v1552
        %v1554 = vrot.slane %v1553, 4
        %v1556 = vshll.u32 %v1452, 16
        %v1558 = vrot.slane %v1556, 5
        %v1559 = vsel %vm1497, %v1554, %v1558
        %v1560 = vshrl.u32 %v1452, 16
        %v1562 = vrot.slane %v1560, 4
        %v1563 = vor.u32 %v1562, %v1558
        %v1564 = vrot.slane %v1563, 4
        %v1566 = vshll.u32 %v1481, 16
        %v1568 = vrot.slane %v1566, 5
        %v1569 = vsel %vm1497, %v1564, %v1568
        %v1571 = vshrl.u32 %v1453, 16
        %v1573 = vrot.slane %v1571, 4
        %v1574 = vshll.u32 %v1453, 16
        %v1576 = vrot.slane %v1574, 5
        %v1577 = vor.u32 %v1573, %v1576
        %v1578 = vrot.slane %v1577, 4
        %v1580 = vshll.u32 %v1454, 16
        %v1582 = vrot.slane %v1580, 5
        %v1583 = vsel %vm1497, %v1578, %v1582
        %v1584 = vshrl.u32 %v1454, 16
        %v1586 = vrot.slane %v1584, 4
        %v1587 = vor.u32 %v1586, %v1582
        %v1588 = vrot.slane %v1587, 4
        %v1590 = vshll.u32 %v1482, 16
        %v1592 = vrot.slane %v1590, 5
        %v1593 = vsel %vm1497, %v1588, %v1592
        %v1595 = vshrl.u32 %v1455, 16
        %v1597 = vrot.slane %v1595, 4
        %v1598 = vshll.u32 %v1455, 16
        %v1600 = vrot.slane %v1598, 5
        %v1601 = vor.u32 %v1597, %v1600
        %v1602 = vrot.slane %v1601, 4
        %v1604 = vshll.u32 %v1456, 16
        %v1606 = vrot.slane %v1604, 5
        %v1607 = vsel %vm1497, %v1602, %v1606
        %v1608 = vshrl.u32 %v1456, 16
        %v1610 = vrot.slane %v1608, 4
        %v1611 = vor.u32 %v1610, %v1606
        %v1612 = vrot.slane %v1611, 4
        %v1614 = vshll.u32 %v1483, 16
        %v1616 = vrot.slane %v1614, 5
        %v1617 = vsel %vm1497, %v1612, %v1616
        %v1619 = vshrl.u32 %v1457, 16
        %v1621 = vrot.slane %v1619, 4
        %v1622 = vshll.u32 %v1457, 16
        %v1624 = vrot.slane %v1622, 5
        %v1625 = vor.u32 %v1621, %v1624
        %v1626 = vrot.slane %v1625, 4
        %v1628 = vshll.u32 %v1458, 16
        %v1630 = vrot.slane %v1628, 5
        %v1631 = vsel %vm1497, %v1626, %v1630
        %v1632 = vshrl.u32 %v1458, 16
        %v1634 = vrot.slane %v1632, 4
        %v1635 = vor.u32 %v1634, %v1630
        %v1636 = vrot.slane %v1635, 4
        %v1638 = vshll.u32 %v1484, 16
        %v1640 = vrot.slane %v1638, 5
        %v1641 = vsel %vm1497, %v1636, %v1640
        %v1643 = vshrl.u32 %v1459, 16
        %v1645 = vrot.slane %v1643, 4
        %v1646 = vshll.u32 %v1459, 16
        %v1648 = vrot.slane %v1646, 5
        %v1649 = vor.u32 %v1645, %v1648
        %v1650 = vrot.slane %v1649, 4
        %v1652 = vshll.u32 %v1460, 16
        %v1654 = vrot.slane %v1652, 5
        %v1655 = vsel %vm1497, %v1650, %v1654
        %v1656 = vshrl.u32 %v1460, 16
        %v1658 = vrot.slane %v1656, 4
        %v1659 = vor.u32 %v1658, %v1654
        %v1660 = vrot.slane %v1659, 4
        %v1662 = vshll.u32 %v1485, 16
        %v1664 = vrot.slane %v1662, 5
        %v1665 = vsel %vm1497, %v1660, %v1664
        %v1667 = vshrl.u32 %v1461, 16
        %v1669 = vrot.slane %v1667, 4
        %v1670 = vshll.u32 %v1461, 16
        %v1672 = vrot.slane %v1670, 5
        %v1673 = vor.u32 %v1669, %v1672
        %v1674 = vrot.slane %v1673, 4
        %v1676 = vshll.u32 %v1462, 16
        %v1678 = vrot.slane %v1676, 5
        %v1679 = vsel %vm1497, %v1674, %v1678
        %v1680 = vshrl.u32 %v1462, 16
        %v1682 = vrot.slane %v1680, 4
        %v1683 = vor.u32 %v1682, %v1678
        %v1684 = vrot.slane %v1683, 4
        %v1686 = vshll.u32 %v1486, 16
        %v1688 = vrot.slane %v1686, 5
        %v1689 = vsel %vm1497, %v1684, %v1688
        %v1691 = vshrl.u32 %v1463, 16
        %v1693 = vrot.slane %v1691, 4
        %v1694 = vshll.u32 %v1463, 16
        %v1696 = vrot.slane %v1694, 5
        %v1697 = vor.u32 %v1693, %v1696
        %v1698 = vrot.slane %v1697, 4
        %v1700 = vshll.u32 %v1464, 16
        %v1702 = vrot.slane %v1700, 5
        %v1703 = vsel %vm1497, %v1698, %v1702
        %v1704 = vshrl.u32 %v1464, 16
        %v1706 = vrot.slane %v1704, 4
        %v1707 = vor.u32 %v1706, %v1702
        %v1708 = vrot.slane %v1707, 4
        %v1710 = vshll.u32 %v1487, 16
        %v1712 = vrot.slane %v1710, 5
        %v1713 = vsel %vm1497, %v1708, %v1712
        %v1715 = vshrl.u32 %v1465, 16
        %v1717 = vrot.slane %v1715, 4
        %v1718 = vshll.u32 %v1465, 16
        %v1720 = vrot.slane %v1718, 5
        %v1721 = vor.u32 %v1717, %v1720
        %v1722 = vrot.slane %v1721, 4
        %v1724 = vshll.u32 %v1466, 16
        %v1726 = vrot.slane %v1724, 5
        %v1727 = vsel %vm1497, %v1722, %v1726
        %v1728 = vshrl.u32 %v1466, 16
        %v1730 = vrot.slane %v1728, 4
        %v1731 = vor.u32 %v1730, %v1726
        %v1732 = vrot.slane %v1731, 4
        %v1734 = vshll.u32 %v1488, 16
        %v1736 = vrot.slane %v1734, 5
        %v1737 = vsel %vm1497, %v1732, %v1736
        %v1739 = vshrl.u32 %v1467, 16
        %v1741 = vrot.slane %v1739, 4
        %v1742 = vshll.u32 %v1467, 16
        %v1744 = vrot.slane %v1742, 5
        %v1745 = vor.u32 %v1741, %v1744
        %v1746 = vrot.slane %v1745, 4
        %v1748 = vshll.u32 %v1468, 16
        %v1750 = vrot.slane %v1748, 5
        %v1751 = vsel %vm1497, %v1746, %v1750
        %v1752 = vshrl.u32 %v1468, 16
        %v1754 = vrot.slane %v1752, 4
        %v1755 = vor.u32 %v1754, %v1750
        %v1756 = vrot.slane %v1755, 4
        %v1758 = vshll.u32 %v1489, 16
        %v1760 = vrot.slane %v1758, 5
        %v1761 = vsel %vm1497, %v1756, %v1760
        %v1763 = vshrl.u32 %v1469, 16
        %v1765 = vrot.slane %v1763, 4
        %v1766 = vshll.u32 %v1469, 16
        %v1768 = vrot.slane %v1766, 5
        %v1769 = vor.u32 %v1765, %v1768
        %v1770 = vrot.slane %v1769, 4
        %v1772 = vshll.u32 %v1470, 16
        %v1774 = vrot.slane %v1772, 5
        %v1775 = vsel %vm1497, %v1770, %v1774
        %v1776 = vshrl.u32 %v1470, 16
        %v1778 = vrot.slane %v1776, 4
        %v1779 = vor.u32 %v1778, %v1774
        %v1780 = vrot.slane %v1779, 4
        %v1782 = vshll.u32 %v1490, 16
        %v1784 = vrot.slane %v1782, 5
        %v1785 = vsel %vm1497, %v1780, %v1784
        %v1787 = vshrl.u32 %v1471, 16
        %v1789 = vrot.slane %v1787, 4
        %v1790 = vshll.u32 %v1471, 16
        %v1792 = vrot.slane %v1790, 5
        %v1793 = vor.u32 %v1789, %v1792
        %v1794 = vrot.slane %v1793, 4
        %v1796 = vshll.u32 %v1472, 16
        %v1798 = vrot.slane %v1796, 5
        %v1799 = vsel %vm1497, %v1794, %v1798
        %v1800 = vshrl.u32 %v1472, 16
        %v1802 = vrot.slane %v1800, 4
        %v1803 = vor.u32 %v1802, %v1798
        %v1804 = vrot.slane %v1803, 4
        %v1806 = vshll.u32 %v1491, 16
        %v1808 = vrot.slane %v1806, 5
        %v1809 = vsel %vm1497, %v1804, %v1808
        %v1811 = vshrl.u32 %v1473, 16
        %v1813 = vrot.slane %v1811, 4
        %v1814 = vshll.u32 %v1473, 16
        %v1816 = vrot.slane %v1814, 5
        %v1817 = vor.u32 %v1813, %v1816
        %v1818 = vrot.slane %v1817, 4
        %v1820 = vshll.u32 %v1474, 16
        %v1822 = vrot.slane %v1820, 5
        %v1823 = vsel %vm1497, %v1818, %v1822
        %v1824 = vshrl.u32 %v1474, 16
        %v1826 = vrot.slane %v1824, 4
        %v1827 = vor.u32 %v1826, %v1822
        %v1828 = vrot.slane %v1827, 4
        %v1830 = vshll.u32 %v1492, 16
        %v1832 = vrot.slane %v1830, 5
        %v1833 = vsel %vm1497, %v1828, %v1832
        %v1835 = vshrl.u32 %v1475, 16
        %v1837 = vrot.slane %v1835, 4
        %v1838 = vshll.u32 %v1475, 16
        %v1840 = vrot.slane %v1838, 5
        %v1841 = vor.u32 %v1837, %v1840
        %v1842 = vrot.slane %v1841, 4
        %v1844 = vshll.u32 %v1476, 16
        %v1846 = vrot.slane %v1844, 5
        %v1847 = vsel %vm1497, %v1842, %v1846
        %v1848 = vshrl.u32 %v1476, 16
        %v1850 = vrot.slane %v1848, 4
        %v1851 = vor.u32 %v1850, %v1846
        %v1852 = vrot.slane %v1851, 4
        %v1854 = vshll.u32 %v1493, 16
        %v1856 = vrot.slane %v1854, 5
        %v1857 = vsel %vm1497, %v1852, %v1856
        %v1859 = vshrl.u32 %v1477, 16
        %v1861 = vrot.slane %v1859, 4
        %v1862 = vshll.u32 %v1477, 16
        %v1864 = vrot.slane %v1862, 5
        %v1865 = vor.u32 %v1861, %v1864
        %v1866 = vrot.slane %v1865, 4
        %v1868 = vshll.u32 %v1478, 16
        %v1870 = vrot.slane %v1868, 5
        %v1871 = vsel %vm1497, %v1866, %v1870
        %v1872 = vshrl.u32 %v1478, 16
        %v1874 = vrot.slane %v1872, 4
        %v1875 = vor.u32 %v1874, %v1870
        %v1876 = vrot.slane %v1875, 4
        %v1878 = vshll.u32 %v1494, 16
        %v1880 = vrot.slane %v1878, 5
        %v1881 = vsel %vm1497, %v1876, %v1880
        %v1882 = vld [vmem:[#allocation2] sm:$0xe]
        %v1883 = vld [vmem:[#allocation2 + $0xc] sm:$0xe]
        %v1884 = vld [vmem:[#allocation2 + $0x18] sm:$0xe]
        %v1885 = vld [vmem:[#allocation2 + $0x24] sm:$0xe]
        %v1886 = vld [vmem:[#allocation2 + $0x30] sm:$0xe]
        %v1887 = vld [vmem:[#allocation2 + $0x3c] sm:$0xe]
        %v1888 = vld [vmem:[#allocation2 + $0x48] sm:$0xe]
        %v1889 = vld [vmem:[#allocation2 + $0x54] sm:$0xe]
        %v1890 = vld [vmem:[#allocation2 + $0x60] sm:$0xe]
        %v1891 = vld [vmem:[#allocation2 + $0x6c] sm:$0xe]
        %v1892 = vld [vmem:[#allocation2 + $0x78] sm:$0xe]
        %v1893 = vld [vmem:[#allocation2 + $0x84] sm:$0xe]
        %v1894 = vld [vmem:[#allocation2 + $0x90] sm:$0xe]
        %v1895 = vld [vmem:[#allocation2 + $0x9c] sm:$0xe]
        %v1896 = vld [vmem:[#allocation2 + $0xa8] sm:$0xe]
        %v1897 = vld [vmem:[#allocation2 + $0xb4] sm:$0xe]
        %vm1946 = vcmask 1042432
        %vm1947 = vcmask 1046532
        %vm1948 = vmor %vm1946, %vm1947
        %v1949 = vrot.slane %v1882, 5
        %v1950 = vrot.slane %v1949, 4
        %v1951 = vrot.slane %v1448, 5
        %v1952 = vsel %vm1948, %v1950, %v1951
        %v1953 = vrot.slane %v1951, 4
        %v1954 = vrot.slane %v1479, 5
        %v1955 = vsel %vm1948, %v1953, %v1954
        %v1956 = vrot.slane %v1883, 5
        %v1957 = vrot.slane %v1956, 4
        %v1958 = vrot.slane %v1450, 5
        %v1959 = vsel %vm1948, %v1957, %v1958
        %v1960 = vrot.slane %v1958, 4
        %v1961 = vrot.slane %v1480, 5
        %v1962 = vsel %vm1948, %v1960, %v1961
        %v1963 = vrot.slane %v1884, 5
        %v1964 = vrot.slane %v1963, 4
        %v1965 = vrot.slane %v1452, 5
        %v1966 = vsel %vm1948, %v1964, %v1965
        %v1967 = vrot.slane %v1965, 4
        %v1968 = vrot.slane %v1481, 5
        %v1969 = vsel %vm1948, %v1967, %v1968
        %v1970 = vrot.slane %v1885, 5
        %v1971 = vrot.slane %v1970, 4
        %v1972 = vrot.slane %v1454, 5
        %v1973 = vsel %vm1948, %v1971, %v1972
        %v1974 = vrot.slane %v1972, 4
        %v1975 = vrot.slane %v1482, 5
        %v1976 = vsel %vm1948, %v1974, %v1975
        %v1977 = vrot.slane %v1886, 5
        %v1978 = vrot.slane %v1977, 4
        %v1979 = vrot.slane %v1456, 5
        %v1980 = vsel %vm1948, %v1978, %v1979
        %v1981 = vrot.slane %v1979, 4
        %v1982 = vrot.slane %v1483, 5
        %v1983 = vsel %vm1948, %v1981, %v1982
        %v1984 = vrot.slane %v1887, 5
        %v1985 = vrot.slane %v1984, 4
        %v1986 = vrot.slane %v1458, 5
        %v1987 = vsel %vm1948, %v1985, %v1986
        %v1988 = vrot.slane %v1986, 4
        %v1989 = vrot.slane %v1484, 5
        %v1990 = vsel %vm1948, %v1988, %v1989
        %v1991 = vrot.slane %v1888, 5
        %v1992 = vrot.slane %v1991, 4
        %v1993 = vrot.slane %v1460, 5
        %v1994 = vsel %vm1948, %v1992, %v1993
        %v1995 = vrot.slane %v1993, 4
        %v1996 = vrot.slane %v1485, 5
        %v1997 = vsel %vm1948, %v1995, %v1996
        %v1998 = vrot.slane %v1889, 5
        %v1999 = vrot.slane %v1998, 4
        %v2000 = vrot.slane %v1462, 5
        %v2001 = vsel %vm1948, %v1999, %v2000
        %v2002 = vrot.slane %v2000, 4
        %v2003 = vrot.slane %v1486, 5
        %v2004 = vsel %vm1948, %v2002, %v2003
        %v2005 = vrot.slane %v1890, 5
        %v2006 = vrot.slane %v2005, 4
        %v2007 = vrot.slane %v1464, 5
        %v2008 = vsel %vm1948, %v2006, %v2007
        %v2009 = vrot.slane %v2007, 4
        %v2010 = vrot.slane %v1487, 5
        %v2011 = vsel %vm1948, %v2009, %v2010
        %v2012 = vrot.slane %v1891, 5
        %v2013 = vrot.slane %v2012, 4
        %v2014 = vrot.slane %v1466, 5
        %v2015 = vsel %vm1948, %v2013, %v2014
        %v2016 = vrot.slane %v2014, 4
        %v2017 = vrot.slane %v1488, 5
        %v2018 = vsel %vm1948, %v2016, %v2017
        %v2019 = vrot.slane %v1892, 5
        %v2020 = vrot.slane %v2019, 4
        %v2021 = vrot.slane %v1468, 5
        %v2022 = vsel %vm1948, %v2020, %v2021
        %v2023 = vrot.slane %v2021, 4
        %v2024 = vrot.slane %v1489, 5
        %v2025 = vsel %vm1948, %v2023, %v2024
        %v2026 = vrot.slane %v1893, 5
        %v2027 = vrot.slane %v2026, 4
        %v2028 = vrot.slane %v1470, 5
        %v2029 = vsel %vm1948, %v2027, %v2028
        %v2030 = vrot.slane %v2028, 4
        %v2031 = vrot.slane %v1490, 5
        %v2032 = vsel %vm1948, %v2030, %v2031
        %v2033 = vrot.slane %v1894, 5
        %v2034 = vrot.slane %v2033, 4
        %v2035 = vrot.slane %v1472, 5
        %v2036 = vsel %vm1948, %v2034, %v2035
        %v2037 = vrot.slane %v2035, 4
        %v2038 = vrot.slane %v1491, 5
        %v2039 = vsel %vm1948, %v2037, %v2038
        %v2040 = vrot.slane %v1895, 5
        %v2041 = vrot.slane %v2040, 4
        %v2042 = vrot.slane %v1474, 5
        %v2043 = vsel %vm1948, %v2041, %v2042
        %v2044 = vrot.slane %v2042, 4
        %v2045 = vrot.slane %v1492, 5
        %v2046 = vsel %vm1948, %v2044, %v2045
        %v2047 = vrot.slane %v1896, 5
        %v2048 = vrot.slane %v2047, 4
        %v2049 = vrot.slane %v1476, 5
        %v2050 = vsel %vm1948, %v2048, %v2049
        %v2051 = vrot.slane %v2049, 4
        %v2052 = vrot.slane %v1493, 5
        %v2053 = vsel %vm1948, %v2051, %v2052
        %v2054 = vrot.slane %v1897, 5
        %v2055 = vrot.slane %v2054, 4
        %v2056 = vrot.slane %v1478, 5
        %v2057 = vsel %vm1948, %v2055, %v2056
        %v2058 = vrot.slane %v2056, 4
        %v2059 = vrot.slane %v1494, 5
        %v2060 = vsel %vm1948, %v2058, %v2059
        %v2061 = vld [vmem:[%s1329] sm:$0xf]
        %v2062 = vld [vmem:[%s1329 + $0x4] sm:$0xf]
        %v2063 = vld [vmem:[%s1329 + $0xc] sm:$0xf]
        %v2064 = vld [vmem:[%s1329 + $0x10] sm:$0xf]
        %v2065 = vld [vmem:[%s1329 + $0x18] sm:$0xf]
        %v2066 = vld [vmem:[%s1329 + $0x1c] sm:$0xf]
        %v2067 = vld [vmem:[%s1329 + $0x24] sm:$0xf]
        %v2068 = vld [vmem:[%s1329 + $0x28] sm:$0xf]
        %v2069 = vld [vmem:[%s1329 + $0x30] sm:$0xf]
        %v2070 = vld [vmem:[%s1329 + $0x34] sm:$0xf]
        %v2071 = vld [vmem:[%s1329 + $0x3c] sm:$0xf]
        %v2072 = vld [vmem:[%s1329 + $0x40] sm:$0xf]
        %v2073 = vld [vmem:[%s1329 + $0x48] sm:$0xf]
        %v2074 = vld [vmem:[%s1329 + $0x4c] sm:$0xf]
        %v2075 = vld [vmem:[%s1329 + $0x54] sm:$0xf]
        %v2076 = vld [vmem:[%s1329 + $0x58] sm:$0xf]
        %v2077 = vld [vmem:[%s1329 + $0x60] sm:$0xf]
        %v2078 = vld [vmem:[%s1329 + $0x64] sm:$0xf]
        %v2079 = vld [vmem:[%s1329 + $0x6c] sm:$0xf]
        %v2080 = vld [vmem:[%s1329 + $0x70] sm:$0xf]
        %v2081 = vld [vmem:[%s1329 + $0x78] sm:$0xf]
        %v2082 = vld [vmem:[%s1329 + $0x7c] sm:$0xf]
        %v2083 = vld [vmem:[%s1329 + $0x84] sm:$0xf]
        %v2084 = vld [vmem:[%s1329 + $0x88] sm:$0xf]
        %v2085 = vld [vmem:[%s1329 + $0x90] sm:$0xf]
        %v2086 = vld [vmem:[%s1329 + $0x94] sm:$0xf]
        %v2087 = vld [vmem:[%s1329 + $0x9c] sm:$0xf]
        %v2088 = vld [vmem:[%s1329 + $0xa0] sm:$0xf]
        %v2089 = vld [vmem:[%s1329 + $0xa8] sm:$0xf]
        %v2090 = vld [vmem:[%s1329 + $0xac] sm:$0xf]
        %v2091 = vld [vmem:[%s1329 + $0xb4] sm:$0xf]
        %v2092 = vld [vmem:[%s1329 + $0xb8] sm:$0xf]
        %v2093 = vld [vmem:[%s1329 + $0x8] sm:$0x1]
        %v2094 = vld [vmem:[%s1329 + $0x14] sm:$0x1]
        %v2095 = vld [vmem:[%s1329 + $0x20] sm:$0x1]
        %v2096 = vld [vmem:[%s1329 + $0x2c] sm:$0x1]
        %v2097 = vld [vmem:[%s1329 + $0x38] sm:$0x1]
        %v2098 = vld [vmem:[%s1329 + $0x44] sm:$0x1]
        %v2099 = vld [vmem:[%s1329 + $0x50] sm:$0x1]
        %v2100 = vld [vmem:[%s1329 + $0x5c] sm:$0x1]
        %v2101 = vld [vmem:[%s1329 + $0x68] sm:$0x1]
        %v2102 = vld [vmem:[%s1329 + $0x74] sm:$0x1]
        %v2103 = vld [vmem:[%s1329 + $0x80] sm:$0x1]
        %v2104 = vld [vmem:[%s1329 + $0x8c] sm:$0x1]
        %v2105 = vld [vmem:[%s1329 + $0x98] sm:$0x1]
        %v2106 = vld [vmem:[%s1329 + $0xa4] sm:$0x1]
        %v2107 = vld [vmem:[%s1329 + $0xb0] sm:$0x1]
        %v2108 = vld [vmem:[%s1329 + $0xbc] sm:$0x1]
        %v2110 = vshrl.u32 %v2061, 16
        %v2112 = vrot.slane %v2110, 4
        %v2113 = vshll.u32 %v2061, 16
        %v2115 = vrot.slane %v2113, 5
        %v2116 = vor.u32 %v2112, %v2115
        %v2117 = vrot.slane %v2116, 4
        %v2119 = vshll.u32 %v2062, 16
        %v2121 = vrot.slane %v2119, 5
        %v2122 = vsel %vm1497, %v2117, %v2121
        %v2123 = vshrl.u32 %v2062, 16
        %v2125 = vrot.slane %v2123, 4
        %v2126 = vor.u32 %v2125, %v2121
        %v2127 = vrot.slane %v2126, 4
        %v2129 = vshll.u32 %v2093, 16
        %v2131 = vrot.slane %v2129, 5
        %v2132 = vsel %vm1497, %v2127, %v2131
        %v2134 = vshrl.u32 %v2063, 16
        %v2136 = vrot.slane %v2134, 4
        %v2137 = vshll.u32 %v2063, 16
        %v2139 = vrot.slane %v2137, 5
        %v2140 = vor.u32 %v2136, %v2139
        %v2141 = vrot.slane %v2140, 4
        %v2143 = vshll.u32 %v2064, 16
        %v2145 = vrot.slane %v2143, 5
        %v2146 = vsel %vm1497, %v2141, %v2145
        %v2147 = vshrl.u32 %v2064, 16
        %v2149 = vrot.slane %v2147, 4
        %v2150 = vor.u32 %v2149, %v2145
        %v2151 = vrot.slane %v2150, 4
        %v2153 = vshll.u32 %v2094, 16
        %v2155 = vrot.slane %v2153, 5
        %v2156 = vsel %vm1497, %v2151, %v2155
        %v2158 = vshrl.u32 %v2065, 16
        %v2160 = vrot.slane %v2158, 4
        %v2161 = vshll.u32 %v2065, 16
        %v2163 = vrot.slane %v2161, 5
        %v2164 = vor.u32 %v2160, %v2163
        %v2165 = vrot.slane %v2164, 4
        %v2167 = vshll.u32 %v2066, 16
        %v2169 = vrot.slane %v2167, 5
        %v2170 = vsel %vm1497, %v2165, %v2169
        %v2171 = vshrl.u32 %v2066, 16
        %v2173 = vrot.slane %v2171, 4
        %v2174 = vor.u32 %v2173, %v2169
        %v2175 = vrot.slane %v2174, 4
        %v2177 = vshll.u32 %v2095, 16
        %v2179 = vrot.slane %v2177, 5
        %v2180 = vsel %vm1497, %v2175, %v2179
        %v2182 = vshrl.u32 %v2067, 16
        %v2184 = vrot.slane %v2182, 4
        %v2185 = vshll.u32 %v2067, 16
        %v2187 = vrot.slane %v2185, 5
        %v2188 = vor.u32 %v2184, %v2187
        %v2189 = vrot.slane %v2188, 4
        %v2191 = vshll.u32 %v2068, 16
        %v2193 = vrot.slane %v2191, 5
        %v2194 = vsel %vm1497, %v2189, %v2193
        %v2195 = vshrl.u32 %v2068, 16
        %v2197 = vrot.slane %v2195, 4
        %v2198 = vor.u32 %v2197, %v2193
        %v2199 = vrot.slane %v2198, 4
        %v2201 = vshll.u32 %v2096, 16
        %v2203 = vrot.slane %v2201, 5
        %v2204 = vsel %vm1497, %v2199, %v2203
        %v2206 = vshrl.u32 %v2069, 16
        %v2208 = vrot.slane %v2206, 4
        %v2209 = vshll.u32 %v2069, 16
        %v2211 = vrot.slane %v2209, 5
        %v2212 = vor.u32 %v2208, %v2211
        %v2213 = vrot.slane %v2212, 4
        %v2215 = vshll.u32 %v2070, 16
        %v2217 = vrot.slane %v2215, 5
        %v2218 = vsel %vm1497, %v2213, %v2217
        %v2219 = vshrl.u32 %v2070, 16
        %v2221 = vrot.slane %v2219, 4
        %v2222 = vor.u32 %v2221, %v2217
        %v2223 = vrot.slane %v2222, 4
        %v2225 = vshll.u32 %v2097, 16
        %v2227 = vrot.slane %v2225, 5
        %v2228 = vsel %vm1497, %v2223, %v2227
        %v2230 = vshrl.u32 %v2071, 16
        %v2232 = vrot.slane %v2230, 4
        %v2233 = vshll.u32 %v2071, 16
        %v2235 = vrot.slane %v2233, 5
        %v2236 = vor.u32 %v2232, %v2235
        %v2237 = vrot.slane %v2236, 4
        %v2239 = vshll.u32 %v2072, 16
        %v2241 = vrot.slane %v2239, 5
        %v2242 = vsel %vm1497, %v2237, %v2241
        %v2243 = vshrl.u32 %v2072, 16
        %v2245 = vrot.slane %v2243, 4
        %v2246 = vor.u32 %v2245, %v2241
        %v2247 = vrot.slane %v2246, 4
        %v2249 = vshll.u32 %v2098, 16
        %v2251 = vrot.slane %v2249, 5
        %v2252 = vsel %vm1497, %v2247, %v2251
        %v2254 = vshrl.u32 %v2073, 16
        %v2256 = vrot.slane %v2254, 4
        %v2257 = vshll.u32 %v2073, 16
        %v2259 = vrot.slane %v2257, 5
        %v2260 = vor.u32 %v2256, %v2259
        %v2261 = vrot.slane %v2260, 4
        %v2263 = vshll.u32 %v2074, 16
        %v2265 = vrot.slane %v2263, 5
        %v2266 = vsel %vm1497, %v2261, %v2265
        %v2267 = vshrl.u32 %v2074, 16
        %v2269 = vrot.slane %v2267, 4
        %v2270 = vor.u32 %v2269, %v2265
        %v2271 = vrot.slane %v2270, 4
        %v2273 = vshll.u32 %v2099, 16
        %v2275 = vrot.slane %v2273, 5
        %v2276 = vsel %vm1497, %v2271, %v2275
        %v2278 = vshrl.u32 %v2075, 16
        %v2280 = vrot.slane %v2278, 4
        %v2281 = vshll.u32 %v2075, 16
        %v2283 = vrot.slane %v2281, 5
        %v2284 = vor.u32 %v2280, %v2283
        %v2285 = vrot.slane %v2284, 4
        %v2287 = vshll.u32 %v2076, 16
        %v2289 = vrot.slane %v2287, 5
        %v2290 = vsel %vm1497, %v2285, %v2289
        %v2291 = vshrl.u32 %v2076, 16
        %v2293 = vrot.slane %v2291, 4
        %v2294 = vor.u32 %v2293, %v2289
        %v2295 = vrot.slane %v2294, 4
        %v2297 = vshll.u32 %v2100, 16
        %v2299 = vrot.slane %v2297, 5
        %v2300 = vsel %vm1497, %v2295, %v2299
        %v2302 = vshrl.u32 %v2077, 16
        %v2304 = vrot.slane %v2302, 4
        %v2305 = vshll.u32 %v2077, 16
        %v2307 = vrot.slane %v2305, 5
        %v2308 = vor.u32 %v2304, %v2307
        %v2309 = vrot.slane %v2308, 4
        %v2311 = vshll.u32 %v2078, 16
        %v2313 = vrot.slane %v2311, 5
        %v2314 = vsel %vm1497, %v2309, %v2313
        %v2315 = vshrl.u32 %v2078, 16
        %v2317 = vrot.slane %v2315, 4
        %v2318 = vor.u32 %v2317, %v2313
        %v2319 = vrot.slane %v2318, 4
        %v2321 = vshll.u32 %v2101, 16
        %v2323 = vrot.slane %v2321, 5
        %v2324 = vsel %vm1497, %v2319, %v2323
        %v2326 = vshrl.u32 %v2079, 16
        %v2328 = vrot.slane %v2326, 4
        %v2329 = vshll.u32 %v2079, 16
        %v2331 = vrot.slane %v2329, 5
        %v2332 = vor.u32 %v2328, %v2331
        %v2333 = vrot.slane %v2332, 4
        %v2335 = vshll.u32 %v2080, 16
        %v2337 = vrot.slane %v2335, 5
        %v2338 = vsel %vm1497, %v2333, %v2337
        %v2339 = vshrl.u32 %v2080, 16
        %v2341 = vrot.slane %v2339, 4
        %v2342 = vor.u32 %v2341, %v2337
        %v2343 = vrot.slane %v2342, 4
        %v2345 = vshll.u32 %v2102, 16
        %v2347 = vrot.slane %v2345, 5
        %v2348 = vsel %vm1497, %v2343, %v2347
        %v2350 = vshrl.u32 %v2081, 16
        %v2352 = vrot.slane %v2350, 4
        %v2353 = vshll.u32 %v2081, 16
        %v2355 = vrot.slane %v2353, 5
        %v2356 = vor.u32 %v2352, %v2355
        %v2357 = vrot.slane %v2356, 4
        %v2359 = vshll.u32 %v2082, 16
        %v2361 = vrot.slane %v2359, 5
        %v2362 = vsel %vm1497, %v2357, %v2361
        %v2363 = vshrl.u32 %v2082, 16
        %v2365 = vrot.slane %v2363, 4
        %v2366 = vor.u32 %v2365, %v2361
        %v2367 = vrot.slane %v2366, 4
        %v2369 = vshll.u32 %v2103, 16
        %v2371 = vrot.slane %v2369, 5
        %v2372 = vsel %vm1497, %v2367, %v2371
        %v2374 = vshrl.u32 %v2083, 16
        %v2376 = vrot.slane %v2374, 4
        %v2377 = vshll.u32 %v2083, 16
        %v2379 = vrot.slane %v2377, 5
        %v2380 = vor.u32 %v2376, %v2379
        %v2381 = vrot.slane %v2380, 4
        %v2383 = vshll.u32 %v2084, 16
        %v2385 = vrot.slane %v2383, 5
        %v2386 = vsel %vm1497, %v2381, %v2385
        %v2387 = vshrl.u32 %v2084, 16
        %v2389 = vrot.slane %v2387, 4
        %v2390 = vor.u32 %v2389, %v2385
        %v2391 = vrot.slane %v2390, 4
        %v2393 = vshll.u32 %v2104, 16
        %v2395 = vrot.slane %v2393, 5
        %v2396 = vsel %vm1497, %v2391, %v2395
        %v2398 = vshrl.u32 %v2085, 16
        %v2400 = vrot.slane %v2398, 4
        %v2401 = vshll.u32 %v2085, 16
        %v2403 = vrot.slane %v2401, 5
        %v2404 = vor.u32 %v2400, %v2403
        %v2405 = vrot.slane %v2404, 4
        %v2407 = vshll.u32 %v2086, 16
        %v2409 = vrot.slane %v2407, 5
        %v2410 = vsel %vm1497, %v2405, %v2409
        %v2411 = vshrl.u32 %v2086, 16
        %v2413 = vrot.slane %v2411, 4
        %v2414 = vor.u32 %v2413, %v2409
        %v2415 = vrot.slane %v2414, 4
        %v2417 = vshll.u32 %v2105, 16
        %v2419 = vrot.slane %v2417, 5
        %v2420 = vsel %vm1497, %v2415, %v2419
        %v2422 = vshrl.u32 %v2087, 16
        %v2424 = vrot.slane %v2422, 4
        %v2425 = vshll.u32 %v2087, 16
        %v2427 = vrot.slane %v2425, 5
        %v2428 = vor.u32 %v2424, %v2427
        %v2429 = vrot.slane %v2428, 4
        %v2431 = vshll.u32 %v2088, 16
        %v2433 = vrot.slane %v2431, 5
        %v2434 = vsel %vm1497, %v2429, %v2433
        %v2435 = vshrl.u32 %v2088, 16
        %v2437 = vrot.slane %v2435, 4
        %v2438 = vor.u32 %v2437, %v2433
        %v2439 = vrot.slane %v2438, 4
        %v2441 = vshll.u32 %v2106, 16
        %v2443 = vrot.slane %v2441, 5
        %v2444 = vsel %vm1497, %v2439, %v2443
        %v2446 = vshrl.u32 %v2089, 16
        %v2448 = vrot.slane %v2446, 4
        %v2449 = vshll.u32 %v2089, 16
        %v2451 = vrot.slane %v2449, 5
        %v2452 = vor.u32 %v2448, %v2451
        %v2453 = vrot.slane %v2452, 4
        %v2455 = vshll.u32 %v2090, 16
        %v2457 = vrot.slane %v2455, 5
        %v2458 = vsel %vm1497, %v2453, %v2457
        %v2459 = vshrl.u32 %v2090, 16
        %v2461 = vrot.slane %v2459, 4
        %v2462 = vor.u32 %v2461, %v2457
        %v2463 = vrot.slane %v2462, 4
        %v2465 = vshll.u32 %v2107, 16
        %v2467 = vrot.slane %v2465, 5
        %v2468 = vsel %vm1497, %v2463, %v2467
        %v2470 = vshrl.u32 %v2091, 16
        %v2472 = vrot.slane %v2470, 4
        %v2473 = vshll.u32 %v2091, 16
        %v2475 = vrot.slane %v2473, 5
        %v2476 = vor.u32 %v2472, %v2475
        %v2477 = vrot.slane %v2476, 4
        %v2479 = vshll.u32 %v2092, 16
        %v2481 = vrot.slane %v2479, 5
        %v2482 = vsel %vm1497, %v2477, %v2481
        %v2483 = vshrl.u32 %v2092, 16
        %v2485 = vrot.slane %v2483, 4
        %v2486 = vor.u32 %v2485, %v2481
        %v2487 = vrot.slane %v2486, 4
        %v2489 = vshll.u32 %v2108, 16
        %v2491 = vrot.slane %v2489, 5
        %v2492 = vsel %vm1497, %v2487, %v2491
        %v2493 = vld [vmem:[%s1329] sm:$0xe]
        %v2494 = vld [vmem:[%s1329 + $0xc] sm:$0xe]
        %v2495 = vld [vmem:[%s1329 + $0x18] sm:$0xe]
        %v2496 = vld [vmem:[%s1329 + $0x24] sm:$0xe]
        %v2497 = vld [vmem:[%s1329 + $0x30] sm:$0xe]
        %v2498 = vld [vmem:[%s1329 + $0x3c] sm:$0xe]
        %v2499 = vld [vmem:[%s1329 + $0x48] sm:$0xe]
        %v2500 = vld [vmem:[%s1329 + $0x54] sm:$0xe]
        %v2501 = vld [vmem:[%s1329 + $0x60] sm:$0xe]
        %v2502 = vld [vmem:[%s1329 + $0x6c] sm:$0xe]
        %v2503 = vld [vmem:[%s1329 + $0x78] sm:$0xe]
        %v2504 = vld [vmem:[%s1329 + $0x84] sm:$0xe]
        %v2505 = vld [vmem:[%s1329 + $0x90] sm:$0xe]
        %v2506 = vld [vmem:[%s1329 + $0x9c] sm:$0xe]
        %v2507 = vld [vmem:[%s1329 + $0xa8] sm:$0xe]
        %v2508 = vld [vmem:[%s1329 + $0xb4] sm:$0xe]
        %v2557 = vrot.slane %v2493, 5
        %v2558 = vrot.slane %v2557, 4
        %v2559 = vrot.slane %v2062, 5
        %v2560 = vsel %vm1948, %v2558, %v2559
        %v2561 = vrot.slane %v2559, 4
        %v2562 = vrot.slane %v2093, 5
        %v2563 = vsel %vm1948, %v2561, %v2562
        %v2564 = vrot.slane %v2494, 5
        %v2565 = vrot.slane %v2564, 4
        %v2566 = vrot.slane %v2064, 5
        %v2567 = vsel %vm1948, %v2565, %v2566
        %v2568 = vrot.slane %v2566, 4
        %v2569 = vrot.slane %v2094, 5
        %v2570 = vsel %vm1948, %v2568, %v2569
        %v2571 = vrot.slane %v2495, 5
        %v2572 = vrot.slane %v2571, 4
        %v2573 = vrot.slane %v2066, 5
        %v2574 = vsel %vm1948, %v2572, %v2573
        %v2575 = vrot.slane %v2573, 4
        %v2576 = vrot.slane %v2095, 5
        %v2577 = vsel %vm1948, %v2575, %v2576
        %v2578 = vrot.slane %v2496, 5
        %v2579 = vrot.slane %v2578, 4
        %v2580 = vrot.slane %v2068, 5
        %v2581 = vsel %vm1948, %v2579, %v2580
        %v2582 = vrot.slane %v2580, 4
        %v2583 = vrot.slane %v2096, 5
        %v2584 = vsel %vm1948, %v2582, %v2583
        %v2585 = vrot.slane %v2497, 5
        %v2586 = vrot.slane %v2585, 4
        %v2587 = vrot.slane %v2070, 5
        %v2588 = vsel %vm1948, %v2586, %v2587
        %v2589 = vrot.slane %v2587, 4
        %v2590 = vrot.slane %v2097, 5
        %v2591 = vsel %vm1948, %v2589, %v2590
        %v2592 = vrot.slane %v2498, 5
        %v2593 = vrot.slane %v2592, 4
        %v2594 = vrot.slane %v2072, 5
        %v2595 = vsel %vm1948, %v2593, %v2594
        %v2596 = vrot.slane %v2594, 4
        %v2597 = vrot.slane %v2098, 5
        %v2598 = vsel %vm1948, %v2596, %v2597
        %v2599 = vrot.slane %v2499, 5
        %v2600 = vrot.slane %v2599, 4
        %v2601 = vrot.slane %v2074, 5
        %v2602 = vsel %vm1948, %v2600, %v2601
        %v2603 = vrot.slane %v2601, 4
        %v2604 = vrot.slane %v2099, 5
        %v2605 = vsel %vm1948, %v2603, %v2604
        %v2606 = vrot.slane %v2500, 5
        %v2607 = vrot.slane %v2606, 4
        %v2608 = vrot.slane %v2076, 5
        %v2609 = vsel %vm1948, %v2607, %v2608
        %v2610 = vrot.slane %v2608, 4
        %v2611 = vrot.slane %v2100, 5
        %v2612 = vsel %vm1948, %v2610, %v2611
        %v2613 = vrot.slane %v2501, 5
        %v2614 = vrot.slane %v2613, 4
        %v2615 = vrot.slane %v2078, 5
        %v2616 = vsel %vm1948, %v2614, %v2615
        %v2617 = vrot.slane %v2615, 4
        %v2618 = vrot.slane %v2101, 5
        %v2619 = vsel %vm1948, %v2617, %v2618
        %v2620 = vrot.slane %v2502, 5
        %v2621 = vrot.slane %v2620, 4
        %v2622 = vrot.slane %v2080, 5
        %v2623 = vsel %vm1948, %v2621, %v2622
        %v2624 = vrot.slane %v2622, 4
        %v2625 = vrot.slane %v2102, 5
        %v2626 = vsel %vm1948, %v2624, %v2625
        %v2627 = vrot.slane %v2503, 5
        %v2628 = vrot.slane %v2627, 4
        %v2629 = vrot.slane %v2082, 5
        %v2630 = vsel %vm1948, %v2628, %v2629
        %v2631 = vrot.slane %v2629, 4
        %v2632 = vrot.slane %v2103, 5
        %v2633 = vsel %vm1948, %v2631, %v2632
        %v2634 = vrot.slane %v2504, 5
        %v2635 = vrot.slane %v2634, 4
        %v2636 = vrot.slane %v2084, 5
        %v2637 = vsel %vm1948, %v2635, %v2636
        %v2638 = vrot.slane %v2636, 4
        %v2639 = vrot.slane %v2104, 5
        %v2640 = vsel %vm1948, %v2638, %v2639
        %v2641 = vrot.slane %v2505, 5
        %v2642 = vrot.slane %v2641, 4
        %v2643 = vrot.slane %v2086, 5
        %v2644 = vsel %vm1948, %v2642, %v2643
        %v2645 = vrot.slane %v2643, 4
        %v2646 = vrot.slane %v2105, 5
        %v2647 = vsel %vm1948, %v2645, %v2646
        %v2648 = vrot.slane %v2506, 5
        %v2649 = vrot.slane %v2648, 4
        %v2650 = vrot.slane %v2088, 5
        %v2651 = vsel %vm1948, %v2649, %v2650
        %v2652 = vrot.slane %v2650, 4
        %v2653 = vrot.slane %v2106, 5
        %v2654 = vsel %vm1948, %v2652, %v2653
        %v2655 = vrot.slane %v2507, 5
        %v2656 = vrot.slane %v2655, 4
        %v2657 = vrot.slane %v2090, 5
        %v2658 = vsel %vm1948, %v2656, %v2657
        %v2659 = vrot.slane %v2657, 4
        %v2660 = vrot.slane %v2107, 5
        %v2661 = vsel %vm1948, %v2659, %v2660
        %v2662 = vrot.slane %v2508, 5
        %v2663 = vrot.slane %v2662, 4
        %v2664 = vrot.slane %v2092, 5
        %v2665 = vsel %vm1948, %v2663, %v2664
        %v2666 = vrot.slane %v2664, 4
        %v2667 = vrot.slane %v2108, 5
        %v2668 = vsel %vm1948, %v2666, %v2667
        %s2669 = scalar_lea.vmem [#allocation2], 24
        %v2670 = vld [vmem:[%s2669] sm:$0xf]
        %v2671 = vld [vmem:[%s2669 + $0x4] sm:$0xf]
        %v2672 = vld [vmem:[%s2669 + $0xc] sm:$0xf]
        %v2673 = vld [vmem:[%s2669 + $0x10] sm:$0xf]
        %v2674 = vld [vmem:[%s2669 + $0x18] sm:$0xf]
        %v2675 = vld [vmem:[%s2669 + $0x1c] sm:$0xf]
        %v2676 = vld [vmem:[%s2669 + $0x24] sm:$0xf]
        %v2677 = vld [vmem:[%s2669 + $0x28] sm:$0xf]
        %v2678 = vld [vmem:[%s2669 + $0x30] sm:$0xf]
        %v2679 = vld [vmem:[%s2669 + $0x34] sm:$0xf]
        %v2680 = vld [vmem:[%s2669 + $0x3c] sm:$0xf]
        %v2681 = vld [vmem:[%s2669 + $0x40] sm:$0xf]
        %v2682 = vld [vmem:[%s2669 + $0x48] sm:$0xf]
        %v2683 = vld [vmem:[%s2669 + $0x4c] sm:$0xf]
        %v2684 = vld [vmem:[%s2669 + $0x54] sm:$0xf]
        %v2685 = vld [vmem:[%s2669 + $0x58] sm:$0xf]
        %v2686 = vld [vmem:[%s2669 + $0x60] sm:$0xf]
        %v2687 = vld [vmem:[%s2669 + $0x64] sm:$0xf]
        %v2688 = vld [vmem:[%s2669 + $0x6c] sm:$0xf]
        %v2689 = vld [vmem:[%s2669 + $0x70] sm:$0xf]
        %v2690 = vld [vmem:[%s2669 + $0x78] sm:$0xf]
        %v2691 = vld [vmem:[%s2669 + $0x7c] sm:$0xf]
        %v2692 = vld [vmem:[%s2669 + $0x84] sm:$0xf]
        %v2693 = vld [vmem:[%s2669 + $0x88] sm:$0xf]
        %v2694 = vld [vmem:[%s2669 + $0x90] sm:$0xf]
        %v2695 = vld [vmem:[%s2669 + $0x94] sm:$0xf]
        %v2696 = vld [vmem:[%s2669 + $0x9c] sm:$0xf]
        %v2697 = vld [vmem:[%s2669 + $0xa0] sm:$0xf]
        %v2698 = vld [vmem:[%s2669 + $0xa8] sm:$0xf]
        %v2699 = vld [vmem:[%s2669 + $0xac] sm:$0xf]
        %v2700 = vld [vmem:[%s2669 + $0xb4] sm:$0xf]
        %v2701 = vld [vmem:[%s2669 + $0xb8] sm:$0xf]
        %v2702 = vld [vmem:[%s2669 + $0x8] sm:$0x1]
        %v2703 = vld [vmem:[%s2669 + $0x14] sm:$0x1]
        %v2704 = vld [vmem:[%s2669 + $0x20] sm:$0x1]
        %v2705 = vld [vmem:[%s2669 + $0x2c] sm:$0x1]
        %v2706 = vld [vmem:[%s2669 + $0x38] sm:$0x1]
        %v2707 = vld [vmem:[%s2669 + $0x44] sm:$0x1]
        %v2708 = vld [vmem:[%s2669 + $0x50] sm:$0x1]
        %v2709 = vld [vmem:[%s2669 + $0x5c] sm:$0x1]
        %v2710 = vld [vmem:[%s2669 + $0x68] sm:$0x1]
        %v2711 = vld [vmem:[%s2669 + $0x74] sm:$0x1]
        %v2712 = vld [vmem:[%s2669 + $0x80] sm:$0x1]
        %v2713 = vld [vmem:[%s2669 + $0x8c] sm:$0x1]
        %v2714 = vld [vmem:[%s2669 + $0x98] sm:$0x1]
        %v2715 = vld [vmem:[%s2669 + $0xa4] sm:$0x1]
        %v2716 = vld [vmem:[%s2669 + $0xb0] sm:$0x1]
        %v2717 = vld [vmem:[%s2669 + $0xbc] sm:$0x1]
        %v2719 = vshrl.u32 %v2670, 16
        %v2721 = vrot.slane %v2719, 4
        %v2722 = vshll.u32 %v2670, 16
        %v2724 = vrot.slane %v2722, 5
        %v2725 = vor.u32 %v2721, %v2724
        %v2726 = vrot.slane %v2725, 4
        %v2728 = vshll.u32 %v2671, 16
        %v2730 = vrot.slane %v2728, 5
        %v2731 = vsel %vm1497, %v2726, %v2730
        %v2732 = vshrl.u32 %v2671, 16
        %v2734 = vrot.slane %v2732, 4
        %v2735 = vor.u32 %v2734, %v2730
        %v2736 = vrot.slane %v2735, 4
        %v2738 = vshll.u32 %v2702, 16
        %v2740 = vrot.slane %v2738, 5
        %v2741 = vsel %vm1497, %v2736, %v2740
        %v2743 = vshrl.u32 %v2672, 16
        %v2745 = vrot.slane %v2743, 4
        %v2746 = vshll.u32 %v2672, 16
        %v2748 = vrot.slane %v2746, 5
        %v2749 = vor.u32 %v2745, %v2748
        %v2750 = vrot.slane %v2749, 4
        %v2752 = vshll.u32 %v2673, 16
        %v2754 = vrot.slane %v2752, 5
        %v2755 = vsel %vm1497, %v2750, %v2754
        %v2756 = vshrl.u32 %v2673, 16
        %v2758 = vrot.slane %v2756, 4
        %v2759 = vor.u32 %v2758, %v2754
        %v2760 = vrot.slane %v2759, 4
        %v2762 = vshll.u32 %v2703, 16
        %v2764 = vrot.slane %v2762, 5
        %v2765 = vsel %vm1497, %v2760, %v2764
        %v2767 = vshrl.u32 %v2674, 16
        %v2769 = vrot.slane %v2767, 4
        %v2770 = vshll.u32 %v2674, 16
        %v2772 = vrot.slane %v2770, 5
        %v2773 = vor.u32 %v2769, %v2772
        %v2774 = vrot.slane %v2773, 4
        %v2776 = vshll.u32 %v2675, 16
        %v2778 = vrot.slane %v2776, 5
        %v2779 = vsel %vm1497, %v2774, %v2778
        %v2780 = vshrl.u32 %v2675, 16
        %v2782 = vrot.slane %v2780, 4
        %v2783 = vor.u32 %v2782, %v2778
        %v2784 = vrot.slane %v2783, 4
        %v2786 = vshll.u32 %v2704, 16
        %v2788 = vrot.slane %v2786, 5
        %v2789 = vsel %vm1497, %v2784, %v2788
        %v2791 = vshrl.u32 %v2676, 16
        %v2793 = vrot.slane %v2791, 4
        %v2794 = vshll.u32 %v2676, 16
        %v2796 = vrot.slane %v2794, 5
        %v2797 = vor.u32 %v2793, %v2796
        %v2798 = vrot.slane %v2797, 4
        %v2800 = vshll.u32 %v2677, 16
        %v2802 = vrot.slane %v2800, 5
        %v2803 = vsel %vm1497, %v2798, %v2802
        %v2804 = vshrl.u32 %v2677, 16
        %v2806 = vrot.slane %v2804, 4
        %v2807 = vor.u32 %v2806, %v2802
        %v2808 = vrot.slane %v2807, 4
        %v2810 = vshll.u32 %v2705, 16
        %v2812 = vrot.slane %v2810, 5
        %v2813 = vsel %vm1497, %v2808, %v2812
        %v2815 = vshrl.u32 %v2678, 16
        %v2817 = vrot.slane %v2815, 4
        %v2818 = vshll.u32 %v2678, 16
        %v2820 = vrot.slane %v2818, 5
        %v2821 = vor.u32 %v2817, %v2820
        %v2822 = vrot.slane %v2821, 4
        %v2824 = vshll.u32 %v2679, 16
        %v2826 = vrot.slane %v2824, 5
        %v2827 = vsel %vm1497, %v2822, %v2826
        %v2828 = vshrl.u32 %v2679, 16
        %v2830 = vrot.slane %v2828, 4
        %v2831 = vor.u32 %v2830, %v2826
        %v2832 = vrot.slane %v2831, 4
        %v2834 = vshll.u32 %v2706, 16
        %v2836 = vrot.slane %v2834, 5
        %v2837 = vsel %vm1497, %v2832, %v2836
        %v2839 = vshrl.u32 %v2680, 16
        %v2841 = vrot.slane %v2839, 4
        %v2842 = vshll.u32 %v2680, 16
        %v2844 = vrot.slane %v2842, 5
        %v2845 = vor.u32 %v2841, %v2844
        %v2846 = vrot.slane %v2845, 4
        %v2848 = vshll.u32 %v2681, 16
        %v2850 = vrot.slane %v2848, 5
        %v2851 = vsel %vm1497, %v2846, %v2850
        %v2852 = vshrl.u32 %v2681, 16
        %v2854 = vrot.slane %v2852, 4
        %v2855 = vor.u32 %v2854, %v2850
        %v2856 = vrot.slane %v2855, 4
        %v2858 = vshll.u32 %v2707, 16
        %v2860 = vrot.slane %v2858, 5
        %v2861 = vsel %vm1497, %v2856, %v2860
        %v2863 = vshrl.u32 %v2682, 16
        %v2865 = vrot.slane %v2863, 4
        %v2866 = vshll.u32 %v2682, 16
        %v2868 = vrot.slane %v2866, 5
        %v2869 = vor.u32 %v2865, %v2868
        %v2870 = vrot.slane %v2869, 4
        %v2872 = vshll.u32 %v2683, 16
        %v2874 = vrot.slane %v2872, 5
        %v2875 = vsel %vm1497, %v2870, %v2874
        %v2876 = vshrl.u32 %v2683, 16
        %v2878 = vrot.slane %v2876, 4
        %v2879 = vor.u32 %v2878, %v2874
        %v2880 = vrot.slane %v2879, 4
        %v2882 = vshll.u32 %v2708, 16
        %v2884 = vrot.slane %v2882, 5
        %v2885 = vsel %vm1497, %v2880, %v2884
        %v2887 = vshrl.u32 %v2684, 16
        %v2889 = vrot.slane %v2887, 4
        %v2890 = vshll.u32 %v2684, 16
        %v2892 = vrot.slane %v2890, 5
        %v2893 = vor.u32 %v2889, %v2892
        %v2894 = vrot.slane %v2893, 4
        %v2896 = vshll.u32 %v2685, 16
        %v2898 = vrot.slane %v2896, 5
        %v2899 = vsel %vm1497, %v2894, %v2898
        %v2900 = vshrl.u32 %v2685, 16
        %v2902 = vrot.slane %v2900, 4
        %v2903 = vor.u32 %v2902, %v2898
        %v2904 = vrot.slane %v2903, 4
        %v2906 = vshll.u32 %v2709, 16
        %v2908 = vrot.slane %v2906, 5
        %v2909 = vsel %vm1497, %v2904, %v2908
        %v2911 = vshrl.u32 %v2686, 16
        %v2913 = vrot.slane %v2911, 4
        %v2914 = vshll.u32 %v2686, 16
        %v2916 = vrot.slane %v2914, 5
        %v2917 = vor.u32 %v2913, %v2916
        %v2918 = vrot.slane %v2917, 4
        %v2920 = vshll.u32 %v2687, 16
        %v2922 = vrot.slane %v2920, 5
        %v2923 = vsel %vm1497, %v2918, %v2922
        %v2924 = vshrl.u32 %v2687, 16
        %v2926 = vrot.slane %v2924, 4
        %v2927 = vor.u32 %v2926, %v2922
        %v2928 = vrot.slane %v2927, 4
        %v2930 = vshll.u32 %v2710, 16
        %v2932 = vrot.slane %v2930, 5
        %v2933 = vsel %vm1497, %v2928, %v2932
        %v2935 = vshrl.u32 %v2688, 16
        %v2937 = vrot.slane %v2935, 4
        %v2938 = vshll.u32 %v2688, 16
        %v2940 = vrot.slane %v2938, 5
        %v2941 = vor.u32 %v2937, %v2940
        %v2942 = vrot.slane %v2941, 4
        %v2944 = vshll.u32 %v2689, 16
        %v2946 = vrot.slane %v2944, 5
        %v2947 = vsel %vm1497, %v2942, %v2946
        %v2948 = vshrl.u32 %v2689, 16
        %v2950 = vrot.slane %v2948, 4
        %v2951 = vor.u32 %v2950, %v2946
        %v2952 = vrot.slane %v2951, 4
        %v2954 = vshll.u32 %v2711, 16
        %v2956 = vrot.slane %v2954, 5
        %v2957 = vsel %vm1497, %v2952, %v2956
        %v2959 = vshrl.u32 %v2690, 16
        %v2961 = vrot.slane %v2959, 4
        %v2962 = vshll.u32 %v2690, 16
        %v2964 = vrot.slane %v2962, 5
        %v2965 = vor.u32 %v2961, %v2964
        %v2966 = vrot.slane %v2965, 4
        %v2968 = vshll.u32 %v2691, 16
        %v2970 = vrot.slane %v2968, 5
        %v2971 = vsel %vm1497, %v2966, %v2970
        %v2972 = vshrl.u32 %v2691, 16
        %v2974 = vrot.slane %v2972, 4
        %v2975 = vor.u32 %v2974, %v2970
        %v2976 = vrot.slane %v2975, 4
        %v2978 = vshll.u32 %v2712, 16
        %v2980 = vrot.slane %v2978, 5
        %v2981 = vsel %vm1497, %v2976, %v2980
        %v2983 = vshrl.u32 %v2692, 16
        %v2985 = vrot.slane %v2983, 4
        %v2986 = vshll.u32 %v2692, 16
        %v2988 = vrot.slane %v2986, 5
        %v2989 = vor.u32 %v2985, %v2988
        %v2990 = vrot.slane %v2989, 4
        %v2992 = vshll.u32 %v2693, 16
        %v2994 = vrot.slane %v2992, 5
        %v2995 = vsel %vm1497, %v2990, %v2994
        %v2996 = vshrl.u32 %v2693, 16
        %v2998 = vrot.slane %v2996, 4
        %v2999 = vor.u32 %v2998, %v2994
        %v3000 = vrot.slane %v2999, 4
        %v3002 = vshll.u32 %v2713, 16
        %v3004 = vrot.slane %v3002, 5
        %v3005 = vsel %vm1497, %v3000, %v3004
        %v3007 = vshrl.u32 %v2694, 16
        %v3009 = vrot.slane %v3007, 4
        %v3010 = vshll.u32 %v2694, 16
        %v3012 = vrot.slane %v3010, 5
        %v3013 = vor.u32 %v3009, %v3012
        %v3014 = vrot.slane %v3013, 4
        %v3016 = vshll.u32 %v2695, 16
        %v3018 = vrot.slane %v3016, 5
        %v3019 = vsel %vm1497, %v3014, %v3018
        %v3020 = vshrl.u32 %v2695, 16
        %v3022 = vrot.slane %v3020, 4
        %v3023 = vor.u32 %v3022, %v3018
        %v3024 = vrot.slane %v3023, 4
        %v3026 = vshll.u32 %v2714, 16
        %v3028 = vrot.slane %v3026, 5
        %v3029 = vsel %vm1497, %v3024, %v3028
        %v3031 = vshrl.u32 %v2696, 16
        %v3033 = vrot.slane %v3031, 4
        %v3034 = vshll.u32 %v2696, 16
        %v3036 = vrot.slane %v3034, 5
        %v3037 = vor.u32 %v3033, %v3036
        %v3038 = vrot.slane %v3037, 4
        %v3040 = vshll.u32 %v2697, 16
        %v3042 = vrot.slane %v3040, 5
        %v3043 = vsel %vm1497, %v3038, %v3042
        %v3044 = vshrl.u32 %v2697, 16
        %v3046 = vrot.slane %v3044, 4
        %v3047 = vor.u32 %v3046, %v3042
        %v3048 = vrot.slane %v3047, 4
        %v3050 = vshll.u32 %v2715, 16
        %v3052 = vrot.slane %v3050, 5
        %v3053 = vsel %vm1497, %v3048, %v3052
        %v3055 = vshrl.u32 %v2698, 16
        %v3057 = vrot.slane %v3055, 4
        %v3058 = vshll.u32 %v2698, 16
        %v3060 = vrot.slane %v3058, 5
        %v3061 = vor.u32 %v3057, %v3060
        %v3062 = vrot.slane %v3061, 4
        %v3064 = vshll.u32 %v2699, 16
        %v3066 = vrot.slane %v3064, 5
        %v3067 = vsel %vm1497, %v3062, %v3066
        %v3068 = vshrl.u32 %v2699, 16
        %v3070 = vrot.slane %v3068, 4
        %v3071 = vor.u32 %v3070, %v3066
        %v3072 = vrot.slane %v3071, 4
        %v3074 = vshll.u32 %v2716, 16
        %v3076 = vrot.slane %v3074, 5
        %v3077 = vsel %vm1497, %v3072, %v3076
        %v3079 = vshrl.u32 %v2700, 16
        %v3081 = vrot.slane %v3079, 4
        %v3082 = vshll.u32 %v2700, 16
        %v3084 = vrot.slane %v3082, 5
        %v3085 = vor.u32 %v3081, %v3084
        %v3086 = vrot.slane %v3085, 4
        %v3088 = vshll.u32 %v2701, 16
        %v3090 = vrot.slane %v3088, 5
        %v3091 = vsel %vm1497, %v3086, %v3090
        %v3092 = vshrl.u32 %v2701, 16
        %v3094 = vrot.slane %v3092, 4
        %v3095 = vor.u32 %v3094, %v3090
        %v3096 = vrot.slane %v3095, 4
        %v3098 = vshll.u32 %v2717, 16
        %v3100 = vrot.slane %v3098, 5
        %v3101 = vsel %vm1497, %v3096, %v3100
        %v3102 = vld [vmem:[%s2669] sm:$0xe]
        %v3103 = vld [vmem:[%s2669 + $0xc] sm:$0xe]
        %v3104 = vld [vmem:[%s2669 + $0x18] sm:$0xe]
        %v3105 = vld [vmem:[%s2669 + $0x24] sm:$0xe]
        %v3106 = vld [vmem:[%s2669 + $0x30] sm:$0xe]
        %v3107 = vld [vmem:[%s2669 + $0x3c] sm:$0xe]
        %v3108 = vld [vmem:[%s2669 + $0x48] sm:$0xe]
        %v3109 = vld [vmem:[%s2669 + $0x54] sm:$0xe]
        %v3110 = vld [vmem:[%s2669 + $0x60] sm:$0xe]
        %v3111 = vld [vmem:[%s2669 + $0x6c] sm:$0xe]
        %v3112 = vld [vmem:[%s2669 + $0x78] sm:$0xe]
        %v3113 = vld [vmem:[%s2669 + $0x84] sm:$0xe]
        %v3114 = vld [vmem:[%s2669 + $0x90] sm:$0xe]
        %v3115 = vld [vmem:[%s2669 + $0x9c] sm:$0xe]
        %v3116 = vld [vmem:[%s2669 + $0xa8] sm:$0xe]
        %v3117 = vld [vmem:[%s2669 + $0xb4] sm:$0xe]
        %v3166 = vrot.slane %v3102, 5
        %v3167 = vrot.slane %v3166, 4
        %v3168 = vrot.slane %v2671, 5
        %v3169 = vsel %vm1948, %v3167, %v3168
        %v3170 = vrot.slane %v3168, 4
        %v3171 = vrot.slane %v2702, 5
        %v3172 = vsel %vm1948, %v3170, %v3171
        %v3173 = vrot.slane %v3103, 5
        %v3174 = vrot.slane %v3173, 4
        %v3175 = vrot.slane %v2673, 5
        %v3176 = vsel %vm1948, %v3174, %v3175
        %v3177 = vrot.slane %v3175, 4
        %v3178 = vrot.slane %v2703, 5
        %v3179 = vsel %vm1948, %v3177, %v3178
        %v3180 = vrot.slane %v3104, 5
        %v3181 = vrot.slane %v3180, 4
        %v3182 = vrot.slane %v2675, 5
        %v3183 = vsel %vm1948, %v3181, %v3182
        %v3184 = vrot.slane %v3182, 4
        %v3185 = vrot.slane %v2704, 5
        %v3186 = vsel %vm1948, %v3184, %v3185
        %v3187 = vrot.slane %v3105, 5
        %v3188 = vrot.slane %v3187, 4
        %v3189 = vrot.slane %v2677, 5
        %v3190 = vsel %vm1948, %v3188, %v3189
        %v3191 = vrot.slane %v3189, 4
        %v3192 = vrot.slane %v2705, 5
        %v3193 = vsel %vm1948, %v3191, %v3192
        %v3194 = vrot.slane %v3106, 5
        %v3195 = vrot.slane %v3194, 4
        %v3196 = vrot.slane %v2679, 5
        %v3197 = vsel %vm1948, %v3195, %v3196
        %v3198 = vrot.slane %v3196, 4
        %v3199 = vrot.slane %v2706, 5
        %v3200 = vsel %vm1948, %v3198, %v3199
        %v3201 = vrot.slane %v3107, 5
        %v3202 = vrot.slane %v3201, 4
        %v3203 = vrot.slane %v2681, 5
        %v3204 = vsel %vm1948, %v3202, %v3203
        %v3205 = vrot.slane %v3203, 4
        %v3206 = vrot.slane %v2707, 5
        %v3207 = vsel %vm1948, %v3205, %v3206
        %v3208 = vrot.slane %v3108, 5
        %v3209 = vrot.slane %v3208, 4
        %v3210 = vrot.slane %v2683, 5
        %v3211 = vsel %vm1948, %v3209, %v3210
        %v3212 = vrot.slane %v3210, 4
        %v3213 = vrot.slane %v2708, 5
        %v3214 = vsel %vm1948, %v3212, %v3213
        %v3215 = vrot.slane %v3109, 5
        %v3216 = vrot.slane %v3215, 4
        %v3217 = vrot.slane %v2685, 5
        %v3218 = vsel %vm1948, %v3216, %v3217
        %v3219 = vrot.slane %v3217, 4
        %v3220 = vrot.slane %v2709, 5
        %v3221 = vsel %vm1948, %v3219, %v3220
        %v3222 = vrot.slane %v3110, 5
        %v3223 = vrot.slane %v3222, 4
        %v3224 = vrot.slane %v2687, 5
        %v3225 = vsel %vm1948, %v3223, %v3224
        %v3226 = vrot.slane %v3224, 4
        %v3227 = vrot.slane %v2710, 5
        %v3228 = vsel %vm1948, %v3226, %v3227
        %v3229 = vrot.slane %v3111, 5
        %v3230 = vrot.slane %v3229, 4
        %v3231 = vrot.slane %v2689, 5
        %v3232 = vsel %vm1948, %v3230, %v3231
        %v3233 = vrot.slane %v3231, 4
        %v3234 = vrot.slane %v2711, 5
        %v3235 = vsel %vm1948, %v3233, %v3234
        %v3236 = vrot.slane %v3112, 5
        %v3237 = vrot.slane %v3236, 4
        %v3238 = vrot.slane %v2691, 5
        %v3239 = vsel %vm1948, %v3237, %v3238
        %v3240 = vrot.slane %v3238, 4
        %v3241 = vrot.slane %v2712, 5
        %v3242 = vsel %vm1948, %v3240, %v3241
        %v3243 = vrot.slane %v3113, 5
        %v3244 = vrot.slane %v3243, 4
        %v3245 = vrot.slane %v2693, 5
        %v3246 = vsel %vm1948, %v3244, %v3245
        %v3247 = vrot.slane %v3245, 4
        %v3248 = vrot.slane %v2713, 5
        %v3249 = vsel %vm1948, %v3247, %v3248
        %v3250 = vrot.slane %v3114, 5
        %v3251 = vrot.slane %v3250, 4
        %v3252 = vrot.slane %v2695, 5
        %v3253 = vsel %vm1948, %v3251, %v3252
        %v3254 = vrot.slane %v3252, 4
        %v3255 = vrot.slane %v2714, 5
        %v3256 = vsel %vm1948, %v3254, %v3255
        %v3257 = vrot.slane %v3115, 5
        %v3258 = vrot.slane %v3257, 4
        %v3259 = vrot.slane %v2697, 5
        %v3260 = vsel %vm1948, %v3258, %v3259
        %v3261 = vrot.slane %v3259, 4
        %v3262 = vrot.slane %v2715, 5
        %v3263 = vsel %vm1948, %v3261, %v3262
        %v3264 = vrot.slane %v3116, 5
        %v3265 = vrot.slane %v3264, 4
        %v3266 = vrot.slane %v2699, 5
        %v3267 = vsel %vm1948, %v3265, %v3266
        %v3268 = vrot.slane %v3266, 4
        %v3269 = vrot.slane %v2716, 5
        %v3270 = vsel %vm1948, %v3268, %v3269
        %v3271 = vrot.slane %v3117, 5
        %v3272 = vrot.slane %v3271, 4
        %v3273 = vrot.slane %v2701, 5
        %v3274 = vsel %vm1948, %v3272, %v3273
        %v3275 = vrot.slane %v3273, 4
        %v3276 = vrot.slane %v2717, 5
        %v3277 = vsel %vm1948, %v3275, %v3276
        %v3294 = vunpack.c.l.b16 %v1447
        %v3295 = vunpack.c.l.b16 %v1448
        %v3296 = vunpack.c.l.b16 %v1449
        %v3297 = vunpack.c.l.b16 %v1450
        %v3298 = vunpack.c.l.b16 %v1451
        %v3299 = vunpack.c.l.b16 %v1452
        %v3300 = vunpack.c.l.b16 %v1453
        %v3301 = vunpack.c.l.b16 %v1454
        %v3302 = vunpack.c.l.b16 %v1455
        %v3303 = vunpack.c.l.b16 %v1456
        %v3304 = vunpack.c.l.b16 %v1457
        %v3305 = vunpack.c.l.b16 %v1458
        %v3306 = vunpack.c.l.b16 %v1459
        %v3307 = vunpack.c.l.b16 %v1460
        %v3308 = vunpack.c.l.b16 %v1461
        %v3309 = vunpack.c.l.b16 %v1462
        %v3310 = vunpack.c.l.b16 %v1463
        %v3311 = vunpack.c.l.b16 %v1464
        %v3312 = vunpack.c.l.b16 %v1465
        %v3313 = vunpack.c.l.b16 %v1466
        %v3314 = vunpack.c.l.b16 %v1467
        %v3315 = vunpack.c.l.b16 %v1468
        %v3316 = vunpack.c.l.b16 %v1469
        %v3317 = vunpack.c.l.b16 %v1470
        %v3318 = vunpack.c.l.b16 %v1471
        %v3319 = vunpack.c.l.b16 %v1472
        %v3320 = vunpack.c.l.b16 %v1473
        %v3321 = vunpack.c.l.b16 %v1474
        %v3322 = vunpack.c.l.b16 %v1475
        %v3323 = vunpack.c.l.b16 %v1476
        %v3324 = vunpack.c.l.b16 %v1477
        %v3325 = vunpack.c.l.b16 %v1478
        %v3326 = vpack.c.b16 %v3295, %v3294
        %v3327 = vpack.c.b16 %v3297, %v3296
        %v3328 = vpack.c.b16 %v3299, %v3298
        %v3329 = vpack.c.b16 %v3301, %v3300
        %v3330 = vpack.c.b16 %v3303, %v3302
        %v3331 = vpack.c.b16 %v3305, %v3304
        %v3332 = vpack.c.b16 %v3307, %v3306
        %v3333 = vpack.c.b16 %v3309, %v3308
        %v3334 = vpack.c.b16 %v3311, %v3310
        %v3335 = vpack.c.b16 %v3313, %v3312
        %v3336 = vpack.c.b16 %v3315, %v3314
        %v3337 = vpack.c.b16 %v3317, %v3316
        %v3338 = vpack.c.b16 %v3319, %v3318
        %v3339 = vpack.c.b16 %v3321, %v3320
        %v3340 = vpack.c.b16 %v3323, %v3322
        %v3341 = vpack.c.b16 %v3325, %v3324
        %v3342 = vunpack.c.l.b16 %v1511
        %v3343 = vunpack.c.l.b16 %v1521
        %v3344 = vunpack.c.l.b16 %v1535
        %v3345 = vunpack.c.l.b16 %v1545
        %v3346 = vunpack.c.l.b16 %v1559
        %v3347 = vunpack.c.l.b16 %v1569
        %v3348 = vunpack.c.l.b16 %v1583
        %v3349 = vunpack.c.l.b16 %v1593
        %v3350 = vunpack.c.l.b16 %v1607
        %v3351 = vunpack.c.l.b16 %v1617
        %v3352 = vunpack.c.l.b16 %v1631
        %v3353 = vunpack.c.l.b16 %v1641
        %v3354 = vunpack.c.l.b16 %v1655
        %v3355 = vunpack.c.l.b16 %v1665
        %v3356 = vunpack.c.l.b16 %v1679
        %v3357 = vunpack.c.l.b16 %v1689
        %v3358 = vunpack.c.l.b16 %v1703
        %v3359 = vunpack.c.l.b16 %v1713
        %v3360 = vunpack.c.l.b16 %v1727
        %v3361 = vunpack.c.l.b16 %v1737
        %v3362 = vunpack.c.l.b16 %v1751
        %v3363 = vunpack.c.l.b16 %v1761
        %v3364 = vunpack.c.l.b16 %v1775
        %v3365 = vunpack.c.l.b16 %v1785
        %v3366 = vunpack.c.l.b16 %v1799
        %v3367 = vunpack.c.l.b16 %v1809
        %v3368 = vunpack.c.l.b16 %v1823
        %v3369 = vunpack.c.l.b16 %v1833
        %v3370 = vunpack.c.l.b16 %v1847
        %v3371 = vunpack.c.l.b16 %v1857
        %v3372 = vunpack.c.l.b16 %v1871
        %v3373 = vunpack.c.l.b16 %v1881
        %v3374 = vpack.c.b16 %v3343, %v3342
        %v3375 = vpack.c.b16 %v3345, %v3344
        %v3376 = vpack.c.b16 %v3347, %v3346
        %v3377 = vpack.c.b16 %v3349, %v3348
        %v3378 = vpack.c.b16 %v3351, %v3350
        %v3379 = vpack.c.b16 %v3353, %v3352
        %v3380 = vpack.c.b16 %v3355, %v3354
        %v3381 = vpack.c.b16 %v3357, %v3356
        %v3382 = vpack.c.b16 %v3359, %v3358
        %v3383 = vpack.c.b16 %v3361, %v3360
        %v3384 = vpack.c.b16 %v3363, %v3362
        %v3385 = vpack.c.b16 %v3365, %v3364
        %v3386 = vpack.c.b16 %v3367, %v3366
        %v3387 = vpack.c.b16 %v3369, %v3368
        %v3388 = vpack.c.b16 %v3371, %v3370
        %v3389 = vpack.c.b16 %v3373, %v3372
        %3390 = vrot.lane.b32.xlu0 %v3374, 4
        %v3391 = vpop.permute.xlu0 %3390
        %3392 = vrot.lane.b32.xlu0 %v3375, 4
        %v3393 = vpop.permute.xlu0 %3392
        %3394 = vrot.lane.b32.xlu0 %v3376, 4
        %v3395 = vpop.permute.xlu0 %3394
        %3396 = vrot.lane.b32.xlu0 %v3377, 4
        %v3397 = vpop.permute.xlu0 %3396
        %3398 = vrot.lane.b32.xlu0 %v3378, 4
        %v3399 = vpop.permute.xlu0 %3398
        %3400 = vrot.lane.b32.xlu0 %v3379, 4
        %v3401 = vpop.permute.xlu0 %3400
        %3402 = vrot.lane.b32.xlu0 %v3380, 4
        %v3403 = vpop.permute.xlu0 %3402
        %3404 = vrot.lane.b32.xlu0 %v3381, 4
        %v3405 = vpop.permute.xlu0 %3404
        %3406 = vrot.lane.b32.xlu0 %v3382, 4
        %v3407 = vpop.permute.xlu0 %3406
        %3408 = vrot.lane.b32.xlu0 %v3383, 4
        %v3409 = vpop.permute.xlu0 %3408
        %3410 = vrot.lane.b32.xlu0 %v3384, 4
        %v3411 = vpop.permute.xlu0 %3410
        %3412 = vrot.lane.b32.xlu0 %v3385, 4
        %v3413 = vpop.permute.xlu0 %3412
        %3414 = vrot.lane.b32.xlu0 %v3386, 4
        %v3415 = vpop.permute.xlu0 %3414
        %3416 = vrot.lane.b32.xlu0 %v3387, 4
        %v3417 = vpop.permute.xlu0 %3416
        %3418 = vrot.lane.b32.xlu0 %v3388, 4
        %v3419 = vpop.permute.xlu0 %3418
        %3420 = vrot.lane.b32.xlu0 %v3389, 4
        %v3421 = vpop.permute.xlu0 %3420
        %v3422 = vunpack.c.l.b16 %v1952
        %v3423 = vunpack.c.l.b16 %v1955
        %v3424 = vunpack.c.l.b16 %v1959
        %v3425 = vunpack.c.l.b16 %v1962
        %v3426 = vunpack.c.l.b16 %v1966
        %v3427 = vunpack.c.l.b16 %v1969
        %v3428 = vunpack.c.l.b16 %v1973
        %v3429 = vunpack.c.l.b16 %v1976
        %v3430 = vunpack.c.l.b16 %v1980
        %v3431 = vunpack.c.l.b16 %v1983
        %v3432 = vunpack.c.l.b16 %v1987
        %v3433 = vunpack.c.l.b16 %v1990
        %v3434 = vunpack.c.l.b16 %v1994
        %v3435 = vunpack.c.l.b16 %v1997
        %v3436 = vunpack.c.l.b16 %v2001
        %v3437 = vunpack.c.l.b16 %v2004
        %v3438 = vunpack.c.l.b16 %v2008
        %v3439 = vunpack.c.l.b16 %v2011
        %v3440 = vunpack.c.l.b16 %v2015
        %v3441 = vunpack.c.l.b16 %v2018
        %v3442 = vunpack.c.l.b16 %v2022
        %v3443 = vunpack.c.l.b16 %v2025
        %v3444 = vunpack.c.l.b16 %v2029
        %v3445 = vunpack.c.l.b16 %v2032
        %v3446 = vunpack.c.l.b16 %v2036
        %v3447 = vunpack.c.l.b16 %v2039
        %v3448 = vunpack.c.l.b16 %v2043
        %v3449 = vunpack.c.l.b16 %v2046
        %v3450 = vunpack.c.l.b16 %v2050
        %v3451 = vunpack.c.l.b16 %v2053
        %v3452 = vunpack.c.l.b16 %v2057
        %v3453 = vunpack.c.l.b16 %v2060
        %v3454 = vpack.c.b16 %v3423, %v3422
        %v3455 = vpack.c.b16 %v3425, %v3424
        %v3456 = vpack.c.b16 %v3427, %v3426
        %v3457 = vpack.c.b16 %v3429, %v3428
        %v3458 = vpack.c.b16 %v3431, %v3430
        %v3459 = vpack.c.b16 %v3433, %v3432
        %v3460 = vpack.c.b16 %v3435, %v3434
        %v3461 = vpack.c.b16 %v3437, %v3436
        %v3462 = vpack.c.b16 %v3439, %v3438
        %v3463 = vpack.c.b16 %v3441, %v3440
        %v3464 = vpack.c.b16 %v3443, %v3442
        %v3465 = vpack.c.b16 %v3445, %v3444
        %v3466 = vpack.c.b16 %v3447, %v3446
        %v3467 = vpack.c.b16 %v3449, %v3448
        %v3468 = vpack.c.b16 %v3451, %v3450
        %v3469 = vpack.c.b16 %v3453, %v3452
        %3470 = vrot.lane.b32.xlu0 %v3454, 8
        %v3471 = vpop.permute.xlu0 %3470
        %3472 = vrot.lane.b32.xlu0 %v3455, 8
        %v3473 = vpop.permute.xlu0 %3472
        %3474 = vrot.lane.b32.xlu0 %v3456, 8
        %v3475 = vpop.permute.xlu0 %3474
        %3476 = vrot.lane.b32.xlu0 %v3457, 8
        %v3477 = vpop.permute.xlu0 %3476
        %3478 = vrot.lane.b32.xlu0 %v3458, 8
        %v3479 = vpop.permute.xlu0 %3478
        %3480 = vrot.lane.b32.xlu0 %v3459, 8
        %v3481 = vpop.permute.xlu0 %3480
        %3482 = vrot.lane.b32.xlu0 %v3460, 8
        %v3483 = vpop.permute.xlu0 %3482
        %3484 = vrot.lane.b32.xlu0 %v3461, 8
        %v3485 = vpop.permute.xlu0 %3484
        %3486 = vrot.lane.b32.xlu0 %v3462, 8
        %v3487 = vpop.permute.xlu0 %3486
        %3488 = vrot.lane.b32.xlu0 %v3463, 8
        %v3489 = vpop.permute.xlu0 %3488
        %3490 = vrot.lane.b32.xlu0 %v3464, 8
        %v3491 = vpop.permute.xlu0 %3490
        %3492 = vrot.lane.b32.xlu0 %v3465, 8
        %v3493 = vpop.permute.xlu0 %3492
        %3494 = vrot.lane.b32.xlu0 %v3466, 8
        %v3495 = vpop.permute.xlu0 %3494
        %3496 = vrot.lane.b32.xlu0 %v3467, 8
        %v3497 = vpop.permute.xlu0 %3496
        %3498 = vrot.lane.b32.xlu0 %v3468, 8
        %v3499 = vpop.permute.xlu0 %3498
        %3500 = vrot.lane.b32.xlu0 %v3469, 8
        %v3501 = vpop.permute.xlu0 %3500
        %v3518 = vunpack.c.l.b16 %v2061
        %v3519 = vunpack.c.l.b16 %v2062
        %v3520 = vunpack.c.l.b16 %v2063
        %v3521 = vunpack.c.l.b16 %v2064
        %v3522 = vunpack.c.l.b16 %v2065
        %v3523 = vunpack.c.l.b16 %v2066
        %v3524 = vunpack.c.l.b16 %v2067
        %v3525 = vunpack.c.l.b16 %v2068
        %v3526 = vunpack.c.l.b16 %v2069
        %v3527 = vunpack.c.l.b16 %v2070
        %v3528 = vunpack.c.l.b16 %v2071
        %v3529 = vunpack.c.l.b16 %v2072
        %v3530 = vunpack.c.l.b16 %v2073
        %v3531 = vunpack.c.l.b16 %v2074
        %v3532 = vunpack.c.l.b16 %v2075
        %v3533 = vunpack.c.l.b16 %v2076
        %v3534 = vunpack.c.l.b16 %v2077
        %v3535 = vunpack.c.l.b16 %v2078
        %v3536 = vunpack.c.l.b16 %v2079
        %v3537 = vunpack.c.l.b16 %v2080
        %v3538 = vunpack.c.l.b16 %v2081
        %v3539 = vunpack.c.l.b16 %v2082
        %v3540 = vunpack.c.l.b16 %v2083
        %v3541 = vunpack.c.l.b16 %v2084
        %v3542 = vunpack.c.l.b16 %v2085
        %v3543 = vunpack.c.l.b16 %v2086
        %v3544 = vunpack.c.l.b16 %v2087
        %v3545 = vunpack.c.l.b16 %v2088
        %v3546 = vunpack.c.l.b16 %v2089
        %v3547 = vunpack.c.l.b16 %v2090
        %v3548 = vunpack.c.l.b16 %v2091
        %v3549 = vunpack.c.l.b16 %v2092
        %v3550 = vpack.c.b16 %v3519, %v3518
        %v3551 = vpack.c.b16 %v3521, %v3520
        %v3552 = vpack.c.b16 %v3523, %v3522
        %v3553 = vpack.c.b16 %v3525, %v3524
        %v3554 = vpack.c.b16 %v3527, %v3526
        %v3555 = vpack.c.b16 %v3529, %v3528
        %v3556 = vpack.c.b16 %v3531, %v3530
        %v3557 = vpack.c.b16 %v3533, %v3532
        %v3558 = vpack.c.b16 %v3535, %v3534
        %v3559 = vpack.c.b16 %v3537, %v3536
        %v3560 = vpack.c.b16 %v3539, %v3538
        %v3561 = vpack.c.b16 %v3541, %v3540
        %v3562 = vpack.c.b16 %v3543, %v3542
        %v3563 = vpack.c.b16 %v3545, %v3544
        %v3564 = vpack.c.b16 %v3547, %v3546
        %v3565 = vpack.c.b16 %v3549, %v3548
        %3566 = vrot.lane.b32.xlu0 %v3550, 12
        %v3567 = vpop.permute.xlu0 %3566
        %3568 = vrot.lane.b32.xlu0 %v3551, 12
        %v3569 = vpop.permute.xlu0 %3568
        %3570 = vrot.lane.b32.xlu0 %v3552, 12
        %v3571 = vpop.permute.xlu0 %3570
        %3572 = vrot.lane.b32.xlu0 %v3553, 12
        %v3573 = vpop.permute.xlu0 %3572
        %3574 = vrot.lane.b32.xlu0 %v3554, 12
        %v3575 = vpop.permute.xlu0 %3574
        %3576 = vrot.lane.b32.xlu0 %v3555, 12
        %v3577 = vpop.permute.xlu0 %3576
        %3578 = vrot.lane.b32.xlu0 %v3556, 12
        %v3579 = vpop.permute.xlu0 %3578
        %3580 = vrot.lane.b32.xlu0 %v3557, 12
        %v3581 = vpop.permute.xlu0 %3580
        %3582 = vrot.lane.b32.xlu0 %v3558, 12
        %v3583 = vpop.permute.xlu0 %3582
        %3584 = vrot.lane.b32.xlu0 %v3559, 12
        %v3585 = vpop.permute.xlu0 %3584
        %3586 = vrot.lane.b32.xlu0 %v3560, 12
        %v3587 = vpop.permute.xlu0 %3586
        %3588 = vrot.lane.b32.xlu0 %v3561, 12
        %v3589 = vpop.permute.xlu0 %3588
        %3590 = vrot.lane.b32.xlu0 %v3562, 12
        %v3591 = vpop.permute.xlu0 %3590
        %3592 = vrot.lane.b32.xlu0 %v3563, 12
        %v3593 = vpop.permute.xlu0 %3592
        %3594 = vrot.lane.b32.xlu0 %v3564, 12
        %v3595 = vpop.permute.xlu0 %3594
        %3596 = vrot.lane.b32.xlu0 %v3565, 12
        %v3597 = vpop.permute.xlu0 %3596
        %v3598 = vunpack.c.l.b16 %v2122
        %v3599 = vunpack.c.l.b16 %v2132
        %v3600 = vunpack.c.l.b16 %v2146
        %v3601 = vunpack.c.l.b16 %v2156
        %v3602 = vunpack.c.l.b16 %v2170
        %v3603 = vunpack.c.l.b16 %v2180
        %v3604 = vunpack.c.l.b16 %v2194
        %v3605 = vunpack.c.l.b16 %v2204
        %v3606 = vunpack.c.l.b16 %v2218
        %v3607 = vunpack.c.l.b16 %v2228
        %v3608 = vunpack.c.l.b16 %v2242
        %v3609 = vunpack.c.l.b16 %v2252
        %v3610 = vunpack.c.l.b16 %v2266
        %v3611 = vunpack.c.l.b16 %v2276
        %v3612 = vunpack.c.l.b16 %v2290
        %v3613 = vunpack.c.l.b16 %v2300
        %v3614 = vunpack.c.l.b16 %v2314
        %v3615 = vunpack.c.l.b16 %v2324
        %v3616 = vunpack.c.l.b16 %v2338
        %v3617 = vunpack.c.l.b16 %v2348
        %v3618 = vunpack.c.l.b16 %v2362
        %v3619 = vunpack.c.l.b16 %v2372
        %v3620 = vunpack.c.l.b16 %v2386
        %v3621 = vunpack.c.l.b16 %v2396
        %v3622 = vunpack.c.l.b16 %v2410
        %v3623 = vunpack.c.l.b16 %v2420
        %v3624 = vunpack.c.l.b16 %v2434
        %v3625 = vunpack.c.l.b16 %v2444
        %v3626 = vunpack.c.l.b16 %v2458
        %v3627 = vunpack.c.l.b16 %v2468
        %v3628 = vunpack.c.l.b16 %v2482
        %v3629 = vunpack.c.l.b16 %v2492
        %v3630 = vpack.c.b16 %v3599, %v3598
        %v3631 = vpack.c.b16 %v3601, %v3600
        %v3632 = vpack.c.b16 %v3603, %v3602
        %v3633 = vpack.c.b16 %v3605, %v3604
        %v3634 = vpack.c.b16 %v3607, %v3606
        %v3635 = vpack.c.b16 %v3609, %v3608
        %v3636 = vpack.c.b16 %v3611, %v3610
        %v3637 = vpack.c.b16 %v3613, %v3612
        %v3638 = vpack.c.b16 %v3615, %v3614
        %v3639 = vpack.c.b16 %v3617, %v3616
        %v3640 = vpack.c.b16 %v3619, %v3618
        %v3641 = vpack.c.b16 %v3621, %v3620
        %v3642 = vpack.c.b16 %v3623, %v3622
        %v3643 = vpack.c.b16 %v3625, %v3624
        %v3644 = vpack.c.b16 %v3627, %v3626
        %v3645 = vpack.c.b16 %v3629, %v3628
        %3646 = vrot.lane.b32.xlu0 %v3630, 16
        %v3647 = vpop.permute.xlu0 %3646
        %3648 = vrot.lane.b32.xlu0 %v3631, 16
        %v3649 = vpop.permute.xlu0 %3648
        %3650 = vrot.lane.b32.xlu0 %v3632, 16
        %v3651 = vpop.permute.xlu0 %3650
        %3652 = vrot.lane.b32.xlu0 %v3633, 16
        %v3653 = vpop.permute.xlu0 %3652
        %3654 = vrot.lane.b32.xlu0 %v3634, 16
        %v3655 = vpop.permute.xlu0 %3654
        %3656 = vrot.lane.b32.xlu0 %v3635, 16
        %v3657 = vpop.permute.xlu0 %3656
        %3658 = vrot.lane.b32.xlu0 %v3636, 16
        %v3659 = vpop.permute.xlu0 %3658
        %3660 = vrot.lane.b32.xlu0 %v3637, 16
        %v3661 = vpop.permute.xlu0 %3660
        %3662 = vrot.lane.b32.xlu0 %v3638, 16
        %v3663 = vpop.permute.xlu0 %3662
        %3664 = vrot.lane.b32.xlu0 %v3639, 16
        %v3665 = vpop.permute.xlu0 %3664
        %3666 = vrot.lane.b32.xlu0 %v3640, 16
        %v3667 = vpop.permute.xlu0 %3666
        %3668 = vrot.lane.b32.xlu0 %v3641, 16
        %v3669 = vpop.permute.xlu0 %3668
        %3670 = vrot.lane.b32.xlu0 %v3642, 16
        %v3671 = vpop.permute.xlu0 %3670
        %3672 = vrot.lane.b32.xlu0 %v3643, 16
        %v3673 = vpop.permute.xlu0 %3672
        %3674 = vrot.lane.b32.xlu0 %v3644, 16
        %v3675 = vpop.permute.xlu0 %3674
        %3676 = vrot.lane.b32.xlu0 %v3645, 16
        %v3677 = vpop.permute.xlu0 %3676
        %v3678 = vunpack.c.l.b16 %v2560
        %v3679 = vunpack.c.l.b16 %v2563
        %v3680 = vunpack.c.l.b16 %v2567
        %v3681 = vunpack.c.l.b16 %v2570
        %v3682 = vunpack.c.l.b16 %v2574
        %v3683 = vunpack.c.l.b16 %v2577
        %v3684 = vunpack.c.l.b16 %v2581
        %v3685 = vunpack.c.l.b16 %v2584
        %v3686 = vunpack.c.l.b16 %v2588
        %v3687 = vunpack.c.l.b16 %v2591
        %v3688 = vunpack.c.l.b16 %v2595
        %v3689 = vunpack.c.l.b16 %v2598
        %v3690 = vunpack.c.l.b16 %v2602
        %v3691 = vunpack.c.l.b16 %v2605
        %v3692 = vunpack.c.l.b16 %v2609
        %v3693 = vunpack.c.l.b16 %v2612
        %v3694 = vunpack.c.l.b16 %v2616
        %v3695 = vunpack.c.l.b16 %v2619
        %v3696 = vunpack.c.l.b16 %v2623
        %v3697 = vunpack.c.l.b16 %v2626
        %v3698 = vunpack.c.l.b16 %v2630
        %v3699 = vunpack.c.l.b16 %v2633
        %v3700 = vunpack.c.l.b16 %v2637
        %v3701 = vunpack.c.l.b16 %v2640
        %v3702 = vunpack.c.l.b16 %v2644
        %v3703 = vunpack.c.l.b16 %v2647
        %v3704 = vunpack.c.l.b16 %v2651
        %v3705 = vunpack.c.l.b16 %v2654
        %v3706 = vunpack.c.l.b16 %v2658
        %v3707 = vunpack.c.l.b16 %v2661
        %v3708 = vunpack.c.l.b16 %v2665
        %v3709 = vunpack.c.l.b16 %v2668
        %v3710 = vpack.c.b16 %v3679, %v3678
        %v3711 = vpack.c.b16 %v3681, %v3680
        %v3712 = vpack.c.b16 %v3683, %v3682
        %v3713 = vpack.c.b16 %v3685, %v3684
        %v3714 = vpack.c.b16 %v3687, %v3686
        %v3715 = vpack.c.b16 %v3689, %v3688
        %v3716 = vpack.c.b16 %v3691, %v3690
        %v3717 = vpack.c.b16 %v3693, %v3692
        %v3718 = vpack.c.b16 %v3695, %v3694
        %v3719 = vpack.c.b16 %v3697, %v3696
        %v3720 = vpack.c.b16 %v3699, %v3698
        %v3721 = vpack.c.b16 %v3701, %v3700
        %v3722 = vpack.c.b16 %v3703, %v3702
        %v3723 = vpack.c.b16 %v3705, %v3704
        %v3724 = vpack.c.b16 %v3707, %v3706
        %v3725 = vpack.c.b16 %v3709, %v3708
        %3726 = vrot.lane.b32.xlu0 %v3710, 20
        %v3727 = vpop.permute.xlu0 %3726
        %3728 = vrot.lane.b32.xlu0 %v3711, 20
        %v3729 = vpop.permute.xlu0 %3728
        %3730 = vrot.lane.b32.xlu0 %v3712, 20
        %v3731 = vpop.permute.xlu0 %3730
        %3732 = vrot.lane.b32.xlu0 %v3713, 20
        %v3733 = vpop.permute.xlu0 %3732
        %3734 = vrot.lane.b32.xlu0 %v3714, 20
        %v3735 = vpop.permute.xlu0 %3734
        %3736 = vrot.lane.b32.xlu0 %v3715, 20
        %v3737 = vpop.permute.xlu0 %3736
        %3738 = vrot.lane.b32.xlu0 %v3716, 20
        %v3739 = vpop.permute.xlu0 %3738
        %3740 = vrot.lane.b32.xlu0 %v3717, 20
        %v3741 = vpop.permute.xlu0 %3740
        %3742 = vrot.lane.b32.xlu0 %v3718, 20
        %v3743 = vpop.permute.xlu0 %3742
        %3744 = vrot.lane.b32.xlu0 %v3719, 20
        %v3745 = vpop.permute.xlu0 %3744
        %3746 = vrot.lane.b32.xlu0 %v3720, 20
        %v3747 = vpop.permute.xlu0 %3746
        %3748 = vrot.lane.b32.xlu0 %v3721, 20
        %v3749 = vpop.permute.xlu0 %3748
        %3750 = vrot.lane.b32.xlu0 %v3722, 20
        %v3751 = vpop.permute.xlu0 %3750
        %3752 = vrot.lane.b32.xlu0 %v3723, 20
        %v3753 = vpop.permute.xlu0 %3752
        %3754 = vrot.lane.b32.xlu0 %v3724, 20
        %v3755 = vpop.permute.xlu0 %3754
        %3756 = vrot.lane.b32.xlu0 %v3725, 20
        %v3757 = vpop.permute.xlu0 %3756
        %v3774 = vunpack.c.l.b16 %v2670
        %v3775 = vunpack.c.l.b16 %v2671
        %v3776 = vunpack.c.l.b16 %v2672
        %v3777 = vunpack.c.l.b16 %v2673
        %v3778 = vunpack.c.l.b16 %v2674
        %v3779 = vunpack.c.l.b16 %v2675
        %v3780 = vunpack.c.l.b16 %v2676
        %v3781 = vunpack.c.l.b16 %v2677
        %v3782 = vunpack.c.l.b16 %v2678
        %v3783 = vunpack.c.l.b16 %v2679
        %v3784 = vunpack.c.l.b16 %v2680
        %v3785 = vunpack.c.l.b16 %v2681
        %v3786 = vunpack.c.l.b16 %v2682
        %v3787 = vunpack.c.l.b16 %v2683
        %v3788 = vunpack.c.l.b16 %v2684
        %v3789 = vunpack.c.l.b16 %v2685
        %v3790 = vunpack.c.l.b16 %v2686
        %v3791 = vunpack.c.l.b16 %v2687
        %v3792 = vunpack.c.l.b16 %v2688
        %v3793 = vunpack.c.l.b16 %v2689
        %v3794 = vunpack.c.l.b16 %v2690
        %v3795 = vunpack.c.l.b16 %v2691
        %v3796 = vunpack.c.l.b16 %v2692
        %v3797 = vunpack.c.l.b16 %v2693
        %v3798 = vunpack.c.l.b16 %v2694
        %v3799 = vunpack.c.l.b16 %v2695
        %v3800 = vunpack.c.l.b16 %v2696
        %v3801 = vunpack.c.l.b16 %v2697
        %v3802 = vunpack.c.l.b16 %v2698
        %v3803 = vunpack.c.l.b16 %v2699
        %v3804 = vunpack.c.l.b16 %v2700
        %v3805 = vunpack.c.l.b16 %v2701
        %v3806 = vpack.c.b16 %v3775, %v3774
        %v3807 = vpack.c.b16 %v3777, %v3776
        %v3808 = vpack.c.b16 %v3779, %v3778
        %v3809 = vpack.c.b16 %v3781, %v3780
        %v3810 = vpack.c.b16 %v3783, %v3782
        %v3811 = vpack.c.b16 %v3785, %v3784
        %v3812 = vpack.c.b16 %v3787, %v3786
        %v3813 = vpack.c.b16 %v3789, %v3788
        %v3814 = vpack.c.b16 %v3791, %v3790
        %v3815 = vpack.c.b16 %v3793, %v3792
        %v3816 = vpack.c.b16 %v3795, %v3794
        %v3817 = vpack.c.b16 %v3797, %v3796
        %v3818 = vpack.c.b16 %v3799, %v3798
        %v3819 = vpack.c.b16 %v3801, %v3800
        %v3820 = vpack.c.b16 %v3803, %v3802
        %v3821 = vpack.c.b16 %v3805, %v3804
        %3822 = vrot.lane.b32.xlu0 %v3806, 24
        %v3823 = vpop.permute.xlu0 %3822
        %3824 = vrot.lane.b32.xlu0 %v3807, 24
        %v3825 = vpop.permute.xlu0 %3824
        %3826 = vrot.lane.b32.xlu0 %v3808, 24
        %v3827 = vpop.permute.xlu0 %3826
        %3828 = vrot.lane.b32.xlu0 %v3809, 24
        %v3829 = vpop.permute.xlu0 %3828
        %3830 = vrot.lane.b32.xlu0 %v3810, 24
        %v3831 = vpop.permute.xlu0 %3830
        %3832 = vrot.lane.b32.xlu0 %v3811, 24
        %v3833 = vpop.permute.xlu0 %3832
        %3834 = vrot.lane.b32.xlu0 %v3812, 24
        %v3835 = vpop.permute.xlu0 %3834
        %3836 = vrot.lane.b32.xlu0 %v3813, 24
        %v3837 = vpop.permute.xlu0 %3836
        %3838 = vrot.lane.b32.xlu0 %v3814, 24
        %v3839 = vpop.permute.xlu0 %3838
        %3840 = vrot.lane.b32.xlu0 %v3815, 24
        %v3841 = vpop.permute.xlu0 %3840
        %3842 = vrot.lane.b32.xlu0 %v3816, 24
        %v3843 = vpop.permute.xlu0 %3842
        %3844 = vrot.lane.b32.xlu0 %v3817, 24
        %v3845 = vpop.permute.xlu0 %3844
        %3846 = vrot.lane.b32.xlu0 %v3818, 24
        %v3847 = vpop.permute.xlu0 %3846
        %3848 = vrot.lane.b32.xlu0 %v3819, 24
        %v3849 = vpop.permute.xlu0 %3848
        %3850 = vrot.lane.b32.xlu0 %v3820, 24
        %v3851 = vpop.permute.xlu0 %3850
        %3852 = vrot.lane.b32.xlu0 %v3821, 24
        %v3853 = vpop.permute.xlu0 %3852
        %v3854 = vunpack.c.l.b16 %v2731
        %v3855 = vunpack.c.l.b16 %v2741
        %v3856 = vunpack.c.l.b16 %v2755
        %v3857 = vunpack.c.l.b16 %v2765
        %v3858 = vunpack.c.l.b16 %v2779
        %v3859 = vunpack.c.l.b16 %v2789
        %v3860 = vunpack.c.l.b16 %v2803
        %v3861 = vunpack.c.l.b16 %v2813
        %v3862 = vunpack.c.l.b16 %v2827
        %v3863 = vunpack.c.l.b16 %v2837
        %v3864 = vunpack.c.l.b16 %v2851
        %v3865 = vunpack.c.l.b16 %v2861
        %v3866 = vunpack.c.l.b16 %v2875
        %v3867 = vunpack.c.l.b16 %v2885
        %v3868 = vunpack.c.l.b16 %v2899
        %v3869 = vunpack.c.l.b16 %v2909
        %v3870 = vunpack.c.l.b16 %v2923
        %v3871 = vunpack.c.l.b16 %v2933
        %v3872 = vunpack.c.l.b16 %v2947
        %v3873 = vunpack.c.l.b16 %v2957
        %v3874 = vunpack.c.l.b16 %v2971
        %v3875 = vunpack.c.l.b16 %v2981
        %v3876 = vunpack.c.l.b16 %v2995
        %v3877 = vunpack.c.l.b16 %v3005
        %v3878 = vunpack.c.l.b16 %v3019
        %v3879 = vunpack.c.l.b16 %v3029
        %v3880 = vunpack.c.l.b16 %v3043
        %v3881 = vunpack.c.l.b16 %v3053
        %v3882 = vunpack.c.l.b16 %v3067
        %v3883 = vunpack.c.l.b16 %v3077
        %v3884 = vunpack.c.l.b16 %v3091
        %v3885 = vunpack.c.l.b16 %v3101
        %v3886 = vpack.c.b16 %v3855, %v3854
        %v3887 = vpack.c.b16 %v3857, %v3856
        %v3888 = vpack.c.b16 %v3859, %v3858
        %v3889 = vpack.c.b16 %v3861, %v3860
        %v3890 = vpack.c.b16 %v3863, %v3862
        %v3891 = vpack.c.b16 %v3865, %v3864
        %v3892 = vpack.c.b16 %v3867, %v3866
        %v3893 = vpack.c.b16 %v3869, %v3868
        %v3894 = vpack.c.b16 %v3871, %v3870
        %v3895 = vpack.c.b16 %v3873, %v3872
        %v3896 = vpack.c.b16 %v3875, %v3874
        %v3897 = vpack.c.b16 %v3877, %v3876
        %v3898 = vpack.c.b16 %v3879, %v3878
        %v3899 = vpack.c.b16 %v3881, %v3880
        %v3900 = vpack.c.b16 %v3883, %v3882
        %v3901 = vpack.c.b16 %v3885, %v3884
        %3902 = vrot.lane.b32.xlu0 %v3886, 28
        %v3903 = vpop.permute.xlu0 %3902
        %3904 = vrot.lane.b32.xlu0 %v3887, 28
        %v3905 = vpop.permute.xlu0 %3904
        %3906 = vrot.lane.b32.xlu0 %v3888, 28
        %v3907 = vpop.permute.xlu0 %3906
        %3908 = vrot.lane.b32.xlu0 %v3889, 28
        %v3909 = vpop.permute.xlu0 %3908
        %3910 = vrot.lane.b32.xlu0 %v3890, 28
        %v3911 = vpop.permute.xlu0 %3910
        %3912 = vrot.lane.b32.xlu0 %v3891, 28
        %v3913 = vpop.permute.xlu0 %3912
        %3914 = vrot.lane.b32.xlu0 %v3892, 28
        %v3915 = vpop.permute.xlu0 %3914
        %3916 = vrot.lane.b32.xlu0 %v3893, 28
        %v3917 = vpop.permute.xlu0 %3916
        %3918 = vrot.lane.b32.xlu0 %v3894, 28
        %v3919 = vpop.permute.xlu0 %3918
        %3920 = vrot.lane.b32.xlu0 %v3895, 28
        %v3921 = vpop.permute.xlu0 %3920
        %3922 = vrot.lane.b32.xlu0 %v3896, 28
        %v3923 = vpop.permute.xlu0 %3922
        %3924 = vrot.lane.b32.xlu0 %v3897, 28
        %v3925 = vpop.permute.xlu0 %3924
        %3926 = vrot.lane.b32.xlu0 %v3898, 28
        %v3927 = vpop.permute.xlu0 %3926
        %3928 = vrot.lane.b32.xlu0 %v3899, 28
        %v3929 = vpop.permute.xlu0 %3928
        %3930 = vrot.lane.b32.xlu0 %v3900, 28
        %v3931 = vpop.permute.xlu0 %3930
        %3932 = vrot.lane.b32.xlu0 %v3901, 28
        %v3933 = vpop.permute.xlu0 %3932
        %v3934 = vunpack.c.l.b16 %v3169
        %v3935 = vunpack.c.l.b16 %v3172
        %v3936 = vunpack.c.l.b16 %v3176
        %v3937 = vunpack.c.l.b16 %v3179
        %v3938 = vunpack.c.l.b16 %v3183
        %v3939 = vunpack.c.l.b16 %v3186
        %v3940 = vunpack.c.l.b16 %v3190
        %v3941 = vunpack.c.l.b16 %v3193
        %v3942 = vunpack.c.l.b16 %v3197
        %v3943 = vunpack.c.l.b16 %v3200
        %v3944 = vunpack.c.l.b16 %v3204
        %v3945 = vunpack.c.l.b16 %v3207
        %v3946 = vunpack.c.l.b16 %v3211
        %v3947 = vunpack.c.l.b16 %v3214
        %v3948 = vunpack.c.l.b16 %v3218
        %v3949 = vunpack.c.l.b16 %v3221
        %v3950 = vunpack.c.l.b16 %v3225
        %v3951 = vunpack.c.l.b16 %v3228
        %v3952 = vunpack.c.l.b16 %v3232
        %v3953 = vunpack.c.l.b16 %v3235
        %v3954 = vunpack.c.l.b16 %v3239
        %v3955 = vunpack.c.l.b16 %v3242
        %v3956 = vunpack.c.l.b16 %v3246
        %v3957 = vunpack.c.l.b16 %v3249
        %v3958 = vunpack.c.l.b16 %v3253
        %v3959 = vunpack.c.l.b16 %v3256
        %v3960 = vunpack.c.l.b16 %v3260
        %v3961 = vunpack.c.l.b16 %v3263
        %v3962 = vunpack.c.l.b16 %v3267
        %v3963 = vunpack.c.l.b16 %v3270
        %v3964 = vunpack.c.l.b16 %v3274
        %v3965 = vunpack.c.l.b16 %v3277
        %v3966 = vpack.c.b16 %v3935, %v3934
        %v3967 = vpack.c.b16 %v3937, %v3936
        %v3968 = vpack.c.b16 %v3939, %v3938
        %v3969 = vpack.c.b16 %v3941, %v3940
        %v3970 = vpack.c.b16 %v3943, %v3942
        %v3971 = vpack.c.b16 %v3945, %v3944
        %v3972 = vpack.c.b16 %v3947, %v3946
        %v3973 = vpack.c.b16 %v3949, %v3948
        %v3974 = vpack.c.b16 %v3951, %v3950
        %v3975 = vpack.c.b16 %v3953, %v3952
        %v3976 = vpack.c.b16 %v3955, %v3954
        %v3977 = vpack.c.b16 %v3957, %v3956
        %v3978 = vpack.c.b16 %v3959, %v3958
        %v3979 = vpack.c.b16 %v3961, %v3960
        %v3980 = vpack.c.b16 %v3963, %v3962
        %v3981 = vpack.c.b16 %v3965, %v3964
        %3982 = vrot.lane.b32.xlu0 %v3966, 32
        %v3983 = vpop.permute.xlu0 %3982
        %3984 = vrot.lane.b32.xlu0 %v3967, 32
        %v3985 = vpop.permute.xlu0 %3984
        %3986 = vrot.lane.b32.xlu0 %v3968, 32
        %v3987 = vpop.permute.xlu0 %3986
        %3988 = vrot.lane.b32.xlu0 %v3969, 32
        %v3989 = vpop.permute.xlu0 %3988
        %3990 = vrot.lane.b32.xlu0 %v3970, 32
        %v3991 = vpop.permute.xlu0 %3990
        %3992 = vrot.lane.b32.xlu0 %v3971, 32
        %v3993 = vpop.permute.xlu0 %3992
        %3994 = vrot.lane.b32.xlu0 %v3972, 32
        %v3995 = vpop.permute.xlu0 %3994
        %3996 = vrot.lane.b32.xlu0 %v3973, 32
        %v3997 = vpop.permute.xlu0 %3996
        %3998 = vrot.lane.b32.xlu0 %v3974, 32
        %v3999 = vpop.permute.xlu0 %3998
        %4000 = vrot.lane.b32.xlu0 %v3975, 32
        %v4001 = vpop.permute.xlu0 %4000
        %4002 = vrot.lane.b32.xlu0 %v3976, 32
        %v4003 = vpop.permute.xlu0 %4002
        %4004 = vrot.lane.b32.xlu0 %v3977, 32
        %v4005 = vpop.permute.xlu0 %4004
        %4006 = vrot.lane.b32.xlu0 %v3978, 32
        %v4007 = vpop.permute.xlu0 %4006
        %4008 = vrot.lane.b32.xlu0 %v3979, 32
        %v4009 = vpop.permute.xlu0 %4008
        %4010 = vrot.lane.b32.xlu0 %v3980, 32
        %v4011 = vpop.permute.xlu0 %4010
        %4012 = vrot.lane.b32.xlu0 %v3981, 32
        %v4013 = vpop.permute.xlu0 %4012
        %v4016 = vsel %vm504, %v3326, %v3391
        %v4019 = vsel %vm504, %v3327, %v3393
        %v4022 = vsel %vm504, %v3328, %v3395
        %v4025 = vsel %vm504, %v3329, %v3397
        %v4028 = vsel %vm504, %v3330, %v3399
        %v4031 = vsel %vm504, %v3331, %v3401
        %v4034 = vsel %vm504, %v3332, %v3403
        %v4037 = vsel %vm504, %v3333, %v3405
        %v4040 = vsel %vm504, %v3334, %v3407
        %v4043 = vsel %vm504, %v3335, %v3409
        %v4046 = vsel %vm504, %v3336, %v3411
        %v4049 = vsel %vm504, %v3337, %v3413
        %v4052 = vsel %vm504, %v3338, %v3415
        %v4055 = vsel %vm504, %v3339, %v3417
        %v4058 = vsel %vm504, %v3340, %v3419
        %v4061 = vsel %vm504, %v3341, %v3421
        %vm4062 = vcmask 64512
        %v4064 = vsel %vm4062, %v4016, %v3471
        %v4066 = vsel %vm4062, %v4019, %v3473
        %v4068 = vsel %vm4062, %v4022, %v3475
        %v4070 = vsel %vm4062, %v4025, %v3477
        %v4072 = vsel %vm4062, %v4028, %v3479
        %v4074 = vsel %vm4062, %v4031, %v3481
        %v4076 = vsel %vm4062, %v4034, %v3483
        %v4078 = vsel %vm4062, %v4037, %v3485
        %v4080 = vsel %vm4062, %v4040, %v3487
        %v4082 = vsel %vm4062, %v4043, %v3489
        %v4084 = vsel %vm4062, %v4046, %v3491
        %v4086 = vsel %vm4062, %v4049, %v3493
        %v4088 = vsel %vm4062, %v4052, %v3495
        %v4090 = vsel %vm4062, %v4055, %v3497
        %v4092 = vsel %vm4062, %v4058, %v3499
        %v4094 = vsel %vm4062, %v4061, %v3501
        %vm4095 = vcmask 97280
        %v4097 = vsel %vm4095, %v4064, %v3567
        %v4099 = vsel %vm4095, %v4066, %v3569
        %v4101 = vsel %vm4095, %v4068, %v3571
        %v4103 = vsel %vm4095, %v4070, %v3573
        %v4105 = vsel %vm4095, %v4072, %v3575
        %v4107 = vsel %vm4095, %v4074, %v3577
        %v4109 = vsel %vm4095, %v4076, %v3579
        %v4111 = vsel %vm4095, %v4078, %v3581
        %v4113 = vsel %vm4095, %v4080, %v3583
        %v4115 = vsel %vm4095, %v4082, %v3585
        %v4117 = vsel %vm4095, %v4084, %v3587
        %v4119 = vsel %vm4095, %v4086, %v3589
        %v4121 = vsel %vm4095, %v4088, %v3591
        %v4123 = vsel %vm4095, %v4090, %v3593
        %v4125 = vsel %vm4095, %v4092, %v3595
        %v4127 = vsel %vm4095, %v4094, %v3597
        %vm4128 = vcmask 130048
        %v4130 = vsel %vm4128, %v4097, %v3647
        %v4132 = vsel %vm4128, %v4099, %v3649
        %v4134 = vsel %vm4128, %v4101, %v3651
        %v4136 = vsel %vm4128, %v4103, %v3653
        %v4138 = vsel %vm4128, %v4105, %v3655
        %v4140 = vsel %vm4128, %v4107, %v3657
        %v4142 = vsel %vm4128, %v4109, %v3659
        %v4144 = vsel %vm4128, %v4111, %v3661
        %v4146 = vsel %vm4128, %v4113, %v3663
        %v4148 = vsel %vm4128, %v4115, %v3665
        %v4150 = vsel %vm4128, %v4117, %v3667
        %v4152 = vsel %vm4128, %v4119, %v3669
        %v4154 = vsel %vm4128, %v4121, %v3671
        %v4156 = vsel %vm4128, %v4123, %v3673
        %v4158 = vsel %vm4128, %v4125, %v3675
        %v4160 = vsel %vm4128, %v4127, %v3677
        %vm4161 = vcmask 162816
        %v4163 = vsel %vm4161, %v4130, %v3727
        %v4165 = vsel %vm4161, %v4132, %v3729
        %v4167 = vsel %vm4161, %v4134, %v3731
        %v4169 = vsel %vm4161, %v4136, %v3733
        %v4171 = vsel %vm4161, %v4138, %v3735
        %v4173 = vsel %vm4161, %v4140, %v3737
        %v4175 = vsel %vm4161, %v4142, %v3739
        %v4177 = vsel %vm4161, %v4144, %v3741
        %v4179 = vsel %vm4161, %v4146, %v3743
        %v4181 = vsel %vm4161, %v4148, %v3745
        %v4183 = vsel %vm4161, %v4150, %v3747
        %v4185 = vsel %vm4161, %v4152, %v3749
        %v4187 = vsel %vm4161, %v4154, %v3751
        %v4189 = vsel %vm4161, %v4156, %v3753
        %v4191 = vsel %vm4161, %v4158, %v3755
        %v4193 = vsel %vm4161, %v4160, %v3757
        %vm4194 = vcmask 195584
        %v4196 = vsel %vm4194, %v4163, %v3823
        %v4198 = vsel %vm4194, %v4165, %v3825
        %v4200 = vsel %vm4194, %v4167, %v3827
        %v4202 = vsel %vm4194, %v4169, %v3829
        %v4204 = vsel %vm4194, %v4171, %v3831
        %v4206 = vsel %vm4194, %v4173, %v3833
        %v4208 = vsel %vm4194, %v4175, %v3835
        %v4210 = vsel %vm4194, %v4177, %v3837
        %v4212 = vsel %vm4194, %v4179, %v3839
        %v4214 = vsel %vm4194, %v4181, %v3841
        %v4216 = vsel %vm4194, %v4183, %v3843
        %v4218 = vsel %vm4194, %v4185, %v3845
        %v4220 = vsel %vm4194, %v4187, %v3847
        %v4222 = vsel %vm4194, %v4189, %v3849
        %v4224 = vsel %vm4194, %v4191, %v3851
        %v4226 = vsel %vm4194, %v4193, %v3853
        %vm4227 = vcmask 228352
        %v4229 = vsel %vm4227, %v4196, %v3903
        %v4231 = vsel %vm4227, %v4198, %v3905
        %v4233 = vsel %vm4227, %v4200, %v3907
        %v4235 = vsel %vm4227, %v4202, %v3909
        %v4237 = vsel %vm4227, %v4204, %v3911
        %v4239 = vsel %vm4227, %v4206, %v3913
        %v4241 = vsel %vm4227, %v4208, %v3915
        %v4243 = vsel %vm4227, %v4210, %v3917
        %v4245 = vsel %vm4227, %v4212, %v3919
        %v4247 = vsel %vm4227, %v4214, %v3921
        %v4249 = vsel %vm4227, %v4216, %v3923
        %v4251 = vsel %vm4227, %v4218, %v3925
        %v4253 = vsel %vm4227, %v4220, %v3927
        %v4255 = vsel %vm4227, %v4222, %v3929
        %v4257 = vsel %vm4227, %v4224, %v3931
        %v4259 = vsel %vm4227, %v4226, %v3933
        %vm4260 = vcmask 261120
        %v4262 = vsel %vm4260, %v4229, %v3983
        %v4264 = vsel %vm4260, %v4231, %v3985
        %v4266 = vsel %vm4260, %v4233, %v3987
        %v4268 = vsel %vm4260, %v4235, %v3989
        %v4270 = vsel %vm4260, %v4237, %v3991
        %v4272 = vsel %vm4260, %v4239, %v3993
        %v4274 = vsel %vm4260, %v4241, %v3995
        %v4276 = vsel %vm4260, %v4243, %v3997
        %v4278 = vsel %vm4260, %v4245, %v3999
        %v4280 = vsel %vm4260, %v4247, %v4001
        %v4282 = vsel %vm4260, %v4249, %v4003
        %v4284 = vsel %vm4260, %v4251, %v4005
        %v4286 = vsel %vm4260, %v4253, %v4007
        %v4288 = vsel %vm4260, %v4255, %v4009
        %v4290 = vsel %vm4260, %v4257, %v4011
        %v4292 = vsel %vm4260, %v4259, %v4013
        %v4293 = vld [vmem:[#allocation9] sm:$0xf]
        %v4294 = vld [vmem:[#allocation9 + $0x4] sm:$0xf]
        %v4295 = vld [vmem:[#allocation9 + $0x8] sm:$0xf]
        %v4296 = vld [vmem:[#allocation9 + $0xc] sm:$0xf]
        %v4297 = vld [vmem:[#allocation9 + $0x10] sm:$0x3]
        %v4298 = vld [vmem:[#allocation11] sm:$0x1]
        %v4300 = vlaneseq
        %v4301 = vshrl.u32 %v4300, 7
        %v4302 = vsub.s32 0, %v4301
        %v4303 = vrot.slane %v4298, %v4302
        %v4310 = vunpack.c.l.b16 %v4293
        %v4311 = vunpack.c.l.b16 %v4294
        %v4312 = vunpack.c.l.b16 %v4295
        %v4313 = vunpack.c.l.b16 %v4296
        %v4314 = vunpack.c.l.b16 %v4297
        %v4315 = vpack.c.b16 %v4311, %v4310
        %v4316 = vpack.c.b16 %v4313, %v4312
        %v4317 = vpack.c.b16 %v4314, %v4314
        %vm4320 = vcmask 293888
        %v4321 = vsel %vm4320, %v4262, 0
        %v4323 = vsel %vm4320, %v4264, 0
        %v4325 = vsel %vm4320, %v4266, 0
        %v4327 = vsel %vm4320, %v4268, 0
        %v4329 = vsel %vm4320, %v4270, 0
        %v4331 = vsel %vm4320, %v4272, 0
        %v4333 = vsel %vm4320, %v4274, 0
        %v4335 = vsel %vm4320, %v4276, 0
        %v4337 = vsel %vm4320, %v4278, 0
        %v4339 = vsel %vm4320, %v4280, 0
        %v4341 = vsel %vm4320, %v4282, 0
        %v4343 = vsel %vm4320, %v4284, 0
        %v4345 = vsel %vm4320, %v4286, 0
        %v4347 = vsel %vm4320, %v4288, 0
        %v4349 = vsel %vm4320, %v4290, 0
        %v4351 = vsel %vm4320, %v4292, 0
        %v4354 = vsel %vm553, %v4317, 0
        %4356 = vmatprep.subr.bf16.mxu0 0
        %4357 = vmatpush1.bf16.msra.mxu0 %v4315
        %4358 = vmatprep.subr.bf16.mxu0 0
        %4359 = vmatpush1.bf16.msra.mxu0 %v4316
        %4360 = vmatprep.subr.bf16.mxu0 0
        %4361 = vmatpush1.bf16.msra.mxu0 %v4354
        %4362 = vmatprep.subr.bf16.mxu0 0
        %4363 = vmatpush1.bf16.msra.mxu0 0
        %4364 = vmatprep.subr.bf16.mxu0 0
        %4365 = vmatpush1.bf16.msra.mxu0 0
        %4366 = vmatprep.subr.bf16.mxu0 0
        %4367 = vmatpush1.bf16.msra.mxu0 0
        %4368 = vmatprep.subr.bf16.mxu0 0
        %4369 = vmatpush1.bf16.msra.mxu0 0
        %4370 = vmatprep.subr.bf16.mxu0 0
        %4371 = vmatpush1.bf16.msra.mxu0 0
        %4372 = vmatprep.subr.bf16.mxu0 0
        %4373 = vmatpush1.bf16.msra.mxu0 0
        %4374 = vmatprep.subr.bf16.mxu0 0
        %4375 = vmatpush1.bf16.msra.mxu0 0
        %4376 = vmatprep.subr.bf16.mxu0 0
        %4377 = vmatpush1.bf16.msra.mxu0 0
        %4378 = vmatprep.subr.bf16.mxu0 0
        %4379 = vmatpush1.bf16.msra.mxu0 0
        %4380 = vmatprep.subr.bf16.mxu0 0
        %4381 = vmatpush1.bf16.msra.mxu0 0
        %4382 = vmatprep.subr.bf16.mxu0 0
        %4383 = vmatpush1.bf16.msra.mxu0 0
        %4384 = vmatprep.subr.bf16.mxu0 0
        %4385 = vmatpush1.bf16.msra.mxu0 0
        %4386 = vmatprep.subr.bf16.mxu0 0
        %4387 = vmatpush1.bf16.msra.mxu0 0
        %4388 = vmatprep.mubr.bf16.mxu0 0
        %4389 = vmatmul.mubr.bf16.gmra.mrb[0].mxu0 %v4321
        %v4390 = vpop.f32.mrb[0].mxu0
        %v4391 = vadd.f32 %v4303, %v4390
        %v4392 = vpop.f32.mrb[0].mxu0
        %v4393 = vpop.f32.mrb[0].mxu0
        %v4394 = vadd.f32 %v4303, %v4393
        %v4395 = vpop.f32.mrb[0].mxu0
        %4396 = vmatprep.mubr.bf16.mxu0 0
        %4397 = vmatmul.mubr.bf16.gmra.mrb[0].mxu0 %v4323
        %v4398 = vpop.f32.mrb[0].mxu0
        %v4399 = vadd.f32 %v4303, %v4398
        %v4400 = vpop.f32.mrb[0].mxu0
        %v4401 = vpop.f32.mrb[0].mxu0
        %v4402 = vadd.f32 %v4303, %v4401
        %v4403 = vpop.f32.mrb[0].mxu0
        %4404 = vmatprep.mubr.bf16.mxu0 0
        %4405 = vmatmul.mubr.bf16.gmra.mrb[0].mxu0 %v4325
        %v4406 = vpop.f32.mrb[0].mxu0
        %v4407 = vadd.f32 %v4303, %v4406
        %v4408 = vpop.f32.mrb[0].mxu0
        %v4409 = vpop.f32.mrb[0].mxu0
        %v4410 = vadd.f32 %v4303, %v4409
        %v4411 = vpop.f32.mrb[0].mxu0
        %4412 = vmatprep.mubr.bf16.mxu0 0
        %4413 = vmatmul.mubr.bf16.gmra.mrb[0].mxu0 %v4327
        %v4414 = vpop.f32.mrb[0].mxu0
        %v4415 = vadd.f32 %v4303, %v4414
        %v4416 = vpop.f32.mrb[0].mxu0
        %v4417 = vpop.f32.mrb[0].mxu0
        %v4418 = vadd.f32 %v4303, %v4417
        %v4419 = vpop.f32.mrb[0].mxu0
        %4420 = vmatprep.mubr.bf16.mxu0 0
        %4421 = vmatmul.mubr.bf16.gmra.mrb[0].mxu0 %v4329
        %v4422 = vpop.f32.mrb[0].mxu0
        %v4423 = vadd.f32 %v4303, %v4422
        %v4424 = vpop.f32.mrb[0].mxu0
        %v4425 = vpop.f32.mrb[0].mxu0
        %v4426 = vadd.f32 %v4303, %v4425
        %v4427 = vpop.f32.mrb[0].mxu0
        %4428 = vmatprep.mubr.bf16.mxu0 0
        %4429 = vmatmul.mubr.bf16.gmra.mrb[0].mxu0 %v4331
        %v4430 = vpop.f32.mrb[0].mxu0
        %v4431 = vadd.f32 %v4303, %v4430
        %v4432 = vpop.f32.mrb[0].mxu0
        %v4433 = vpop.f32.mrb[0].mxu0
        %v4434 = vadd.f32 %v4303, %v4433
        %v4435 = vpop.f32.mrb[0].mxu0
        %4436 = vmatprep.mubr.bf16.mxu0 0
        %4437 = vmatmul.mubr.bf16.gmra.mrb[0].mxu0 %v4333
        %v4438 = vpop.f32.mrb[0].mxu0
        %v4439 = vadd.f32 %v4303, %v4438
        %v4440 = vpop.f32.mrb[0].mxu0
        %v4441 = vpop.f32.mrb[0].mxu0
        %v4442 = vadd.f32 %v4303, %v4441
        %v4443 = vpop.f32.mrb[0].mxu0
        %4444 = vmatprep.mubr.bf16.mxu0 0
        %4445 = vmatmul.mubr.bf16.gmra.mrb[0].mxu0 %v4335
        %v4446 = vpop.f32.mrb[0].mxu0
        %v4447 = vadd.f32 %v4303, %v4446
        %v4448 = vpop.f32.mrb[0].mxu0
        %v4449 = vpop.f32.mrb[0].mxu0
        %v4450 = vadd.f32 %v4303, %v4449
        %v4451 = vpop.f32.mrb[0].mxu0
        %4452 = vmatprep.mubr.bf16.mxu0 0
        %4453 = vmatmul.mubr.bf16.gmra.mrb[0].mxu0 %v4337
        %v4454 = vpop.f32.mrb[0].mxu0
        %v4455 = vadd.f32 %v4303, %v4454
        %v4456 = vpop.f32.mrb[0].mxu0
        %v4457 = vpop.f32.mrb[0].mxu0
        %v4458 = vadd.f32 %v4303, %v4457
        %v4459 = vpop.f32.mrb[0].mxu0
        %4460 = vmatprep.mubr.bf16.mxu0 0
        %4461 = vmatmul.mubr.bf16.gmra.mrb[0].mxu0 %v4339
        %v4462 = vpop.f32.mrb[0].mxu0
        %v4463 = vadd.f32 %v4303, %v4462
        %v4464 = vpop.f32.mrb[0].mxu0
        %v4465 = vpop.f32.mrb[0].mxu0
        %v4466 = vadd.f32 %v4303, %v4465
        %v4467 = vpop.f32.mrb[0].mxu0
        %4468 = vmatprep.mubr.bf16.mxu0 0
        %4469 = vmatmul.mubr.bf16.gmra.mrb[0].mxu0 %v4341
        %v4470 = vpop.f32.mrb[0].mxu0
        %v4471 = vadd.f32 %v4303, %v4470
        %v4472 = vpop.f32.mrb[0].mxu0
        %v4473 = vpop.f32.mrb[0].mxu0
        %v4474 = vadd.f32 %v4303, %v4473
        %v4475 = vpop.f32.mrb[0].mxu0
        %4476 = vmatprep.mubr.bf16.mxu0 0
        %4477 = vmatmul.mubr.bf16.gmra.mrb[0].mxu0 %v4343
        %v4478 = vpop.f32.mrb[0].mxu0
        %v4479 = vadd.f32 %v4303, %v4478
        %v4480 = vpop.f32.mrb[0].mxu0
        %v4481 = vpop.f32.mrb[0].mxu0
        %v4482 = vadd.f32 %v4303, %v4481
        %v4483 = vpop.f32.mrb[0].mxu0
        %4484 = vmatprep.mubr.bf16.mxu0 0
        %4485 = vmatmul.mubr.bf16.gmra.mrb[0].mxu0 %v4345
        %v4486 = vpop.f32.mrb[0].mxu0
        %v4487 = vadd.f32 %v4303, %v4486
        %v4488 = vpop.f32.mrb[0].mxu0
        %v4489 = vpop.f32.mrb[0].mxu0
        %v4490 = vadd.f32 %v4303, %v4489
        %v4491 = vpop.f32.mrb[0].mxu0
        %4492 = vmatprep.mubr.bf16.mxu0 0
        %4493 = vmatmul.mubr.bf16.gmra.mrb[0].mxu0 %v4347
        %v4494 = vpop.f32.mrb[0].mxu0
        %v4495 = vadd.f32 %v4303, %v4494
        %v4496 = vpop.f32.mrb[0].mxu0
        %v4497 = vpop.f32.mrb[0].mxu0
        %v4498 = vadd.f32 %v4303, %v4497
        %v4499 = vpop.f32.mrb[0].mxu0
        %4500 = vmatprep.mubr.bf16.mxu0 0
        %4501 = vmatmul.mubr.bf16.gmra.mrb[0].mxu0 %v4349
        %v4502 = vpop.f32.mrb[0].mxu0
        %v4503 = vadd.f32 %v4303, %v4502
        %v4504 = vpop.f32.mrb[0].mxu0
        %v4505 = vpop.f32.mrb[0].mxu0
        %v4506 = vadd.f32 %v4303, %v4505
        %v4507 = vpop.f32.mrb[0].mxu0
        %4508 = vmatprep.mubr.bf16.mxu0 0
        %4509 = vmatmul.mubr.bf16.gmra.mrb[0].mxu0 %v4351
        %v4510 = vpop.f32.mrb[0].mxu0
        %v4511 = vadd.f32 %v4303, %v4510
        %v4512 = vpop.f32.mrb[0].mxu0
        %v4513 = vpop.f32.mrb[0].mxu0
        %v4514 = vadd.f32 %v4303, %v4513
        %v4515 = vpop.f32.mrb[0].mxu0
        %4516 = vdwg.mxu0
        %v4517 = vsub.f32 0.0, %v4391
        %v4518 = vsub.f32 0.0, %v4394
        %v4519 = vsub.f32 0.0, %v4399
        %v4520 = vsub.f32 0.0, %v4402
        %v4521 = vsub.f32 0.0, %v4407
        %v4522 = vsub.f32 0.0, %v4410
        %v4523 = vsub.f32 0.0, %v4415
        %v4524 = vsub.f32 0.0, %v4418
        %v4525 = vsub.f32 0.0, %v4423
        %v4526 = vsub.f32 0.0, %v4426
        %v4527 = vsub.f32 0.0, %v4431
        %v4528 = vsub.f32 0.0, %v4434
        %v4529 = vsub.f32 0.0, %v4439
        %v4530 = vsub.f32 0.0, %v4442
        %v4531 = vsub.f32 0.0, %v4447
        %v4532 = vsub.f32 0.0, %v4450
        %v4533 = vsub.f32 0.0, %v4455
        %v4534 = vsub.f32 0.0, %v4458
        %v4535 = vsub.f32 0.0, %v4463
        %v4536 = vsub.f32 0.0, %v4466
        %v4537 = vsub.f32 0.0, %v4471
        %v4538 = vsub.f32 0.0, %v4474
        %v4539 = vsub.f32 0.0, %v4479
        %v4540 = vsub.f32 0.0, %v4482
        %v4541 = vsub.f32 0.0, %v4487
        %v4542 = vsub.f32 0.0, %v4490
        %v4543 = vsub.f32 0.0, %v4495
        %v4544 = vsub.f32 0.0, %v4498
        %v4545 = vsub.f32 0.0, %v4503
        %v4546 = vsub.f32 0.0, %v4506
        %v4547 = vsub.f32 0.0, %v4511
        %v4548 = vsub.f32 0.0, %v4514
        %v4549 = vmul.f32 %v4517, 1.442695
        %v4550 = vpow.pop %v4549
        %v4551 = vmul.f32 %v4518, 1.442695
        %v4552 = vpow.pop %v4551
        %v4553 = vmul.f32 %v4519, 1.442695
        %v4554 = vpow.pop %v4553
        %v4555 = vmul.f32 %v4520, 1.442695
        %v4556 = vpow.pop %v4555
        %v4557 = vmul.f32 %v4521, 1.442695
        %v4558 = vpow.pop %v4557
        %v4559 = vmul.f32 %v4522, 1.442695
        %v4560 = vpow.pop %v4559
        %v4561 = vmul.f32 %v4523, 1.442695
        %v4562 = vpow.pop %v4561
        %v4563 = vmul.f32 %v4524, 1.442695
        %v4564 = vpow.pop %v4563
        %v4565 = vmul.f32 %v4525, 1.442695
        %v4566 = vpow.pop %v4565
        %v4567 = vmul.f32 %v4526, 1.442695
        %v4568 = vpow.pop %v4567
        %v4569 = vmul.f32 %v4527, 1.442695
        %v4570 = vpow.pop %v4569
        %v4571 = vmul.f32 %v4528, 1.442695
        %v4572 = vpow.pop %v4571
        %v4573 = vmul.f32 %v4529, 1.442695
        %v4574 = vpow.pop %v4573
        %v4575 = vmul.f32 %v4530, 1.442695
        %v4576 = vpow.pop %v4575
        %v4577 = vmul.f32 %v4531, 1.442695
        %v4578 = vpow.pop %v4577
        %v4579 = vmul.f32 %v4532, 1.442695
        %v4580 = vpow.pop %v4579
        %v4581 = vmul.f32 %v4533, 1.442695
        %v4582 = vpow.pop %v4581
        %v4583 = vmul.f32 %v4534, 1.442695
        %v4584 = vpow.pop %v4583
        %v4585 = vmul.f32 %v4535, 1.442695
        %v4586 = vpow.pop %v4585
        %v4587 = vmul.f32 %v4536, 1.442695
        %v4588 = vpow.pop %v4587
        %v4589 = vmul.f32 %v4537, 1.442695
        %v4590 = vpow.pop %v4589
        %v4591 = vmul.f32 %v4538, 1.442695
        %v4592 = vpow.pop %v4591
        %v4593 = vmul.f32 %v4539, 1.442695
        %v4594 = vpow.pop %v4593
        %v4595 = vmul.f32 %v4540, 1.442695
        %v4596 = vpow.pop %v4595
        %v4597 = vmul.f32 %v4541, 1.442695
        %v4598 = vpow.pop %v4597
        %v4599 = vmul.f32 %v4542, 1.442695
        %v4600 = vpow.pop %v4599
        %v4601 = vmul.f32 %v4543, 1.442695
        %v4602 = vpow.pop %v4601
        %v4603 = vmul.f32 %v4544, 1.442695
        %v4604 = vpow.pop %v4603
        %v4605 = vmul.f32 %v4545, 1.442695
        %v4606 = vpow.pop %v4605
        %v4607 = vmul.f32 %v4546, 1.442695
        %v4608 = vpow.pop %v4607
        %v4609 = vmul.f32 %v4547, 1.442695
        %v4610 = vpow.pop %v4609
        %v4611 = vmul.f32 %v4548, 1.442695
        %v4612 = vpow.pop %v4611
        %v4613 = vadd.f32 %v4550, 1.0
        %v4614 = vadd.f32 %v4552, 1.0
        %v4615 = vadd.f32 %v4554, 1.0
        %v4616 = vadd.f32 %v4556, 1.0
        %v4617 = vadd.f32 %v4558, 1.0
        %v4618 = vadd.f32 %v4560, 1.0
        %v4619 = vadd.f32 %v4562, 1.0
        %v4620 = vadd.f32 %v4564, 1.0
        %v4621 = vadd.f32 %v4566, 1.0
        %v4622 = vadd.f32 %v4568, 1.0
        %v4623 = vadd.f32 %v4570, 1.0
        %v4624 = vadd.f32 %v4572, 1.0
        %v4625 = vadd.f32 %v4574, 1.0
        %v4626 = vadd.f32 %v4576, 1.0
        %v4627 = vadd.f32 %v4578, 1.0
        %v4628 = vadd.f32 %v4580, 1.0
        %v4629 = vadd.f32 %v4582, 1.0
        %v4630 = vadd.f32 %v4584, 1.0
        %v4631 = vadd.f32 %v4586, 1.0
        %v4632 = vadd.f32 %v4588, 1.0
        %v4633 = vadd.f32 %v4590, 1.0
        %v4634 = vadd.f32 %v4592, 1.0
        %v4635 = vadd.f32 %v4594, 1.0
        %v4636 = vadd.f32 %v4596, 1.0
        %v4637 = vadd.f32 %v4598, 1.0
        %v4638 = vadd.f32 %v4600, 1.0
        %v4639 = vadd.f32 %v4602, 1.0
        %v4640 = vadd.f32 %v4604, 1.0
        %v4641 = vadd.f32 %v4606, 1.0
        %v4642 = vadd.f32 %v4608, 1.0
        %v4643 = vadd.f32 %v4610, 1.0
        %v4644 = vadd.f32 %v4612, 1.0
        %v4645 = vrcp.pop %v4613
        %v4646 = vrcp.pop %v4614
        %v4647 = vrcp.pop %v4615
        %v4648 = vrcp.pop %v4616
        %v4649 = vrcp.pop %v4617
        %v4650 = vrcp.pop %v4618
        %v4651 = vrcp.pop %v4619
        %v4652 = vrcp.pop %v4620
        %v4653 = vrcp.pop %v4621
        %v4654 = vrcp.pop %v4622
        %v4655 = vrcp.pop %v4623
        %v4656 = vrcp.pop %v4624
        %v4657 = vrcp.pop %v4625
        %v4658 = vrcp.pop %v4626
        %v4659 = vrcp.pop %v4627
        %v4660 = vrcp.pop %v4628
        %v4661 = vrcp.pop %v4629
        %v4662 = vrcp.pop %v4630
        %v4663 = vrcp.pop %v4631
        %v4664 = vrcp.pop %v4632
        %v4665 = vrcp.pop %v4633
        %v4666 = vrcp.pop %v4634
        %v4667 = vrcp.pop %v4635
        %v4668 = vrcp.pop %v4636
        %v4669 = vrcp.pop %v4637
        %v4670 = vrcp.pop %v4638
        %v4671 = vrcp.pop %v4639
        %v4672 = vrcp.pop %v4640
        %v4673 = vrcp.pop %v4641
        %v4674 = vrcp.pop %v4642
        %v4675 = vrcp.pop %v4643
        %v4676 = vrcp.pop %v4644
        %v4677 = vmul.f32 %v4391, %v4645
        %v4678 = vmul.f32 %v4394, %v4646
        %v4679 = vmul.f32 %v4399, %v4647
        %v4680 = vmul.f32 %v4402, %v4648
        %v4681 = vmul.f32 %v4407, %v4649
        %v4682 = vmul.f32 %v4410, %v4650
        %v4683 = vmul.f32 %v4415, %v4651
        %v4684 = vmul.f32 %v4418, %v4652
        %v4685 = vmul.f32 %v4423, %v4653
        %v4686 = vmul.f32 %v4426, %v4654
        %v4687 = vmul.f32 %v4431, %v4655
        %v4688 = vmul.f32 %v4434, %v4656
        %v4689 = vmul.f32 %v4439, %v4657
        %v4690 = vmul.f32 %v4442, %v4658
        %v4691 = vmul.f32 %v4447, %v4659
        %v4692 = vmul.f32 %v4450, %v4660
        %v4693 = vmul.f32 %v4455, %v4661
        %v4694 = vmul.f32 %v4458, %v4662
        %v4695 = vmul.f32 %v4463, %v4663
        %v4696 = vmul.f32 %v4466, %v4664
        %v4697 = vmul.f32 %v4471, %v4665
        %v4698 = vmul.f32 %v4474, %v4666
        %v4699 = vmul.f32 %v4479, %v4667
        %v4700 = vmul.f32 %v4482, %v4668
        %v4701 = vmul.f32 %v4487, %v4669
        %v4702 = vmul.f32 %v4490, %v4670
        %v4703 = vmul.f32 %v4495, %v4671
        %v4704 = vmul.f32 %v4498, %v4672
        %v4705 = vmul.f32 %v4503, %v4673
        %v4706 = vmul.f32 %v4506, %v4674
        %v4707 = vmul.f32 %v4511, %v4675
        %v4708 = vmul.f32 %v4514, %v4676
        %v4709 = vld [vmem:[%s252] sm:$0xf]
        %v4710 = vld [vmem:[%s252 + $0x4] sm:$0xf]
        %v4711 = vld [vmem:[%s252 + $0x8] sm:$0xf]
        %v4712 = vld [vmem:[%s252 + $0xc] sm:$0xf]
        %v4713 = vld [vmem:[%s252 + $0x10] sm:$0xf]
        %v4714 = vld [vmem:[%s252 + $0x14] sm:$0xf]
        %v4715 = vld [vmem:[%s252 + $0x18] sm:$0xf]
        %v4716 = vld [vmem:[%s252 + $0x1c] sm:$0xf]
        %v4717 = vld [vmem:[%s252 + $0x20] sm:$0xf]
        %v4718 = vld [vmem:[%s252 + $0x24] sm:$0xf]
        %v4719 = vld [vmem:[%s252 + $0x28] sm:$0xf]
        %v4720 = vld [vmem:[%s252 + $0x2c] sm:$0xf]
        %v4721 = vld [vmem:[%s252 + $0x30] sm:$0xf]
        %v4722 = vld [vmem:[%s252 + $0x34] sm:$0xf]
        %v4723 = vld [vmem:[%s252 + $0x38] sm:$0xf]
        %v4724 = vld [vmem:[%s252 + $0x3c] sm:$0xf]
        %v4725 = vld [vmem:[%s252 + $0x40] sm:$0xf]
        %v4726 = vld [vmem:[%s252 + $0x44] sm:$0xf]
        %v4727 = vld [vmem:[%s252 + $0x48] sm:$0xf]
        %v4728 = vld [vmem:[%s252 + $0x4c] sm:$0xf]
        %v4729 = vld [vmem:[%s252 + $0x50] sm:$0xf]
        %v4730 = vld [vmem:[%s252 + $0x54] sm:$0xf]
        %v4731 = vld [vmem:[%s252 + $0x58] sm:$0xf]
        %v4732 = vld [vmem:[%s252 + $0x5c] sm:$0xf]
        %v4733 = vld [vmem:[%s252 + $0x60] sm:$0xf]
        %v4734 = vld [vmem:[%s252 + $0x64] sm:$0xf]
        %v4735 = vld [vmem:[%s252 + $0x68] sm:$0xf]
        %v4736 = vld [vmem:[%s252 + $0x6c] sm:$0xf]
        %v4737 = vld [vmem:[%s252 + $0x70] sm:$0xf]
        %v4738 = vld [vmem:[%s252 + $0x74] sm:$0xf]
        %v4739 = vld [vmem:[%s252 + $0x78] sm:$0xf]
        %v4740 = vld [vmem:[%s252 + $0x7c] sm:$0xf]
        %v4741 = vunpack.c.l.bf16 %v4709
        %v4742 = vunpack.c.l.bf16 %v4710
        %v4743 = vunpack.c.l.bf16 %v4711
        %v4744 = vunpack.c.l.bf16 %v4712
        %v4745 = vunpack.c.l.bf16 %v4713
        %v4746 = vunpack.c.l.bf16 %v4714
        %v4747 = vunpack.c.l.bf16 %v4715
        %v4748 = vunpack.c.l.bf16 %v4716
        %v4749 = vunpack.c.l.bf16 %v4717
        %v4750 = vunpack.c.l.bf16 %v4718
        %v4751 = vunpack.c.l.bf16 %v4719
        %v4752 = vunpack.c.l.bf16 %v4720
        %v4753 = vunpack.c.l.bf16 %v4721
        %v4754 = vunpack.c.l.bf16 %v4722
        %v4755 = vunpack.c.l.bf16 %v4723
        %v4756 = vunpack.c.l.bf16 %v4724
        %v4757 = vunpack.c.l.bf16 %v4725
        %v4758 = vunpack.c.l.bf16 %v4726
        %v4759 = vunpack.c.l.bf16 %v4727
        %v4760 = vunpack.c.l.bf16 %v4728
        %v4761 = vunpack.c.l.bf16 %v4729
        %v4762 = vunpack.c.l.bf16 %v4730
        %v4763 = vunpack.c.l.bf16 %v4731
        %v4764 = vunpack.c.l.bf16 %v4732
        %v4765 = vunpack.c.l.bf16 %v4733
        %v4766 = vunpack.c.l.bf16 %v4734
        %v4767 = vunpack.c.l.bf16 %v4735
        %v4768 = vunpack.c.l.bf16 %v4736
        %v4769 = vunpack.c.l.bf16 %v4737
        %v4770 = vunpack.c.l.bf16 %v4738
        %v4771 = vunpack.c.l.bf16 %v4739
        %v4772 = vunpack.c.l.bf16 %v4740
        %4805 = vrot.lane.b32.xlu0 %v4741, 124
        %v4806 = vpop.permute.xlu0 %4805
        %4807 = vrot.lane.b32.xlu0 %v4742, 124
        %v4808 = vpop.permute.xlu0 %4807
        %4809 = vrot.lane.b32.xlu0 %v4743, 124
        %v4810 = vpop.permute.xlu0 %4809
        %4811 = vrot.lane.b32.xlu0 %v4744, 124
        %v4812 = vpop.permute.xlu0 %4811
        %4813 = vrot.lane.b32.xlu0 %v4745, 124
        %v4814 = vpop.permute.xlu0 %4813
        %4815 = vrot.lane.b32.xlu0 %v4746, 124
        %v4816 = vpop.permute.xlu0 %4815
        %4817 = vrot.lane.b32.xlu0 %v4747, 124
        %v4818 = vpop.permute.xlu0 %4817
        %4819 = vrot.lane.b32.xlu0 %v4748, 124
        %v4820 = vpop.permute.xlu0 %4819
        %4821 = vrot.lane.b32.xlu0 %v4749, 124
        %v4822 = vpop.permute.xlu0 %4821
        %4823 = vrot.lane.b32.xlu0 %v4750, 124
        %v4824 = vpop.permute.xlu0 %4823
        %4825 = vrot.lane.b32.xlu0 %v4751, 124
        %v4826 = vpop.permute.xlu0 %4825
        %4827 = vrot.lane.b32.xlu0 %v4752, 124
        %v4828 = vpop.permute.xlu0 %4827
        %4829 = vrot.lane.b32.xlu0 %v4753, 124
        %v4830 = vpop.permute.xlu0 %4829
        %4831 = vrot.lane.b32.xlu0 %v4754, 124
        %v4832 = vpop.permute.xlu0 %4831
        %4833 = vrot.lane.b32.xlu0 %v4755, 124
        %v4834 = vpop.permute.xlu0 %4833
        %4835 = vrot.lane.b32.xlu0 %v4756, 124
        %v4836 = vpop.permute.xlu0 %4835
        %4837 = vrot.lane.b32.xlu0 %v4757, 124
        %v4838 = vpop.permute.xlu0 %4837
        %4839 = vrot.lane.b32.xlu0 %v4758, 124
        %v4840 = vpop.permute.xlu0 %4839
        %4841 = vrot.lane.b32.xlu0 %v4759, 124
        %v4842 = vpop.permute.xlu0 %4841
        %4843 = vrot.lane.b32.xlu0 %v4760, 124
        %v4844 = vpop.permute.xlu0 %4843
        %4845 = vrot.lane.b32.xlu0 %v4761, 124
        %v4846 = vpop.permute.xlu0 %4845
        %4847 = vrot.lane.b32.xlu0 %v4762, 124
        %v4848 = vpop.permute.xlu0 %4847
        %4849 = vrot.lane.b32.xlu0 %v4763, 124
        %v4850 = vpop.permute.xlu0 %4849
        %4851 = vrot.lane.b32.xlu0 %v4764, 124
        %v4852 = vpop.permute.xlu0 %4851
        %4853 = vrot.lane.b32.xlu0 %v4765, 124
        %v4854 = vpop.permute.xlu0 %4853
        %4855 = vrot.lane.b32.xlu0 %v4766, 124
        %v4856 = vpop.permute.xlu0 %4855
        %4857 = vrot.lane.b32.xlu0 %v4767, 124
        %v4858 = vpop.permute.xlu0 %4857
        %4859 = vrot.lane.b32.xlu0 %v4768, 124
        %v4860 = vpop.permute.xlu0 %4859
        %4861 = vrot.lane.b32.xlu0 %v4769, 124
        %v4862 = vpop.permute.xlu0 %4861
        %4863 = vrot.lane.b32.xlu0 %v4770, 124
        %v4864 = vpop.permute.xlu0 %4863
        %4865 = vrot.lane.b32.xlu0 %v4771, 124
        %v4866 = vpop.permute.xlu0 %4865
        %4867 = vrot.lane.b32.xlu0 %v4772, 124
        %v4868 = vpop.permute.xlu0 %4867
        %v4901 = vadd.f32 %v4677, %v4806
        %v4902 = vadd.f32 %v4678, %v4808
        %v4903 = vadd.f32 %v4679, %v4810
        %v4904 = vadd.f32 %v4680, %v4812
        %v4905 = vadd.f32 %v4681, %v4814
        %v4906 = vadd.f32 %v4682, %v4816
        %v4907 = vadd.f32 %v4683, %v4818
        %v4908 = vadd.f32 %v4684, %v4820
        %v4909 = vadd.f32 %v4685, %v4822
        %v4910 = vadd.f32 %v4686, %v4824
        %v4911 = vadd.f32 %v4687, %v4826
        %v4912 = vadd.f32 %v4688, %v4828
        %v4913 = vadd.f32 %v4689, %v4830
        %v4914 = vadd.f32 %v4690, %v4832
        %v4915 = vadd.f32 %v4691, %v4834
        %v4916 = vadd.f32 %v4692, %v4836
        %v4917 = vadd.f32 %v4693, %v4838
        %v4918 = vadd.f32 %v4694, %v4840
        %v4919 = vadd.f32 %v4695, %v4842
        %v4920 = vadd.f32 %v4696, %v4844
        %v4921 = vadd.f32 %v4697, %v4846
        %v4922 = vadd.f32 %v4698, %v4848
        %v4923 = vadd.f32 %v4699, %v4850
        %v4924 = vadd.f32 %v4700, %v4852
        %v4925 = vadd.f32 %v4701, %v4854
        %v4926 = vadd.f32 %v4702, %v4856
        %v4927 = vadd.f32 %v4703, %v4858
        %v4928 = vadd.f32 %v4704, %v4860
        %v4929 = vadd.f32 %v4705, %v4862
        %v4930 = vadd.f32 %v4706, %v4864
        %v4931 = vadd.f32 %v4707, %v4866
        %v4932 = vadd.f32 %v4708, %v4868
        %v4933 = vpack.c.bf16 %v4902, %v4901
        %v4934 = vpack.c.bf16 %v4904, %v4903
        %v4935 = vpack.c.bf16 %v4906, %v4905
        %v4936 = vpack.c.bf16 %v4908, %v4907
        %v4937 = vpack.c.bf16 %v4910, %v4909
        %v4938 = vpack.c.bf16 %v4912, %v4911
        %v4939 = vpack.c.bf16 %v4914, %v4913
        %v4940 = vpack.c.bf16 %v4916, %v4915
        %v4941 = vpack.c.bf16 %v4918, %v4917
        %v4942 = vpack.c.bf16 %v4920, %v4919
        %v4943 = vpack.c.bf16 %v4922, %v4921
        %v4944 = vpack.c.bf16 %v4924, %v4923
        %v4945 = vpack.c.bf16 %v4926, %v4925
        %v4946 = vpack.c.bf16 %v4928, %v4927
        %v4947 = vpack.c.bf16 %v4930, %v4929
        %v4948 = vpack.c.bf16 %v4932, %v4931
        %v4981 = vunpack.c.l.b16 %v4709
        %v4982 = vunpack.c.l.b16 %v4710
        %v4983 = vunpack.c.l.b16 %v4711
        %v4984 = vunpack.c.l.b16 %v4712
        %v4985 = vunpack.c.l.b16 %v4713
        %v4986 = vunpack.c.l.b16 %v4714
        %v4987 = vunpack.c.l.b16 %v4715
        %v4988 = vunpack.c.l.b16 %v4716
        %v4989 = vunpack.c.l.b16 %v4717
        %v4990 = vunpack.c.l.b16 %v4718
        %v4991 = vunpack.c.l.b16 %v4719
        %v4992 = vunpack.c.l.b16 %v4720
        %v4993 = vunpack.c.l.b16 %v4721
        %v4994 = vunpack.c.l.b16 %v4722
        %v4995 = vunpack.c.l.b16 %v4723
        %v4996 = vunpack.c.l.b16 %v4724
        %v4997 = vunpack.c.l.b16 %v4725
        %v4998 = vunpack.c.l.b16 %v4726
        %v4999 = vunpack.c.l.b16 %v4727
        %v5000 = vunpack.c.l.b16 %v4728
        %v5001 = vunpack.c.l.b16 %v4729
        %v5002 = vunpack.c.l.b16 %v4730
        %v5003 = vunpack.c.l.b16 %v4731
        %v5004 = vunpack.c.l.b16 %v4732
        %v5005 = vunpack.c.l.b16 %v4733
        %v5006 = vunpack.c.l.b16 %v4734
        %v5007 = vunpack.c.l.b16 %v4735
        %v5008 = vunpack.c.l.b16 %v4736
        %v5009 = vunpack.c.l.b16 %v4737
        %v5010 = vunpack.c.l.b16 %v4738
        %v5011 = vunpack.c.l.b16 %v4739
        %v5012 = vunpack.c.l.b16 %v4740
        %v5013 = vpack.c.b16 %v4982, %v4981
        %v5014 = vpack.c.b16 %v4984, %v4983
        %v5015 = vpack.c.b16 %v4986, %v4985
        %v5016 = vpack.c.b16 %v4988, %v4987
        %v5017 = vpack.c.b16 %v4990, %v4989
        %v5018 = vpack.c.b16 %v4992, %v4991
        %v5019 = vpack.c.b16 %v4994, %v4993
        %v5020 = vpack.c.b16 %v4996, %v4995
        %v5021 = vpack.c.b16 %v4998, %v4997
        %v5022 = vpack.c.b16 %v5000, %v4999
        %v5023 = vpack.c.b16 %v5002, %v5001
        %v5024 = vpack.c.b16 %v5004, %v5003
        %v5025 = vpack.c.b16 %v5006, %v5005
        %v5026 = vpack.c.b16 %v5008, %v5007
        %v5027 = vpack.c.b16 %v5010, %v5009
        %v5028 = vpack.c.b16 %v5012, %v5011
        %5045 = vrot.lane.b32.xlu0 %v4933, 8
        %v5046 = vpop.permute.xlu0 %5045
        %5047 = vrot.lane.b32.xlu0 %v4934, 8
        %v5048 = vpop.permute.xlu0 %5047
        %5049 = vrot.lane.b32.xlu0 %v4935, 8
        %v5050 = vpop.permute.xlu0 %5049
        %5051 = vrot.lane.b32.xlu0 %v4936, 8
        %v5052 = vpop.permute.xlu0 %5051
        %5053 = vrot.lane.b32.xlu0 %v4937, 8
        %v5054 = vpop.permute.xlu0 %5053
        %5055 = vrot.lane.b32.xlu0 %v4938, 8
        %v5056 = vpop.permute.xlu0 %5055
        %5057 = vrot.lane.b32.xlu0 %v4939, 8
        %v5058 = vpop.permute.xlu0 %5057
        %5059 = vrot.lane.b32.xlu0 %v4940, 8
        %v5060 = vpop.permute.xlu0 %5059
        %5061 = vrot.lane.b32.xlu0 %v4941, 8
        %v5062 = vpop.permute.xlu0 %5061
        %5063 = vrot.lane.b32.xlu0 %v4942, 8
        %v5064 = vpop.permute.xlu0 %5063
        %5065 = vrot.lane.b32.xlu0 %v4943, 8
        %v5066 = vpop.permute.xlu0 %5065
        %5067 = vrot.lane.b32.xlu0 %v4944, 8
        %v5068 = vpop.permute.xlu0 %5067
        %5069 = vrot.lane.b32.xlu0 %v4945, 8
        %v5070 = vpop.permute.xlu0 %5069
        %5071 = vrot.lane.b32.xlu0 %v4946, 8
        %v5072 = vpop.permute.xlu0 %5071
        %5073 = vrot.lane.b32.xlu0 %v4947, 8
        %v5074 = vpop.permute.xlu0 %5073
        %5075 = vrot.lane.b32.xlu0 %v4948, 8
        %v5076 = vpop.permute.xlu0 %5075
        %v5079 = vsel %vm4062, %v5013, %v5046
        %v5082 = vsel %vm4062, %v5014, %v5048
        %v5085 = vsel %vm4062, %v5015, %v5050
        %v5088 = vsel %vm4062, %v5016, %v5052
        %v5091 = vsel %vm4062, %v5017, %v5054
        %v5094 = vsel %vm4062, %v5018, %v5056
        %v5097 = vsel %vm4062, %v5019, %v5058
        %v5100 = vsel %vm4062, %v5020, %v5060
        %v5103 = vsel %vm4062, %v5021, %v5062
        %v5106 = vsel %vm4062, %v5022, %v5064
        %v5109 = vsel %vm4062, %v5023, %v5066
        %v5112 = vsel %vm4062, %v5024, %v5068
        %v5115 = vsel %vm4062, %v5025, %v5070
        %v5118 = vsel %vm4062, %v5026, %v5072
        %v5121 = vsel %vm4062, %v5027, %v5074
        %v5124 = vsel %vm4062, %v5028, %v5076
        %v5141 = vunpack.c.l.b16 %v5079
        %v5142 = vunpack.c.h.b16 %v5079
        %v5143 = vunpack.c.l.b16 %v5082
        %v5144 = vunpack.c.h.b16 %v5082
        %v5145 = vunpack.c.l.b16 %v5085
        %v5146 = vunpack.c.h.b16 %v5085
        %v5147 = vunpack.c.l.b16 %v5088
        %v5148 = vunpack.c.h.b16 %v5088
        %v5149 = vunpack.c.l.b16 %v5091
        %v5150 = vunpack.c.h.b16 %v5091
        %v5151 = vunpack.c.l.b16 %v5094
        %v5152 = vunpack.c.h.b16 %v5094
        %v5153 = vunpack.c.l.b16 %v5097
        %v5154 = vunpack.c.h.b16 %v5097
        %v5155 = vunpack.c.l.b16 %v5100
        %v5156 = vunpack.c.h.b16 %v5100
        %v5157 = vunpack.c.l.b16 %v5103
        %v5158 = vunpack.c.h.b16 %v5103
        %v5159 = vunpack.c.l.b16 %v5106
        %v5160 = vunpack.c.h.b16 %v5106
        %v5161 = vunpack.c.l.b16 %v5109
        %v5162 = vunpack.c.h.b16 %v5109
        %v5163 = vunpack.c.l.b16 %v5112
        %v5164 = vunpack.c.h.b16 %v5112
        %v5165 = vunpack.c.l.b16 %v5115
        %v5166 = vunpack.c.h.b16 %v5115
        %v5167 = vunpack.c.l.b16 %v5118
        %v5168 = vunpack.c.h.b16 %v5118
        %v5169 = vunpack.c.l.b16 %v5121
        %v5170 = vunpack.c.h.b16 %v5121
        %v5171 = vunpack.c.l.b16 %v5124
        %v5172 = vunpack.c.h.b16 %v5124
        %v5173 = vpack.c.b16 %v5141, %v5141
        %v5174 = vpack.c.b16 %v5142, %v5142
        %v5175 = vpack.c.b16 %v5143, %v5143
        %v5176 = vpack.c.b16 %v5144, %v5144
        %v5177 = vpack.c.b16 %v5145, %v5145
        %v5178 = vpack.c.b16 %v5146, %v5146
        %v5179 = vpack.c.b16 %v5147, %v5147
        %v5180 = vpack.c.b16 %v5148, %v5148
        %v5181 = vpack.c.b16 %v5149, %v5149
        %v5182 = vpack.c.b16 %v5150, %v5150
        %v5183 = vpack.c.b16 %v5151, %v5151
        %v5184 = vpack.c.b16 %v5152, %v5152
        %v5185 = vpack.c.b16 %v5153, %v5153
        %v5186 = vpack.c.b16 %v5154, %v5154
        %v5187 = vpack.c.b16 %v5155, %v5155
        %v5188 = vpack.c.b16 %v5156, %v5156
        %v5189 = vpack.c.b16 %v5157, %v5157
        %v5190 = vpack.c.b16 %v5158, %v5158
        %v5191 = vpack.c.b16 %v5159, %v5159
        %v5192 = vpack.c.b16 %v5160, %v5160
        %v5193 = vpack.c.b16 %v5161, %v5161
        %v5194 = vpack.c.b16 %v5162, %v5162
        %v5195 = vpack.c.b16 %v5163, %v5163
        %v5196 = vpack.c.b16 %v5164, %v5164
        %v5197 = vpack.c.b16 %v5165, %v5165
        %v5198 = vpack.c.b16 %v5166, %v5166
        %v5199 = vpack.c.b16 %v5167, %v5167
        %v5200 = vpack.c.b16 %v5168, %v5168
        %v5201 = vpack.c.b16 %v5169, %v5169
        %v5202 = vpack.c.b16 %v5170, %v5170
        %v5203 = vpack.c.b16 %v5171, %v5171
        %v5204 = vpack.c.b16 %v5172, %v5172
        %vm5237 = vcmask 93184
        %5238 = vst.msk [vmem:[%s294] sm:$0xf] %vm5237, %v5173
        %5239 = vst.msk [vmem:[%s294 + $0x4] sm:$0xf] %vm5237, %v5174
        %5240 = vst.msk [vmem:[%s294 + $0x8] sm:$0xf] %vm5237, %v5175
        %5241 = vst.msk [vmem:[%s294 + $0xc] sm:$0xf] %vm5237, %v5176
        %5242 = vst.msk [vmem:[%s294 + $0x10] sm:$0xf] %vm5237, %v5177
        %5243 = vst.msk [vmem:[%s294 + $0x14] sm:$0xf] %vm5237, %v5178
        %5244 = vst.msk [vmem:[%s294 + $0x18] sm:$0xf] %vm5237, %v5179
        %5245 = vst.msk [vmem:[%s294 + $0x1c] sm:$0xf] %vm5237, %v5180
        %5246 = vst.msk [vmem:[%s294 + $0x20] sm:$0xf] %vm5237, %v5181
        %5247 = vst.msk [vmem:[%s294 + $0x24] sm:$0xf] %vm5237, %v5182
        %5248 = vst.msk [vmem:[%s294 + $0x28] sm:$0xf] %vm5237, %v5183
        %5249 = vst.msk [vmem:[%s294 + $0x2c] sm:$0xf] %vm5237, %v5184
        %5250 = vst.msk [vmem:[%s294 + $0x30] sm:$0xf] %vm5237, %v5185
        %5251 = vst.msk [vmem:[%s294 + $0x34] sm:$0xf] %vm5237, %v5186
        %5252 = vst.msk [vmem:[%s294 + $0x38] sm:$0xf] %vm5237, %v5187
        %5253 = vst.msk [vmem:[%s294 + $0x3c] sm:$0xf] %vm5237, %v5188
        %5254 = vst.msk [vmem:[%s294 + $0x40] sm:$0xf] %vm5237, %v5189
        %5255 = vst.msk [vmem:[%s294 + $0x44] sm:$0xf] %vm5237, %v5190
        %5256 = vst.msk [vmem:[%s294 + $0x48] sm:$0xf] %vm5237, %v5191
        %5257 = vst.msk [vmem:[%s294 + $0x4c] sm:$0xf] %vm5237, %v5192
        %5258 = vst.msk [vmem:[%s294 + $0x50] sm:$0xf] %vm5237, %v5193
        %5259 = vst.msk [vmem:[%s294 + $0x54] sm:$0xf] %vm5237, %v5194
        %5260 = vst.msk [vmem:[%s294 + $0x58] sm:$0xf] %vm5237, %v5195
        %5261 = vst.msk [vmem:[%s294 + $0x5c] sm:$0xf] %vm5237, %v5196
        %5262 = vst.msk [vmem:[%s294 + $0x60] sm:$0xf] %vm5237, %v5197
        %5263 = vst.msk [vmem:[%s294 + $0x64] sm:$0xf] %vm5237, %v5198
        %5264 = vst.msk [vmem:[%s294 + $0x68] sm:$0xf] %vm5237, %v5199
        %5265 = vst.msk [vmem:[%s294 + $0x6c] sm:$0xf] %vm5237, %v5200
        %5266 = vst.msk [vmem:[%s294 + $0x70] sm:$0xf] %vm5237, %v5201
        %5267 = vst.msk [vmem:[%s294 + $0x74] sm:$0xf] %vm5237, %v5202
        %5268 = vst.msk [vmem:[%s294 + $0x78] sm:$0xf] %vm5237, %v5203
        %5269 = vst.msk [vmem:[%s294 + $0x7c] sm:$0xf] %vm5237, %v5204
        %s5270 = sand.u32 %s142, 1
        %s5271 = scalar_lea.sflag [#allocation5], %s5270
        %s5272 = sand.u32 %s142, 1
        %s5273 = smul.addr %s5272, 128
        %s5274 = scalar_lea.vmem [#allocation12], %s5273
        // Predicated region
        $region61: #{c2f_forward.4} parent=39 // pred_check
          %p5275 = pneg %p152
        $region62: #{c2f_forward.4} parent=39 // pred_check_branch
          %5277 = sbr.rel (%p5275) target = $region64
        $region63: #{c2f_forward.4} parent=39 // pred_region
          %s5279 = ssub.s32 2048, 2048
          %5280 = vsyncadd %s5271, %s5279
          %s5281 = smul.addr %s24, 32
          %s5282 = smul.addr %s5281, 64
          %s5283 = scalar_lea.hbm %s5, %s5282
          %s5284 = sshll.u32 %s5274, 4
          %s5285 = int_to_ptr.vmem [resolvable:$true] %s5284
          %5290 = dma.vmem_to_hbm [thread:$0]  %s5285, 2048, %s5283, %s5271, 64, 64, 4
        $region64: #{c2f_forward.4} parent=39 // pred_fallthru
          _
      $region40: #{c2f_forward.4} parent=5 // pred_fallthru
        _
      %p5291 = scmp.le.s32.totalorder 2, %s19
      // Predicated region
      $region65: #{c2f_forward.4} parent=5 // pred_check
        %p5292 = pneg %p5291
      $region66: #{c2f_forward.4} parent=5 // pred_check_branch
        %5294 = sbr.rel (%p5292) target = $region68
      $region67: #{c2f_forward.4} parent=5 // pred_region
        %s5295 = ssub.s32 %s19, 2
        // Predicated region
        $region69: #{c2f_forward.4} parent=67 // pred_check
          %p5296 = pneg %p158
        $region70: #{c2f_forward.4} parent=67 // pred_check_branch
          %5298 = sbr.rel (%p5296) target = $region72
        $region71: #{c2f_forward.4} parent=67 // pred_region
          %s5299 = sand.u32 %s143, 1
          %s5300 = scalar_lea.sflag [#allocation5], %s5299
          %s5301 = sand.u32 %s143, 1
          %s5302 = smul.addr %s5301, 128
          %s5303 = scalar_lea.vmem [#allocation12], %s5302
          %5304 = dma.done %s5300, 2048
        $region72: #{c2f_forward.4} parent=67 // pred_fallthru
          _
      $region68: #{c2f_forward.4} parent=5 // pred_fallthru
        _
    $region6: #{c2f_forward.4} parent=1 // loop_footer
      %s23 = sadd.s32 1, %s19
    $region7: #{c2f_forward.4} parent=1 // loop_footer_branch
      %18 = sbr.rel target = $region3
    $region8: #{c2f_forward.4} parent=1 // loop_exit
      _
    %5305 = vsyncpa [#allocation4], 1
    %s5306 = scalar_lea.sflag [#allocation4], 1
    %5307 = vsyncpa %s5306, 1
    %5308 = vsyncpa [#allocation7], 1
    %5309 = vsyncpa [#allocation10], 1
    %5310 = vsyncpa [#allocation5], 1
    %s5311 = scalar_lea.sflag [#allocation5], 1
    %5312 = vsyncpa %s5311, 1

</llo_original>
